<compile_context>
chip_gen: v7x
topology: tpu7x:2x2x1
jax: 0.10.0
libtpu: 0.0.40
codegen_flags: <defaults>
</compile_context>

<pallas_src>
import functools

import jax
import jax.numpy as jnp
from jax.experimental import pallas as pl
from jax.experimental.pallas import tpu as pltpu

# Module hyper-parameters (defaults of ParallelWaveGANDiscriminator).
LAYERS = 10
K = 3
CCH = 64            # conv_channels
IN_CH = 1
OUT_CH = 1
NEG_SLOPE = 0.2
# dilation schedule: i==0 -> 1, i>0 -> i (dilation_factor == 1), last conv -> 1
DILATIONS = (1, 1, 2, 3, 4, 5, 6, 7, 8, 1)

HALO = 128          # per-tile halo; >= sum(DILATIONS)=38 and lane aligned
SHIFT_PAD = 128     # zero border of the shift scratch; >= max(DILATIONS)=8
assert HALO >= sum(DILATIONS)
assert SHIFT_PAD >= max(DILATIONS)


def _disc_kernel(x_ref, w0_ref, wmid_ref, wlast_ref, b_ref, o_ref, hpad_ref,
                 *, tile_t, t_real):
    # x_ref    : (1, 1, T_pad) f32      zero-padded input row (this batch elem)
    # w0_ref   : (CCH, K) f32           layer-0 taps (in_channels == 1)
    # wmid_ref : (LAYERS-2, CCH, 3*CCH) bf16  fused 3-tap weights, layers 1..8
    # wlast_ref: (8, 3*CCH) bf16        fused last-layer weight (row 0 real)
    # b_ref    : (LAYERS, CCH, 1) f32   biases (last layer uses [LAYERS-1, 0])
    # o_ref    : (1, 1, TILE_T) f32     output block
    # hpad_ref : (CCH, W + 2*SHIFT_PAD) bf16  scratch for the tap shifts
    w_win = tile_t + 2 * HALO
    t_idx = pl.program_id(1)
    t_start = pl.multiple_of(t_idx * tile_t, 128)

    # Zero the borders of the shift scratch (interior is rewritten each layer).
    zeros_border = jnp.zeros((CCH, SHIFT_PAD), jnp.bfloat16)
    hpad_ref[:, :SHIFT_PAD] = zeros_border
    hpad_ref[:, SHIFT_PAD + w_win:] = zeros_border

    # Columns of this window that lie inside the real signal [0, T); applying
    # the mask after every layer reproduces torch Conv1d zero padding exactly.
    gpos = (t_start - HALO) + jax.lax.broadcasted_iota(jnp.int32, (1, w_win), 1)
    maskf = jnp.logical_and(gpos >= 0, gpos < t_real).astype(jnp.float32)

    # ---- layer 0: 1 -> 64 channels via three broadcast taps (no matmul). ----
    xw = x_ref[0, :, pl.ds(t_start, w_win)]                        # (1, W) f32
    zc = jnp.zeros((1, 1), jnp.float32)
    xl = jnp.concatenate([zc, xw[:, :w_win - 1]], axis=1)          # x[t - 1]
    xr = jnp.concatenate([xw[:, 1:], zc], axis=1)                  # x[t + 1]
    w0 = w0_ref[...]                                               # (CCH, 3)
    z = w0[:, 0:1] * xl + w0[:, 1:2] * xw + w0[:, 2:3] * xr + b_ref[0]
    h = jnp.where(z >= 0.0, z, NEG_SLOPE * z) * maskf              # (CCH, W)

    # ---- layers 1..8: fused 3-tap (64, 192) x (192, W) bf16 MXU matmul. ----
    for l in range(1, LAYERS - 1):
        d = DILATIONS[l]
        h16 = h.astype(jnp.bfloat16)
        hpad_ref[:, SHIFT_PAD:SHIFT_PAD + w_win] = h16
        left = hpad_ref[:, SHIFT_PAD - d:SHIFT_PAD - d + w_win]    # h[t - d]
        right = hpad_ref[:, SHIFT_PAD + d:SHIFT_PAD + d + w_win]   # h[t + d]
        stacked = jnp.concatenate([left, h16, right], axis=0)      # (192, W)
        z = jnp.dot(wmid_ref[l - 1], stacked,
                    preferred_element_type=jnp.float32) + b_ref[l]
        h = jnp.where(z >= 0.0, z, NEG_SLOPE * z) * maskf

    # ---- last layer: 64 -> 1, central TILE_T columns only. ----
    d = DILATIONS[LAYERS - 1]
    h16 = h.astype(jnp.bfloat16)
    hpad_ref[:, SHIFT_PAD:SHIFT_PAD + w_win] = h16
    left = hpad_ref[:, SHIFT_PAD - d:SHIFT_PAD - d + w_win]
    right = hpad_ref[:, SHIFT_PAD + d:SHIFT_PAD + d + w_win]
    stacked = jnp.concatenate([left, h16, right], axis=0)          # (192, W)
    stacked_c = stacked[:, HALO:HALO + tile_t]                     # (192, TILE_T)
    zl = jnp.dot(wlast_ref[...], stacked_c,
                 preferred_element_type=jnp.float32)               # (8, TILE_T)
    b_last = b_ref[LAYERS - 1][0:1, :]                             # (1, 1)
    o_ref[0, :, :] = zl[0:1, :] + b_last


def _pack_params(weights, biases):
    """Repack torch-layout conv params for the fused-tap kernel."""
    # Layer 0 taps: (64, 1, 3) -> (64, 3), kept f32 (VPU path).
    w0 = weights[0][:, 0, :].astype(jnp.float32)
    # Layers 1..8 fused: columns [k*64:(k+1)*64] = w[:, :, k]  -> (8, 64, 192).
    w_mid = jnp.stack(
        [jnp.concatenate([weights[l][:, :, k] for k in range(K)], axis=1)
         for l in range(1, LAYERS - 1)], axis=0).astype(jnp.bfloat16)
    # Last layer (1, 64, 3) -> fused (1, 192), zero-padded to 8 rows.
    wl = weights[LAYERS - 1]
    w_last_row = jnp.concatenate([wl[:, :, k] for k in range(K)], axis=1)
    w_last = (jnp.zeros((8, 3 * CCH), jnp.float32)
              .at[0:1, :].set(w_last_row).astype(jnp.bfloat16))
    # Biases (f32): (LAYERS, CCH, 1); last layer occupies row [LAYERS-1, 0].
    b_all = jnp.zeros((LAYERS, CCH, 1), jnp.float32)
    for l in range(LAYERS):
        co = biases[l].shape[0]
        b_all = b_all.at[l, :co, 0].set(biases[l])
    return w0, w_mid, w_last, b_all


def parallel_wavegan_discriminator(x, weights, biases, *, tile_t=2048):
    """x: (B, 1, T) float32 -> (B, 1, T) float32."""
    b_sz, c_in, t = x.shape
    assert c_in == IN_CH

    # Pick a lane-aligned time tile (clamped to the padded signal length).
    t_ceil128 = ((t + 127) // 128) * 128
    tile_t = max(128, (min(tile_t, t_ceil128) // 128) * 128)
    n_tiles = pl.cdiv(t, tile_t)
    t_ceil = n_tiles * tile_t
    t_pad = t_ceil + 2 * HALO
    w_win = tile_t + 2 * HALO

    # Zero-pad time by HALO on each side (and up to t_ceil on the right).
    x_pad = jnp.zeros((b_sz, 1, t_pad), jnp.float32)
    x_pad = x_pad.at[:, :, HALO:HALO + t].set(x.astype(jnp.float32))

    w0, w_mid, w_last, b_all = _pack_params(weights, biases)

    kernel = functools.partial(_disc_kernel, tile_t=tile_t, t_real=t)

    # Explicit VMEM budget for the chosen tile (inputs double-buffered +
    # scratch + generous allowance for live layer temporaries).
    w_bytes = (CCH * K * 4 + (LAYERS - 2) * CCH * 3 * CCH * 2
               + 8 * 3 * CCH * 2 + LAYERS * CCH * 4)
    est = (2 * 4 * t_pad + 2 * 4 * tile_t + 2 * w_bytes
           + CCH * (w_win + 2 * SHIFT_PAD) * 2
           + 24 * CCH * w_win * 4)
    vmem_limit = int(min(max(2 * est, 32 * 1024 * 1024), 96 * 1024 * 1024))

    out = pl.pallas_call(
        kernel,
        out_shape=jax.ShapeDtypeStruct((b_sz, OUT_CH, t_ceil), jnp.float32),
        grid_spec=pltpu.PrefetchScalarGridSpec(
            num_scalar_prefetch=0,
            grid=(b_sz, n_tiles),
            in_specs=[
                # Per-batch input row (tiny since channel padding was dropped);
                # constant index over the tile axis so it is fetched once per b.
                pl.BlockSpec((1, 1, t_pad), lambda b, ti: (b, 0, 0)),
                pl.BlockSpec((CCH, K), lambda b, ti: (0, 0)),
                pl.BlockSpec((LAYERS - 2, CCH, 3 * CCH),
                             lambda b, ti: (0, 0, 0)),
                pl.BlockSpec((8, 3 * CCH), lambda b, ti: (0, 0)),
                pl.BlockSpec((LAYERS, CCH, 1), lambda b, ti: (0, 0, 0)),
            ],
            out_specs=pl.BlockSpec((1, OUT_CH, tile_t),
                                   lambda b, ti: (b, 0, ti)),
            scratch_shapes=[
                pltpu.VMEM((CCH, w_win + 2 * SHIFT_PAD), jnp.bfloat16),
            ],
        ),
        compiler_params=pltpu.CompilerParams(
            dimension_semantics=("parallel", "parallel"),
            vmem_limit_bytes=vmem_limit,
        ),
    )(x_pad, w0, w_mid, w_last, b_all)
    return out[:, :, :t]


def _ref_forward(x, weights, biases):
    """Pure-JAX f32 reference (mirrors torch Conv1d semantics, NCH layout)."""
    h = x
    for l, (w, bias) in enumerate(zip(weights, biases)):
        d = DILATIONS[l]
        pad = (K - 1) // 2 * d
        h = jax.lax.conv_general_dilated(
            h, w, window_strides=(1,), padding=[(pad, pad)],
            rhs_dilation=(d,), dimension_numbers=("NCH", "OIH", "NCH"),
            precision=jax.lax.Precision.HIGHEST)
        h = h + bias[None, :, None]
        if l < LAYERS - 1:
            h = jnp.where(h >= 0, h, NEG_SLOPE * h)
    return h


def _init_params(key):
    """Deterministic parameter init matching torch Conv1d shapes."""
    shapes = []
    c_in = IN_CH
    for i in range(LAYERS - 1):
        if i > 0:
            c_in = CCH
        shapes.append((CCH, c_in, K))
    shapes.append((OUT_CH, CCH, K))  # last conv

    weights, biases = [], []
    for shp in shapes:
        key, kw, kb = jax.random.split(key, 3)
        weights.append(0.05 * jax.random.normal(kw, shp, jnp.float32))
        biases.append(0.05 * jax.random.normal(kb, (shp[0],), jnp.float32))
    return weights, biases


if __name__ == "__main__":
    key = jax.random.PRNGKey(0)
    key, kx = jax.random.split(key)

    # Small but multi-tile test: T=640 with tile_t=256 exercises 3 time tiles,
    # both signal boundaries and the non-multiple-of-tile tail.
    B, T = 2, 640
    x = jax.random.normal(kx, (B, IN_CH, T), jnp.float32)

    weights, biases = _init_params(key)

    out = parallel_wavegan_discriminator(x, weights, biases, tile_t=256)
    out = jax.block_until_ready(out)

    ref = _ref_forward(x, weights, biases)
    assert out.shape == (B, OUT_CH, T)
    err = float(jnp.max(jnp.abs(out - ref)))
    scale = float(jnp.max(jnp.abs(ref)))
    # bf16 matmul operands (f32 accumulation) -> loosened tolerance vs f32 ref.
    assert err <= 0.05 * max(scale, 1e-3), (err, scale)

    print("KERNEL_OK")
</pallas_src>

<mosaic_0001>
module attributes {stable_mosaic.version = 11 : i64} {
  func.func @_disc_kernel(%arg0: i32, %arg1: i32, %arg2: memref<1x1x1024xf32, #tpu.memory_space<vmem>>, %arg3: memref<64x3xf32, #tpu.memory_space<vmem>>, %arg4: memref<8x64x192xbf16, #tpu.memory_space<vmem>>, %arg5: memref<8x192xbf16, #tpu.memory_space<vmem>>, %arg6: memref<10x64x1xf32, #tpu.memory_space<vmem>>, %arg7: memref<1x1x256xf32, #tpu.memory_space<vmem>>, %arg8: memref<64x768xbf16, #tpu.memory_space<vmem>>) attributes {dimension_semantics = [#tpu.dimension_semantics<parallel>, #tpu.dimension_semantics<parallel>], iteration_bounds = array<i64: 2, 3>, scalar_prefetch = 0 : i64, scratch_operands = 1 : i64, tpu.core_type = #tpu.core_type<tc>, window_params = [{transform_indices = @transform_0, window_bounds = array<i64: 1, 1, 1024>}, {pipeline_mode = #tpu.pipeline_mode<synchronous>, transform_indices = @transform_1, window_bounds = array<i64: 64, 3>}, {pipeline_mode = #tpu.pipeline_mode<synchronous>, transform_indices = @transform_2, window_bounds = array<i64: 8, 64, 192>}, {pipeline_mode = #tpu.pipeline_mode<synchronous>, transform_indices = @transform_3, window_bounds = array<i64: 8, 192>}, {pipeline_mode = #tpu.pipeline_mode<synchronous>, transform_indices = @transform_4, window_bounds = array<i64: 10, 64, 1>}, {transform_indices = @transform_5, window_bounds = array<i64: 1, 1, 256>}]} {
    %c256_i32 = arith.constant 256 : i32
    %0 = arith.muli %arg1, %c256_i32 : i32
    %1 = tpu.assume_multiple %0, 128 : i32
    %cst = arith.constant 0.000000e+00 : bf16
    %2 = vector.broadcast %cst : bf16 to vector<64x128xbf16>
    %c0 = arith.constant 0 : index
    %c0_0 = arith.constant 0 : index
    %3 = vector.load %arg8[%c0, %c0_0] : memref<64x768xbf16, #tpu.memory_space<vmem>>, vector<64x128xbf16>
    tpu.vector_store %arg8[%c0, %c0_0], %2 {strides = array<i32>} : memref<64x768xbf16, #tpu.memory_space<vmem>>, vector<64x128xbf16>,
    %c0_1 = arith.constant 0 : index
    %c640 = arith.constant 640 : index
    %4 = vector.load %arg8[%c0_1, %c640] : memref<64x768xbf16, #tpu.memory_space<vmem>>, vector<64x128xbf16>
    tpu.vector_store %arg8[%c0_1, %c640], %2 {strides = array<i32>} : memref<64x768xbf16, #tpu.memory_space<vmem>>, vector<64x128xbf16>,
    %c128_i32 = arith.constant 128 : i32
    %5 = arith.subi %1, %c128_i32 : i32
    %6 = tpu.iota {dimensions = array<i32: 1>} : vector<1x512xi32>
    %7 = vector.broadcast %5 : i32 to vector<1x512xi32>
    %8 = arith.addi %7, %6 : vector<1x512xi32>
    %c0_i32 = arith.constant 0 : i32
    %9 = vector.broadcast %c0_i32 : i32 to vector<1x512xi32>
    %10 = arith.cmpi sge, %8, %9 : vector<1x512xi32>
    %c640_i32 = arith.constant 640 : i32
    %11 = vector.broadcast %c640_i32 : i32 to vector<1x512xi32>
    %12 = arith.cmpi slt, %8, %11 : vector<1x512xi32>
    %13 = arith.andi %10, %12 : vector<1x512xi1>
    %14 = arith.extui %13 : vector<1x512xi1> to vector<1x512xi32>
    %15 = arith.sitofp %14 : vector<1x512xi32> to vector<1x512xf32>
    %c0_2 = arith.constant 0 : index
    %c0_3 = arith.constant 0 : index
    %16 = arith.index_cast %1 : i32 to index
    %17 = vector.load %arg2[%c0_2, %c0_3, %16] : memref<1x1x1024xf32, #tpu.memory_space<vmem>>, vector<1x1x512xf32>
    %18 = vector.shape_cast %17 : vector<1x1x512xf32> to vector<1x512xf32>
    %cst_4 = arith.constant 0.000000e+00 : f32
    %19 = vector.broadcast %cst_4 : f32 to vector<1x1xf32>
    %20 = vector.extract_strided_slice %18 {offsets = [0, 0], sizes = [1, 511], strides = [1, 1]} : vector<1x512xf32> to vector<1x511xf32>
    %21 = tpu.concatenate %19, %20 in 1 : vector<1x1xf32>, vector<1x511xf32> -> vector<1x512xf32>
    %22 = vector.extract_strided_slice %18 {offsets = [0, 1], sizes = [1, 511], strides = [1, 1]} : vector<1x512xf32> to vector<1x511xf32>
    %23 = tpu.concatenate %22, %19 in 1 : vector<1x511xf32>, vector<1x1xf32> -> vector<1x512xf32>
    %c0_5 = arith.constant 0 : index
    %c0_6 = arith.constant 0 : index
    %24 = vector.load %arg3[%c0_5, %c0_6] : memref<64x3xf32, #tpu.memory_space<vmem>>, vector<64x3xf32>
    %25 = vector.extract_strided_slice %24 {offsets = [0, 0], sizes = [64, 1], strides = [1, 1]} : vector<64x3xf32> to vector<64x1xf32>
    %26 = vector.broadcast %25 : vector<64x1xf32> to vector<64x512xf32>
    %27 = vector.broadcast %21 : vector<1x512xf32> to vector<64x512xf32>
    %28 = arith.mulf %26, %27 : vector<64x512xf32>
    %29 = vector.extract_strided_slice %24 {offsets = [0, 1], sizes = [64, 1], strides = [1, 1]} : vector<64x3xf32> to vector<64x1xf32>
    %30 = vector.broadcast %29 : vector<64x1xf32> to vector<64x512xf32>
    %31 = vector.broadcast %18 : vector<1x512xf32> to vector<64x512xf32>
    %32 = arith.mulf %30, %31 : vector<64x512xf32>
    %33 = arith.addf %28, %32 : vector<64x512xf32>
    %34 = vector.extract_strided_slice %24 {offsets = [0, 2], sizes = [64, 1], strides = [1, 1]} : vector<64x3xf32> to vector<64x1xf32>
    %35 = vector.broadcast %34 : vector<64x1xf32> to vector<64x512xf32>
    %36 = vector.broadcast %23 : vector<1x512xf32> to vector<64x512xf32>
    %37 = arith.mulf %35, %36 : vector<64x512xf32>
    %38 = arith.addf %33, %37 : vector<64x512xf32>
    %c0_7 = arith.constant 0 : index
    %c0_8 = arith.constant 0 : index
    %c0_9 = arith.constant 0 : index
    %39 = vector.load %arg6[%c0_7, %c0_8, %c0_9] : memref<10x64x1xf32, #tpu.memory_space<vmem>>, vector<1x64x1xf32>
    %40 = vector.shape_cast %39 : vector<1x64x1xf32> to vector<64x1xf32>
    %41 = vector.broadcast %40 : vector<64x1xf32> to vector<64x512xf32>
    %42 = arith.addf %38, %41 : vector<64x512xf32>
    %cst_10 = arith.constant 0.000000e+00 : f32
    %43 = vector.broadcast %cst_10 : f32 to vector<64x512xf32>
    %44 = arith.cmpf oge, %42, %43 : vector<64x512xf32>
    %cst_11 = arith.constant 2.000000e-01 : f32
    %45 = vector.broadcast %cst_11 : f32 to vector<64x512xf32>
    %46 = arith.mulf %45, %42 : vector<64x512xf32>
    %47 = arith.select %44, %42, %46 : vector<64x512xi1>, vector<64x512xf32>
    %48 = vector.broadcast %15 : vector<1x512xf32> to vector<64x512xf32>
    %49 = arith.mulf %47, %48 : vector<64x512xf32>
    %50 = arith.truncf %49 : vector<64x512xf32> to vector<64x512xbf16>
    %c0_12 = arith.constant 0 : index
    %c128 = arith.constant 128 : index
    %51 = vector.load %arg8[%c0_12, %c128] : memref<64x768xbf16, #tpu.memory_space<vmem>>, vector<64x512xbf16>
    tpu.vector_store %arg8[%c0_12, %c128], %50 {strides = array<i32>} : memref<64x768xbf16, #tpu.memory_space<vmem>>, vector<64x512xbf16>,
    %c0_13 = arith.constant 0 : index
    %c127 = arith.constant 127 : index
    %52 = vector.load %arg8[%c0_13, %c127] : memref<64x768xbf16, #tpu.memory_space<vmem>>, vector<64x512xbf16>
    %c0_14 = arith.constant 0 : index
    %c129 = arith.constant 129 : index
    %53 = vector.load %arg8[%c0_14, %c129] : memref<64x768xbf16, #tpu.memory_space<vmem>>, vector<64x512xbf16>
    %54 = tpu.concatenate %52, %50, %53 in 0 : vector<64x512xbf16>, vector<64x512xbf16>, vector<64x512xbf16> -> vector<192x512xbf16>
    %c0_15 = arith.constant 0 : index
    %c0_16 = arith.constant 0 : index
    %c0_17 = arith.constant 0 : index
    %55 = vector.load %arg4[%c0_15, %c0_16, %c0_17] : memref<8x64x192xbf16, #tpu.memory_space<vmem>>, vector<1x64x192xbf16>
    %56 = vector.shape_cast %55 : vector<1x64x192xbf16> to vector<64x192xbf16>
    %cst_18 = arith.constant dense<0.000000e+00> : vector<64x512xf32>
    %57 = tpu.matmul %56, %54, %cst_18 {dimension_numbers = #tpu.dot_dimension_numbers<[1], [0], [0], [1], [0, 0, 1, 1], [], []>} : vector<64x192xbf16>, vector<192x512xbf16>, vector<64x512xf32> -> vector<64x512xf32>
    %c1 = arith.constant 1 : index
    %c0_19 = arith.constant 0 : index
    %c0_20 = arith.constant 0 : index
    %58 = vector.load %arg6[%c1, %c0_19, %c0_20] : memref<10x64x1xf32, #tpu.memory_space<vmem>>, vector<1x64x1xf32>
    %59 = vector.shape_cast %58 : vector<1x64x1xf32> to vector<64x1xf32>
    %60 = vector.broadcast %59 : vector<64x1xf32> to vector<64x512xf32>
    %61 = arith.addf %57, %60 : vector<64x512xf32>
    %cst_21 = arith.constant 0.000000e+00 : f32
    %62 = vector.broadcast %cst_21 : f32 to vector<64x512xf32>
    %63 = arith.cmpf oge, %61, %62 : vector<64x512xf32>
    %cst_22 = arith.constant 2.000000e-01 : f32
    %64 = vector.broadcast %cst_22 : f32 to vector<64x512xf32>
    %65 = arith.mulf %64, %61 : vector<64x512xf32>
    %66 = arith.select %63, %61, %65 : vector<64x512xi1>, vector<64x512xf32>
    %67 = vector.broadcast %15 : vector<1x512xf32> to vector<64x512xf32>
    %68 = arith.mulf %66, %67 : vector<64x512xf32>
    %69 = arith.truncf %68 : vector<64x512xf32> to vector<64x512xbf16>
    %c0_23 = arith.constant 0 : index
    %c128_24 = arith.constant 128 : index
    %70 = vector.load %arg8[%c0_23, %c128_24] : memref<64x768xbf16, #tpu.memory_space<vmem>>, vector<64x512xbf16>
    tpu.vector_store %arg8[%c0_23, %c128_24], %69 {strides = array<i32>} : memref<64x768xbf16, #tpu.memory_space<vmem>>, vector<64x512xbf16>,
    %c0_25 = arith.constant 0 : index
    %c126 = arith.constant 126 : index
    %71 = vector.load %arg8[%c0_25, %c126] : memref<64x768xbf16, #tpu.memory_space<vmem>>, vector<64x512xbf16>
    %c0_26 = arith.constant 0 : index
    %c130 = arith.constant 130 : index
    %72 = vector.load %arg8[%c0_26, %c130] : memref<64x768xbf16, #tpu.memory_space<vmem>>, vector<64x512xbf16>
    %73 = tpu.concatenate %71, %69, %72 in 0 : vector<64x512xbf16>, vector<64x512xbf16>, vector<64x512xbf16> -> vector<192x512xbf16>
    %c1_27 = arith.constant 1 : index
    %c0_28 = arith.constant 0 : index
    %c0_29 = arith.constant 0 : index
    %74 = vector.load %arg4[%c1_27, %c0_28, %c0_29] : memref<8x64x192xbf16, #tpu.memory_space<vmem>>, vector<1x64x192xbf16>
    %75 = vector.shape_cast %74 : vector<1x64x192xbf16> to vector<64x192xbf16>
    %cst_30 = arith.constant dense<0.000000e+00> : vector<64x512xf32>
    %76 = tpu.matmul %75, %73, %cst_30 {dimension_numbers = #tpu.dot_dimension_numbers<[1], [0], [0], [1], [0, 0, 1, 1], [], []>} : vector<64x192xbf16>, vector<192x512xbf16>, vector<64x512xf32> -> vector<64x512xf32>
    %c2 = arith.constant 2 : index
    %c0_31 = arith.constant 0 : index
    %c0_32 = arith.constant 0 : index
    %77 = vector.load %arg6[%c2, %c0_31, %c0_32] : memref<10x64x1xf32, #tpu.memory_space<vmem>>, vector<1x64x1xf32>
    %78 = vector.shape_cast %77 : vector<1x64x1xf32> to vector<64x1xf32>
    %79 = vector.broadcast %78 : vector<64x1xf32> to vector<64x512xf32>
    %80 = arith.addf %76, %79 : vector<64x512xf32>
    %cst_33 = arith.constant 0.000000e+00 : f32
    %81 = vector.broadcast %cst_33 : f32 to vector<64x512xf32>
    %82 = arith.cmpf oge, %80, %81 : vector<64x512xf32>
    %cst_34 = arith.constant 2.000000e-01 : f32
    %83 = vector.broadcast %cst_34 : f32 to vector<64x512xf32>
    %84 = arith.mulf %83, %80 : vector<64x512xf32>
    %85 = arith.select %82, %80, %84 : vector<64x512xi1>, vector<64x512xf32>
    %86 = vector.broadcast %15 : vector<1x512xf32> to vector<64x512xf32>
    %87 = arith.mulf %85, %86 : vector<64x512xf32>
    %88 = arith.truncf %87 : vector<64x512xf32> to vector<64x512xbf16>
    %c0_35 = arith.constant 0 : index
    %c128_36 = arith.constant 128 : index
    %89 = vector.load %arg8[%c0_35, %c128_36] : memref<64x768xbf16, #tpu.memory_space<vmem>>, vector<64x512xbf16>
    tpu.vector_store %arg8[%c0_35, %c128_36], %88 {strides = array<i32>} : memref<64x768xbf16, #tpu.memory_space<vmem>>, vector<64x512xbf16>,
    %c0_37 = arith.constant 0 : index
    %c125 = arith.constant 125 : index
    %90 = vector.load %arg8[%c0_37, %c125] : memref<64x768xbf16, #tpu.memory_space<vmem>>, vector<64x512xbf16>
    %c0_38 = arith.constant 0 : index
    %c131 = arith.constant 131 : index
    %91 = vector.load %arg8[%c0_38, %c131] : memref<64x768xbf16, #tpu.memory_space<vmem>>, vector<64x512xbf16>
    %92 = tpu.concatenate %90, %88, %91 in 0 : vector<64x512xbf16>, vector<64x512xbf16>, vector<64x512xbf16> -> vector<192x512xbf16>
    %c2_39 = arith.constant 2 : index
    %c0_40 = arith.constant 0 : index
    %c0_41 = arith.constant 0 : index
    %93 = vector.load %arg4[%c2_39, %c0_40, %c0_41] : memref<8x64x192xbf16, #tpu.memory_space<vmem>>, vector<1x64x192xbf16>
    %94 = vector.shape_cast %93 : vector<1x64x192xbf16> to vector<64x192xbf16>
    %cst_42 = arith.constant dense<0.000000e+00> : vector<64x512xf32>
    %95 = tpu.matmul %94, %92, %cst_42 {dimension_numbers = #tpu.dot_dimension_numbers<[1], [0], [0], [1], [0, 0, 1, 1], [], []>} : vector<64x192xbf16>, vector<192x512xbf16>, vector<64x512xf32> -> vector<64x512xf32>
    %c3 = arith.constant 3 : index
    %c0_43 = arith.constant 0 : index
    %c0_44 = arith.constant 0 : index
    %96 = vector.load %arg6[%c3, %c0_43, %c0_44] : memref<10x64x1xf32, #tpu.memory_space<vmem>>, vector<1x64x1xf32>
    %97 = vector.shape_cast %96 : vector<1x64x1xf32> to vector<64x1xf32>
    %98 = vector.broadcast %97 : vector<64x1xf32> to vector<64x512xf32>
    %99 = arith.addf %95, %98 : vector<64x512xf32>
    %cst_45 = arith.constant 0.000000e+00 : f32
    %100 = vector.broadcast %cst_45 : f32 to vector<64x512xf32>
    %101 = arith.cmpf oge, %99, %100 : vector<64x512xf32>
    %cst_46 = arith.constant 2.000000e-01 : f32
    %102 = vector.broadcast %cst_46 : f32 to vector<64x512xf32>
    %103 = arith.mulf %102, %99 : vector<64x512xf32>
    %104 = arith.select %101, %99, %103 : vector<64x512xi1>, vector<64x512xf32>
    %105 = vector.broadcast %15 : vector<1x512xf32> to vector<64x512xf32>
    %106 = arith.mulf %104, %105 : vector<64x512xf32>
    %107 = arith.truncf %106 : vector<64x512xf32> to vector<64x512xbf16>
    %c0_47 = arith.constant 0 : index
    %c128_48 = arith.constant 128 : index
    %108 = vector.load %arg8[%c0_47, %c128_48] : memref<64x768xbf16, #tpu.memory_space<vmem>>, vector<64x512xbf16>
    tpu.vector_store %arg8[%c0_47, %c128_48], %107 {strides = array<i32>} : memref<64x768xbf16, #tpu.memory_space<vmem>>, vector<64x512xbf16>,
    %c0_49 = arith.constant 0 : index
    %c124 = arith.constant 124 : index
    %109 = vector.load %arg8[%c0_49, %c124] : memref<64x768xbf16, #tpu.memory_space<vmem>>, vector<64x512xbf16>
    %c0_50 = arith.constant 0 : index
    %c132 = arith.constant 132 : index
    %110 = vector.load %arg8[%c0_50, %c132] : memref<64x768xbf16, #tpu.memory_space<vmem>>, vector<64x512xbf16>
    %111 = tpu.concatenate %109, %107, %110 in 0 : vector<64x512xbf16>, vector<64x512xbf16>, vector<64x512xbf16> -> vector<192x512xbf16>
    %c3_51 = arith.constant 3 : index
    %c0_52 = arith.constant 0 : index
    %c0_53 = arith.constant 0 : index
    %112 = vector.load %arg4[%c3_51, %c0_52, %c0_53] : memref<8x64x192xbf16, #tpu.memory_space<vmem>>, vector<1x64x192xbf16>
    %113 = vector.shape_cast %112 : vector<1x64x192xbf16> to vector<64x192xbf16>
    %cst_54 = arith.constant dense<0.000000e+00> : vector<64x512xf32>
    %114 = tpu.matmul %113, %111, %cst_54 {dimension_numbers = #tpu.dot_dimension_numbers<[1], [0], [0], [1], [0, 0, 1, 1], [], []>} : vector<64x192xbf16>, vector<192x512xbf16>, vector<64x512xf32> -> vector<64x512xf32>
    %c4 = arith.constant 4 : index
    %c0_55 = arith.constant 0 : index
    %c0_56 = arith.constant 0 : index
    %115 = vector.load %arg6[%c4, %c0_55, %c0_56] : memref<10x64x1xf32, #tpu.memory_space<vmem>>, vector<1x64x1xf32>
    %116 = vector.shape_cast %115 : vector<1x64x1xf32> to vector<64x1xf32>
    %117 = vector.broadcast %116 : vector<64x1xf32> to vector<64x512xf32>
    %118 = arith.addf %114, %117 : vector<64x512xf32>
    %cst_57 = arith.constant 0.000000e+00 : f32
    %119 = vector.broadcast %cst_57 : f32 to vector<64x512xf32>
    %120 = arith.cmpf oge, %118, %119 : vector<64x512xf32>
    %cst_58 = arith.constant 2.000000e-01 : f32
    %121 = vector.broadcast %cst_58 : f32 to vector<64x512xf32>
    %122 = arith.mulf %121, %118 : vector<64x512xf32>
    %123 = arith.select %120, %118, %122 : vector<64x512xi1>, vector<64x512xf32>
    %124 = vector.broadcast %15 : vector<1x512xf32> to vector<64x512xf32>
    %125 = arith.mulf %123, %124 : vector<64x512xf32>
    %126 = arith.truncf %125 : vector<64x512xf32> to vector<64x512xbf16>
    %c0_59 = arith.constant 0 : index
    %c128_60 = arith.constant 128 : index
    %127 = vector.load %arg8[%c0_59, %c128_60] : memref<64x768xbf16, #tpu.memory_space<vmem>>, vector<64x512xbf16>
    tpu.vector_store %arg8[%c0_59, %c128_60], %126 {strides = array<i32>} : memref<64x768xbf16, #tpu.memory_space<vmem>>, vector<64x512xbf16>,
    %c0_61 = arith.constant 0 : index
    %c123 = arith.constant 123 : index
    %128 = vector.load %arg8[%c0_61, %c123] : memref<64x768xbf16, #tpu.memory_space<vmem>>, vector<64x512xbf16>
    %c0_62 = arith.constant 0 : index
    %c133 = arith.constant 133 : index
    %129 = vector.load %arg8[%c0_62, %c133] : memref<64x768xbf16, #tpu.memory_space<vmem>>, vector<64x512xbf16>
    %130 = tpu.concatenate %128, %126, %129 in 0 : vector<64x512xbf16>, vector<64x512xbf16>, vector<64x512xbf16> -> vector<192x512xbf16>
    %c4_63 = arith.constant 4 : index
    %c0_64 = arith.constant 0 : index
    %c0_65 = arith.constant 0 : index
    %131 = vector.load %arg4[%c4_63, %c0_64, %c0_65] : memref<8x64x192xbf16, #tpu.memory_space<vmem>>, vector<1x64x192xbf16>
    %132 = vector.shape_cast %131 : vector<1x64x192xbf16> to vector<64x192xbf16>
    %cst_66 = arith.constant dense<0.000000e+00> : vector<64x512xf32>
    %133 = tpu.matmul %132, %130, %cst_66 {dimension_numbers = #tpu.dot_dimension_numbers<[1], [0], [0], [1], [0, 0, 1, 1], [], []>} : vector<64x192xbf16>, vector<192x512xbf16>, vector<64x512xf32> -> vector<64x512xf32>
    %c5 = arith.constant 5 : index
    %c0_67 = arith.constant 0 : index
    %c0_68 = arith.constant 0 : index
    %134 = vector.load %arg6[%c5, %c0_67, %c0_68] : memref<10x64x1xf32, #tpu.memory_space<vmem>>, vector<1x64x1xf32>
    %135 = vector.shape_cast %134 : vector<1x64x1xf32> to vector<64x1xf32>
    %136 = vector.broadcast %135 : vector<64x1xf32> to vector<64x512xf32>
    %137 = arith.addf %133, %136 : vector<64x512xf32>
    %cst_69 = arith.constant 0.000000e+00 : f32
    %138 = vector.broadcast %cst_69 : f32 to vector<64x512xf32>
    %139 = arith.cmpf oge, %137, %138 : vector<64x512xf32>
    %cst_70 = arith.constant 2.000000e-01 : f32
    %140 = vector.broadcast %cst_70 : f32 to vector<64x512xf32>
    %141 = arith.mulf %140, %137 : vector<64x512xf32>
    %142 = arith.select %139, %137, %141 : vector<64x512xi1>, vector<64x512xf32>
    %143 = vector.broadcast %15 : vector<1x512xf32> to vector<64x512xf32>
    %144 = arith.mulf %142, %143 : vector<64x512xf32>
    %145 = arith.truncf %144 : vector<64x512xf32> to vector<64x512xbf16>
    %c0_71 = arith.constant 0 : index
    %c128_72 = arith.constant 128 : index
    %146 = vector.load %arg8[%c0_71, %c128_72] : memref<64x768xbf16, #tpu.memory_space<vmem>>, vector<64x512xbf16>
    tpu.vector_store %arg8[%c0_71, %c128_72], %145 {strides = array<i32>} : memref<64x768xbf16, #tpu.memory_space<vmem>>, vector<64x512xbf16>,
    %c0_73 = arith.constant 0 : index
    %c122 = arith.constant 122 : index
    %147 = vector.load %arg8[%c0_73, %c122] : memref<64x768xbf16, #tpu.memory_space<vmem>>, vector<64x512xbf16>
    %c0_74 = arith.constant 0 : index
    %c134 = arith.constant 134 : index
    %148 = vector.load %arg8[%c0_74, %c134] : memref<64x768xbf16, #tpu.memory_space<vmem>>, vector<64x512xbf16>
    %149 = tpu.concatenate %147, %145, %148 in 0 : vector<64x512xbf16>, vector<64x512xbf16>, vector<64x512xbf16> -> vector<192x512xbf16>
    %c5_75 = arith.constant 5 : index
    %c0_76 = arith.constant 0 : index
    %c0_77 = arith.constant 0 : index
    %150 = vector.load %arg4[%c5_75, %c0_76, %c0_77] : memref<8x64x192xbf16, #tpu.memory_space<vmem>>, vector<1x64x192xbf16>
    %151 = vector.shape_cast %150 : vector<1x64x192xbf16> to vector<64x192xbf16>
    %cst_78 = arith.constant dense<0.000000e+00> : vector<64x512xf32>
    %152 = tpu.matmul %151, %149, %cst_78 {dimension_numbers = #tpu.dot_dimension_numbers<[1], [0], [0], [1], [0, 0, 1, 1], [], []>} : vector<64x192xbf16>, vector<192x512xbf16>, vector<64x512xf32> -> vector<64x512xf32>
    %c6 = arith.constant 6 : index
    %c0_79 = arith.constant 0 : index
    %c0_80 = arith.constant 0 : index
    %153 = vector.load %arg6[%c6, %c0_79, %c0_80] : memref<10x64x1xf32, #tpu.memory_space<vmem>>, vector<1x64x1xf32>
    %154 = vector.shape_cast %153 : vector<1x64x1xf32> to vector<64x1xf32>
    %155 = vector.broadcast %154 : vector<64x1xf32> to vector<64x512xf32>
    %156 = arith.addf %152, %155 : vector<64x512xf32>
    %cst_81 = arith.constant 0.000000e+00 : f32
    %157 = vector.broadcast %cst_81 : f32 to vector<64x512xf32>
    %158 = arith.cmpf oge, %156, %157 : vector<64x512xf32>
    %cst_82 = arith.constant 2.000000e-01 : f32
    %159 = vector.broadcast %cst_82 : f32 to vector<64x512xf32>
    %160 = arith.mulf %159, %156 : vector<64x512xf32>
    %161 = arith.select %158, %156, %160 : vector<64x512xi1>, vector<64x512xf32>
    %162 = vector.broadcast %15 : vector<1x512xf32> to vector<64x512xf32>
    %163 = arith.mulf %161, %162 : vector<64x512xf32>
    %164 = arith.truncf %163 : vector<64x512xf32> to vector<64x512xbf16>
    %c0_83 = arith.constant 0 : index
    %c128_84 = arith.constant 128 : index
    %165 = vector.load %arg8[%c0_83, %c128_84] : memref<64x768xbf16, #tpu.memory_space<vmem>>, vector<64x512xbf16>
    tpu.vector_store %arg8[%c0_83, %c128_84], %164 {strides = array<i32>} : memref<64x768xbf16, #tpu.memory_space<vmem>>, vector<64x512xbf16>,
    %c0_85 = arith.constant 0 : index
    %c121 = arith.constant 121 : index
    %166 = vector.load %arg8[%c0_85, %c121] : memref<64x768xbf16, #tpu.memory_space<vmem>>, vector<64x512xbf16>
    %c0_86 = arith.constant 0 : index
    %c135 = arith.constant 135 : index
    %167 = vector.load %arg8[%c0_86, %c135] : memref<64x768xbf16, #tpu.memory_space<vmem>>, vector<64x512xbf16>
    %168 = tpu.concatenate %166, %164, %167 in 0 : vector<64x512xbf16>, vector<64x512xbf16>, vector<64x512xbf16> -> vector<192x512xbf16>
    %c6_87 = arith.constant 6 : index
    %c0_88 = arith.constant 0 : index
    %c0_89 = arith.constant 0 : index
    %169 = vector.load %arg4[%c6_87, %c0_88, %c0_89] : memref<8x64x192xbf16, #tpu.memory_space<vmem>>, vector<1x64x192xbf16>
    %170 = vector.shape_cast %169 : vector<1x64x192xbf16> to vector<64x192xbf16>
    %cst_90 = arith.constant dense<0.000000e+00> : vector<64x512xf32>
    %171 = tpu.matmul %170, %168, %cst_90 {dimension_numbers = #tpu.dot_dimension_numbers<[1], [0], [0], [1], [0, 0, 1, 1], [], []>} : vector<64x192xbf16>, vector<192x512xbf16>, vector<64x512xf32> -> vector<64x512xf32>
    %c7 = arith.constant 7 : index
    %c0_91 = arith.constant 0 : index
    %c0_92 = arith.constant 0 : index
    %172 = vector.load %arg6[%c7, %c0_91, %c0_92] : memref<10x64x1xf32, #tpu.memory_space<vmem>>, vector<1x64x1xf32>
    %173 = vector.shape_cast %172 : vector<1x64x1xf32> to vector<64x1xf32>
    %174 = vector.broadcast %173 : vector<64x1xf32> to vector<64x512xf32>
    %175 = arith.addf %171, %174 : vector<64x512xf32>
    %cst_93 = arith.constant 0.000000e+00 : f32
    %176 = vector.broadcast %cst_93 : f32 to vector<64x512xf32>
    %177 = arith.cmpf oge, %175, %176 : vector<64x512xf32>
    %cst_94 = arith.constant 2.000000e-01 : f32
    %178 = vector.broadcast %cst_94 : f32 to vector<64x512xf32>
    %179 = arith.mulf %178, %175 : vector<64x512xf32>
    %180 = arith.select %177, %175, %179 : vector<64x512xi1>, vector<64x512xf32>
    %181 = vector.broadcast %15 : vector<1x512xf32> to vector<64x512xf32>
    %182 = arith.mulf %180, %181 : vector<64x512xf32>
    %183 = arith.truncf %182 : vector<64x512xf32> to vector<64x512xbf16>
    %c0_95 = arith.constant 0 : index
    %c128_96 = arith.constant 128 : index
    %184 = vector.load %arg8[%c0_95, %c128_96] : memref<64x768xbf16, #tpu.memory_space<vmem>>, vector<64x512xbf16>
    tpu.vector_store %arg8[%c0_95, %c128_96], %183 {strides = array<i32>} : memref<64x768xbf16, #tpu.memory_space<vmem>>, vector<64x512xbf16>,
    %c0_97 = arith.constant 0 : index
    %c120 = arith.constant 120 : index
    %185 = vector.load %arg8[%c0_97, %c120] : memref<64x768xbf16, #tpu.memory_space<vmem>>, vector<64x512xbf16>
    %c0_98 = arith.constant 0 : index
    %c136 = arith.constant 136 : index
    %186 = vector.load %arg8[%c0_98, %c136] : memref<64x768xbf16, #tpu.memory_space<vmem>>, vector<64x512xbf16>
    %187 = tpu.concatenate %185, %183, %186 in 0 : vector<64x512xbf16>, vector<64x512xbf16>, vector<64x512xbf16> -> vector<192x512xbf16>
    %c7_99 = arith.constant 7 : index
    %c0_100 = arith.constant 0 : index
    %c0_101 = arith.constant 0 : index
    %188 = vector.load %arg4[%c7_99, %c0_100, %c0_101] : memref<8x64x192xbf16, #tpu.memory_space<vmem>>, vector<1x64x192xbf16>
    %189 = vector.shape_cast %188 : vector<1x64x192xbf16> to vector<64x192xbf16>
    %cst_102 = arith.constant dense<0.000000e+00> : vector<64x512xf32>
    %190 = tpu.matmul %189, %187, %cst_102 {dimension_numbers = #tpu.dot_dimension_numbers<[1], [0], [0], [1], [0, 0, 1, 1], [], []>} : vector<64x192xbf16>, vector<192x512xbf16>, vector<64x512xf32> -> vector<64x512xf32>
    %c8 = arith.constant 8 : index
    %c0_103 = arith.constant 0 : index
    %c0_104 = arith.constant 0 : index
    %191 = vector.load %arg6[%c8, %c0_103, %c0_104] : memref<10x64x1xf32, #tpu.memory_space<vmem>>, vector<1x64x1xf32>
    %192 = vector.shape_cast %191 : vector<1x64x1xf32> to vector<64x1xf32>
    %193 = vector.broadcast %192 : vector<64x1xf32> to vector<64x512xf32>
    %194 = arith.addf %190, %193 : vector<64x512xf32>
    %cst_105 = arith.constant 0.000000e+00 : f32
    %195 = vector.broadcast %cst_105 : f32 to vector<64x512xf32>
    %196 = arith.cmpf oge, %194, %195 : vector<64x512xf32>
    %cst_106 = arith.constant 2.000000e-01 : f32
    %197 = vector.broadcast %cst_106 : f32 to vector<64x512xf32>
    %198 = arith.mulf %197, %194 : vector<64x512xf32>
    %199 = arith.select %196, %194, %198 : vector<64x512xi1>, vector<64x512xf32>
    %200 = vector.broadcast %15 : vector<1x512xf32> to vector<64x512xf32>
    %201 = arith.mulf %199, %200 : vector<64x512xf32>
    %202 = arith.truncf %201 : vector<64x512xf32> to vector<64x512xbf16>
    %c0_107 = arith.constant 0 : index
    %c128_108 = arith.constant 128 : index
    %203 = vector.load %arg8[%c0_107, %c128_108] : memref<64x768xbf16, #tpu.memory_space<vmem>>, vector<64x512xbf16>
    tpu.vector_store %arg8[%c0_107, %c128_108], %202 {strides = array<i32>} : memref<64x768xbf16, #tpu.memory_space<vmem>>, vector<64x512xbf16>,
    %c0_109 = arith.constant 0 : index
    %c127_110 = arith.constant 127 : index
    %204 = vector.load %arg8[%c0_109, %c127_110] : memref<64x768xbf16, #tpu.memory_space<vmem>>, vector<64x512xbf16>
    %c0_111 = arith.constant 0 : index
    %c129_112 = arith.constant 129 : index
    %205 = vector.load %arg8[%c0_111, %c129_112] : memref<64x768xbf16, #tpu.memory_space<vmem>>, vector<64x512xbf16>
    %206 = tpu.concatenate %204, %202, %205 in 0 : vector<64x512xbf16>, vector<64x512xbf16>, vector<64x512xbf16> -> vector<192x512xbf16>
    %207 = vector.extract_strided_slice %206 {offsets = [0, 128], sizes = [192, 256], strides = [1, 1]} : vector<192x512xbf16> to vector<192x256xbf16>
    %c0_113 = arith.constant 0 : index
    %c0_114 = arith.constant 0 : index
    %208 = vector.load %arg5[%c0_113, %c0_114] : memref<8x192xbf16, #tpu.memory_space<vmem>>, vector<8x192xbf16>
    %cst_115 = arith.constant dense<0.000000e+00> : vector<8x256xf32>
    %209 = tpu.matmul %208, %207, %cst_115 {dimension_numbers = #tpu.dot_dimension_numbers<[1], [0], [0], [1], [0, 0, 1, 1], [], []>} : vector<8x192xbf16>, vector<192x256xbf16>, vector<8x256xf32> -> vector<8x256xf32>
    %c9 = arith.constant 9 : index
    %c0_116 = arith.constant 0 : index
    %c0_117 = arith.constant 0 : index
    %210 = vector.load %arg6[%c9, %c0_116, %c0_117] : memref<10x64x1xf32, #tpu.memory_space<vmem>>, vector<1x64x1xf32>
    %211 = vector.shape_cast %210 : vector<1x64x1xf32> to vector<64x1xf32>
    %212 = vector.extract_strided_slice %211 {offsets = [0, 0], sizes = [1, 1], strides = [1, 1]} : vector<64x1xf32> to vector<1x1xf32>
    %213 = vector.extract_strided_slice %209 {offsets = [0, 0], sizes = [1, 256], strides = [1, 1]} : vector<8x256xf32> to vector<1x256xf32>
    %214 = vector.broadcast %212 : vector<1x1xf32> to vector<1x256xf32>
    %215 = arith.addf %213, %214 : vector<1x256xf32>
    %c0_118 = arith.constant 0 : index
    %c0_119 = arith.constant 0 : index
    %c0_120 = arith.constant 0 : index
    %216 = vector.load %arg7[%c0_118, %c0_119, %c0_120] : memref<1x1x256xf32, #tpu.memory_space<vmem>>, vector<1x1x256xf32>
    %217 = vector.shape_cast %216 : vector<1x1x256xf32> to vector<1x256xf32>
    %218 = vector.shape_cast %215 : vector<1x256xf32> to vector<1x1x256xf32>
    tpu.vector_store %arg7[%c0_118, %c0_119, %c0_120], %218 {strides = array<i32>} : memref<1x1x256xf32, #tpu.memory_space<vmem>>, vector<1x1x256xf32>,
    return
  }
  func.func @transform_0(%arg0: i32, %arg1: i32) -> (i32, i32, i32) {
    %c0_i32 = arith.constant 0 : i32
    %c0_i32_0 = arith.constant 0 : i32
    %c0_i32_1 = arith.constant 0 : i32
    return %arg0, %c0_i32, %c0_i32_0 : i32, i32, i32
  }
  func.func @transform_1(%arg0: i32, %arg1: i32) -> (i32, i32) {
    %c0_i32 = arith.constant 0 : i32
    %c0_i32_0 = arith.constant 0 : i32
    %c0_i32_1 = arith.constant 0 : i32
    return %c0_i32, %c0_i32_0 : i32, i32
  }
  func.func @transform_2(%arg0: i32, %arg1: i32) -> (i32, i32, i32) {
    %c0_i32 = arith.constant 0 : i32
    %c0_i32_0 = arith.constant 0 : i32
    %c0_i32_1 = arith.constant 0 : i32
    %c0_i32_2 = arith.constant 0 : i32
    return %c0_i32, %c0_i32_0, %c0_i32_1 : i32, i32, i32
  }
  func.func @transform_3(%arg0: i32, %arg1: i32) -> (i32, i32) {
    %c0_i32 = arith.constant 0 : i32
    %c0_i32_0 = arith.constant 0 : i32
    %c0_i32_1 = arith.constant 0 : i32
    return %c0_i32, %c0_i32_0 : i32, i32
  }
  func.func @transform_4(%arg0: i32, %arg1: i32) -> (i32, i32, i32) {
    %c0_i32 = arith.constant 0 : i32
    %c0_i32_0 = arith.constant 0 : i32
    %c0_i32_1 = arith.constant 0 : i32
    %c0_i32_2 = arith.constant 0 : i32
    return %c0_i32, %c0_i32_0, %c0_i32_1 : i32, i32, i32
  }
  func.func @transform_5(%arg0: i32, %arg1: i32) -> (i32, i32, i32) {
    %c0_i32 = arith.constant 0 : i32
    %c0_i32_0 = arith.constant 0 : i32
    return %arg0, %c0_i32, %arg1 : i32, i32, i32
  }
}

</mosaic_0001>

<llo_original>
// kernel: tpu_custom_call.1
$region0: #{tpu_custom_call.1}
  #allocation0 [shape = 'u32[]', space=smem, size = 0x4, offset = 0x4, fixed_abs, tag = 'smem constant byte address 0x4 - core index']
  #allocation1 [shape = 'u32[144,128]{1,0:T(1,128)}', space=vmem, size = 0x12000, scoped, tag = 'internal scratch']
  #allocation2 [shape = 'bf16[64,768]{1,0:T(16,128)(2,1)}', space=vmem, size = 0x18000, scoped, tag = 'scratch operand']
  %s0 = inlined_call_operand.vmem [shape: f32[2,1,1024], index: 0, kind: input, shape index: {}]
  %s1 = inlined_call_operand.vmem [shape: f32[64,3], index: 1, kind: input, shape index: {}]
  %s2 = inlined_call_operand.vmem [shape: bf16[8,64,192], index: 2, kind: input, shape index: {}]
  %s3 = inlined_call_operand.vmem [shape: bf16[8,192], index: 3, kind: input, shape index: {}]
  %s4 = inlined_call_operand.vmem [shape: f32[10,64,1], index: 4, kind: input, shape index: {}]
  %s5 = inlined_call_operand.hbm [shape: f32[2,1,768], index: 5, kind: output, shape index: {}]
  %s6 = sld [smem:[#allocation0]]
  $region53: #{tpu_custom_call.1} parent=0
    _
  %s8 = ssub.s32 1, %s6
  %s9 = scalar_select 0, %s8, %s6
  $region1: #{tpu_custom_call.1} parent=0
    #allocation3 [shape = 'u8[2048]{0}', space=vmem, size = 0x800, scoped, tag = 'output window, operand 0']
    #allocation4 [shape = 's32[2]{0}', space=sflag, size = 0x8, scoped, tag = 'scoped memory for tpu_custom_call.1']
    %10 = vsyncpa [#allocation4], 0
    %s11 = scalar_lea.sflag [#allocation4], 1
    %12 = vsyncpa %s11, 0
    loop: start=0, step=1, limit=8
    $region2: #{tpu_custom_call.1} parent=1 // loop_pre_header
      _
    $region3: #{tpu_custom_call.1} parent=1 // loop_header
      %s14 = sphi 0, %s18
      %p15 = scmp.ge.s32.totalorder %s14, 8
      %s21 = sphi 0, %s33
      %s22 = sphi 0, %s29
      %s23 = sphi 0, %s21
      %s24 = sphi 0, %s22
      %s25 = sphi 0, %s23
      %s26 = sphi 0, %s24
      %s36 = sphi 0, %s38
      %s39 = sphi 0, %s36
      %s40 = sphi 0, %s39
      %s56 = sphi 0, %s40
      %s60 = sphi 0, %s60
      %s62 = sphi 0, %s60
      %s63 = sphi 0, %s62
      %s77 = sphi 0, %s63
      %s81 = sphi 0, %s81
      %s83 = sphi 0, %s81
      %s84 = sphi 0, %s83
      %s98 = sphi 0, %s84
      %s102 = sphi 0, %s102
      %s104 = sphi 0, %s102
      %s105 = sphi 0, %s104
      %s119 = sphi 0, %s105
      %s123 = sphi 0, %s123
      %s125 = sphi 0, %s123
      %s126 = sphi 0, %s125
      %s140 = sphi 0, %s126
      %s148 = sphi 0, %s150
      %s151 = sphi 0, %s148
      %s152 = sphi 0, %s151
      %s168 = sphi 0, %s152
    $region4: #{tpu_custom_call.1} parent=1 // loop_header_branch
      %17 = sbr.rel (%p15) target = $region8
    $region5: #{tpu_custom_call.1} parent=1 // loop_body
      %s19 = ssub.s32 %s14, 1
      %s20 = ssub.s32 %s14, 2
      %s27 = sadd.s32 1, %s22
      %p28 = scmp.ge.s32.totalorder %s27, 3
      %s29 = scalar_select %p28, 0, %s27
      %s30 = sadd.s32 1, %s21
      %s31 = scalar_select %p28, %s30, %s21
      %p32 = scmp.ge.s32.totalorder %s31, 2
      %s33 = scalar_select %p32, 0, %s31
      %s34 = ssub.s32 %s21, %s33
      %p35 = scmp.eq.s32.totalorder %s34, 0
      %s37 = sadd.s32 %s36, 1
      %s38 = scalar_select %p35, %s36, %s37
      %p41 = pneg %p35
      %p42 = scmp.eq.s32.totalorder %s14, 5
      %p43 = por %p41, %p42
      %p44 = scmp.ne.s32.totalorder %s36, %s39
      %p45 = scmp.eq.s32.totalorder %s14, 0
      %p46 = por %p44, %p45
      %p47 = scmp.ne.s32.totalorder %s36, %s39
      %p48 = scmp.eq.s32.totalorder %s19, 5
      %p49 = por %p47, %p48
      %p50 = scmp.ne.s32.totalorder %s39, %s40
      %p51 = scmp.eq.s32.totalorder %s19, 0
      %p52 = por %p50, %p51
      %p53 = scmp.ne.s32.totalorder %s39, %s40
      %p54 = scmp.eq.s32.totalorder %s20, 5
      %p55 = por %p53, %p54
      %p57 = scmp.ne.s32.totalorder %s40, %s56
      %p58 = scmp.eq.s32.totalorder %s20, 0
      %p59 = por %p57, %p58
      %s61 = sadd.s32 %s60, 1
      %p64 = scmp.eq.s32.totalorder %s14, 5
      %p65 = scmp.ne.s32.totalorder %s60, %s62
      %p66 = scmp.eq.s32.totalorder %s14, 0
      %p67 = por %p65, %p66
      %p68 = scmp.ne.s32.totalorder %s60, %s62
      %p69 = scmp.eq.s32.totalorder %s19, 5
      %p70 = por %p68, %p69
      %p71 = scmp.ne.s32.totalorder %s62, %s63
      %p72 = scmp.eq.s32.totalorder %s19, 0
      %p73 = por %p71, %p72
      %p74 = scmp.ne.s32.totalorder %s62, %s63
      %p75 = scmp.eq.s32.totalorder %s20, 5
      %p76 = por %p74, %p75
      %p78 = scmp.ne.s32.totalorder %s63, %s77
      %p79 = scmp.eq.s32.totalorder %s20, 0
      %p80 = por %p78, %p79
      %s82 = sadd.s32 %s81, 1
      %p85 = scmp.eq.s32.totalorder %s14, 5
      %p86 = scmp.ne.s32.totalorder %s81, %s83
      %p87 = scmp.eq.s32.totalorder %s14, 0
      %p88 = por %p86, %p87
      %p89 = scmp.ne.s32.totalorder %s81, %s83
      %p90 = scmp.eq.s32.totalorder %s19, 5
      %p91 = por %p89, %p90
      %p92 = scmp.ne.s32.totalorder %s83, %s84
      %p93 = scmp.eq.s32.totalorder %s19, 0
      %p94 = por %p92, %p93
      %p95 = scmp.ne.s32.totalorder %s83, %s84
      %p96 = scmp.eq.s32.totalorder %s20, 5
      %p97 = por %p95, %p96
      %p99 = scmp.ne.s32.totalorder %s84, %s98
      %p100 = scmp.eq.s32.totalorder %s20, 0
      %p101 = por %p99, %p100
      %s103 = sadd.s32 %s102, 1
      %p106 = scmp.eq.s32.totalorder %s14, 5
      %p107 = scmp.ne.s32.totalorder %s102, %s104
      %p108 = scmp.eq.s32.totalorder %s14, 0
      %p109 = por %p107, %p108
      %p110 = scmp.ne.s32.totalorder %s102, %s104
      %p111 = scmp.eq.s32.totalorder %s19, 5
      %p112 = por %p110, %p111
      %p113 = scmp.ne.s32.totalorder %s104, %s105
      %p114 = scmp.eq.s32.totalorder %s19, 0
      %p115 = por %p113, %p114
      %p116 = scmp.ne.s32.totalorder %s104, %s105
      %p117 = scmp.eq.s32.totalorder %s20, 5
      %p118 = por %p116, %p117
      %p120 = scmp.ne.s32.totalorder %s105, %s119
      %p121 = scmp.eq.s32.totalorder %s20, 0
      %p122 = por %p120, %p121
      %s124 = sadd.s32 %s123, 1
      %p127 = scmp.eq.s32.totalorder %s14, 5
      %p128 = scmp.ne.s32.totalorder %s123, %s125
      %p129 = scmp.eq.s32.totalorder %s14, 0
      %p130 = por %p128, %p129
      %p131 = scmp.ne.s32.totalorder %s123, %s125
      %p132 = scmp.eq.s32.totalorder %s19, 5
      %p133 = por %p131, %p132
      %p134 = scmp.ne.s32.totalorder %s125, %s126
      %p135 = scmp.eq.s32.totalorder %s19, 0
      %p136 = por %p134, %p135
      %p137 = scmp.ne.s32.totalorder %s125, %s126
      %p138 = scmp.eq.s32.totalorder %s20, 5
      %p139 = por %p137, %p138
      %p141 = scmp.ne.s32.totalorder %s126, %s140
      %p142 = scmp.eq.s32.totalorder %s20, 0
      %p143 = por %p141, %p142
      %s144 = ssub.s32 %s21, %s33
      %s145 = ssub.s32 %s22, %s29
      %s146 = sor.u32 %s144, %s145
      %p147 = scmp.eq.s32.totalorder %s146, 0
      %s149 = sadd.s32 %s148, 1
      %s150 = scalar_select %p147, %s148, %s149
      %p153 = pneg %p147
      %p154 = scmp.eq.s32.totalorder %s14, 5
      %p155 = por %p153, %p154
      %p156 = scmp.ne.s32.totalorder %s148, %s151
      %p157 = scmp.eq.s32.totalorder %s14, 0
      %p158 = por %p156, %p157
      %p159 = scmp.ne.s32.totalorder %s148, %s151
      %p160 = scmp.eq.s32.totalorder %s19, 5
      %p161 = por %p159, %p160
      %p162 = scmp.ne.s32.totalorder %s151, %s152
      %p163 = scmp.eq.s32.totalorder %s19, 0
      %p164 = por %p162, %p163
      %p165 = scmp.ne.s32.totalorder %s151, %s152
      %p166 = scmp.eq.s32.totalorder %s20, 5
      %p167 = por %p165, %p166
      %p169 = scmp.ne.s32.totalorder %s152, %s168
      %p170 = scmp.eq.s32.totalorder %s20, 0
      %p171 = por %p169, %p170
      %p172 = scmp.le.s32.totalorder 1, %s14
      %p173 = scmp.lt.s32.totalorder %s14, 7
      %p174 = pnand %p172, %p173
      %p175 = pneg %p174
      // Predicated region
      $region9: #{tpu_custom_call.1} parent=5 // pred_check
        _
      $region10: #{tpu_custom_call.1} parent=5 // pred_check_branch
        %177 = sbr.rel (%p174) target = $region12
      $region11: #{tpu_custom_call.1} parent=5 // pred_region
        %s178 = ssub.s32 %s14, 1
        // Predicated region
        $region13: #{tpu_custom_call.1} parent=11 // pred_check
          %p179 = pneg %p73
        $region14: #{tpu_custom_call.1} parent=11 // pred_check_branch
          %181 = sbr.rel (%p179) target = $region16
        $region15: #{tpu_custom_call.1} parent=11 // pred_region
          _
        $region16: #{tpu_custom_call.1} parent=11 // pred_fallthru
          _
        // Predicated region
        $region17: #{tpu_custom_call.1} parent=11 // pred_check
          %p182 = pneg %p94
        $region18: #{tpu_custom_call.1} parent=11 // pred_check_branch
          %184 = sbr.rel (%p182) target = $region20
        $region19: #{tpu_custom_call.1} parent=11 // pred_region
          _
        $region20: #{tpu_custom_call.1} parent=11 // pred_fallthru
          _
        // Predicated region
        $region21: #{tpu_custom_call.1} parent=11 // pred_check
          %p185 = pneg %p115
        $region22: #{tpu_custom_call.1} parent=11 // pred_check_branch
          %187 = sbr.rel (%p185) target = $region24
        $region23: #{tpu_custom_call.1} parent=11 // pred_region
          _
        $region24: #{tpu_custom_call.1} parent=11 // pred_fallthru
          _
        // Predicated region
        $region25: #{tpu_custom_call.1} parent=11 // pred_check
          %p188 = pneg %p136
        $region26: #{tpu_custom_call.1} parent=11 // pred_check_branch
          %190 = sbr.rel (%p188) target = $region28
        $region27: #{tpu_custom_call.1} parent=11 // pred_region
          _
        $region28: #{tpu_custom_call.1} parent=11 // pred_fallthru
          _
      $region12: #{tpu_custom_call.1} parent=5 // pred_fallthru
        _
      %p191 = scmp.lt.s32.totalorder %s14, 6
      // Predicated region
      $region29: #{tpu_custom_call.1} parent=5 // pred_check
        %p192 = pneg %p191
      $region30: #{tpu_custom_call.1} parent=5 // pred_check_branch
        %194 = sbr.rel (%p192) target = $region32
      $region31: #{tpu_custom_call.1} parent=5 // pred_region
        // Predicated region
        $region33: #{tpu_custom_call.1} parent=31 // pred_check
          %p195 = pneg %p46
        $region34: #{tpu_custom_call.1} parent=31 // pred_check_branch
          %197 = sbr.rel (%p195) target = $region36
        $region35: #{tpu_custom_call.1} parent=31 // pred_region
          %p198 = scmp.lt.s32.totalorder %s21, 1
          %s199 = scalar_select %p198, %s21, 1
          %s200 = smul.addr %s199, 8
          %s201 = scalar_lea.vmem %s0, %s200
        $region36: #{tpu_custom_call.1} parent=31 // pred_fallthru
          _
      $region32: #{tpu_custom_call.1} parent=5 // pred_fallthru
        _
      %p202 = scmp.le.s32.totalorder 1, %s14
      %p203 = scmp.lt.s32.totalorder %s14, 7
      %p204 = pnand %p202, %p203
      %p205 = pneg %p204
      // Predicated region
      $region37: #{tpu_custom_call.1} parent=5 // pred_check
        _
      $region38: #{tpu_custom_call.1} parent=5 // pred_check_branch
        %207 = sbr.rel (%p204) target = $region40
      $region39: #{tpu_custom_call.1} parent=5 // pred_region
        %s208 = ssub.s32 %s14, 1
        %p209 = scmp.lt.s32.totalorder %s23, 1
        %s210 = scalar_select %p209, %s23, 1
        %s211 = smul.addr %s210, 8
        %s212 = scalar_lea.vmem %s0, %s211
        %p213 = pneg %p52
        %p214 = pneg %p49
        %p215 = pneg %p73
        %p216 = pneg %p70
        %p217 = pneg %p94
        %p218 = pneg %p91
        %p219 = pneg %p115
        %p220 = pneg %p112
        %p221 = pneg %p136
        %p222 = pneg %p133
        %p223 = pneg %p164
        %p224 = pneg %p161
        %s225 = sand.u32 %s151, 1
        %s226 = scalar_lea.sflag [#allocation4], %s225
        %s227 = sand.u32 %s151, 1
        %s228 = smul.addr %s227, 2
        %s229 = scalar_lea.vmem [#allocation3], %s228
        %p230 = scmp.lt.s32.totalorder %s23, 1
        %s231 = scalar_select %p230, %s23, 1
        %s232 = smul.addr %s231, 8
        %s233 = scalar_lea.vmem %s0, %s232
        %s234 = smul.u32 2, %s24
        %s236 = smul.u32 %s24, 256
        %237 = vst [vmem:[#allocation2] sm:$0xff] 0
        %238 = vst [vmem:[#allocation2 + $0x30] sm:$0xff] 0
        %239 = vst [vmem:[#allocation2 + $0x60] sm:$0xff] 0
        %240 = vst [vmem:[#allocation2 + $0x90] sm:$0xff] 0
        %241 = vst [vmem:[#allocation2 + $0x28] sm:$0xff] 0
        %242 = vst [vmem:[#allocation2 + $0x58] sm:$0xff] 0
        %243 = vst [vmem:[#allocation2 + $0x88] sm:$0xff] 0
        %244 = vst [vmem:[#allocation2 + $0xb8] sm:$0xff] 0
        %s245 = ssub.s32 %s236, 128
        %v246 = vlaneseq
        %v247 = vand.u32 %v246, 127
        %v248 = vadd.s32 %v247, 128
        %v249 = vadd.s32 %v247, 256
        %v250 = vadd.s32 %v247, 384
        %v251 = vstv %s245
        %v252 = vadd.s32 %v251, %v247
        %v253 = vadd.s32 %v251, %v248
        %v254 = vadd.s32 %v251, %v249
        %v255 = vadd.s32 %v251, %v250
        %vm256 = vcmp.ge.s32.totalorder %v252, 0
        %vm257 = vcmp.ge.s32.totalorder %v253, 0
        %vm258 = vcmp.ge.s32.totalorder %v254, 0
        %vm259 = vcmp.ge.s32.totalorder %v255, 0
        %vm260 = vcmp.lt.s32.totalorder %v252, 640
        %vm261 = vcmp.lt.s32.totalorder %v253, 640
        %vm262 = vcmp.lt.s32.totalorder %v254, 640
        %vm263 = vcmp.lt.s32.totalorder %v255, 640
        %vm264 = vmand %vm256, %vm260
        %vm265 = vmand %vm257, %vm261
        %vm266 = vmand %vm258, %vm262
        %vm267 = vmand %vm259, %vm263
        %v268 = vsel %vm264, 1, 0
        %v269 = vsel %vm265, 1, 0
        %v270 = vsel %vm266, 1, 0
        %v271 = vsel %vm267, 1, 0
        %v272 = vcvt.s32.f32 %v268
        %v273 = vcvt.s32.f32 %v269
        %v274 = vcvt.s32.f32 %v270
        %v275 = vcvt.s32.f32 %v271
        %s276 = sshra.s32 %s236, 7
        %s277 = sand.u32 %s236, 127
        %s278 = scalar_lea.vmem %s233, %s276
        %v279 = vld [vmem:[%s278] sm:$0xf]
        %v281 = vlaneseq
        %v282 = vshrl.u32 %v281, 7
        %v283 = vsub.s32 0, %v282
        %v284 = vrot.slane %v279, %v283
        %v285 = vlaneseq
        %v286 = vshrl.u32 %v285, 7
        %v287 = vsub.s32 1, %v286
        %v288 = vrot.slane %v279, %v287
        %v289 = vlaneseq
        %v290 = vshrl.u32 %v289, 7
        %v291 = vsub.s32 2, %v290
        %v292 = vrot.slane %v279, %v291
        %v293 = vlaneseq
        %v294 = vshrl.u32 %v293, 7
        %v295 = vsub.s32 3, %v294
        %v296 = vrot.slane %v279, %v295
        %297 = vrot.lane.b32.xlu0 %v284, 1
        %v298 = vpop.permute.xlu0 %297
        %299 = vrot.lane.b32.xlu0 %v288, 1
        %v300 = vpop.permute.xlu0 %299
        %301 = vrot.lane.b32.xlu0 %v292, 1
        %v302 = vpop.permute.xlu0 %301
        %303 = vrot.lane.b32.xlu0 %v296, 1
        %v304 = vpop.permute.xlu0 %303
        %vm305 = vcmask 7168
        %v306 = vsel %vm305, %v298, %v300
        %v307 = vsel %vm305, %v300, %v302
        %v308 = vsel %vm305, %v302, %v304
        %v313 = vsel %vm305, 0.0, %v298
        %314 = vrot.lane.b32.xlu0 %v284, 127
        %v315 = vpop.permute.xlu0 %314
        %316 = vrot.lane.b32.xlu0 %v288, 127
        %v317 = vpop.permute.xlu0 %316
        %318 = vrot.lane.b32.xlu0 %v292, 127
        %v319 = vpop.permute.xlu0 %318
        %320 = vrot.lane.b32.xlu0 %v296, 127
        %v321 = vpop.permute.xlu0 %320
        %vm322 = vcmask 1039360
        %v323 = vsel %vm322, %v315, %v317
        %v324 = vsel %vm322, %v317, %v319
        %v325 = vsel %vm322, %v319, %v321
        %v330 = vsel %vm322, %v321, 0.0
        %v331 = vld [vmem:[%s1] sm:$0xff]
        %v332 = vld [vmem:[%s1 + $0x8] sm:$0xff]
        %v333 = vld [vmem:[%s1 + $0x10] sm:$0xff]
        %v334 = vld [vmem:[%s1 + $0x18] sm:$0xff]
        %v335 = vld [vmem:[%s1 + $0x20] sm:$0xff]
        %v336 = vld [vmem:[%s1 + $0x28] sm:$0xff]
        %v337 = vld [vmem:[%s1 + $0x30] sm:$0xff]
        %v338 = vld [vmem:[%s1 + $0x38] sm:$0xff]
        %340 = vset.pattern.permute.xlu0 0
        %341 = vperm.xlu0 %340, %v331
        %v342 = vpop.permute.xlu0 %341
        %345 = vset.pattern.permute.xlu0 0
        %346 = vperm.xlu0 %345, %v332
        %v347 = vpop.permute.xlu0 %346
        %350 = vset.pattern.permute.xlu0 0
        %351 = vperm.xlu0 %350, %v333
        %v352 = vpop.permute.xlu0 %351
        %355 = vset.pattern.permute.xlu0 0
        %356 = vperm.xlu0 %355, %v334
        %v357 = vpop.permute.xlu0 %356
        %360 = vset.pattern.permute.xlu0 0
        %361 = vperm.xlu0 %360, %v335
        %v362 = vpop.permute.xlu0 %361
        %365 = vset.pattern.permute.xlu0 0
        %366 = vperm.xlu0 %365, %v336
        %v367 = vpop.permute.xlu0 %366
        %370 = vset.pattern.permute.xlu0 0
        %371 = vperm.xlu0 %370, %v337
        %v372 = vpop.permute.xlu0 %371
        %375 = vset.pattern.permute.xlu0 0
        %376 = vperm.xlu0 %375, %v338
        %v377 = vpop.permute.xlu0 %376
        %v379 = vlaneseq
        %v380 = vshrl.u32 %v379, 7
        %v381 = vsub.s32 0, %v380
        %v382 = vrot.slane %v313, %v381
        %v383 = vlaneseq
        %v384 = vshrl.u32 %v383, 7
        %v385 = vsub.s32 0, %v384
        %v386 = vrot.slane %v306, %v385
        %v387 = vlaneseq
        %v388 = vshrl.u32 %v387, 7
        %v389 = vsub.s32 0, %v388
        %v390 = vrot.slane %v307, %v389
        %v391 = vlaneseq
        %v392 = vshrl.u32 %v391, 7
        %v393 = vsub.s32 0, %v392
        %v394 = vrot.slane %v308, %v393
        %v395 = vmul.f32 %v342, %v382
        %v396 = vmul.f32 %v342, %v386
        %v397 = vmul.f32 %v342, %v390
        %v398 = vmul.f32 %v342, %v394
        %v399 = vmul.f32 %v347, %v382
        %v400 = vmul.f32 %v347, %v386
        %v401 = vmul.f32 %v347, %v390
        %v402 = vmul.f32 %v347, %v394
        %v403 = vmul.f32 %v352, %v382
        %v404 = vmul.f32 %v352, %v386
        %v405 = vmul.f32 %v352, %v390
        %v406 = vmul.f32 %v352, %v394
        %v407 = vmul.f32 %v357, %v382
        %v408 = vmul.f32 %v357, %v386
        %v409 = vmul.f32 %v357, %v390
        %v410 = vmul.f32 %v357, %v394
        %v411 = vmul.f32 %v362, %v382
        %v412 = vmul.f32 %v362, %v386
        %v413 = vmul.f32 %v362, %v390
        %v414 = vmul.f32 %v362, %v394
        %v415 = vmul.f32 %v367, %v382
        %v416 = vmul.f32 %v367, %v386
        %v417 = vmul.f32 %v367, %v390
        %v418 = vmul.f32 %v367, %v394
        %v419 = vmul.f32 %v372, %v382
        %v420 = vmul.f32 %v372, %v386
        %v421 = vmul.f32 %v372, %v390
        %v422 = vmul.f32 %v372, %v394
        %v423 = vmul.f32 %v377, %v382
        %v424 = vmul.f32 %v377, %v386
        %v425 = vmul.f32 %v377, %v390
        %v426 = vmul.f32 %v377, %v394
        %427 = vset.pattern.permute.xlu0 1
        %428 = vperm.xlu0 %427, %v331
        %v429 = vpop.permute.xlu0 %428
        %431 = vset.pattern.permute.xlu0 1
        %432 = vperm.xlu0 %431, %v332
        %v433 = vpop.permute.xlu0 %432
        %435 = vset.pattern.permute.xlu0 1
        %436 = vperm.xlu0 %435, %v333
        %v437 = vpop.permute.xlu0 %436
        %439 = vset.pattern.permute.xlu0 1
        %440 = vperm.xlu0 %439, %v334
        %v441 = vpop.permute.xlu0 %440
        %443 = vset.pattern.permute.xlu0 1
        %444 = vperm.xlu0 %443, %v335
        %v445 = vpop.permute.xlu0 %444
        %447 = vset.pattern.permute.xlu0 1
        %448 = vperm.xlu0 %447, %v336
        %v449 = vpop.permute.xlu0 %448
        %451 = vset.pattern.permute.xlu0 1
        %452 = vperm.xlu0 %451, %v337
        %v453 = vpop.permute.xlu0 %452
        %455 = vset.pattern.permute.xlu0 1
        %456 = vperm.xlu0 %455, %v338
        %v457 = vpop.permute.xlu0 %456
        %v463 = vmul.f32 %v429, %v284
        %v464 = vmul.f32 %v429, %v288
        %v465 = vmul.f32 %v429, %v292
        %v466 = vmul.f32 %v429, %v296
        %v467 = vmul.f32 %v433, %v284
        %v468 = vmul.f32 %v433, %v288
        %v469 = vmul.f32 %v433, %v292
        %v470 = vmul.f32 %v433, %v296
        %v471 = vmul.f32 %v437, %v284
        %v472 = vmul.f32 %v437, %v288
        %v473 = vmul.f32 %v437, %v292
        %v474 = vmul.f32 %v437, %v296
        %v475 = vmul.f32 %v441, %v284
        %v476 = vmul.f32 %v441, %v288
        %v477 = vmul.f32 %v441, %v292
        %v478 = vmul.f32 %v441, %v296
        %v479 = vmul.f32 %v445, %v284
        %v480 = vmul.f32 %v445, %v288
        %v481 = vmul.f32 %v445, %v292
        %v482 = vmul.f32 %v445, %v296
        %v483 = vmul.f32 %v449, %v284
        %v484 = vmul.f32 %v449, %v288
        %v485 = vmul.f32 %v449, %v292
        %v486 = vmul.f32 %v449, %v296
        %v487 = vmul.f32 %v453, %v284
        %v488 = vmul.f32 %v453, %v288
        %v489 = vmul.f32 %v453, %v292
        %v490 = vmul.f32 %v453, %v296
        %v491 = vmul.f32 %v457, %v284
        %v492 = vmul.f32 %v457, %v288
        %v493 = vmul.f32 %v457, %v292
        %v494 = vmul.f32 %v457, %v296
        %v495 = vadd.f32 %v395, %v463
        %v496 = vadd.f32 %v396, %v464
        %v497 = vadd.f32 %v397, %v465
        %v498 = vadd.f32 %v398, %v466
        %v499 = vadd.f32 %v399, %v467
        %v500 = vadd.f32 %v400, %v468
        %v501 = vadd.f32 %v401, %v469
        %v502 = vadd.f32 %v402, %v470
        %v503 = vadd.f32 %v403, %v471
        %v504 = vadd.f32 %v404, %v472
        %v505 = vadd.f32 %v405, %v473
        %v506 = vadd.f32 %v406, %v474
        %v507 = vadd.f32 %v407, %v475
        %v508 = vadd.f32 %v408, %v476
        %v509 = vadd.f32 %v409, %v477
        %v510 = vadd.f32 %v410, %v478
        %v511 = vadd.f32 %v411, %v479
        %v512 = vadd.f32 %v412, %v480
        %v513 = vadd.f32 %v413, %v481
        %v514 = vadd.f32 %v414, %v482
        %v515 = vadd.f32 %v415, %v483
        %v516 = vadd.f32 %v416, %v484
        %v517 = vadd.f32 %v417, %v485
        %v518 = vadd.f32 %v418, %v486
        %v519 = vadd.f32 %v419, %v487
        %v520 = vadd.f32 %v420, %v488
        %v521 = vadd.f32 %v421, %v489
        %v522 = vadd.f32 %v422, %v490
        %v523 = vadd.f32 %v423, %v491
        %v524 = vadd.f32 %v424, %v492
        %v525 = vadd.f32 %v425, %v493
        %v526 = vadd.f32 %v426, %v494
        %527 = vset.pattern.permute.xlu0 2
        %528 = vperm.xlu0 %527, %v331
        %v529 = vpop.permute.xlu0 %528
        %531 = vset.pattern.permute.xlu0 2
        %532 = vperm.xlu0 %531, %v332
        %v533 = vpop.permute.xlu0 %532
        %535 = vset.pattern.permute.xlu0 2
        %536 = vperm.xlu0 %535, %v333
        %v537 = vpop.permute.xlu0 %536
        %539 = vset.pattern.permute.xlu0 2
        %540 = vperm.xlu0 %539, %v334
        %v541 = vpop.permute.xlu0 %540
        %543 = vset.pattern.permute.xlu0 2
        %544 = vperm.xlu0 %543, %v335
        %v545 = vpop.permute.xlu0 %544
        %547 = vset.pattern.permute.xlu0 2
        %548 = vperm.xlu0 %547, %v336
        %v549 = vpop.permute.xlu0 %548
        %551 = vset.pattern.permute.xlu0 2
        %552 = vperm.xlu0 %551, %v337
        %v553 = vpop.permute.xlu0 %552
        %555 = vset.pattern.permute.xlu0 2
        %556 = vperm.xlu0 %555, %v338
        %v557 = vpop.permute.xlu0 %556
        %v559 = vlaneseq
        %v560 = vshrl.u32 %v559, 7
        %v561 = vsub.s32 0, %v560
        %v562 = vrot.slane %v323, %v561
        %v563 = vlaneseq
        %v564 = vshrl.u32 %v563, 7
        %v565 = vsub.s32 0, %v564
        %v566 = vrot.slane %v324, %v565
        %v567 = vlaneseq
        %v568 = vshrl.u32 %v567, 7
        %v569 = vsub.s32 0, %v568
        %v570 = vrot.slane %v325, %v569
        %v571 = vlaneseq
        %v572 = vshrl.u32 %v571, 7
        %v573 = vsub.s32 0, %v572
        %v574 = vrot.slane %v330, %v573
        %v575 = vmul.f32 %v529, %v562
        %v576 = vmul.f32 %v529, %v566
        %v577 = vmul.f32 %v529, %v570
        %v578 = vmul.f32 %v529, %v574
        %v579 = vmul.f32 %v533, %v562
        %v580 = vmul.f32 %v533, %v566
        %v581 = vmul.f32 %v533, %v570
        %v582 = vmul.f32 %v533, %v574
        %v583 = vmul.f32 %v537, %v562
        %v584 = vmul.f32 %v537, %v566
        %v585 = vmul.f32 %v537, %v570
        %v586 = vmul.f32 %v537, %v574
        %v587 = vmul.f32 %v541, %v562
        %v588 = vmul.f32 %v541, %v566
        %v589 = vmul.f32 %v541, %v570
        %v590 = vmul.f32 %v541, %v574
        %v591 = vmul.f32 %v545, %v562
        %v592 = vmul.f32 %v545, %v566
        %v593 = vmul.f32 %v545, %v570
        %v594 = vmul.f32 %v545, %v574
        %v595 = vmul.f32 %v549, %v562
        %v596 = vmul.f32 %v549, %v566
        %v597 = vmul.f32 %v549, %v570
        %v598 = vmul.f32 %v549, %v574
        %v599 = vmul.f32 %v553, %v562
        %v600 = vmul.f32 %v553, %v566
        %v601 = vmul.f32 %v553, %v570
        %v602 = vmul.f32 %v553, %v574
        %v603 = vmul.f32 %v557, %v562
        %v604 = vmul.f32 %v557, %v566
        %v605 = vmul.f32 %v557, %v570
        %v606 = vmul.f32 %v557, %v574
        %v607 = vadd.f32 %v495, %v575
        %v608 = vadd.f32 %v496, %v576
        %v609 = vadd.f32 %v497, %v577
        %v610 = vadd.f32 %v498, %v578
        %v611 = vadd.f32 %v499, %v579
        %v612 = vadd.f32 %v500, %v580
        %v613 = vadd.f32 %v501, %v581
        %v614 = vadd.f32 %v502, %v582
        %v615 = vadd.f32 %v503, %v583
        %v616 = vadd.f32 %v504, %v584
        %v617 = vadd.f32 %v505, %v585
        %v618 = vadd.f32 %v506, %v586
        %v619 = vadd.f32 %v507, %v587
        %v620 = vadd.f32 %v508, %v588
        %v621 = vadd.f32 %v509, %v589
        %v622 = vadd.f32 %v510, %v590
        %v623 = vadd.f32 %v511, %v591
        %v624 = vadd.f32 %v512, %v592
        %v625 = vadd.f32 %v513, %v593
        %v626 = vadd.f32 %v514, %v594
        %v627 = vadd.f32 %v515, %v595
        %v628 = vadd.f32 %v516, %v596
        %v629 = vadd.f32 %v517, %v597
        %v630 = vadd.f32 %v518, %v598
        %v631 = vadd.f32 %v519, %v599
        %v632 = vadd.f32 %v520, %v600
        %v633 = vadd.f32 %v521, %v601
        %v634 = vadd.f32 %v522, %v602
        %v635 = vadd.f32 %v523, %v603
        %v636 = vadd.f32 %v524, %v604
        %v637 = vadd.f32 %v525, %v605
        %v638 = vadd.f32 %v526, %v606
        %v639 = vld [vmem:[%s4] sm:$0xff]
        %v640 = vld [vmem:[%s4 + $0x8] sm:$0xff]
        %v641 = vld [vmem:[%s4 + $0x10] sm:$0xff]
        %v642 = vld [vmem:[%s4 + $0x18] sm:$0xff]
        %v643 = vld [vmem:[%s4 + $0x20] sm:$0xff]
        %v644 = vld [vmem:[%s4 + $0x28] sm:$0xff]
        %v645 = vld [vmem:[%s4 + $0x30] sm:$0xff]
        %v646 = vld [vmem:[%s4 + $0x38] sm:$0xff]
        %648 = vset.pattern.permute.xlu0 0
        %649 = vperm.xlu0 %648, %v639
        %v650 = vpop.permute.xlu0 %649
        %653 = vset.pattern.permute.xlu0 0
        %654 = vperm.xlu0 %653, %v640
        %v655 = vpop.permute.xlu0 %654
        %658 = vset.pattern.permute.xlu0 0
        %659 = vperm.xlu0 %658, %v641
        %v660 = vpop.permute.xlu0 %659
        %663 = vset.pattern.permute.xlu0 0
        %664 = vperm.xlu0 %663, %v642
        %v665 = vpop.permute.xlu0 %664
        %668 = vset.pattern.permute.xlu0 0
        %669 = vperm.xlu0 %668, %v643
        %v670 = vpop.permute.xlu0 %669
        %673 = vset.pattern.permute.xlu0 0
        %674 = vperm.xlu0 %673, %v644
        %v675 = vpop.permute.xlu0 %674
        %678 = vset.pattern.permute.xlu0 0
        %679 = vperm.xlu0 %678, %v645
        %v680 = vpop.permute.xlu0 %679
        %683 = vset.pattern.permute.xlu0 0
        %684 = vperm.xlu0 %683, %v646
        %v685 = vpop.permute.xlu0 %684
        %v687 = vadd.f32 %v607, %v650
        %v688 = vadd.f32 %v608, %v650
        %v689 = vadd.f32 %v609, %v650
        %v690 = vadd.f32 %v610, %v650
        %v691 = vadd.f32 %v611, %v655
        %v692 = vadd.f32 %v612, %v655
        %v693 = vadd.f32 %v613, %v655
        %v694 = vadd.f32 %v614, %v655
        %v695 = vadd.f32 %v615, %v660
        %v696 = vadd.f32 %v616, %v660
        %v697 = vadd.f32 %v617, %v660
        %v698 = vadd.f32 %v618, %v660
        %v699 = vadd.f32 %v619, %v665
        %v700 = vadd.f32 %v620, %v665
        %v701 = vadd.f32 %v621, %v665
        %v702 = vadd.f32 %v622, %v665
        %v703 = vadd.f32 %v623, %v670
        %v704 = vadd.f32 %v624, %v670
        %v705 = vadd.f32 %v625, %v670
        %v706 = vadd.f32 %v626, %v670
        %v707 = vadd.f32 %v627, %v675
        %v708 = vadd.f32 %v628, %v675
        %v709 = vadd.f32 %v629, %v675
        %v710 = vadd.f32 %v630, %v675
        %v711 = vadd.f32 %v631, %v680
        %v712 = vadd.f32 %v632, %v680
        %v713 = vadd.f32 %v633, %v680
        %v714 = vadd.f32 %v634, %v680
        %v715 = vadd.f32 %v635, %v685
        %v716 = vadd.f32 %v636, %v685
        %v717 = vadd.f32 %v637, %v685
        %v718 = vadd.f32 %v638, %v685
        %vm719 = vcmp.ge.f32.partialorder %v687, 0.0
        %vm720 = vcmp.ge.f32.partialorder %v688, 0.0
        %vm721 = vcmp.ge.f32.partialorder %v689, 0.0
        %vm722 = vcmp.ge.f32.partialorder %v690, 0.0
        %vm723 = vcmp.ge.f32.partialorder %v691, 0.0
        %vm724 = vcmp.ge.f32.partialorder %v692, 0.0
        %vm725 = vcmp.ge.f32.partialorder %v693, 0.0
        %vm726 = vcmp.ge.f32.partialorder %v694, 0.0
        %vm727 = vcmp.ge.f32.partialorder %v695, 0.0
        %vm728 = vcmp.ge.f32.partialorder %v696, 0.0
        %vm729 = vcmp.ge.f32.partialorder %v697, 0.0
        %vm730 = vcmp.ge.f32.partialorder %v698, 0.0
        %vm731 = vcmp.ge.f32.partialorder %v699, 0.0
        %vm732 = vcmp.ge.f32.partialorder %v700, 0.0
        %vm733 = vcmp.ge.f32.partialorder %v701, 0.0
        %vm734 = vcmp.ge.f32.partialorder %v702, 0.0
        %vm735 = vcmp.ge.f32.partialorder %v703, 0.0
        %vm736 = vcmp.ge.f32.partialorder %v704, 0.0
        %vm737 = vcmp.ge.f32.partialorder %v705, 0.0
        %vm738 = vcmp.ge.f32.partialorder %v706, 0.0
        %vm739 = vcmp.ge.f32.partialorder %v707, 0.0
        %vm740 = vcmp.ge.f32.partialorder %v708, 0.0
        %vm741 = vcmp.ge.f32.partialorder %v709, 0.0
        %vm742 = vcmp.ge.f32.partialorder %v710, 0.0
        %vm743 = vcmp.ge.f32.partialorder %v711, 0.0
        %vm744 = vcmp.ge.f32.partialorder %v712, 0.0
        %vm745 = vcmp.ge.f32.partialorder %v713, 0.0
        %vm746 = vcmp.ge.f32.partialorder %v714, 0.0
        %vm747 = vcmp.ge.f32.partialorder %v715, 0.0
        %vm748 = vcmp.ge.f32.partialorder %v716, 0.0
        %vm749 = vcmp.ge.f32.partialorder %v717, 0.0
        %vm750 = vcmp.ge.f32.partialorder %v718, 0.0
        %v751 = vmul.f32 %v687, 0.2
        %v752 = vmul.f32 %v688, 0.2
        %v753 = vmul.f32 %v689, 0.2
        %v754 = vmul.f32 %v690, 0.2
        %v755 = vmul.f32 %v691, 0.2
        %v756 = vmul.f32 %v692, 0.2
        %v757 = vmul.f32 %v693, 0.2
        %v758 = vmul.f32 %v694, 0.2
        %v759 = vmul.f32 %v695, 0.2
        %v760 = vmul.f32 %v696, 0.2
        %v761 = vmul.f32 %v697, 0.2
        %v762 = vmul.f32 %v698, 0.2
        %v763 = vmul.f32 %v699, 0.2
        %v764 = vmul.f32 %v700, 0.2
        %v765 = vmul.f32 %v701, 0.2
        %v766 = vmul.f32 %v702, 0.2
        %v767 = vmul.f32 %v703, 0.2
        %v768 = vmul.f32 %v704, 0.2
        %v769 = vmul.f32 %v705, 0.2
        %v770 = vmul.f32 %v706, 0.2
        %v771 = vmul.f32 %v707, 0.2
        %v772 = vmul.f32 %v708, 0.2
        %v773 = vmul.f32 %v709, 0.2
        %v774 = vmul.f32 %v710, 0.2
        %v775 = vmul.f32 %v711, 0.2
        %v776 = vmul.f32 %v712, 0.2
        %v777 = vmul.f32 %v713, 0.2
        %v778 = vmul.f32 %v714, 0.2
        %v779 = vmul.f32 %v715, 0.2
        %v780 = vmul.f32 %v716, 0.2
        %v781 = vmul.f32 %v717, 0.2
        %v782 = vmul.f32 %v718, 0.2
        %v783 = vsel %vm719, %v687, %v751
        %v784 = vsel %vm720, %v688, %v752
        %v785 = vsel %vm721, %v689, %v753
        %v786 = vsel %vm722, %v690, %v754
        %v787 = vsel %vm723, %v691, %v755
        %v788 = vsel %vm724, %v692, %v756
        %v789 = vsel %vm725, %v693, %v757
        %v790 = vsel %vm726, %v694, %v758
        %v791 = vsel %vm727, %v695, %v759
        %v792 = vsel %vm728, %v696, %v760
        %v793 = vsel %vm729, %v697, %v761
        %v794 = vsel %vm730, %v698, %v762
        %v795 = vsel %vm731, %v699, %v763
        %v796 = vsel %vm732, %v700, %v764
        %v797 = vsel %vm733, %v701, %v765
        %v798 = vsel %vm734, %v702, %v766
        %v799 = vsel %vm735, %v703, %v767
        %v800 = vsel %vm736, %v704, %v768
        %v801 = vsel %vm737, %v705, %v769
        %v802 = vsel %vm738, %v706, %v770
        %v803 = vsel %vm739, %v707, %v771
        %v804 = vsel %vm740, %v708, %v772
        %v805 = vsel %vm741, %v709, %v773
        %v806 = vsel %vm742, %v710, %v774
        %v807 = vsel %vm743, %v711, %v775
        %v808 = vsel %vm744, %v712, %v776
        %v809 = vsel %vm745, %v713, %v777
        %v810 = vsel %vm746, %v714, %v778
        %v811 = vsel %vm747, %v715, %v779
        %v812 = vsel %vm748, %v716, %v780
        %v813 = vsel %vm749, %v717, %v781
        %v814 = vsel %vm750, %v718, %v782
        %v815 = vmul.f32 %v783, %v272
        %v816 = vmul.f32 %v784, %v273
        %v817 = vmul.f32 %v785, %v274
        %v818 = vmul.f32 %v786, %v275
        %v819 = vmul.f32 %v787, %v272
        %v820 = vmul.f32 %v788, %v273
        %v821 = vmul.f32 %v789, %v274
        %v822 = vmul.f32 %v790, %v275
        %v823 = vmul.f32 %v791, %v272
        %v824 = vmul.f32 %v792, %v273
        %v825 = vmul.f32 %v793, %v274
        %v826 = vmul.f32 %v794, %v275
        %v827 = vmul.f32 %v795, %v272
        %v828 = vmul.f32 %v796, %v273
        %v829 = vmul.f32 %v797, %v274
        %v830 = vmul.f32 %v798, %v275
        %v831 = vmul.f32 %v799, %v272
        %v832 = vmul.f32 %v800, %v273
        %v833 = vmul.f32 %v801, %v274
        %v834 = vmul.f32 %v802, %v275
        %v835 = vmul.f32 %v803, %v272
        %v836 = vmul.f32 %v804, %v273
        %v837 = vmul.f32 %v805, %v274
        %v838 = vmul.f32 %v806, %v275
        %v839 = vmul.f32 %v807, %v272
        %v840 = vmul.f32 %v808, %v273
        %v841 = vmul.f32 %v809, %v274
        %v842 = vmul.f32 %v810, %v275
        %v843 = vmul.f32 %v811, %v272
        %v844 = vmul.f32 %v812, %v273
        %v845 = vmul.f32 %v813, %v274
        %v846 = vmul.f32 %v814, %v275
        %v847 = vpack.c.bf16 %v819, %v815
        %v848 = vpack.c.bf16 %v820, %v816
        %v849 = vpack.c.bf16 %v821, %v817
        %v850 = vpack.c.bf16 %v822, %v818
        %v851 = vpack.c.bf16 %v827, %v823
        %v852 = vpack.c.bf16 %v828, %v824
        %v853 = vpack.c.bf16 %v829, %v825
        %v854 = vpack.c.bf16 %v830, %v826
        %v855 = vpack.c.bf16 %v835, %v831
        %v856 = vpack.c.bf16 %v836, %v832
        %v857 = vpack.c.bf16 %v837, %v833
        %v858 = vpack.c.bf16 %v838, %v834
        %v859 = vpack.c.bf16 %v843, %v839
        %v860 = vpack.c.bf16 %v844, %v840
        %v861 = vpack.c.bf16 %v845, %v841
        %v862 = vpack.c.bf16 %v846, %v842
        %863 = vst [vmem:[#allocation2 + $0x8] sm:$0xff] %v847
        %864 = vst [vmem:[#allocation2 + $0x10] sm:$0xff] %v848
        %865 = vst [vmem:[#allocation2 + $0x18] sm:$0xff] %v849
        %866 = vst [vmem:[#allocation2 + $0x20] sm:$0xff] %v850
        %867 = vst [vmem:[#allocation2 + $0x38] sm:$0xff] %v851
        %868 = vst [vmem:[#allocation2 + $0x40] sm:$0xff] %v852
        %869 = vst [vmem:[#allocation2 + $0x48] sm:$0xff] %v853
        %870 = vst [vmem:[#allocation2 + $0x50] sm:$0xff] %v854
        %871 = vst [vmem:[#allocation2 + $0x68] sm:$0xff] %v855
        %872 = vst [vmem:[#allocation2 + $0x70] sm:$0xff] %v856
        %873 = vst [vmem:[#allocation2 + $0x78] sm:$0xff] %v857
        %874 = vst [vmem:[#allocation2 + $0x80] sm:$0xff] %v858
        %875 = vst [vmem:[#allocation2 + $0x98] sm:$0xff] %v859
        %876 = vst [vmem:[#allocation2 + $0xa0] sm:$0xff] %v860
        %877 = vst [vmem:[#allocation2 + $0xa8] sm:$0xff] %v861
        %878 = vst [vmem:[#allocation2 + $0xb0] sm:$0xff] %v862
        %v879 = vld [vmem:[#allocation2] sm:$0xff]
        %v880 = vld [vmem:[#allocation2 + $0x8] sm:$0xff]
        %v881 = vld [vmem:[#allocation2 + $0x10] sm:$0xff]
        %v882 = vld [vmem:[#allocation2 + $0x18] sm:$0xff]
        %v883 = vld [vmem:[#allocation2 + $0x20] sm:$0xff]
        %v884 = vld [vmem:[#allocation2 + $0x30] sm:$0xff]
        %v885 = vld [vmem:[#allocation2 + $0x38] sm:$0xff]
        %v886 = vld [vmem:[#allocation2 + $0x40] sm:$0xff]
        %v887 = vld [vmem:[#allocation2 + $0x48] sm:$0xff]
        %v888 = vld [vmem:[#allocation2 + $0x50] sm:$0xff]
        %v889 = vld [vmem:[#allocation2 + $0x60] sm:$0xff]
        %v890 = vld [vmem:[#allocation2 + $0x68] sm:$0xff]
        %v891 = vld [vmem:[#allocation2 + $0x70] sm:$0xff]
        %v892 = vld [vmem:[#allocation2 + $0x78] sm:$0xff]
        %v893 = vld [vmem:[#allocation2 + $0x80] sm:$0xff]
        %v894 = vld [vmem:[#allocation2 + $0x90] sm:$0xff]
        %v895 = vld [vmem:[#allocation2 + $0x98] sm:$0xff]
        %v896 = vld [vmem:[#allocation2 + $0xa0] sm:$0xff]
        %v897 = vld [vmem:[#allocation2 + $0xa8] sm:$0xff]
        %v898 = vld [vmem:[#allocation2 + $0xb0] sm:$0xff]
        %v899 = vld [vmem:[#allocation2 + $0x8] sm:$0xff]
        %v900 = vld [vmem:[#allocation2 + $0x10] sm:$0xff]
        %v901 = vld [vmem:[#allocation2 + $0x18] sm:$0xff]
        %v902 = vld [vmem:[#allocation2 + $0x20] sm:$0xff]
        %v903 = vld [vmem:[#allocation2 + $0x28] sm:$0xff]
        %v904 = vld [vmem:[#allocation2 + $0x38] sm:$0xff]
        %v905 = vld [vmem:[#allocation2 + $0x40] sm:$0xff]
        %v906 = vld [vmem:[#allocation2 + $0x48] sm:$0xff]
        %v907 = vld [vmem:[#allocation2 + $0x50] sm:$0xff]
        %v908 = vld [vmem:[#allocation2 + $0x58] sm:$0xff]
        %v909 = vld [vmem:[#allocation2 + $0x68] sm:$0xff]
        %v910 = vld [vmem:[#allocation2 + $0x70] sm:$0xff]
        %v911 = vld [vmem:[#allocation2 + $0x78] sm:$0xff]
        %v912 = vld [vmem:[#allocation2 + $0x80] sm:$0xff]
        %v913 = vld [vmem:[#allocation2 + $0x88] sm:$0xff]
        %v914 = vld [vmem:[#allocation2 + $0x98] sm:$0xff]
        %v915 = vld [vmem:[#allocation2 + $0xa0] sm:$0xff]
        %v916 = vld [vmem:[#allocation2 + $0xa8] sm:$0xff]
        %v917 = vld [vmem:[#allocation2 + $0xb0] sm:$0xff]
        %v918 = vld [vmem:[#allocation2 + $0xb8] sm:$0xff]
        %935 = vrot.lane.b32.xlu0 %v847, 127
        %v936 = vpop.permute.xlu0 %935
        %937 = vrot.lane.b32.xlu0 %v848, 127
        %v938 = vpop.permute.xlu0 %937
        %939 = vrot.lane.b32.xlu0 %v849, 127
        %v940 = vpop.permute.xlu0 %939
        %941 = vrot.lane.b32.xlu0 %v850, 127
        %v942 = vpop.permute.xlu0 %941
        %943 = vrot.lane.b32.xlu0 %v851, 127
        %v944 = vpop.permute.xlu0 %943
        %945 = vrot.lane.b32.xlu0 %v852, 127
        %v946 = vpop.permute.xlu0 %945
        %947 = vrot.lane.b32.xlu0 %v853, 127
        %v948 = vpop.permute.xlu0 %947
        %949 = vrot.lane.b32.xlu0 %v854, 127
        %v950 = vpop.permute.xlu0 %949
        %951 = vrot.lane.b32.xlu0 %v855, 127
        %v952 = vpop.permute.xlu0 %951
        %953 = vrot.lane.b32.xlu0 %v856, 127
        %v954 = vpop.permute.xlu0 %953
        %955 = vrot.lane.b32.xlu0 %v857, 127
        %v956 = vpop.permute.xlu0 %955
        %957 = vrot.lane.b32.xlu0 %v858, 127
        %v958 = vpop.permute.xlu0 %957
        %959 = vrot.lane.b32.xlu0 %v859, 127
        %v960 = vpop.permute.xlu0 %959
        %961 = vrot.lane.b32.xlu0 %v860, 127
        %v962 = vpop.permute.xlu0 %961
        %963 = vrot.lane.b32.xlu0 %v861, 127
        %v964 = vpop.permute.xlu0 %963
        %965 = vrot.lane.b32.xlu0 %v862, 127
        %v966 = vpop.permute.xlu0 %965
        %vm967 = vcmask 1039360
        %v968 = vsel %vm967, %v936, %v938
        %v969 = vsel %vm967, %v938, %v940
        %v970 = vsel %vm967, %v940, %v942
        %v971 = vsel %vm967, %v944, %v946
        %v972 = vsel %vm967, %v946, %v948
        %v973 = vsel %vm967, %v948, %v950
        %v974 = vsel %vm967, %v952, %v954
        %v975 = vsel %vm967, %v954, %v956
        %v976 = vsel %vm967, %v956, %v958
        %v977 = vsel %vm967, %v960, %v962
        %v978 = vsel %vm967, %v962, %v964
        %v979 = vsel %vm967, %v964, %v966
        %1000 = vrot.lane.b32.xlu0 %v899, 126
        %v1001 = vpop.permute.xlu0 %1000
        %1002 = vrot.lane.b32.xlu0 %v900, 126
        %v1003 = vpop.permute.xlu0 %1002
        %1004 = vrot.lane.b32.xlu0 %v901, 126
        %v1005 = vpop.permute.xlu0 %1004
        %1006 = vrot.lane.b32.xlu0 %v902, 126
        %v1007 = vpop.permute.xlu0 %1006
        %1008 = vrot.lane.b32.xlu0 %v903, 126
        %v1009 = vpop.permute.xlu0 %1008
        %1010 = vrot.lane.b32.xlu0 %v904, 126
        %v1011 = vpop.permute.xlu0 %1010
        %1012 = vrot.lane.b32.xlu0 %v905, 126
        %v1013 = vpop.permute.xlu0 %1012
        %1014 = vrot.lane.b32.xlu0 %v906, 126
        %v1015 = vpop.permute.xlu0 %1014
        %1016 = vrot.lane.b32.xlu0 %v907, 126
        %v1017 = vpop.permute.xlu0 %1016
        %1018 = vrot.lane.b32.xlu0 %v908, 126
        %v1019 = vpop.permute.xlu0 %1018
        %1020 = vrot.lane.b32.xlu0 %v909, 126
        %v1021 = vpop.permute.xlu0 %1020
        %1022 = vrot.lane.b32.xlu0 %v910, 126
        %v1023 = vpop.permute.xlu0 %1022
        %1024 = vrot.lane.b32.xlu0 %v911, 126
        %v1025 = vpop.permute.xlu0 %1024
        %1026 = vrot.lane.b32.xlu0 %v912, 126
        %v1027 = vpop.permute.xlu0 %1026
        %1028 = vrot.lane.b32.xlu0 %v913, 126
        %v1029 = vpop.permute.xlu0 %1028
        %1030 = vrot.lane.b32.xlu0 %v914, 126
        %v1031 = vpop.permute.xlu0 %1030
        %1032 = vrot.lane.b32.xlu0 %v915, 126
        %v1033 = vpop.permute.xlu0 %1032
        %1034 = vrot.lane.b32.xlu0 %v916, 126
        %v1035 = vpop.permute.xlu0 %1034
        %1036 = vrot.lane.b32.xlu0 %v917, 126
        %v1037 = vpop.permute.xlu0 %1036
        %1038 = vrot.lane.b32.xlu0 %v918, 126
        %v1039 = vpop.permute.xlu0 %1038
        %vm1040 = vcmask 1031168
        %v1041 = vsel %vm1040, %v1001, %v1003
        %v1042 = vsel %vm1040, %v1003, %v1005
        %v1043 = vsel %vm1040, %v1005, %v1007
        %v1044 = vsel %vm1040, %v1007, %v1009
        %v1045 = vsel %vm1040, %v1011, %v1013
        %v1046 = vsel %vm1040, %v1013, %v1015
        %v1047 = vsel %vm1040, %v1015, %v1017
        %v1048 = vsel %vm1040, %v1017, %v1019
        %v1049 = vsel %vm1040, %v1021, %v1023
        %v1050 = vsel %vm1040, %v1023, %v1025
        %v1051 = vsel %vm1040, %v1025, %v1027
        %v1052 = vsel %vm1040, %v1027, %v1029
        %v1053 = vsel %vm1040, %v1031, %v1033
        %v1054 = vsel %vm1040, %v1033, %v1035
        %v1055 = vsel %vm1040, %v1035, %v1037
        %v1056 = vsel %vm1040, %v1037, %v1039
        %v1057 = vld [vmem:[%s2] sm:$0xff]
        %v1058 = vld [vmem:[%s2 + $0x8] sm:$0xff]
        %v1059 = vld [vmem:[%s2 + $0x10] sm:$0xff]
        %v1060 = vld [vmem:[%s2 + $0x18] sm:$0xff]
        %v1061 = vld [vmem:[%s2 + $0x20] sm:$0xff]
        %v1062 = vld [vmem:[%s2 + $0x28] sm:$0xff]
        %v1063 = vld [vmem:[%s2 + $0x30] sm:$0xff]
        %v1064 = vld [vmem:[%s2 + $0x38] sm:$0xff]
        %s1065 = scalar_lea.vmem %s4, 64
        %v1066 = vld [vmem:[%s1065] sm:$0xff]
        %v1067 = vld [vmem:[%s1065 + $0x8] sm:$0xff]
        %v1068 = vld [vmem:[%s1065 + $0x10] sm:$0xff]
        %v1069 = vld [vmem:[%s1065 + $0x18] sm:$0xff]
        %v1070 = vld [vmem:[%s1065 + $0x20] sm:$0xff]
        %v1071 = vld [vmem:[%s1065 + $0x28] sm:$0xff]
        %v1072 = vld [vmem:[%s1065 + $0x30] sm:$0xff]
        %v1073 = vld [vmem:[%s1065 + $0x38] sm:$0xff]
        %1075 = vset.pattern.permute.xlu0 0
        %1076 = vperm.xlu0 %1075, %v1066
        %v1077 = vpop.permute.xlu0 %1076
        %1080 = vset.pattern.permute.xlu0 0
        %1081 = vperm.xlu0 %1080, %v1067
        %v1082 = vpop.permute.xlu0 %1081
        %1085 = vset.pattern.permute.xlu0 0
        %1086 = vperm.xlu0 %1085, %v1068
        %v1087 = vpop.permute.xlu0 %1086
        %1090 = vset.pattern.permute.xlu0 0
        %1091 = vperm.xlu0 %1090, %v1069
        %v1092 = vpop.permute.xlu0 %1091
        %1095 = vset.pattern.permute.xlu0 0
        %1096 = vperm.xlu0 %1095, %v1070
        %v1097 = vpop.permute.xlu0 %1096
        %1100 = vset.pattern.permute.xlu0 0
        %1101 = vperm.xlu0 %1100, %v1071
        %v1102 = vpop.permute.xlu0 %1101
        %1105 = vset.pattern.permute.xlu0 0
        %1106 = vperm.xlu0 %1105, %v1072
        %v1107 = vpop.permute.xlu0 %1106
        %1110 = vset.pattern.permute.xlu0 0
        %1111 = vperm.xlu0 %1110, %v1073
        %v1112 = vpop.permute.xlu0 %1111
        %v1122 = vunpack.c.l.b16 %v1057
        %v1123 = vunpack.c.h.b16 %v1057
        %v1124 = vunpack.c.l.b16 %v1058
        %v1125 = vunpack.c.h.b16 %v1058
        %v1126 = vunpack.c.l.b16 %v1059
        %v1127 = vunpack.c.h.b16 %v1059
        %v1128 = vunpack.c.l.b16 %v1060
        %v1129 = vunpack.c.h.b16 %v1060
        %v1130 = vunpack.c.l.b16 %v1061
        %v1131 = vunpack.c.h.b16 %v1061
        %v1132 = vunpack.c.l.b16 %v1062
        %v1133 = vunpack.c.h.b16 %v1062
        %v1134 = vunpack.c.l.b16 %v1063
        %v1135 = vunpack.c.h.b16 %v1063
        %v1136 = vunpack.c.l.b16 %v1064
        %v1137 = vunpack.c.h.b16 %v1064
        %v1138 = vpack.c.b16 %v1124, %v1122
        %v1139 = vpack.c.b16 %v1125, %v1123
        %v1140 = vpack.c.b16 %v1128, %v1126
        %v1141 = vpack.c.b16 %v1129, %v1127
        %v1142 = vpack.c.b16 %v1132, %v1130
        %v1143 = vpack.c.b16 %v1133, %v1131
        %v1144 = vpack.c.b16 %v1136, %v1134
        %v1145 = vpack.c.b16 %v1137, %v1135
        %1170 = vrot.lane.b32.xlu0 %v879, 1
        %v1171 = vpop.permute.xlu0 %1170
        %1172 = vrot.lane.b32.xlu0 %v880, 1
        %v1173 = vpop.permute.xlu0 %1172
        %1174 = vrot.lane.b32.xlu0 %v881, 1
        %v1175 = vpop.permute.xlu0 %1174
        %1176 = vrot.lane.b32.xlu0 %v882, 1
        %v1177 = vpop.permute.xlu0 %1176
        %1178 = vrot.lane.b32.xlu0 %v883, 1
        %v1179 = vpop.permute.xlu0 %1178
        %1180 = vrot.lane.b32.xlu0 %v884, 1
        %v1181 = vpop.permute.xlu0 %1180
        %1182 = vrot.lane.b32.xlu0 %v885, 1
        %v1183 = vpop.permute.xlu0 %1182
        %1184 = vrot.lane.b32.xlu0 %v886, 1
        %v1185 = vpop.permute.xlu0 %1184
        %1186 = vrot.lane.b32.xlu0 %v887, 1
        %v1187 = vpop.permute.xlu0 %1186
        %1188 = vrot.lane.b32.xlu0 %v888, 1
        %v1189 = vpop.permute.xlu0 %1188
        %1190 = vrot.lane.b32.xlu0 %v889, 1
        %v1191 = vpop.permute.xlu0 %1190
        %1192 = vrot.lane.b32.xlu0 %v890, 1
        %v1193 = vpop.permute.xlu0 %1192
        %1194 = vrot.lane.b32.xlu0 %v891, 1
        %v1195 = vpop.permute.xlu0 %1194
        %1196 = vrot.lane.b32.xlu0 %v892, 1
        %v1197 = vpop.permute.xlu0 %1196
        %1198 = vrot.lane.b32.xlu0 %v893, 1
        %v1199 = vpop.permute.xlu0 %1198
        %1200 = vrot.lane.b32.xlu0 %v894, 1
        %v1201 = vpop.permute.xlu0 %1200
        %1202 = vrot.lane.b32.xlu0 %v895, 1
        %v1203 = vpop.permute.xlu0 %1202
        %1204 = vrot.lane.b32.xlu0 %v896, 1
        %v1205 = vpop.permute.xlu0 %1204
        %1206 = vrot.lane.b32.xlu0 %v897, 1
        %v1207 = vpop.permute.xlu0 %1206
        %1208 = vrot.lane.b32.xlu0 %v898, 1
        %v1209 = vpop.permute.xlu0 %1208
        %1210 = vrot.lane.b32.xlu0 %v936, 1
        %v1211 = vpop.permute.xlu0 %1210
        %1212 = vrot.lane.b32.xlu0 %v968, 1
        %v1213 = vpop.permute.xlu0 %1212
        %1214 = vrot.lane.b32.xlu0 %v969, 1
        %v1215 = vpop.permute.xlu0 %1214
        %1216 = vrot.lane.b32.xlu0 %v970, 1
        %v1217 = vpop.permute.xlu0 %1216
        %1218 = vrot.lane.b32.xlu0 %v942, 1
        %v1219 = vpop.permute.xlu0 %1218
        %1220 = vrot.lane.b32.xlu0 %v944, 1
        %v1221 = vpop.permute.xlu0 %1220
        %1222 = vrot.lane.b32.xlu0 %v971, 1
        %v1223 = vpop.permute.xlu0 %1222
        %1224 = vrot.lane.b32.xlu0 %v972, 1
        %v1225 = vpop.permute.xlu0 %1224
        %1226 = vrot.lane.b32.xlu0 %v973, 1
        %v1227 = vpop.permute.xlu0 %1226
        %1228 = vrot.lane.b32.xlu0 %v950, 1
        %v1229 = vpop.permute.xlu0 %1228
        %1230 = vrot.lane.b32.xlu0 %v952, 1
        %v1231 = vpop.permute.xlu0 %1230
        %1232 = vrot.lane.b32.xlu0 %v974, 1
        %v1233 = vpop.permute.xlu0 %1232
        %1234 = vrot.lane.b32.xlu0 %v975, 1
        %v1235 = vpop.permute.xlu0 %1234
        %1236 = vrot.lane.b32.xlu0 %v976, 1
        %v1237 = vpop.permute.xlu0 %1236
        %1238 = vrot.lane.b32.xlu0 %v958, 1
        %v1239 = vpop.permute.xlu0 %1238
        %1240 = vrot.lane.b32.xlu0 %v960, 1
        %v1241 = vpop.permute.xlu0 %1240
        %1242 = vrot.lane.b32.xlu0 %v977, 1
        %v1243 = vpop.permute.xlu0 %1242
        %1244 = vrot.lane.b32.xlu0 %v978, 1
        %v1245 = vpop.permute.xlu0 %1244
        %1246 = vrot.lane.b32.xlu0 %v979, 1
        %v1247 = vpop.permute.xlu0 %1246
        %1248 = vrot.lane.b32.xlu0 %v966, 1
        %v1249 = vpop.permute.xlu0 %1248
        %1250 = vrot.lane.b32.xlu0 %v1001, 1
        %v1251 = vpop.permute.xlu0 %1250
        %1252 = vrot.lane.b32.xlu0 %v1041, 1
        %v1253 = vpop.permute.xlu0 %1252
        %1254 = vrot.lane.b32.xlu0 %v1042, 1
        %v1255 = vpop.permute.xlu0 %1254
        %1256 = vrot.lane.b32.xlu0 %v1043, 1
        %v1257 = vpop.permute.xlu0 %1256
        %1258 = vrot.lane.b32.xlu0 %v1044, 1
        %v1259 = vpop.permute.xlu0 %1258
        %1260 = vrot.lane.b32.xlu0 %v1011, 1
        %v1261 = vpop.permute.xlu0 %1260
        %1262 = vrot.lane.b32.xlu0 %v1045, 1
        %v1263 = vpop.permute.xlu0 %1262
        %1264 = vrot.lane.b32.xlu0 %v1046, 1
        %v1265 = vpop.permute.xlu0 %1264
        %1266 = vrot.lane.b32.xlu0 %v1047, 1
        %v1267 = vpop.permute.xlu0 %1266
        %1268 = vrot.lane.b32.xlu0 %v1048, 1
        %v1269 = vpop.permute.xlu0 %1268
        %1270 = vrot.lane.b32.xlu0 %v1021, 1
        %v1271 = vpop.permute.xlu0 %1270
        %1272 = vrot.lane.b32.xlu0 %v1049, 1
        %v1273 = vpop.permute.xlu0 %1272
        %1274 = vrot.lane.b32.xlu0 %v1050, 1
        %v1275 = vpop.permute.xlu0 %1274
        %1276 = vrot.lane.b32.xlu0 %v1051, 1
        %v1277 = vpop.permute.xlu0 %1276
        %1278 = vrot.lane.b32.xlu0 %v1052, 1
        %v1279 = vpop.permute.xlu0 %1278
        %1280 = vrot.lane.b32.xlu0 %v1031, 1
        %v1281 = vpop.permute.xlu0 %1280
        %1282 = vrot.lane.b32.xlu0 %v1053, 1
        %v1283 = vpop.permute.xlu0 %1282
        %1284 = vrot.lane.b32.xlu0 %v1054, 1
        %v1285 = vpop.permute.xlu0 %1284
        %1286 = vrot.lane.b32.xlu0 %v1055, 1
        %v1287 = vpop.permute.xlu0 %1286
        %1288 = vrot.lane.b32.xlu0 %v1056, 1
        %v1289 = vpop.permute.xlu0 %1288
        %vm1290 = vcmask 7168
        %v1291 = vsel %vm1290, %v1171, %v1173
        %v1292 = vsel %vm1290, %v1173, %v1175
        %v1293 = vsel %vm1290, %v1175, %v1177
        %v1294 = vsel %vm1290, %v1177, %v1179
        %v1295 = vsel %vm1290, %v1181, %v1183
        %v1296 = vsel %vm1290, %v1183, %v1185
        %v1297 = vsel %vm1290, %v1185, %v1187
        %v1298 = vsel %vm1290, %v1187, %v1189
        %v1299 = vsel %vm1290, %v1191, %v1193
        %v1300 = vsel %vm1290, %v1193, %v1195
        %v1301 = vsel %vm1290, %v1195, %v1197
        %v1302 = vsel %vm1290, %v1197, %v1199
        %v1303 = vsel %vm1290, %v1201, %v1203
        %v1304 = vsel %vm1290, %v1203, %v1205
        %v1305 = vsel %vm1290, %v1205, %v1207
        %v1306 = vsel %vm1290, %v1207, %v1209
        %v1307 = vsel %vm1290, %v1211, %v1213
        %v1308 = vsel %vm1290, %v1213, %v1215
        %v1309 = vsel %vm1290, %v1215, %v1217
        %v1310 = vsel %vm1290, %v1217, %v1219
        %v1311 = vsel %vm1290, %v1221, %v1223
        %v1312 = vsel %vm1290, %v1223, %v1225
        %v1313 = vsel %vm1290, %v1225, %v1227
        %v1314 = vsel %vm1290, %v1227, %v1229
        %v1315 = vsel %vm1290, %v1231, %v1233
        %v1316 = vsel %vm1290, %v1233, %v1235
        %v1317 = vsel %vm1290, %v1235, %v1237
        %v1318 = vsel %vm1290, %v1237, %v1239
        %v1319 = vsel %vm1290, %v1241, %v1243
        %v1320 = vsel %vm1290, %v1243, %v1245
        %v1321 = vsel %vm1290, %v1245, %v1247
        %v1322 = vsel %vm1290, %v1247, %v1249
        %v1323 = vsel %vm1290, %v1251, %v1253
        %v1324 = vsel %vm1290, %v1253, %v1255
        %v1325 = vsel %vm1290, %v1255, %v1257
        %v1326 = vsel %vm1290, %v1257, %v1259
        %v1327 = vsel %vm1290, %v1261, %v1263
        %v1328 = vsel %vm1290, %v1263, %v1265
        %v1329 = vsel %vm1290, %v1265, %v1267
        %v1330 = vsel %vm1290, %v1267, %v1269
        %v1331 = vsel %vm1290, %v1271, %v1273
        %v1332 = vsel %vm1290, %v1273, %v1275
        %v1333 = vsel %vm1290, %v1275, %v1277
        %v1334 = vsel %vm1290, %v1277, %v1279
        %v1335 = vsel %vm1290, %v1281, %v1283
        %v1336 = vsel %vm1290, %v1283, %v1285
        %v1337 = vsel %vm1290, %v1285, %v1287
        %v1338 = vsel %vm1290, %v1287, %v1289
        %vm1387 = vcmask 523264
        %v1389 = vsel %vm1387, %v1139, 0
        %v1392 = vsel %vm1387, %v1141, 0
        %v1395 = vsel %vm1387, %v1143, 0
        %v1398 = vsel %vm1387, %v1145, 0
        %1400 = vmatprep.subr.bf16.mxu0 %v1292
        %1401 = vmatpush1.bf16.msra.mxu0 %v1291
        %1402 = vmatprep.subr.bf16.mxu0 %v1296
        %1403 = vmatpush1.bf16.msra.mxu0 %v1295
        %1404 = vmatprep.subr.bf16.mxu0 %v1300
        %1405 = vmatpush1.bf16.msra.mxu0 %v1299
        %1406 = vmatprep.subr.bf16.mxu0 %v1304
        %1407 = vmatpush1.bf16.msra.mxu0 %v1303
        %1408 = vmatprep.subr.bf16.mxu0 %v1308
        %1409 = vmatpush1.bf16.msra.mxu0 %v1307
        %1410 = vmatprep.subr.bf16.mxu0 %v1312
        %1411 = vmatpush1.bf16.msra.mxu0 %v1311
        %1412 = vmatprep.subr.bf16.mxu0 %v1316
        %1413 = vmatpush1.bf16.msra.mxu0 %v1315
        %1414 = vmatprep.subr.bf16.mxu0 %v1320
        %1415 = vmatpush1.bf16.msra.mxu0 %v1319
        %1416 = vmatprep.subr.bf16.mxu0 %v1324
        %1417 = vmatpush1.bf16.msra.mxu0 %v1323
        %1418 = vmatprep.subr.bf16.mxu0 %v1328
        %1419 = vmatpush1.bf16.msra.mxu0 %v1327
        %1420 = vmatprep.subr.bf16.mxu0 %v1332
        %1421 = vmatpush1.bf16.msra.mxu0 %v1331
        %1422 = vmatprep.subr.bf16.mxu0 %v1336
        %1423 = vmatpush1.bf16.msra.mxu0 %v1335
        %1424 = vmatprep.subr.bf16.mxu0 0
        %1425 = vmatpush1.bf16.msra.mxu0 0
        %1426 = vmatprep.subr.bf16.mxu0 0
        %1427 = vmatpush1.bf16.msra.mxu0 0
        %1428 = vmatprep.subr.bf16.mxu0 0
        %1429 = vmatpush1.bf16.msra.mxu0 0
        %1430 = vmatprep.subr.bf16.mxu0 0
        %1431 = vmatpush1.bf16.msra.mxu0 0
        %1432 = vmatprep.mubr.bf16.mxu0 %v1389
        %1433 = vmatmul.mubr.bf16.gmra.mrb[0].mxu0 %v1138
        %v1434 = vpop.f32.mrb[0].mxu0
        %v1435 = vadd.f32 %v1077, %v1434
        %v1436 = vpop.f32.mrb[0].mxu0
        %v1437 = vadd.f32 %v1077, %v1436
        %v1438 = vpop.f32.mrb[0].mxu0
        %v1439 = vadd.f32 %v1082, %v1438
        %v1440 = vpop.f32.mrb[0].mxu0
        %v1441 = vadd.f32 %v1082, %v1440
        %1442 = vmatprep.mubr.bf16.mxu0 %v1392
        %1443 = vmatmul.mubr.bf16.gmra.mrb[0].mxu0 %v1140
        %v1444 = vpop.f32.mrb[0].mxu0
        %v1445 = vadd.f32 %v1087, %v1444
        %v1446 = vpop.f32.mrb[0].mxu0
        %v1447 = vadd.f32 %v1087, %v1446
        %v1448 = vpop.f32.mrb[0].mxu0
        %v1449 = vadd.f32 %v1092, %v1448
        %v1450 = vpop.f32.mrb[0].mxu0
        %v1451 = vadd.f32 %v1092, %v1450
        %1452 = vmatprep.mubr.bf16.mxu0 %v1395
        %1453 = vmatmul.mubr.bf16.gmra.mrb[0].mxu0 %v1142
        %v1454 = vpop.f32.mrb[0].mxu0
        %v1455 = vadd.f32 %v1097, %v1454
        %v1456 = vpop.f32.mrb[0].mxu0
        %v1457 = vadd.f32 %v1097, %v1456
        %v1458 = vpop.f32.mrb[0].mxu0
        %v1459 = vadd.f32 %v1102, %v1458
        %v1460 = vpop.f32.mrb[0].mxu0
        %v1461 = vadd.f32 %v1102, %v1460
        %1462 = vmatprep.mubr.bf16.mxu0 %v1398
        %1463 = vmatmul.mubr.bf16.gmra.mrb[0].mxu0 %v1144
        %v1464 = vpop.f32.mrb[0].mxu0
        %v1465 = vadd.f32 %v1107, %v1464
        %v1466 = vpop.f32.mrb[0].mxu0
        %v1467 = vadd.f32 %v1107, %v1466
        %v1468 = vpop.f32.mrb[0].mxu0
        %v1469 = vadd.f32 %v1112, %v1468
        %v1470 = vpop.f32.mrb[0].mxu0
        %v1471 = vadd.f32 %v1112, %v1470
        %1472 = vdwg.mxu0
        %1473 = vmatprep.subr.bf16.mxu0 %v1294
        %1474 = vmatpush1.bf16.msra.mxu0 %v1293
        %1475 = vmatprep.subr.bf16.mxu0 %v1298
        %1476 = vmatpush1.bf16.msra.mxu0 %v1297
        %1477 = vmatprep.subr.bf16.mxu0 %v1302
        %1478 = vmatpush1.bf16.msra.mxu0 %v1301
        %1479 = vmatprep.subr.bf16.mxu0 %v1306
        %1480 = vmatpush1.bf16.msra.mxu0 %v1305
        %1481 = vmatprep.subr.bf16.mxu0 %v1310
        %1482 = vmatpush1.bf16.msra.mxu0 %v1309
        %1483 = vmatprep.subr.bf16.mxu0 %v1314
        %1484 = vmatpush1.bf16.msra.mxu0 %v1313
        %1485 = vmatprep.subr.bf16.mxu0 %v1318
        %1486 = vmatpush1.bf16.msra.mxu0 %v1317
        %1487 = vmatprep.subr.bf16.mxu0 %v1322
        %1488 = vmatpush1.bf16.msra.mxu0 %v1321
        %1489 = vmatprep.subr.bf16.mxu0 %v1326
        %1490 = vmatpush1.bf16.msra.mxu0 %v1325
        %1491 = vmatprep.subr.bf16.mxu0 %v1330
        %1492 = vmatpush1.bf16.msra.mxu0 %v1329
        %1493 = vmatprep.subr.bf16.mxu0 %v1334
        %1494 = vmatpush1.bf16.msra.mxu0 %v1333
        %1495 = vmatprep.subr.bf16.mxu0 %v1338
        %1496 = vmatpush1.bf16.msra.mxu0 %v1337
        %1497 = vmatprep.subr.bf16.mxu0 0
        %1498 = vmatpush1.bf16.msra.mxu0 0
        %1499 = vmatprep.subr.bf16.mxu0 0
        %1500 = vmatpush1.bf16.msra.mxu0 0
        %1501 = vmatprep.subr.bf16.mxu0 0
        %1502 = vmatpush1.bf16.msra.mxu0 0
        %1503 = vmatprep.subr.bf16.mxu0 0
        %1504 = vmatpush1.bf16.msra.mxu0 0
        %1505 = vmatprep.mubr.bf16.mxu0 %v1389
        %1506 = vmatmul.mubr.bf16.gmra.mrb[0].mxu0 %v1138
        %v1507 = vpop.f32.mrb[0].mxu0
        %v1508 = vadd.f32 %v1077, %v1507
        %v1509 = vpop.f32.mrb[0].mxu0
        %v1510 = vadd.f32 %v1077, %v1509
        %v1511 = vpop.f32.mrb[0].mxu0
        %v1512 = vadd.f32 %v1082, %v1511
        %v1513 = vpop.f32.mrb[0].mxu0
        %v1514 = vadd.f32 %v1082, %v1513
        %1515 = vmatprep.mubr.bf16.mxu0 %v1392
        %1516 = vmatmul.mubr.bf16.gmra.mrb[0].mxu0 %v1140
        %v1517 = vpop.f32.mrb[0].mxu0
        %v1518 = vadd.f32 %v1087, %v1517
        %v1519 = vpop.f32.mrb[0].mxu0
        %v1520 = vadd.f32 %v1087, %v1519
        %v1521 = vpop.f32.mrb[0].mxu0
        %v1522 = vadd.f32 %v1092, %v1521
        %v1523 = vpop.f32.mrb[0].mxu0
        %v1524 = vadd.f32 %v1092, %v1523
        %1525 = vmatprep.mubr.bf16.mxu0 %v1395
        %1526 = vmatmul.mubr.bf16.gmra.mrb[0].mxu0 %v1142
        %v1527 = vpop.f32.mrb[0].mxu0
        %v1528 = vadd.f32 %v1097, %v1527
        %v1529 = vpop.f32.mrb[0].mxu0
        %v1530 = vadd.f32 %v1097, %v1529
        %v1531 = vpop.f32.mrb[0].mxu0
        %v1532 = vadd.f32 %v1102, %v1531
        %v1533 = vpop.f32.mrb[0].mxu0
        %v1534 = vadd.f32 %v1102, %v1533
        %1535 = vmatprep.mubr.bf16.mxu0 %v1398
        %1536 = vmatmul.mubr.bf16.gmra.mrb[0].mxu0 %v1144
        %v1537 = vpop.f32.mrb[0].mxu0
        %v1538 = vadd.f32 %v1107, %v1537
        %v1539 = vpop.f32.mrb[0].mxu0
        %v1540 = vadd.f32 %v1107, %v1539
        %v1541 = vpop.f32.mrb[0].mxu0
        %v1542 = vadd.f32 %v1112, %v1541
        %v1543 = vpop.f32.mrb[0].mxu0
        %v1544 = vadd.f32 %v1112, %v1543
        %1545 = vdwg.mxu0
        %vm1546 = vcmp.ge.f32.partialorder %v1435, 0.0
        %vm1547 = vcmp.ge.f32.partialorder %v1437, 0.0
        %vm1548 = vcmp.ge.f32.partialorder %v1508, 0.0
        %vm1549 = vcmp.ge.f32.partialorder %v1510, 0.0
        %vm1550 = vcmp.ge.f32.partialorder %v1439, 0.0
        %vm1551 = vcmp.ge.f32.partialorder %v1441, 0.0
        %vm1552 = vcmp.ge.f32.partialorder %v1512, 0.0
        %vm1553 = vcmp.ge.f32.partialorder %v1514, 0.0
        %vm1554 = vcmp.ge.f32.partialorder %v1445, 0.0
        %vm1555 = vcmp.ge.f32.partialorder %v1447, 0.0
        %vm1556 = vcmp.ge.f32.partialorder %v1518, 0.0
        %vm1557 = vcmp.ge.f32.partialorder %v1520, 0.0
        %vm1558 = vcmp.ge.f32.partialorder %v1449, 0.0
        %vm1559 = vcmp.ge.f32.partialorder %v1451, 0.0
        %vm1560 = vcmp.ge.f32.partialorder %v1522, 0.0
        %vm1561 = vcmp.ge.f32.partialorder %v1524, 0.0
        %vm1562 = vcmp.ge.f32.partialorder %v1455, 0.0
        %vm1563 = vcmp.ge.f32.partialorder %v1457, 0.0
        %vm1564 = vcmp.ge.f32.partialorder %v1528, 0.0
        %vm1565 = vcmp.ge.f32.partialorder %v1530, 0.0
        %vm1566 = vcmp.ge.f32.partialorder %v1459, 0.0
        %vm1567 = vcmp.ge.f32.partialorder %v1461, 0.0
        %vm1568 = vcmp.ge.f32.partialorder %v1532, 0.0
        %vm1569 = vcmp.ge.f32.partialorder %v1534, 0.0
        %vm1570 = vcmp.ge.f32.partialorder %v1465, 0.0
        %vm1571 = vcmp.ge.f32.partialorder %v1467, 0.0
        %vm1572 = vcmp.ge.f32.partialorder %v1538, 0.0
        %vm1573 = vcmp.ge.f32.partialorder %v1540, 0.0
        %vm1574 = vcmp.ge.f32.partialorder %v1469, 0.0
        %vm1575 = vcmp.ge.f32.partialorder %v1471, 0.0
        %vm1576 = vcmp.ge.f32.partialorder %v1542, 0.0
        %vm1577 = vcmp.ge.f32.partialorder %v1544, 0.0
        %v1578 = vmul.f32 %v1435, 0.2
        %v1579 = vmul.f32 %v1437, 0.2
        %v1580 = vmul.f32 %v1508, 0.2
        %v1581 = vmul.f32 %v1510, 0.2
        %v1582 = vmul.f32 %v1439, 0.2
        %v1583 = vmul.f32 %v1441, 0.2
        %v1584 = vmul.f32 %v1512, 0.2
        %v1585 = vmul.f32 %v1514, 0.2
        %v1586 = vmul.f32 %v1445, 0.2
        %v1587 = vmul.f32 %v1447, 0.2
        %v1588 = vmul.f32 %v1518, 0.2
        %v1589 = vmul.f32 %v1520, 0.2
        %v1590 = vmul.f32 %v1449, 0.2
        %v1591 = vmul.f32 %v1451, 0.2
        %v1592 = vmul.f32 %v1522, 0.2
        %v1593 = vmul.f32 %v1524, 0.2
        %v1594 = vmul.f32 %v1455, 0.2
        %v1595 = vmul.f32 %v1457, 0.2
        %v1596 = vmul.f32 %v1528, 0.2
        %v1597 = vmul.f32 %v1530, 0.2
        %v1598 = vmul.f32 %v1459, 0.2
        %v1599 = vmul.f32 %v1461, 0.2
        %v1600 = vmul.f32 %v1532, 0.2
        %v1601 = vmul.f32 %v1534, 0.2
        %v1602 = vmul.f32 %v1465, 0.2
        %v1603 = vmul.f32 %v1467, 0.2
        %v1604 = vmul.f32 %v1538, 0.2
        %v1605 = vmul.f32 %v1540, 0.2
        %v1606 = vmul.f32 %v1469, 0.2
        %v1607 = vmul.f32 %v1471, 0.2
        %v1608 = vmul.f32 %v1542, 0.2
        %v1609 = vmul.f32 %v1544, 0.2
        %v1610 = vsel %vm1546, %v1435, %v1578
        %v1611 = vsel %vm1547, %v1437, %v1579
        %v1612 = vsel %vm1548, %v1508, %v1580
        %v1613 = vsel %vm1549, %v1510, %v1581
        %v1614 = vsel %vm1550, %v1439, %v1582
        %v1615 = vsel %vm1551, %v1441, %v1583
        %v1616 = vsel %vm1552, %v1512, %v1584
        %v1617 = vsel %vm1553, %v1514, %v1585
        %v1618 = vsel %vm1554, %v1445, %v1586
        %v1619 = vsel %vm1555, %v1447, %v1587
        %v1620 = vsel %vm1556, %v1518, %v1588
        %v1621 = vsel %vm1557, %v1520, %v1589
        %v1622 = vsel %vm1558, %v1449, %v1590
        %v1623 = vsel %vm1559, %v1451, %v1591
        %v1624 = vsel %vm1560, %v1522, %v1592
        %v1625 = vsel %vm1561, %v1524, %v1593
        %v1626 = vsel %vm1562, %v1455, %v1594
        %v1627 = vsel %vm1563, %v1457, %v1595
        %v1628 = vsel %vm1564, %v1528, %v1596
        %v1629 = vsel %vm1565, %v1530, %v1597
        %v1630 = vsel %vm1566, %v1459, %v1598
        %v1631 = vsel %vm1567, %v1461, %v1599
        %v1632 = vsel %vm1568, %v1532, %v1600
        %v1633 = vsel %vm1569, %v1534, %v1601
        %v1634 = vsel %vm1570, %v1465, %v1602
        %v1635 = vsel %vm1571, %v1467, %v1603
        %v1636 = vsel %vm1572, %v1538, %v1604
        %v1637 = vsel %vm1573, %v1540, %v1605
        %v1638 = vsel %vm1574, %v1469, %v1606
        %v1639 = vsel %vm1575, %v1471, %v1607
        %v1640 = vsel %vm1576, %v1542, %v1608
        %v1641 = vsel %vm1577, %v1544, %v1609
        %v1642 = vmul.f32 %v1610, %v272
        %v1643 = vmul.f32 %v1611, %v273
        %v1644 = vmul.f32 %v1612, %v274
        %v1645 = vmul.f32 %v1613, %v275
        %v1646 = vmul.f32 %v1614, %v272
        %v1647 = vmul.f32 %v1615, %v273
        %v1648 = vmul.f32 %v1616, %v274
        %v1649 = vmul.f32 %v1617, %v275
        %v1650 = vmul.f32 %v1618, %v272
        %v1651 = vmul.f32 %v1619, %v273
        %v1652 = vmul.f32 %v1620, %v274
        %v1653 = vmul.f32 %v1621, %v275
        %v1654 = vmul.f32 %v1622, %v272
        %v1655 = vmul.f32 %v1623, %v273
        %v1656 = vmul.f32 %v1624, %v274
        %v1657 = vmul.f32 %v1625, %v275
        %v1658 = vmul.f32 %v1626, %v272
        %v1659 = vmul.f32 %v1627, %v273
        %v1660 = vmul.f32 %v1628, %v274
        %v1661 = vmul.f32 %v1629, %v275
        %v1662 = vmul.f32 %v1630, %v272
        %v1663 = vmul.f32 %v1631, %v273
        %v1664 = vmul.f32 %v1632, %v274
        %v1665 = vmul.f32 %v1633, %v275
        %v1666 = vmul.f32 %v1634, %v272
        %v1667 = vmul.f32 %v1635, %v273
        %v1668 = vmul.f32 %v1636, %v274
        %v1669 = vmul.f32 %v1637, %v275
        %v1670 = vmul.f32 %v1638, %v272
        %v1671 = vmul.f32 %v1639, %v273
        %v1672 = vmul.f32 %v1640, %v274
        %v1673 = vmul.f32 %v1641, %v275
        %v1674 = vpack.c.bf16 %v1646, %v1642
        %v1675 = vpack.c.bf16 %v1647, %v1643
        %v1676 = vpack.c.bf16 %v1648, %v1644
        %v1677 = vpack.c.bf16 %v1649, %v1645
        %v1678 = vpack.c.bf16 %v1654, %v1650
        %v1679 = vpack.c.bf16 %v1655, %v1651
        %v1680 = vpack.c.bf16 %v1656, %v1652
        %v1681 = vpack.c.bf16 %v1657, %v1653
        %v1682 = vpack.c.bf16 %v1662, %v1658
        %v1683 = vpack.c.bf16 %v1663, %v1659
        %v1684 = vpack.c.bf16 %v1664, %v1660
        %v1685 = vpack.c.bf16 %v1665, %v1661
        %v1686 = vpack.c.bf16 %v1670, %v1666
        %v1687 = vpack.c.bf16 %v1671, %v1667
        %v1688 = vpack.c.bf16 %v1672, %v1668
        %v1689 = vpack.c.bf16 %v1673, %v1669
        %1690 = vst [vmem:[#allocation2 + $0x8] sm:$0xff] %v1674
        %1691 = vst [vmem:[#allocation2 + $0x10] sm:$0xff] %v1675
        %1692 = vst [vmem:[#allocation2 + $0x18] sm:$0xff] %v1676
        %1693 = vst [vmem:[#allocation2 + $0x20] sm:$0xff] %v1677
        %1694 = vst [vmem:[#allocation2 + $0x38] sm:$0xff] %v1678
        %1695 = vst [vmem:[#allocation2 + $0x40] sm:$0xff] %v1679
        %1696 = vst [vmem:[#allocation2 + $0x48] sm:$0xff] %v1680
        %1697 = vst [vmem:[#allocation2 + $0x50] sm:$0xff] %v1681
        %1698 = vst [vmem:[#allocation2 + $0x68] sm:$0xff] %v1682
        %1699 = vst [vmem:[#allocation2 + $0x70] sm:$0xff] %v1683
        %1700 = vst [vmem:[#allocation2 + $0x78] sm:$0xff] %v1684
        %1701 = vst [vmem:[#allocation2 + $0x80] sm:$0xff] %v1685
        %1702 = vst [vmem:[#allocation2 + $0x98] sm:$0xff] %v1686
        %1703 = vst [vmem:[#allocation2 + $0xa0] sm:$0xff] %v1687
        %1704 = vst [vmem:[#allocation2 + $0xa8] sm:$0xff] %v1688
        %1705 = vst [vmem:[#allocation2 + $0xb0] sm:$0xff] %v1689
        %v1706 = vld [vmem:[#allocation2] sm:$0xff]
        %v1707 = vld [vmem:[#allocation2 + $0x8] sm:$0xff]
        %v1708 = vld [vmem:[#allocation2 + $0x10] sm:$0xff]
        %v1709 = vld [vmem:[#allocation2 + $0x18] sm:$0xff]
        %v1710 = vld [vmem:[#allocation2 + $0x20] sm:$0xff]
        %v1711 = vld [vmem:[#allocation2 + $0x30] sm:$0xff]
        %v1712 = vld [vmem:[#allocation2 + $0x38] sm:$0xff]
        %v1713 = vld [vmem:[#allocation2 + $0x40] sm:$0xff]
        %v1714 = vld [vmem:[#allocation2 + $0x48] sm:$0xff]
        %v1715 = vld [vmem:[#allocation2 + $0x50] sm:$0xff]
        %v1716 = vld [vmem:[#allocation2 + $0x60] sm:$0xff]
        %v1717 = vld [vmem:[#allocation2 + $0x68] sm:$0xff]
        %v1718 = vld [vmem:[#allocation2 + $0x70] sm:$0xff]
        %v1719 = vld [vmem:[#allocation2 + $0x78] sm:$0xff]
        %v1720 = vld [vmem:[#allocation2 + $0x80] sm:$0xff]
        %v1721 = vld [vmem:[#allocation2 + $0x90] sm:$0xff]
        %v1722 = vld [vmem:[#allocation2 + $0x98] sm:$0xff]
        %v1723 = vld [vmem:[#allocation2 + $0xa0] sm:$0xff]
        %v1724 = vld [vmem:[#allocation2 + $0xa8] sm:$0xff]
        %v1725 = vld [vmem:[#allocation2 + $0xb0] sm:$0xff]
        %v1726 = vld [vmem:[#allocation2 + $0x8] sm:$0xff]
        %v1727 = vld [vmem:[#allocation2 + $0x10] sm:$0xff]
        %v1728 = vld [vmem:[#allocation2 + $0x18] sm:$0xff]
        %v1729 = vld [vmem:[#allocation2 + $0x20] sm:$0xff]
        %v1730 = vld [vmem:[#allocation2 + $0x28] sm:$0xff]
        %v1731 = vld [vmem:[#allocation2 + $0x38] sm:$0xff]
        %v1732 = vld [vmem:[#allocation2 + $0x40] sm:$0xff]
        %v1733 = vld [vmem:[#allocation2 + $0x48] sm:$0xff]
        %v1734 = vld [vmem:[#allocation2 + $0x50] sm:$0xff]
        %v1735 = vld [vmem:[#allocation2 + $0x58] sm:$0xff]
        %v1736 = vld [vmem:[#allocation2 + $0x68] sm:$0xff]
        %v1737 = vld [vmem:[#allocation2 + $0x70] sm:$0xff]
        %v1738 = vld [vmem:[#allocation2 + $0x78] sm:$0xff]
        %v1739 = vld [vmem:[#allocation2 + $0x80] sm:$0xff]
        %v1740 = vld [vmem:[#allocation2 + $0x88] sm:$0xff]
        %v1741 = vld [vmem:[#allocation2 + $0x98] sm:$0xff]
        %v1742 = vld [vmem:[#allocation2 + $0xa0] sm:$0xff]
        %v1743 = vld [vmem:[#allocation2 + $0xa8] sm:$0xff]
        %v1744 = vld [vmem:[#allocation2 + $0xb0] sm:$0xff]
        %v1745 = vld [vmem:[#allocation2 + $0xb8] sm:$0xff]
        %1762 = vrot.lane.b32.xlu0 %v1674, 126
        %v1763 = vpop.permute.xlu0 %1762
        %1764 = vrot.lane.b32.xlu0 %v1675, 126
        %v1765 = vpop.permute.xlu0 %1764
        %1766 = vrot.lane.b32.xlu0 %v1676, 126
        %v1767 = vpop.permute.xlu0 %1766
        %1768 = vrot.lane.b32.xlu0 %v1677, 126
        %v1769 = vpop.permute.xlu0 %1768
        %1770 = vrot.lane.b32.xlu0 %v1678, 126
        %v1771 = vpop.permute.xlu0 %1770
        %1772 = vrot.lane.b32.xlu0 %v1679, 126
        %v1773 = vpop.permute.xlu0 %1772
        %1774 = vrot.lane.b32.xlu0 %v1680, 126
        %v1775 = vpop.permute.xlu0 %1774
        %1776 = vrot.lane.b32.xlu0 %v1681, 126
        %v1777 = vpop.permute.xlu0 %1776
        %1778 = vrot.lane.b32.xlu0 %v1682, 126
        %v1779 = vpop.permute.xlu0 %1778
        %1780 = vrot.lane.b32.xlu0 %v1683, 126
        %v1781 = vpop.permute.xlu0 %1780
        %1782 = vrot.lane.b32.xlu0 %v1684, 126
        %v1783 = vpop.permute.xlu0 %1782
        %1784 = vrot.lane.b32.xlu0 %v1685, 126
        %v1785 = vpop.permute.xlu0 %1784
        %1786 = vrot.lane.b32.xlu0 %v1686, 126
        %v1787 = vpop.permute.xlu0 %1786
        %1788 = vrot.lane.b32.xlu0 %v1687, 126
        %v1789 = vpop.permute.xlu0 %1788
        %1790 = vrot.lane.b32.xlu0 %v1688, 126
        %v1791 = vpop.permute.xlu0 %1790
        %1792 = vrot.lane.b32.xlu0 %v1689, 126
        %v1793 = vpop.permute.xlu0 %1792
        %v1794 = vsel %vm1040, %v1763, %v1765
        %v1795 = vsel %vm1040, %v1765, %v1767
        %v1796 = vsel %vm1040, %v1767, %v1769
        %v1797 = vsel %vm1040, %v1771, %v1773
        %v1798 = vsel %vm1040, %v1773, %v1775
        %v1799 = vsel %vm1040, %v1775, %v1777
        %v1800 = vsel %vm1040, %v1779, %v1781
        %v1801 = vsel %vm1040, %v1781, %v1783
        %v1802 = vsel %vm1040, %v1783, %v1785
        %v1803 = vsel %vm1040, %v1787, %v1789
        %v1804 = vsel %vm1040, %v1789, %v1791
        %v1805 = vsel %vm1040, %v1791, %v1793
        %1826 = vrot.lane.b32.xlu0 %v1726, 124
        %v1827 = vpop.permute.xlu0 %1826
        %1828 = vrot.lane.b32.xlu0 %v1727, 124
        %v1829 = vpop.permute.xlu0 %1828
        %1830 = vrot.lane.b32.xlu0 %v1728, 124
        %v1831 = vpop.permute.xlu0 %1830
        %1832 = vrot.lane.b32.xlu0 %v1729, 124
        %v1833 = vpop.permute.xlu0 %1832
        %1834 = vrot.lane.b32.xlu0 %v1730, 124
        %v1835 = vpop.permute.xlu0 %1834
        %1836 = vrot.lane.b32.xlu0 %v1731, 124
        %v1837 = vpop.permute.xlu0 %1836
        %1838 = vrot.lane.b32.xlu0 %v1732, 124
        %v1839 = vpop.permute.xlu0 %1838
        %1840 = vrot.lane.b32.xlu0 %v1733, 124
        %v1841 = vpop.permute.xlu0 %1840
        %1842 = vrot.lane.b32.xlu0 %v1734, 124
        %v1843 = vpop.permute.xlu0 %1842
        %1844 = vrot.lane.b32.xlu0 %v1735, 124
        %v1845 = vpop.permute.xlu0 %1844
        %1846 = vrot.lane.b32.xlu0 %v1736, 124
        %v1847 = vpop.permute.xlu0 %1846
        %1848 = vrot.lane.b32.xlu0 %v1737, 124
        %v1849 = vpop.permute.xlu0 %1848
        %1850 = vrot.lane.b32.xlu0 %v1738, 124
        %v1851 = vpop.permute.xlu0 %1850
        %1852 = vrot.lane.b32.xlu0 %v1739, 124
        %v1853 = vpop.permute.xlu0 %1852
        %1854 = vrot.lane.b32.xlu0 %v1740, 124
        %v1855 = vpop.permute.xlu0 %1854
        %1856 = vrot.lane.b32.xlu0 %v1741, 124
        %v1857 = vpop.permute.xlu0 %1856
        %1858 = vrot.lane.b32.xlu0 %v1742, 124
        %v1859 = vpop.permute.xlu0 %1858
        %1860 = vrot.lane.b32.xlu0 %v1743, 124
        %v1861 = vpop.permute.xlu0 %1860
        %1862 = vrot.lane.b32.xlu0 %v1744, 124
        %v1863 = vpop.permute.xlu0 %1862
        %1864 = vrot.lane.b32.xlu0 %v1745, 124
        %v1865 = vpop.permute.xlu0 %1864
        %vm1866 = vcmask 1014784
        %v1867 = vsel %vm1866, %v1827, %v1829
        %v1868 = vsel %vm1866, %v1829, %v1831
        %v1869 = vsel %vm1866, %v1831, %v1833
        %v1870 = vsel %vm1866, %v1833, %v1835
        %v1871 = vsel %vm1866, %v1837, %v1839
        %v1872 = vsel %vm1866, %v1839, %v1841
        %v1873 = vsel %vm1866, %v1841, %v1843
        %v1874 = vsel %vm1866, %v1843, %v1845
        %v1875 = vsel %vm1866, %v1847, %v1849
        %v1876 = vsel %vm1866, %v1849, %v1851
        %v1877 = vsel %vm1866, %v1851, %v1853
        %v1878 = vsel %vm1866, %v1853, %v1855
        %v1879 = vsel %vm1866, %v1857, %v1859
        %v1880 = vsel %vm1866, %v1859, %v1861
        %v1881 = vsel %vm1866, %v1861, %v1863
        %v1882 = vsel %vm1866, %v1863, %v1865
        %s1883 = scalar_lea.vmem %s2, 64
        %v1884 = vld [vmem:[%s1883] sm:$0xff]
        %v1885 = vld [vmem:[%s1883 + $0x8] sm:$0xff]
        %v1886 = vld [vmem:[%s1883 + $0x10] sm:$0xff]
        %v1887 = vld [vmem:[%s1883 + $0x18] sm:$0xff]
        %v1888 = vld [vmem:[%s1883 + $0x20] sm:$0xff]
        %v1889 = vld [vmem:[%s1883 + $0x28] sm:$0xff]
        %v1890 = vld [vmem:[%s1883 + $0x30] sm:$0xff]
        %v1891 = vld [vmem:[%s1883 + $0x38] sm:$0xff]
        %s1892 = scalar_lea.vmem %s4, 128
        %v1893 = vld [vmem:[%s1892] sm:$0xff]
        %v1894 = vld [vmem:[%s1892 + $0x8] sm:$0xff]
        %v1895 = vld [vmem:[%s1892 + $0x10] sm:$0xff]
        %v1896 = vld [vmem:[%s1892 + $0x18] sm:$0xff]
        %v1897 = vld [vmem:[%s1892 + $0x20] sm:$0xff]
        %v1898 = vld [vmem:[%s1892 + $0x28] sm:$0xff]
        %v1899 = vld [vmem:[%s1892 + $0x30] sm:$0xff]
        %v1900 = vld [vmem:[%s1892 + $0x38] sm:$0xff]
        %1902 = vset.pattern.permute.xlu0 0
        %1903 = vperm.xlu0 %1902, %v1893
        %v1904 = vpop.permute.xlu0 %1903
        %1907 = vset.pattern.permute.xlu0 0
        %1908 = vperm.xlu0 %1907, %v1894
        %v1909 = vpop.permute.xlu0 %1908
        %1912 = vset.pattern.permute.xlu0 0
        %1913 = vperm.xlu0 %1912, %v1895
        %v1914 = vpop.permute.xlu0 %1913
        %1917 = vset.pattern.permute.xlu0 0
        %1918 = vperm.xlu0 %1917, %v1896
        %v1919 = vpop.permute.xlu0 %1918
        %1922 = vset.pattern.permute.xlu0 0
        %1923 = vperm.xlu0 %1922, %v1897
        %v1924 = vpop.permute.xlu0 %1923
        %1927 = vset.pattern.permute.xlu0 0
        %1928 = vperm.xlu0 %1927, %v1898
        %v1929 = vpop.permute.xlu0 %1928
        %1932 = vset.pattern.permute.xlu0 0
        %1933 = vperm.xlu0 %1932, %v1899
        %v1934 = vpop.permute.xlu0 %1933
        %1937 = vset.pattern.permute.xlu0 0
        %1938 = vperm.xlu0 %1937, %v1900
        %v1939 = vpop.permute.xlu0 %1938
        %v1949 = vunpack.c.l.b16 %v1884
        %v1950 = vunpack.c.h.b16 %v1884
        %v1951 = vunpack.c.l.b16 %v1885
        %v1952 = vunpack.c.h.b16 %v1885
        %v1953 = vunpack.c.l.b16 %v1886
        %v1954 = vunpack.c.h.b16 %v1886
        %v1955 = vunpack.c.l.b16 %v1887
        %v1956 = vunpack.c.h.b16 %v1887
        %v1957 = vunpack.c.l.b16 %v1888
        %v1958 = vunpack.c.h.b16 %v1888
        %v1959 = vunpack.c.l.b16 %v1889
        %v1960 = vunpack.c.h.b16 %v1889
        %v1961 = vunpack.c.l.b16 %v1890
        %v1962 = vunpack.c.h.b16 %v1890
        %v1963 = vunpack.c.l.b16 %v1891
        %v1964 = vunpack.c.h.b16 %v1891
        %v1965 = vpack.c.b16 %v1951, %v1949
        %v1966 = vpack.c.b16 %v1952, %v1950
        %v1967 = vpack.c.b16 %v1955, %v1953
        %v1968 = vpack.c.b16 %v1956, %v1954
        %v1969 = vpack.c.b16 %v1959, %v1957
        %v1970 = vpack.c.b16 %v1960, %v1958
        %v1971 = vpack.c.b16 %v1963, %v1961
        %v1972 = vpack.c.b16 %v1964, %v1962
        %1997 = vrot.lane.b32.xlu0 %v1706, 2
        %v1998 = vpop.permute.xlu0 %1997
        %1999 = vrot.lane.b32.xlu0 %v1707, 2
        %v2000 = vpop.permute.xlu0 %1999
        %2001 = vrot.lane.b32.xlu0 %v1708, 2
        %v2002 = vpop.permute.xlu0 %2001
        %2003 = vrot.lane.b32.xlu0 %v1709, 2
        %v2004 = vpop.permute.xlu0 %2003
        %2005 = vrot.lane.b32.xlu0 %v1710, 2
        %v2006 = vpop.permute.xlu0 %2005
        %2007 = vrot.lane.b32.xlu0 %v1711, 2
        %v2008 = vpop.permute.xlu0 %2007
        %2009 = vrot.lane.b32.xlu0 %v1712, 2
        %v2010 = vpop.permute.xlu0 %2009
        %2011 = vrot.lane.b32.xlu0 %v1713, 2
        %v2012 = vpop.permute.xlu0 %2011
        %2013 = vrot.lane.b32.xlu0 %v1714, 2
        %v2014 = vpop.permute.xlu0 %2013
        %2015 = vrot.lane.b32.xlu0 %v1715, 2
        %v2016 = vpop.permute.xlu0 %2015
        %2017 = vrot.lane.b32.xlu0 %v1716, 2
        %v2018 = vpop.permute.xlu0 %2017
        %2019 = vrot.lane.b32.xlu0 %v1717, 2
        %v2020 = vpop.permute.xlu0 %2019
        %2021 = vrot.lane.b32.xlu0 %v1718, 2
        %v2022 = vpop.permute.xlu0 %2021
        %2023 = vrot.lane.b32.xlu0 %v1719, 2
        %v2024 = vpop.permute.xlu0 %2023
        %2025 = vrot.lane.b32.xlu0 %v1720, 2
        %v2026 = vpop.permute.xlu0 %2025
        %2027 = vrot.lane.b32.xlu0 %v1721, 2
        %v2028 = vpop.permute.xlu0 %2027
        %2029 = vrot.lane.b32.xlu0 %v1722, 2
        %v2030 = vpop.permute.xlu0 %2029
        %2031 = vrot.lane.b32.xlu0 %v1723, 2
        %v2032 = vpop.permute.xlu0 %2031
        %2033 = vrot.lane.b32.xlu0 %v1724, 2
        %v2034 = vpop.permute.xlu0 %2033
        %2035 = vrot.lane.b32.xlu0 %v1725, 2
        %v2036 = vpop.permute.xlu0 %2035
        %2037 = vrot.lane.b32.xlu0 %v1763, 2
        %v2038 = vpop.permute.xlu0 %2037
        %2039 = vrot.lane.b32.xlu0 %v1794, 2
        %v2040 = vpop.permute.xlu0 %2039
        %2041 = vrot.lane.b32.xlu0 %v1795, 2
        %v2042 = vpop.permute.xlu0 %2041
        %2043 = vrot.lane.b32.xlu0 %v1796, 2
        %v2044 = vpop.permute.xlu0 %2043
        %2045 = vrot.lane.b32.xlu0 %v1769, 2
        %v2046 = vpop.permute.xlu0 %2045
        %2047 = vrot.lane.b32.xlu0 %v1771, 2
        %v2048 = vpop.permute.xlu0 %2047
        %2049 = vrot.lane.b32.xlu0 %v1797, 2
        %v2050 = vpop.permute.xlu0 %2049
        %2051 = vrot.lane.b32.xlu0 %v1798, 2
        %v2052 = vpop.permute.xlu0 %2051
        %2053 = vrot.lane.b32.xlu0 %v1799, 2
        %v2054 = vpop.permute.xlu0 %2053
        %2055 = vrot.lane.b32.xlu0 %v1777, 2
        %v2056 = vpop.permute.xlu0 %2055
        %2057 = vrot.lane.b32.xlu0 %v1779, 2
        %v2058 = vpop.permute.xlu0 %2057
        %2059 = vrot.lane.b32.xlu0 %v1800, 2
        %v2060 = vpop.permute.xlu0 %2059
        %2061 = vrot.lane.b32.xlu0 %v1801, 2
        %v2062 = vpop.permute.xlu0 %2061
        %2063 = vrot.lane.b32.xlu0 %v1802, 2
        %v2064 = vpop.permute.xlu0 %2063
        %2065 = vrot.lane.b32.xlu0 %v1785, 2
        %v2066 = vpop.permute.xlu0 %2065
        %2067 = vrot.lane.b32.xlu0 %v1787, 2
        %v2068 = vpop.permute.xlu0 %2067
        %2069 = vrot.lane.b32.xlu0 %v1803, 2
        %v2070 = vpop.permute.xlu0 %2069
        %2071 = vrot.lane.b32.xlu0 %v1804, 2
        %v2072 = vpop.permute.xlu0 %2071
        %2073 = vrot.lane.b32.xlu0 %v1805, 2
        %v2074 = vpop.permute.xlu0 %2073
        %2075 = vrot.lane.b32.xlu0 %v1793, 2
        %v2076 = vpop.permute.xlu0 %2075
        %2077 = vrot.lane.b32.xlu0 %v1827, 2
        %v2078 = vpop.permute.xlu0 %2077
        %2079 = vrot.lane.b32.xlu0 %v1867, 2
        %v2080 = vpop.permute.xlu0 %2079
        %2081 = vrot.lane.b32.xlu0 %v1868, 2
        %v2082 = vpop.permute.xlu0 %2081
        %2083 = vrot.lane.b32.xlu0 %v1869, 2
        %v2084 = vpop.permute.xlu0 %2083
        %2085 = vrot.lane.b32.xlu0 %v1870, 2
        %v2086 = vpop.permute.xlu0 %2085
        %2087 = vrot.lane.b32.xlu0 %v1837, 2
        %v2088 = vpop.permute.xlu0 %2087
        %2089 = vrot.lane.b32.xlu0 %v1871, 2
        %v2090 = vpop.permute.xlu0 %2089
        %2091 = vrot.lane.b32.xlu0 %v1872, 2
        %v2092 = vpop.permute.xlu0 %2091
        %2093 = vrot.lane.b32.xlu0 %v1873, 2
        %v2094 = vpop.permute.xlu0 %2093
        %2095 = vrot.lane.b32.xlu0 %v1874, 2
        %v2096 = vpop.permute.xlu0 %2095
        %2097 = vrot.lane.b32.xlu0 %v1847, 2
        %v2098 = vpop.permute.xlu0 %2097
        %2099 = vrot.lane.b32.xlu0 %v1875, 2
        %v2100 = vpop.permute.xlu0 %2099
        %2101 = vrot.lane.b32.xlu0 %v1876, 2
        %v2102 = vpop.permute.xlu0 %2101
        %2103 = vrot.lane.b32.xlu0 %v1877, 2
        %v2104 = vpop.permute.xlu0 %2103
        %2105 = vrot.lane.b32.xlu0 %v1878, 2
        %v2106 = vpop.permute.xlu0 %2105
        %2107 = vrot.lane.b32.xlu0 %v1857, 2
        %v2108 = vpop.permute.xlu0 %2107
        %2109 = vrot.lane.b32.xlu0 %v1879, 2
        %v2110 = vpop.permute.xlu0 %2109
        %2111 = vrot.lane.b32.xlu0 %v1880, 2
        %v2112 = vpop.permute.xlu0 %2111
        %2113 = vrot.lane.b32.xlu0 %v1881, 2
        %v2114 = vpop.permute.xlu0 %2113
        %2115 = vrot.lane.b32.xlu0 %v1882, 2
        %v2116 = vpop.permute.xlu0 %2115
        %vm2117 = vcmask 15360
        %v2118 = vsel %vm2117, %v1998, %v2000
        %v2119 = vsel %vm2117, %v2000, %v2002
        %v2120 = vsel %vm2117, %v2002, %v2004
        %v2121 = vsel %vm2117, %v2004, %v2006
        %v2122 = vsel %vm2117, %v2008, %v2010
        %v2123 = vsel %vm2117, %v2010, %v2012
        %v2124 = vsel %vm2117, %v2012, %v2014
        %v2125 = vsel %vm2117, %v2014, %v2016
        %v2126 = vsel %vm2117, %v2018, %v2020
        %v2127 = vsel %vm2117, %v2020, %v2022
        %v2128 = vsel %vm2117, %v2022, %v2024
        %v2129 = vsel %vm2117, %v2024, %v2026
        %v2130 = vsel %vm2117, %v2028, %v2030
        %v2131 = vsel %vm2117, %v2030, %v2032
        %v2132 = vsel %vm2117, %v2032, %v2034
        %v2133 = vsel %vm2117, %v2034, %v2036
        %v2134 = vsel %vm2117, %v2038, %v2040
        %v2135 = vsel %vm2117, %v2040, %v2042
        %v2136 = vsel %vm2117, %v2042, %v2044
        %v2137 = vsel %vm2117, %v2044, %v2046
        %v2138 = vsel %vm2117, %v2048, %v2050
        %v2139 = vsel %vm2117, %v2050, %v2052
        %v2140 = vsel %vm2117, %v2052, %v2054
        %v2141 = vsel %vm2117, %v2054, %v2056
        %v2142 = vsel %vm2117, %v2058, %v2060
        %v2143 = vsel %vm2117, %v2060, %v2062
        %v2144 = vsel %vm2117, %v2062, %v2064
        %v2145 = vsel %vm2117, %v2064, %v2066
        %v2146 = vsel %vm2117, %v2068, %v2070
        %v2147 = vsel %vm2117, %v2070, %v2072
        %v2148 = vsel %vm2117, %v2072, %v2074
        %v2149 = vsel %vm2117, %v2074, %v2076
        %v2150 = vsel %vm2117, %v2078, %v2080
        %v2151 = vsel %vm2117, %v2080, %v2082
        %v2152 = vsel %vm2117, %v2082, %v2084
        %v2153 = vsel %vm2117, %v2084, %v2086
        %v2154 = vsel %vm2117, %v2088, %v2090
        %v2155 = vsel %vm2117, %v2090, %v2092
        %v2156 = vsel %vm2117, %v2092, %v2094
        %v2157 = vsel %vm2117, %v2094, %v2096
        %v2158 = vsel %vm2117, %v2098, %v2100
        %v2159 = vsel %vm2117, %v2100, %v2102
        %v2160 = vsel %vm2117, %v2102, %v2104
        %v2161 = vsel %vm2117, %v2104, %v2106
        %v2162 = vsel %vm2117, %v2108, %v2110
        %v2163 = vsel %vm2117, %v2110, %v2112
        %v2164 = vsel %vm2117, %v2112, %v2114
        %v2165 = vsel %vm2117, %v2114, %v2116
        %v2215 = vsel %vm1387, %v1966, 0
        %v2218 = vsel %vm1387, %v1968, 0
        %v2221 = vsel %vm1387, %v1970, 0
        %v2224 = vsel %vm1387, %v1972, 0
        %2226 = vmatprep.subr.bf16.mxu0 %v2119
        %2227 = vmatpush1.bf16.msra.mxu0 %v2118
        %2228 = vmatprep.subr.bf16.mxu0 %v2123
        %2229 = vmatpush1.bf16.msra.mxu0 %v2122
        %2230 = vmatprep.subr.bf16.mxu0 %v2127
        %2231 = vmatpush1.bf16.msra.mxu0 %v2126
        %2232 = vmatprep.subr.bf16.mxu0 %v2131
        %2233 = vmatpush1.bf16.msra.mxu0 %v2130
        %2234 = vmatprep.subr.bf16.mxu0 %v2135
        %2235 = vmatpush1.bf16.msra.mxu0 %v2134
        %2236 = vmatprep.subr.bf16.mxu0 %v2139
        %2237 = vmatpush1.bf16.msra.mxu0 %v2138
        %2238 = vmatprep.subr.bf16.mxu0 %v2143
        %2239 = vmatpush1.bf16.msra.mxu0 %v2142
        %2240 = vmatprep.subr.bf16.mxu0 %v2147
        %2241 = vmatpush1.bf16.msra.mxu0 %v2146
        %2242 = vmatprep.subr.bf16.mxu0 %v2151
        %2243 = vmatpush1.bf16.msra.mxu0 %v2150
        %2244 = vmatprep.subr.bf16.mxu0 %v2155
        %2245 = vmatpush1.bf16.msra.mxu0 %v2154
        %2246 = vmatprep.subr.bf16.mxu0 %v2159
        %2247 = vmatpush1.bf16.msra.mxu0 %v2158
        %2248 = vmatprep.subr.bf16.mxu0 %v2163
        %2249 = vmatpush1.bf16.msra.mxu0 %v2162
        %2250 = vmatprep.subr.bf16.mxu0 0
        %2251 = vmatpush1.bf16.msra.mxu0 0
        %2252 = vmatprep.subr.bf16.mxu0 0
        %2253 = vmatpush1.bf16.msra.mxu0 0
        %2254 = vmatprep.subr.bf16.mxu0 0
        %2255 = vmatpush1.bf16.msra.mxu0 0
        %2256 = vmatprep.subr.bf16.mxu0 0
        %2257 = vmatpush1.bf16.msra.mxu0 0
        %2258 = vmatprep.mubr.bf16.mxu0 %v2215
        %2259 = vmatmul.mubr.bf16.gmra.mrb[0].mxu0 %v1965
        %v2260 = vpop.f32.mrb[0].mxu0
        %v2261 = vadd.f32 %v1904, %v2260
        %v2262 = vpop.f32.mrb[0].mxu0
        %v2263 = vadd.f32 %v1904, %v2262
        %v2264 = vpop.f32.mrb[0].mxu0
        %v2265 = vadd.f32 %v1909, %v2264
        %v2266 = vpop.f32.mrb[0].mxu0
        %v2267 = vadd.f32 %v1909, %v2266
        %2268 = vmatprep.mubr.bf16.mxu0 %v2218
        %2269 = vmatmul.mubr.bf16.gmra.mrb[0].mxu0 %v1967
        %v2270 = vpop.f32.mrb[0].mxu0
        %v2271 = vadd.f32 %v1914, %v2270
        %v2272 = vpop.f32.mrb[0].mxu0
        %v2273 = vadd.f32 %v1914, %v2272
        %v2274 = vpop.f32.mrb[0].mxu0
        %v2275 = vadd.f32 %v1919, %v2274
        %v2276 = vpop.f32.mrb[0].mxu0
        %v2277 = vadd.f32 %v1919, %v2276
        %2278 = vmatprep.mubr.bf16.mxu0 %v2221
        %2279 = vmatmul.mubr.bf16.gmra.mrb[0].mxu0 %v1969
        %v2280 = vpop.f32.mrb[0].mxu0
        %v2281 = vadd.f32 %v1924, %v2280
        %v2282 = vpop.f32.mrb[0].mxu0
        %v2283 = vadd.f32 %v1924, %v2282
        %v2284 = vpop.f32.mrb[0].mxu0
        %v2285 = vadd.f32 %v1929, %v2284
        %v2286 = vpop.f32.mrb[0].mxu0
        %v2287 = vadd.f32 %v1929, %v2286
        %2288 = vmatprep.mubr.bf16.mxu0 %v2224
        %2289 = vmatmul.mubr.bf16.gmra.mrb[0].mxu0 %v1971
        %v2290 = vpop.f32.mrb[0].mxu0
        %v2291 = vadd.f32 %v1934, %v2290
        %v2292 = vpop.f32.mrb[0].mxu0
        %v2293 = vadd.f32 %v1934, %v2292
        %v2294 = vpop.f32.mrb[0].mxu0
        %v2295 = vadd.f32 %v1939, %v2294
        %v2296 = vpop.f32.mrb[0].mxu0
        %v2297 = vadd.f32 %v1939, %v2296
        %2298 = vdwg.mxu0
        %2299 = vmatprep.subr.bf16.mxu0 %v2121
        %2300 = vmatpush1.bf16.msra.mxu0 %v2120
        %2301 = vmatprep.subr.bf16.mxu0 %v2125
        %2302 = vmatpush1.bf16.msra.mxu0 %v2124
        %2303 = vmatprep.subr.bf16.mxu0 %v2129
        %2304 = vmatpush1.bf16.msra.mxu0 %v2128
        %2305 = vmatprep.subr.bf16.mxu0 %v2133
        %2306 = vmatpush1.bf16.msra.mxu0 %v2132
        %2307 = vmatprep.subr.bf16.mxu0 %v2137
        %2308 = vmatpush1.bf16.msra.mxu0 %v2136
        %2309 = vmatprep.subr.bf16.mxu0 %v2141
        %2310 = vmatpush1.bf16.msra.mxu0 %v2140
        %2311 = vmatprep.subr.bf16.mxu0 %v2145
        %2312 = vmatpush1.bf16.msra.mxu0 %v2144
        %2313 = vmatprep.subr.bf16.mxu0 %v2149
        %2314 = vmatpush1.bf16.msra.mxu0 %v2148
        %2315 = vmatprep.subr.bf16.mxu0 %v2153
        %2316 = vmatpush1.bf16.msra.mxu0 %v2152
        %2317 = vmatprep.subr.bf16.mxu0 %v2157
        %2318 = vmatpush1.bf16.msra.mxu0 %v2156
        %2319 = vmatprep.subr.bf16.mxu0 %v2161
        %2320 = vmatpush1.bf16.msra.mxu0 %v2160
        %2321 = vmatprep.subr.bf16.mxu0 %v2165
        %2322 = vmatpush1.bf16.msra.mxu0 %v2164
        %2323 = vmatprep.subr.bf16.mxu0 0
        %2324 = vmatpush1.bf16.msra.mxu0 0
        %2325 = vmatprep.subr.bf16.mxu0 0
        %2326 = vmatpush1.bf16.msra.mxu0 0
        %2327 = vmatprep.subr.bf16.mxu0 0
        %2328 = vmatpush1.bf16.msra.mxu0 0
        %2329 = vmatprep.subr.bf16.mxu0 0
        %2330 = vmatpush1.bf16.msra.mxu0 0
        %2331 = vmatprep.mubr.bf16.mxu0 %v2215
        %2332 = vmatmul.mubr.bf16.gmra.mrb[0].mxu0 %v1965
        %v2333 = vpop.f32.mrb[0].mxu0
        %v2334 = vadd.f32 %v1904, %v2333
        %v2335 = vpop.f32.mrb[0].mxu0
        %v2336 = vadd.f32 %v1904, %v2335
        %v2337 = vpop.f32.mrb[0].mxu0
        %v2338 = vadd.f32 %v1909, %v2337
        %v2339 = vpop.f32.mrb[0].mxu0
        %v2340 = vadd.f32 %v1909, %v2339
        %2341 = vmatprep.mubr.bf16.mxu0 %v2218
        %2342 = vmatmul.mubr.bf16.gmra.mrb[0].mxu0 %v1967
        %v2343 = vpop.f32.mrb[0].mxu0
        %v2344 = vadd.f32 %v1914, %v2343
        %v2345 = vpop.f32.mrb[0].mxu0
        %v2346 = vadd.f32 %v1914, %v2345
        %v2347 = vpop.f32.mrb[0].mxu0
        %v2348 = vadd.f32 %v1919, %v2347
        %v2349 = vpop.f32.mrb[0].mxu0
        %v2350 = vadd.f32 %v1919, %v2349
        %2351 = vmatprep.mubr.bf16.mxu0 %v2221
        %2352 = vmatmul.mubr.bf16.gmra.mrb[0].mxu0 %v1969
        %v2353 = vpop.f32.mrb[0].mxu0
        %v2354 = vadd.f32 %v1924, %v2353
        %v2355 = vpop.f32.mrb[0].mxu0
        %v2356 = vadd.f32 %v1924, %v2355
        %v2357 = vpop.f32.mrb[0].mxu0
        %v2358 = vadd.f32 %v1929, %v2357
        %v2359 = vpop.f32.mrb[0].mxu0
        %v2360 = vadd.f32 %v1929, %v2359
        %2361 = vmatprep.mubr.bf16.mxu0 %v2224
        %2362 = vmatmul.mubr.bf16.gmra.mrb[0].mxu0 %v1971
        %v2363 = vpop.f32.mrb[0].mxu0
        %v2364 = vadd.f32 %v1934, %v2363
        %v2365 = vpop.f32.mrb[0].mxu0
        %v2366 = vadd.f32 %v1934, %v2365
        %v2367 = vpop.f32.mrb[0].mxu0
        %v2368 = vadd.f32 %v1939, %v2367
        %v2369 = vpop.f32.mrb[0].mxu0
        %v2370 = vadd.f32 %v1939, %v2369
        %2371 = vdwg.mxu0
        %vm2372 = vcmp.ge.f32.partialorder %v2261, 0.0
        %vm2373 = vcmp.ge.f32.partialorder %v2263, 0.0
        %vm2374 = vcmp.ge.f32.partialorder %v2334, 0.0
        %vm2375 = vcmp.ge.f32.partialorder %v2336, 0.0
        %vm2376 = vcmp.ge.f32.partialorder %v2265, 0.0
        %vm2377 = vcmp.ge.f32.partialorder %v2267, 0.0
        %vm2378 = vcmp.ge.f32.partialorder %v2338, 0.0
        %vm2379 = vcmp.ge.f32.partialorder %v2340, 0.0
        %vm2380 = vcmp.ge.f32.partialorder %v2271, 0.0
        %vm2381 = vcmp.ge.f32.partialorder %v2273, 0.0
        %vm2382 = vcmp.ge.f32.partialorder %v2344, 0.0
        %vm2383 = vcmp.ge.f32.partialorder %v2346, 0.0
        %vm2384 = vcmp.ge.f32.partialorder %v2275, 0.0
        %vm2385 = vcmp.ge.f32.partialorder %v2277, 0.0
        %vm2386 = vcmp.ge.f32.partialorder %v2348, 0.0
        %vm2387 = vcmp.ge.f32.partialorder %v2350, 0.0
        %vm2388 = vcmp.ge.f32.partialorder %v2281, 0.0
        %vm2389 = vcmp.ge.f32.partialorder %v2283, 0.0
        %vm2390 = vcmp.ge.f32.partialorder %v2354, 0.0
        %vm2391 = vcmp.ge.f32.partialorder %v2356, 0.0
        %vm2392 = vcmp.ge.f32.partialorder %v2285, 0.0
        %vm2393 = vcmp.ge.f32.partialorder %v2287, 0.0
        %vm2394 = vcmp.ge.f32.partialorder %v2358, 0.0
        %vm2395 = vcmp.ge.f32.partialorder %v2360, 0.0
        %vm2396 = vcmp.ge.f32.partialorder %v2291, 0.0
        %vm2397 = vcmp.ge.f32.partialorder %v2293, 0.0
        %vm2398 = vcmp.ge.f32.partialorder %v2364, 0.0
        %vm2399 = vcmp.ge.f32.partialorder %v2366, 0.0
        %vm2400 = vcmp.ge.f32.partialorder %v2295, 0.0
        %vm2401 = vcmp.ge.f32.partialorder %v2297, 0.0
        %vm2402 = vcmp.ge.f32.partialorder %v2368, 0.0
        %vm2403 = vcmp.ge.f32.partialorder %v2370, 0.0
        %v2404 = vmul.f32 %v2261, 0.2
        %v2405 = vmul.f32 %v2263, 0.2
        %v2406 = vmul.f32 %v2334, 0.2
        %v2407 = vmul.f32 %v2336, 0.2
        %v2408 = vmul.f32 %v2265, 0.2
        %v2409 = vmul.f32 %v2267, 0.2
        %v2410 = vmul.f32 %v2338, 0.2
        %v2411 = vmul.f32 %v2340, 0.2
        %v2412 = vmul.f32 %v2271, 0.2
        %v2413 = vmul.f32 %v2273, 0.2
        %v2414 = vmul.f32 %v2344, 0.2
        %v2415 = vmul.f32 %v2346, 0.2
        %v2416 = vmul.f32 %v2275, 0.2
        %v2417 = vmul.f32 %v2277, 0.2
        %v2418 = vmul.f32 %v2348, 0.2
        %v2419 = vmul.f32 %v2350, 0.2
        %v2420 = vmul.f32 %v2281, 0.2
        %v2421 = vmul.f32 %v2283, 0.2
        %v2422 = vmul.f32 %v2354, 0.2
        %v2423 = vmul.f32 %v2356, 0.2
        %v2424 = vmul.f32 %v2285, 0.2
        %v2425 = vmul.f32 %v2287, 0.2
        %v2426 = vmul.f32 %v2358, 0.2
        %v2427 = vmul.f32 %v2360, 0.2
        %v2428 = vmul.f32 %v2291, 0.2
        %v2429 = vmul.f32 %v2293, 0.2
        %v2430 = vmul.f32 %v2364, 0.2
        %v2431 = vmul.f32 %v2366, 0.2
        %v2432 = vmul.f32 %v2295, 0.2
        %v2433 = vmul.f32 %v2297, 0.2
        %v2434 = vmul.f32 %v2368, 0.2
        %v2435 = vmul.f32 %v2370, 0.2
        %v2436 = vsel %vm2372, %v2261, %v2404
        %v2437 = vsel %vm2373, %v2263, %v2405
        %v2438 = vsel %vm2374, %v2334, %v2406
        %v2439 = vsel %vm2375, %v2336, %v2407
        %v2440 = vsel %vm2376, %v2265, %v2408
        %v2441 = vsel %vm2377, %v2267, %v2409
        %v2442 = vsel %vm2378, %v2338, %v2410
        %v2443 = vsel %vm2379, %v2340, %v2411
        %v2444 = vsel %vm2380, %v2271, %v2412
        %v2445 = vsel %vm2381, %v2273, %v2413
        %v2446 = vsel %vm2382, %v2344, %v2414
        %v2447 = vsel %vm2383, %v2346, %v2415
        %v2448 = vsel %vm2384, %v2275, %v2416
        %v2449 = vsel %vm2385, %v2277, %v2417
        %v2450 = vsel %vm2386, %v2348, %v2418
        %v2451 = vsel %vm2387, %v2350, %v2419
        %v2452 = vsel %vm2388, %v2281, %v2420
        %v2453 = vsel %vm2389, %v2283, %v2421
        %v2454 = vsel %vm2390, %v2354, %v2422
        %v2455 = vsel %vm2391, %v2356, %v2423
        %v2456 = vsel %vm2392, %v2285, %v2424
        %v2457 = vsel %vm2393, %v2287, %v2425
        %v2458 = vsel %vm2394, %v2358, %v2426
        %v2459 = vsel %vm2395, %v2360, %v2427
        %v2460 = vsel %vm2396, %v2291, %v2428
        %v2461 = vsel %vm2397, %v2293, %v2429
        %v2462 = vsel %vm2398, %v2364, %v2430
        %v2463 = vsel %vm2399, %v2366, %v2431
        %v2464 = vsel %vm2400, %v2295, %v2432
        %v2465 = vsel %vm2401, %v2297, %v2433
        %v2466 = vsel %vm2402, %v2368, %v2434
        %v2467 = vsel %vm2403, %v2370, %v2435
        %v2468 = vmul.f32 %v2436, %v272
        %v2469 = vmul.f32 %v2437, %v273
        %v2470 = vmul.f32 %v2438, %v274
        %v2471 = vmul.f32 %v2439, %v275
        %v2472 = vmul.f32 %v2440, %v272
        %v2473 = vmul.f32 %v2441, %v273
        %v2474 = vmul.f32 %v2442, %v274
        %v2475 = vmul.f32 %v2443, %v275
        %v2476 = vmul.f32 %v2444, %v272
        %v2477 = vmul.f32 %v2445, %v273
        %v2478 = vmul.f32 %v2446, %v274
        %v2479 = vmul.f32 %v2447, %v275
        %v2480 = vmul.f32 %v2448, %v272
        %v2481 = vmul.f32 %v2449, %v273
        %v2482 = vmul.f32 %v2450, %v274
        %v2483 = vmul.f32 %v2451, %v275
        %v2484 = vmul.f32 %v2452, %v272
        %v2485 = vmul.f32 %v2453, %v273
        %v2486 = vmul.f32 %v2454, %v274
        %v2487 = vmul.f32 %v2455, %v275
        %v2488 = vmul.f32 %v2456, %v272
        %v2489 = vmul.f32 %v2457, %v273
        %v2490 = vmul.f32 %v2458, %v274
        %v2491 = vmul.f32 %v2459, %v275
        %v2492 = vmul.f32 %v2460, %v272
        %v2493 = vmul.f32 %v2461, %v273
        %v2494 = vmul.f32 %v2462, %v274
        %v2495 = vmul.f32 %v2463, %v275
        %v2496 = vmul.f32 %v2464, %v272
        %v2497 = vmul.f32 %v2465, %v273
        %v2498 = vmul.f32 %v2466, %v274
        %v2499 = vmul.f32 %v2467, %v275
        %v2500 = vpack.c.bf16 %v2472, %v2468
        %v2501 = vpack.c.bf16 %v2473, %v2469
        %v2502 = vpack.c.bf16 %v2474, %v2470
        %v2503 = vpack.c.bf16 %v2475, %v2471
        %v2504 = vpack.c.bf16 %v2480, %v2476
        %v2505 = vpack.c.bf16 %v2481, %v2477
        %v2506 = vpack.c.bf16 %v2482, %v2478
        %v2507 = vpack.c.bf16 %v2483, %v2479
        %v2508 = vpack.c.bf16 %v2488, %v2484
        %v2509 = vpack.c.bf16 %v2489, %v2485
        %v2510 = vpack.c.bf16 %v2490, %v2486
        %v2511 = vpack.c.bf16 %v2491, %v2487
        %v2512 = vpack.c.bf16 %v2496, %v2492
        %v2513 = vpack.c.bf16 %v2497, %v2493
        %v2514 = vpack.c.bf16 %v2498, %v2494
        %v2515 = vpack.c.bf16 %v2499, %v2495
        %2516 = vst [vmem:[#allocation2 + $0x8] sm:$0xff] %v2500
        %2517 = vst [vmem:[#allocation2 + $0x10] sm:$0xff] %v2501
        %2518 = vst [vmem:[#allocation2 + $0x18] sm:$0xff] %v2502
        %2519 = vst [vmem:[#allocation2 + $0x20] sm:$0xff] %v2503
        %2520 = vst [vmem:[#allocation2 + $0x38] sm:$0xff] %v2504
        %2521 = vst [vmem:[#allocation2 + $0x40] sm:$0xff] %v2505
        %2522 = vst [vmem:[#allocation2 + $0x48] sm:$0xff] %v2506
        %2523 = vst [vmem:[#allocation2 + $0x50] sm:$0xff] %v2507
        %2524 = vst [vmem:[#allocation2 + $0x68] sm:$0xff] %v2508
        %2525 = vst [vmem:[#allocation2 + $0x70] sm:$0xff] %v2509
        %2526 = vst [vmem:[#allocation2 + $0x78] sm:$0xff] %v2510
        %2527 = vst [vmem:[#allocation2 + $0x80] sm:$0xff] %v2511
        %2528 = vst [vmem:[#allocation2 + $0x98] sm:$0xff] %v2512
        %2529 = vst [vmem:[#allocation2 + $0xa0] sm:$0xff] %v2513
        %2530 = vst [vmem:[#allocation2 + $0xa8] sm:$0xff] %v2514
        %2531 = vst [vmem:[#allocation2 + $0xb0] sm:$0xff] %v2515
        %v2532 = vld [vmem:[#allocation2] sm:$0xff]
        %v2533 = vld [vmem:[#allocation2 + $0x8] sm:$0xff]
        %v2534 = vld [vmem:[#allocation2 + $0x10] sm:$0xff]
        %v2535 = vld [vmem:[#allocation2 + $0x18] sm:$0xff]
        %v2536 = vld [vmem:[#allocation2 + $0x20] sm:$0xff]
        %v2537 = vld [vmem:[#allocation2 + $0x30] sm:$0xff]
        %v2538 = vld [vmem:[#allocation2 + $0x38] sm:$0xff]
        %v2539 = vld [vmem:[#allocation2 + $0x40] sm:$0xff]
        %v2540 = vld [vmem:[#allocation2 + $0x48] sm:$0xff]
        %v2541 = vld [vmem:[#allocation2 + $0x50] sm:$0xff]
        %v2542 = vld [vmem:[#allocation2 + $0x60] sm:$0xff]
        %v2543 = vld [vmem:[#allocation2 + $0x68] sm:$0xff]
        %v2544 = vld [vmem:[#allocation2 + $0x70] sm:$0xff]
        %v2545 = vld [vmem:[#allocation2 + $0x78] sm:$0xff]
        %v2546 = vld [vmem:[#allocation2 + $0x80] sm:$0xff]
        %v2547 = vld [vmem:[#allocation2 + $0x90] sm:$0xff]
        %v2548 = vld [vmem:[#allocation2 + $0x98] sm:$0xff]
        %v2549 = vld [vmem:[#allocation2 + $0xa0] sm:$0xff]
        %v2550 = vld [vmem:[#allocation2 + $0xa8] sm:$0xff]
        %v2551 = vld [vmem:[#allocation2 + $0xb0] sm:$0xff]
        %v2552 = vld [vmem:[#allocation2 + $0x8] sm:$0xff]
        %v2553 = vld [vmem:[#allocation2 + $0x10] sm:$0xff]
        %v2554 = vld [vmem:[#allocation2 + $0x18] sm:$0xff]
        %v2555 = vld [vmem:[#allocation2 + $0x20] sm:$0xff]
        %v2556 = vld [vmem:[#allocation2 + $0x28] sm:$0xff]
        %v2557 = vld [vmem:[#allocation2 + $0x38] sm:$0xff]
        %v2558 = vld [vmem:[#allocation2 + $0x40] sm:$0xff]
        %v2559 = vld [vmem:[#allocation2 + $0x48] sm:$0xff]
        %v2560 = vld [vmem:[#allocation2 + $0x50] sm:$0xff]
        %v2561 = vld [vmem:[#allocation2 + $0x58] sm:$0xff]
        %v2562 = vld [vmem:[#allocation2 + $0x68] sm:$0xff]
        %v2563 = vld [vmem:[#allocation2 + $0x70] sm:$0xff]
        %v2564 = vld [vmem:[#allocation2 + $0x78] sm:$0xff]
        %v2565 = vld [vmem:[#allocation2 + $0x80] sm:$0xff]
        %v2566 = vld [vmem:[#allocation2 + $0x88] sm:$0xff]
        %v2567 = vld [vmem:[#allocation2 + $0x98] sm:$0xff]
        %v2568 = vld [vmem:[#allocation2 + $0xa0] sm:$0xff]
        %v2569 = vld [vmem:[#allocation2 + $0xa8] sm:$0xff]
        %v2570 = vld [vmem:[#allocation2 + $0xb0] sm:$0xff]
        %v2571 = vld [vmem:[#allocation2 + $0xb8] sm:$0xff]
        %2588 = vrot.lane.b32.xlu0 %v2500, 125
        %v2589 = vpop.permute.xlu0 %2588
        %2590 = vrot.lane.b32.xlu0 %v2501, 125
        %v2591 = vpop.permute.xlu0 %2590
        %2592 = vrot.lane.b32.xlu0 %v2502, 125
        %v2593 = vpop.permute.xlu0 %2592
        %2594 = vrot.lane.b32.xlu0 %v2503, 125
        %v2595 = vpop.permute.xlu0 %2594
        %2596 = vrot.lane.b32.xlu0 %v2504, 125
        %v2597 = vpop.permute.xlu0 %2596
        %2598 = vrot.lane.b32.xlu0 %v2505, 125
        %v2599 = vpop.permute.xlu0 %2598
        %2600 = vrot.lane.b32.xlu0 %v2506, 125
        %v2601 = vpop.permute.xlu0 %2600
        %2602 = vrot.lane.b32.xlu0 %v2507, 125
        %v2603 = vpop.permute.xlu0 %2602
        %2604 = vrot.lane.b32.xlu0 %v2508, 125
        %v2605 = vpop.permute.xlu0 %2604
        %2606 = vrot.lane.b32.xlu0 %v2509, 125
        %v2607 = vpop.permute.xlu0 %2606
        %2608 = vrot.lane.b32.xlu0 %v2510, 125
        %v2609 = vpop.permute.xlu0 %2608
        %2610 = vrot.lane.b32.xlu0 %v2511, 125
        %v2611 = vpop.permute.xlu0 %2610
        %2612 = vrot.lane.b32.xlu0 %v2512, 125
        %v2613 = vpop.permute.xlu0 %2612
        %2614 = vrot.lane.b32.xlu0 %v2513, 125
        %v2615 = vpop.permute.xlu0 %2614
        %2616 = vrot.lane.b32.xlu0 %v2514, 125
        %v2617 = vpop.permute.xlu0 %2616
        %2618 = vrot.lane.b32.xlu0 %v2515, 125
        %v2619 = vpop.permute.xlu0 %2618
        %vm2620 = vcmask 1022976
        %v2621 = vsel %vm2620, %v2589, %v2591
        %v2622 = vsel %vm2620, %v2591, %v2593
        %v2623 = vsel %vm2620, %v2593, %v2595
        %v2624 = vsel %vm2620, %v2597, %v2599
        %v2625 = vsel %vm2620, %v2599, %v2601
        %v2626 = vsel %vm2620, %v2601, %v2603
        %v2627 = vsel %vm2620, %v2605, %v2607
        %v2628 = vsel %vm2620, %v2607, %v2609
        %v2629 = vsel %vm2620, %v2609, %v2611
        %v2630 = vsel %vm2620, %v2613, %v2615
        %v2631 = vsel %vm2620, %v2615, %v2617
        %v2632 = vsel %vm2620, %v2617, %v2619
        %2653 = vrot.lane.b32.xlu0 %v2552, 122
        %v2654 = vpop.permute.xlu0 %2653
        %2655 = vrot.lane.b32.xlu0 %v2553, 122
        %v2656 = vpop.permute.xlu0 %2655
        %2657 = vrot.lane.b32.xlu0 %v2554, 122
        %v2658 = vpop.permute.xlu0 %2657
        %2659 = vrot.lane.b32.xlu0 %v2555, 122
        %v2660 = vpop.permute.xlu0 %2659
        %2661 = vrot.lane.b32.xlu0 %v2556, 122
        %v2662 = vpop.permute.xlu0 %2661
        %2663 = vrot.lane.b32.xlu0 %v2557, 122
        %v2664 = vpop.permute.xlu0 %2663
        %2665 = vrot.lane.b32.xlu0 %v2558, 122
        %v2666 = vpop.permute.xlu0 %2665
        %2667 = vrot.lane.b32.xlu0 %v2559, 122
        %v2668 = vpop.permute.xlu0 %2667
        %2669 = vrot.lane.b32.xlu0 %v2560, 122
        %v2670 = vpop.permute.xlu0 %2669
        %2671 = vrot.lane.b32.xlu0 %v2561, 122
        %v2672 = vpop.permute.xlu0 %2671
        %2673 = vrot.lane.b32.xlu0 %v2562, 122
        %v2674 = vpop.permute.xlu0 %2673
        %2675 = vrot.lane.b32.xlu0 %v2563, 122
        %v2676 = vpop.permute.xlu0 %2675
        %2677 = vrot.lane.b32.xlu0 %v2564, 122
        %v2678 = vpop.permute.xlu0 %2677
        %2679 = vrot.lane.b32.xlu0 %v2565, 122
        %v2680 = vpop.permute.xlu0 %2679
        %2681 = vrot.lane.b32.xlu0 %v2566, 122
        %v2682 = vpop.permute.xlu0 %2681
        %2683 = vrot.lane.b32.xlu0 %v2567, 122
        %v2684 = vpop.permute.xlu0 %2683
        %2685 = vrot.lane.b32.xlu0 %v2568, 122
        %v2686 = vpop.permute.xlu0 %2685
        %2687 = vrot.lane.b32.xlu0 %v2569, 122
        %v2688 = vpop.permute.xlu0 %2687
        %2689 = vrot.lane.b32.xlu0 %v2570, 122
        %v2690 = vpop.permute.xlu0 %2689
        %2691 = vrot.lane.b32.xlu0 %v2571, 122
        %v2692 = vpop.permute.xlu0 %2691
        %vm2693 = vcmask 998400
        %v2694 = vsel %vm2693, %v2654, %v2656
        %v2695 = vsel %vm2693, %v2656, %v2658
        %v2696 = vsel %vm2693, %v2658, %v2660
        %v2697 = vsel %vm2693, %v2660, %v2662
        %v2698 = vsel %vm2693, %v2664, %v2666
        %v2699 = vsel %vm2693, %v2666, %v2668
        %v2700 = vsel %vm2693, %v2668, %v2670
        %v2701 = vsel %vm2693, %v2670, %v2672
        %v2702 = vsel %vm2693, %v2674, %v2676
        %v2703 = vsel %vm2693, %v2676, %v2678
        %v2704 = vsel %vm2693, %v2678, %v2680
        %v2705 = vsel %vm2693, %v2680, %v2682
        %v2706 = vsel %vm2693, %v2684, %v2686
        %v2707 = vsel %vm2693, %v2686, %v2688
        %v2708 = vsel %vm2693, %v2688, %v2690
        %v2709 = vsel %vm2693, %v2690, %v2692
        %s2710 = scalar_lea.vmem %s2, 128
        %v2711 = vld [vmem:[%s2710] sm:$0xff]
        %v2712 = vld [vmem:[%s2710 + $0x8] sm:$0xff]
        %v2713 = vld [vmem:[%s2710 + $0x10] sm:$0xff]
        %v2714 = vld [vmem:[%s2710 + $0x18] sm:$0xff]
        %v2715 = vld [vmem:[%s2710 + $0x20] sm:$0xff]
        %v2716 = vld [vmem:[%s2710 + $0x28] sm:$0xff]
        %v2717 = vld [vmem:[%s2710 + $0x30] sm:$0xff]
        %v2718 = vld [vmem:[%s2710 + $0x38] sm:$0xff]
        %s2719 = scalar_lea.vmem %s4, 192
        %v2720 = vld [vmem:[%s2719] sm:$0xff]
        %v2721 = vld [vmem:[%s2719 + $0x8] sm:$0xff]
        %v2722 = vld [vmem:[%s2719 + $0x10] sm:$0xff]
        %v2723 = vld [vmem:[%s2719 + $0x18] sm:$0xff]
        %v2724 = vld [vmem:[%s2719 + $0x20] sm:$0xff]
        %v2725 = vld [vmem:[%s2719 + $0x28] sm:$0xff]
        %v2726 = vld [vmem:[%s2719 + $0x30] sm:$0xff]
        %v2727 = vld [vmem:[%s2719 + $0x38] sm:$0xff]
        %2729 = vset.pattern.permute.xlu0 0
        %2730 = vperm.xlu0 %2729, %v2720
        %v2731 = vpop.permute.xlu0 %2730
        %2734 = vset.pattern.permute.xlu0 0
        %2735 = vperm.xlu0 %2734, %v2721
        %v2736 = vpop.permute.xlu0 %2735
        %2739 = vset.pattern.permute.xlu0 0
        %2740 = vperm.xlu0 %2739, %v2722
        %v2741 = vpop.permute.xlu0 %2740
        %2744 = vset.pattern.permute.xlu0 0
        %2745 = vperm.xlu0 %2744, %v2723
        %v2746 = vpop.permute.xlu0 %2745
        %2749 = vset.pattern.permute.xlu0 0
        %2750 = vperm.xlu0 %2749, %v2724
        %v2751 = vpop.permute.xlu0 %2750
        %2754 = vset.pattern.permute.xlu0 0
        %2755 = vperm.xlu0 %2754, %v2725
        %v2756 = vpop.permute.xlu0 %2755
        %2759 = vset.pattern.permute.xlu0 0
        %2760 = vperm.xlu0 %2759, %v2726
        %v2761 = vpop.permute.xlu0 %2760
        %2764 = vset.pattern.permute.xlu0 0
        %2765 = vperm.xlu0 %2764, %v2727
        %v2766 = vpop.permute.xlu0 %2765
        %v2776 = vunpack.c.l.b16 %v2711
        %v2777 = vunpack.c.h.b16 %v2711
        %v2778 = vunpack.c.l.b16 %v2712
        %v2779 = vunpack.c.h.b16 %v2712
        %v2780 = vunpack.c.l.b16 %v2713
        %v2781 = vunpack.c.h.b16 %v2713
        %v2782 = vunpack.c.l.b16 %v2714
        %v2783 = vunpack.c.h.b16 %v2714
        %v2784 = vunpack.c.l.b16 %v2715
        %v2785 = vunpack.c.h.b16 %v2715
        %v2786 = vunpack.c.l.b16 %v2716
        %v2787 = vunpack.c.h.b16 %v2716
        %v2788 = vunpack.c.l.b16 %v2717
        %v2789 = vunpack.c.h.b16 %v2717
        %v2790 = vunpack.c.l.b16 %v2718
        %v2791 = vunpack.c.h.b16 %v2718
        %v2792 = vpack.c.b16 %v2778, %v2776
        %v2793 = vpack.c.b16 %v2779, %v2777
        %v2794 = vpack.c.b16 %v2782, %v2780
        %v2795 = vpack.c.b16 %v2783, %v2781
        %v2796 = vpack.c.b16 %v2786, %v2784
        %v2797 = vpack.c.b16 %v2787, %v2785
        %v2798 = vpack.c.b16 %v2790, %v2788
        %v2799 = vpack.c.b16 %v2791, %v2789
        %2824 = vrot.lane.b32.xlu0 %v2532, 3
        %v2825 = vpop.permute.xlu0 %2824
        %2826 = vrot.lane.b32.xlu0 %v2533, 3
        %v2827 = vpop.permute.xlu0 %2826
        %2828 = vrot.lane.b32.xlu0 %v2534, 3
        %v2829 = vpop.permute.xlu0 %2828
        %2830 = vrot.lane.b32.xlu0 %v2535, 3
        %v2831 = vpop.permute.xlu0 %2830
        %2832 = vrot.lane.b32.xlu0 %v2536, 3
        %v2833 = vpop.permute.xlu0 %2832
        %2834 = vrot.lane.b32.xlu0 %v2537, 3
        %v2835 = vpop.permute.xlu0 %2834
        %2836 = vrot.lane.b32.xlu0 %v2538, 3
        %v2837 = vpop.permute.xlu0 %2836
        %2838 = vrot.lane.b32.xlu0 %v2539, 3
        %v2839 = vpop.permute.xlu0 %2838
        %2840 = vrot.lane.b32.xlu0 %v2540, 3
        %v2841 = vpop.permute.xlu0 %2840
        %2842 = vrot.lane.b32.xlu0 %v2541, 3
        %v2843 = vpop.permute.xlu0 %2842
        %2844 = vrot.lane.b32.xlu0 %v2542, 3
        %v2845 = vpop.permute.xlu0 %2844
        %2846 = vrot.lane.b32.xlu0 %v2543, 3
        %v2847 = vpop.permute.xlu0 %2846
        %2848 = vrot.lane.b32.xlu0 %v2544, 3
        %v2849 = vpop.permute.xlu0 %2848
        %2850 = vrot.lane.b32.xlu0 %v2545, 3
        %v2851 = vpop.permute.xlu0 %2850
        %2852 = vrot.lane.b32.xlu0 %v2546, 3
        %v2853 = vpop.permute.xlu0 %2852
        %2854 = vrot.lane.b32.xlu0 %v2547, 3
        %v2855 = vpop.permute.xlu0 %2854
        %2856 = vrot.lane.b32.xlu0 %v2548, 3
        %v2857 = vpop.permute.xlu0 %2856
        %2858 = vrot.lane.b32.xlu0 %v2549, 3
        %v2859 = vpop.permute.xlu0 %2858
        %2860 = vrot.lane.b32.xlu0 %v2550, 3
        %v2861 = vpop.permute.xlu0 %2860
        %2862 = vrot.lane.b32.xlu0 %v2551, 3
        %v2863 = vpop.permute.xlu0 %2862
        %2864 = vrot.lane.b32.xlu0 %v2589, 3
        %v2865 = vpop.permute.xlu0 %2864
        %2866 = vrot.lane.b32.xlu0 %v2621, 3
        %v2867 = vpop.permute.xlu0 %2866
        %2868 = vrot.lane.b32.xlu0 %v2622, 3
        %v2869 = vpop.permute.xlu0 %2868
        %2870 = vrot.lane.b32.xlu0 %v2623, 3
        %v2871 = vpop.permute.xlu0 %2870
        %2872 = vrot.lane.b32.xlu0 %v2595, 3
        %v2873 = vpop.permute.xlu0 %2872
        %2874 = vrot.lane.b32.xlu0 %v2597, 3
        %v2875 = vpop.permute.xlu0 %2874
        %2876 = vrot.lane.b32.xlu0 %v2624, 3
        %v2877 = vpop.permute.xlu0 %2876
        %2878 = vrot.lane.b32.xlu0 %v2625, 3
        %v2879 = vpop.permute.xlu0 %2878
        %2880 = vrot.lane.b32.xlu0 %v2626, 3
        %v2881 = vpop.permute.xlu0 %2880
        %2882 = vrot.lane.b32.xlu0 %v2603, 3
        %v2883 = vpop.permute.xlu0 %2882
        %2884 = vrot.lane.b32.xlu0 %v2605, 3
        %v2885 = vpop.permute.xlu0 %2884
        %2886 = vrot.lane.b32.xlu0 %v2627, 3
        %v2887 = vpop.permute.xlu0 %2886
        %2888 = vrot.lane.b32.xlu0 %v2628, 3
        %v2889 = vpop.permute.xlu0 %2888
        %2890 = vrot.lane.b32.xlu0 %v2629, 3
        %v2891 = vpop.permute.xlu0 %2890
        %2892 = vrot.lane.b32.xlu0 %v2611, 3
        %v2893 = vpop.permute.xlu0 %2892
        %2894 = vrot.lane.b32.xlu0 %v2613, 3
        %v2895 = vpop.permute.xlu0 %2894
        %2896 = vrot.lane.b32.xlu0 %v2630, 3
        %v2897 = vpop.permute.xlu0 %2896
        %2898 = vrot.lane.b32.xlu0 %v2631, 3
        %v2899 = vpop.permute.xlu0 %2898
        %2900 = vrot.lane.b32.xlu0 %v2632, 3
        %v2901 = vpop.permute.xlu0 %2900
        %2902 = vrot.lane.b32.xlu0 %v2619, 3
        %v2903 = vpop.permute.xlu0 %2902
        %2904 = vrot.lane.b32.xlu0 %v2654, 3
        %v2905 = vpop.permute.xlu0 %2904
        %2906 = vrot.lane.b32.xlu0 %v2694, 3
        %v2907 = vpop.permute.xlu0 %2906
        %2908 = vrot.lane.b32.xlu0 %v2695, 3
        %v2909 = vpop.permute.xlu0 %2908
        %2910 = vrot.lane.b32.xlu0 %v2696, 3
        %v2911 = vpop.permute.xlu0 %2910
        %2912 = vrot.lane.b32.xlu0 %v2697, 3
        %v2913 = vpop.permute.xlu0 %2912
        %2914 = vrot.lane.b32.xlu0 %v2664, 3
        %v2915 = vpop.permute.xlu0 %2914
        %2916 = vrot.lane.b32.xlu0 %v2698, 3
        %v2917 = vpop.permute.xlu0 %2916
        %2918 = vrot.lane.b32.xlu0 %v2699, 3
        %v2919 = vpop.permute.xlu0 %2918
        %2920 = vrot.lane.b32.xlu0 %v2700, 3
        %v2921 = vpop.permute.xlu0 %2920
        %2922 = vrot.lane.b32.xlu0 %v2701, 3
        %v2923 = vpop.permute.xlu0 %2922
        %2924 = vrot.lane.b32.xlu0 %v2674, 3
        %v2925 = vpop.permute.xlu0 %2924
        %2926 = vrot.lane.b32.xlu0 %v2702, 3
        %v2927 = vpop.permute.xlu0 %2926
        %2928 = vrot.lane.b32.xlu0 %v2703, 3
        %v2929 = vpop.permute.xlu0 %2928
        %2930 = vrot.lane.b32.xlu0 %v2704, 3
        %v2931 = vpop.permute.xlu0 %2930
        %2932 = vrot.lane.b32.xlu0 %v2705, 3
        %v2933 = vpop.permute.xlu0 %2932
        %2934 = vrot.lane.b32.xlu0 %v2684, 3
        %v2935 = vpop.permute.xlu0 %2934
        %2936 = vrot.lane.b32.xlu0 %v2706, 3
        %v2937 = vpop.permute.xlu0 %2936
        %2938 = vrot.lane.b32.xlu0 %v2707, 3
        %v2939 = vpop.permute.xlu0 %2938
        %2940 = vrot.lane.b32.xlu0 %v2708, 3
        %v2941 = vpop.permute.xlu0 %2940
        %2942 = vrot.lane.b32.xlu0 %v2709, 3
        %v2943 = vpop.permute.xlu0 %2942
        %vm2944 = vcmask 23552
        %v2945 = vsel %vm2944, %v2825, %v2827
        %v2946 = vsel %vm2944, %v2827, %v2829
        %v2947 = vsel %vm2944, %v2829, %v2831
        %v2948 = vsel %vm2944, %v2831, %v2833
        %v2949 = vsel %vm2944, %v2835, %v2837
        %v2950 = vsel %vm2944, %v2837, %v2839
        %v2951 = vsel %vm2944, %v2839, %v2841
        %v2952 = vsel %vm2944, %v2841, %v2843
        %v2953 = vsel %vm2944, %v2845, %v2847
        %v2954 = vsel %vm2944, %v2847, %v2849
        %v2955 = vsel %vm2944, %v2849, %v2851
        %v2956 = vsel %vm2944, %v2851, %v2853
        %v2957 = vsel %vm2944, %v2855, %v2857
        %v2958 = vsel %vm2944, %v2857, %v2859
        %v2959 = vsel %vm2944, %v2859, %v2861
        %v2960 = vsel %vm2944, %v2861, %v2863
        %v2961 = vsel %vm2944, %v2865, %v2867
        %v2962 = vsel %vm2944, %v2867, %v2869
        %v2963 = vsel %vm2944, %v2869, %v2871
        %v2964 = vsel %vm2944, %v2871, %v2873
        %v2965 = vsel %vm2944, %v2875, %v2877
        %v2966 = vsel %vm2944, %v2877, %v2879
        %v2967 = vsel %vm2944, %v2879, %v2881
        %v2968 = vsel %vm2944, %v2881, %v2883
        %v2969 = vsel %vm2944, %v2885, %v2887
        %v2970 = vsel %vm2944, %v2887, %v2889
        %v2971 = vsel %vm2944, %v2889, %v2891
        %v2972 = vsel %vm2944, %v2891, %v2893
        %v2973 = vsel %vm2944, %v2895, %v2897
        %v2974 = vsel %vm2944, %v2897, %v2899
        %v2975 = vsel %vm2944, %v2899, %v2901
        %v2976 = vsel %vm2944, %v2901, %v2903
        %v2977 = vsel %vm2944, %v2905, %v2907
        %v2978 = vsel %vm2944, %v2907, %v2909
        %v2979 = vsel %vm2944, %v2909, %v2911
        %v2980 = vsel %vm2944, %v2911, %v2913
        %v2981 = vsel %vm2944, %v2915, %v2917
        %v2982 = vsel %vm2944, %v2917, %v2919
        %v2983 = vsel %vm2944, %v2919, %v2921
        %v2984 = vsel %vm2944, %v2921, %v2923
        %v2985 = vsel %vm2944, %v2925, %v2927
        %v2986 = vsel %vm2944, %v2927, %v2929
        %v2987 = vsel %vm2944, %v2929, %v2931
        %v2988 = vsel %vm2944, %v2931, %v2933
        %v2989 = vsel %vm2944, %v2935, %v2937
        %v2990 = vsel %vm2944, %v2937, %v2939
        %v2991 = vsel %vm2944, %v2939, %v2941
        %v2992 = vsel %vm2944, %v2941, %v2943
        %v3042 = vsel %vm1387, %v2793, 0
        %v3045 = vsel %vm1387, %v2795, 0
        %v3048 = vsel %vm1387, %v2797, 0
        %v3051 = vsel %vm1387, %v2799, 0
        %3053 = vmatprep.subr.bf16.mxu0 %v2946
        %3054 = vmatpush1.bf16.msra.mxu0 %v2945
        %3055 = vmatprep.subr.bf16.mxu0 %v2950
        %3056 = vmatpush1.bf16.msra.mxu0 %v2949
        %3057 = vmatprep.subr.bf16.mxu0 %v2954
        %3058 = vmatpush1.bf16.msra.mxu0 %v2953
        %3059 = vmatprep.subr.bf16.mxu0 %v2958
        %3060 = vmatpush1.bf16.msra.mxu0 %v2957
        %3061 = vmatprep.subr.bf16.mxu0 %v2962
        %3062 = vmatpush1.bf16.msra.mxu0 %v2961
        %3063 = vmatprep.subr.bf16.mxu0 %v2966
        %3064 = vmatpush1.bf16.msra.mxu0 %v2965
        %3065 = vmatprep.subr.bf16.mxu0 %v2970
        %3066 = vmatpush1.bf16.msra.mxu0 %v2969
        %3067 = vmatprep.subr.bf16.mxu0 %v2974
        %3068 = vmatpush1.bf16.msra.mxu0 %v2973
        %3069 = vmatprep.subr.bf16.mxu0 %v2978
        %3070 = vmatpush1.bf16.msra.mxu0 %v2977
        %3071 = vmatprep.subr.bf16.mxu0 %v2982
        %3072 = vmatpush1.bf16.msra.mxu0 %v2981
        %3073 = vmatprep.subr.bf16.mxu0 %v2986
        %3074 = vmatpush1.bf16.msra.mxu0 %v2985
        %3075 = vmatprep.subr.bf16.mxu0 %v2990
        %3076 = vmatpush1.bf16.msra.mxu0 %v2989
        %3077 = vmatprep.subr.bf16.mxu0 0
        %3078 = vmatpush1.bf16.msra.mxu0 0
        %3079 = vmatprep.subr.bf16.mxu0 0
        %3080 = vmatpush1.bf16.msra.mxu0 0
        %3081 = vmatprep.subr.bf16.mxu0 0
        %3082 = vmatpush1.bf16.msra.mxu0 0
        %3083 = vmatprep.subr.bf16.mxu0 0
        %3084 = vmatpush1.bf16.msra.mxu0 0
        %3085 = vmatprep.mubr.bf16.mxu0 %v3042
        %3086 = vmatmul.mubr.bf16.gmra.mrb[0].mxu0 %v2792
        %v3087 = vpop.f32.mrb[0].mxu0
        %v3088 = vadd.f32 %v2731, %v3087
        %v3089 = vpop.f32.mrb[0].mxu0
        %v3090 = vadd.f32 %v2731, %v3089
        %v3091 = vpop.f32.mrb[0].mxu0
        %v3092 = vadd.f32 %v2736, %v3091
        %v3093 = vpop.f32.mrb[0].mxu0
        %v3094 = vadd.f32 %v2736, %v3093
        %3095 = vmatprep.mubr.bf16.mxu0 %v3045
        %3096 = vmatmul.mubr.bf16.gmra.mrb[0].mxu0 %v2794
        %v3097 = vpop.f32.mrb[0].mxu0
        %v3098 = vadd.f32 %v2741, %v3097
        %v3099 = vpop.f32.mrb[0].mxu0
        %v3100 = vadd.f32 %v2741, %v3099
        %v3101 = vpop.f32.mrb[0].mxu0
        %v3102 = vadd.f32 %v2746, %v3101
        %v3103 = vpop.f32.mrb[0].mxu0
        %v3104 = vadd.f32 %v2746, %v3103
        %3105 = vmatprep.mubr.bf16.mxu0 %v3048
        %3106 = vmatmul.mubr.bf16.gmra.mrb[0].mxu0 %v2796
        %v3107 = vpop.f32.mrb[0].mxu0
        %v3108 = vadd.f32 %v2751, %v3107
        %v3109 = vpop.f32.mrb[0].mxu0
        %v3110 = vadd.f32 %v2751, %v3109
        %v3111 = vpop.f32.mrb[0].mxu0
        %v3112 = vadd.f32 %v2756, %v3111
        %v3113 = vpop.f32.mrb[0].mxu0
        %v3114 = vadd.f32 %v2756, %v3113
        %3115 = vmatprep.mubr.bf16.mxu0 %v3051
        %3116 = vmatmul.mubr.bf16.gmra.mrb[0].mxu0 %v2798
        %v3117 = vpop.f32.mrb[0].mxu0
        %v3118 = vadd.f32 %v2761, %v3117
        %v3119 = vpop.f32.mrb[0].mxu0
        %v3120 = vadd.f32 %v2761, %v3119
        %v3121 = vpop.f32.mrb[0].mxu0
        %v3122 = vadd.f32 %v2766, %v3121
        %v3123 = vpop.f32.mrb[0].mxu0
        %v3124 = vadd.f32 %v2766, %v3123
        %3125 = vdwg.mxu0
        %3126 = vmatprep.subr.bf16.mxu0 %v2948
        %3127 = vmatpush1.bf16.msra.mxu0 %v2947
        %3128 = vmatprep.subr.bf16.mxu0 %v2952
        %3129 = vmatpush1.bf16.msra.mxu0 %v2951
        %3130 = vmatprep.subr.bf16.mxu0 %v2956
        %3131 = vmatpush1.bf16.msra.mxu0 %v2955
        %3132 = vmatprep.subr.bf16.mxu0 %v2960
        %3133 = vmatpush1.bf16.msra.mxu0 %v2959
        %3134 = vmatprep.subr.bf16.mxu0 %v2964
        %3135 = vmatpush1.bf16.msra.mxu0 %v2963
        %3136 = vmatprep.subr.bf16.mxu0 %v2968
        %3137 = vmatpush1.bf16.msra.mxu0 %v2967
        %3138 = vmatprep.subr.bf16.mxu0 %v2972
        %3139 = vmatpush1.bf16.msra.mxu0 %v2971
        %3140 = vmatprep.subr.bf16.mxu0 %v2976
        %3141 = vmatpush1.bf16.msra.mxu0 %v2975
        %3142 = vmatprep.subr.bf16.mxu0 %v2980
        %3143 = vmatpush1.bf16.msra.mxu0 %v2979
        %3144 = vmatprep.subr.bf16.mxu0 %v2984
        %3145 = vmatpush1.bf16.msra.mxu0 %v2983
        %3146 = vmatprep.subr.bf16.mxu0 %v2988
        %3147 = vmatpush1.bf16.msra.mxu0 %v2987
        %3148 = vmatprep.subr.bf16.mxu0 %v2992
        %3149 = vmatpush1.bf16.msra.mxu0 %v2991
        %3150 = vmatprep.subr.bf16.mxu0 0
        %3151 = vmatpush1.bf16.msra.mxu0 0
        %3152 = vmatprep.subr.bf16.mxu0 0
        %3153 = vmatpush1.bf16.msra.mxu0 0
        %3154 = vmatprep.subr.bf16.mxu0 0
        %3155 = vmatpush1.bf16.msra.mxu0 0
        %3156 = vmatprep.subr.bf16.mxu0 0
        %3157 = vmatpush1.bf16.msra.mxu0 0
        %3158 = vmatprep.mubr.bf16.mxu0 %v3042
        %3159 = vmatmul.mubr.bf16.gmra.mrb[0].mxu0 %v2792
        %v3160 = vpop.f32.mrb[0].mxu0
        %v3161 = vadd.f32 %v2731, %v3160
        %v3162 = vpop.f32.mrb[0].mxu0
        %v3163 = vadd.f32 %v2731, %v3162
        %v3164 = vpop.f32.mrb[0].mxu0
        %v3165 = vadd.f32 %v2736, %v3164
        %v3166 = vpop.f32.mrb[0].mxu0
        %v3167 = vadd.f32 %v2736, %v3166
        %3168 = vmatprep.mubr.bf16.mxu0 %v3045
        %3169 = vmatmul.mubr.bf16.gmra.mrb[0].mxu0 %v2794
        %v3170 = vpop.f32.mrb[0].mxu0
        %v3171 = vadd.f32 %v2741, %v3170
        %v3172 = vpop.f32.mrb[0].mxu0
        %v3173 = vadd.f32 %v2741, %v3172
        %v3174 = vpop.f32.mrb[0].mxu0
        %v3175 = vadd.f32 %v2746, %v3174
        %v3176 = vpop.f32.mrb[0].mxu0
        %v3177 = vadd.f32 %v2746, %v3176
        %3178 = vmatprep.mubr.bf16.mxu0 %v3048
        %3179 = vmatmul.mubr.bf16.gmra.mrb[0].mxu0 %v2796
        %v3180 = vpop.f32.mrb[0].mxu0
        %v3181 = vadd.f32 %v2751, %v3180
        %v3182 = vpop.f32.mrb[0].mxu0
        %v3183 = vadd.f32 %v2751, %v3182
        %v3184 = vpop.f32.mrb[0].mxu0
        %v3185 = vadd.f32 %v2756, %v3184
        %v3186 = vpop.f32.mrb[0].mxu0
        %v3187 = vadd.f32 %v2756, %v3186
        %3188 = vmatprep.mubr.bf16.mxu0 %v3051
        %3189 = vmatmul.mubr.bf16.gmra.mrb[0].mxu0 %v2798
        %v3190 = vpop.f32.mrb[0].mxu0
        %v3191 = vadd.f32 %v2761, %v3190
        %v3192 = vpop.f32.mrb[0].mxu0
        %v3193 = vadd.f32 %v2761, %v3192
        %v3194 = vpop.f32.mrb[0].mxu0
        %v3195 = vadd.f32 %v2766, %v3194
        %v3196 = vpop.f32.mrb[0].mxu0
        %v3197 = vadd.f32 %v2766, %v3196
        %3198 = vdwg.mxu0
        %vm3199 = vcmp.ge.f32.partialorder %v3088, 0.0
        %vm3200 = vcmp.ge.f32.partialorder %v3090, 0.0
        %vm3201 = vcmp.ge.f32.partialorder %v3161, 0.0
        %vm3202 = vcmp.ge.f32.partialorder %v3163, 0.0
        %vm3203 = vcmp.ge.f32.partialorder %v3092, 0.0
        %vm3204 = vcmp.ge.f32.partialorder %v3094, 0.0
        %vm3205 = vcmp.ge.f32.partialorder %v3165, 0.0
        %vm3206 = vcmp.ge.f32.partialorder %v3167, 0.0
        %vm3207 = vcmp.ge.f32.partialorder %v3098, 0.0
        %vm3208 = vcmp.ge.f32.partialorder %v3100, 0.0
        %vm3209 = vcmp.ge.f32.partialorder %v3171, 0.0
        %vm3210 = vcmp.ge.f32.partialorder %v3173, 0.0
        %vm3211 = vcmp.ge.f32.partialorder %v3102, 0.0
        %vm3212 = vcmp.ge.f32.partialorder %v3104, 0.0
        %vm3213 = vcmp.ge.f32.partialorder %v3175, 0.0
        %vm3214 = vcmp.ge.f32.partialorder %v3177, 0.0
        %vm3215 = vcmp.ge.f32.partialorder %v3108, 0.0
        %vm3216 = vcmp.ge.f32.partialorder %v3110, 0.0
        %vm3217 = vcmp.ge.f32.partialorder %v3181, 0.0
        %vm3218 = vcmp.ge.f32.partialorder %v3183, 0.0
        %vm3219 = vcmp.ge.f32.partialorder %v3112, 0.0
        %vm3220 = vcmp.ge.f32.partialorder %v3114, 0.0
        %vm3221 = vcmp.ge.f32.partialorder %v3185, 0.0
        %vm3222 = vcmp.ge.f32.partialorder %v3187, 0.0
        %vm3223 = vcmp.ge.f32.partialorder %v3118, 0.0
        %vm3224 = vcmp.ge.f32.partialorder %v3120, 0.0
        %vm3225 = vcmp.ge.f32.partialorder %v3191, 0.0
        %vm3226 = vcmp.ge.f32.partialorder %v3193, 0.0
        %vm3227 = vcmp.ge.f32.partialorder %v3122, 0.0
        %vm3228 = vcmp.ge.f32.partialorder %v3124, 0.0
        %vm3229 = vcmp.ge.f32.partialorder %v3195, 0.0
        %vm3230 = vcmp.ge.f32.partialorder %v3197, 0.0
        %v3231 = vmul.f32 %v3088, 0.2
        %v3232 = vmul.f32 %v3090, 0.2
        %v3233 = vmul.f32 %v3161, 0.2
        %v3234 = vmul.f32 %v3163, 0.2
        %v3235 = vmul.f32 %v3092, 0.2
        %v3236 = vmul.f32 %v3094, 0.2
        %v3237 = vmul.f32 %v3165, 0.2
        %v3238 = vmul.f32 %v3167, 0.2
        %v3239 = vmul.f32 %v3098, 0.2
        %v3240 = vmul.f32 %v3100, 0.2
        %v3241 = vmul.f32 %v3171, 0.2
        %v3242 = vmul.f32 %v3173, 0.2
        %v3243 = vmul.f32 %v3102, 0.2
        %v3244 = vmul.f32 %v3104, 0.2
        %v3245 = vmul.f32 %v3175, 0.2
        %v3246 = vmul.f32 %v3177, 0.2
        %v3247 = vmul.f32 %v3108, 0.2
        %v3248 = vmul.f32 %v3110, 0.2
        %v3249 = vmul.f32 %v3181, 0.2
        %v3250 = vmul.f32 %v3183, 0.2
        %v3251 = vmul.f32 %v3112, 0.2
        %v3252 = vmul.f32 %v3114, 0.2
        %v3253 = vmul.f32 %v3185, 0.2
        %v3254 = vmul.f32 %v3187, 0.2
        %v3255 = vmul.f32 %v3118, 0.2
        %v3256 = vmul.f32 %v3120, 0.2
        %v3257 = vmul.f32 %v3191, 0.2
        %v3258 = vmul.f32 %v3193, 0.2
        %v3259 = vmul.f32 %v3122, 0.2
        %v3260 = vmul.f32 %v3124, 0.2
        %v3261 = vmul.f32 %v3195, 0.2
        %v3262 = vmul.f32 %v3197, 0.2
        %v3263 = vsel %vm3199, %v3088, %v3231
        %v3264 = vsel %vm3200, %v3090, %v3232
        %v3265 = vsel %vm3201, %v3161, %v3233
        %v3266 = vsel %vm3202, %v3163, %v3234
        %v3267 = vsel %vm3203, %v3092, %v3235
        %v3268 = vsel %vm3204, %v3094, %v3236
        %v3269 = vsel %vm3205, %v3165, %v3237
        %v3270 = vsel %vm3206, %v3167, %v3238
        %v3271 = vsel %vm3207, %v3098, %v3239
        %v3272 = vsel %vm3208, %v3100, %v3240
        %v3273 = vsel %vm3209, %v3171, %v3241
        %v3274 = vsel %vm3210, %v3173, %v3242
        %v3275 = vsel %vm3211, %v3102, %v3243
        %v3276 = vsel %vm3212, %v3104, %v3244
        %v3277 = vsel %vm3213, %v3175, %v3245
        %v3278 = vsel %vm3214, %v3177, %v3246
        %v3279 = vsel %vm3215, %v3108, %v3247
        %v3280 = vsel %vm3216, %v3110, %v3248
        %v3281 = vsel %vm3217, %v3181, %v3249
        %v3282 = vsel %vm3218, %v3183, %v3250
        %v3283 = vsel %vm3219, %v3112, %v3251
        %v3284 = vsel %vm3220, %v3114, %v3252
        %v3285 = vsel %vm3221, %v3185, %v3253
        %v3286 = vsel %vm3222, %v3187, %v3254
        %v3287 = vsel %vm3223, %v3118, %v3255
        %v3288 = vsel %vm3224, %v3120, %v3256
        %v3289 = vsel %vm3225, %v3191, %v3257
        %v3290 = vsel %vm3226, %v3193, %v3258
        %v3291 = vsel %vm3227, %v3122, %v3259
        %v3292 = vsel %vm3228, %v3124, %v3260
        %v3293 = vsel %vm3229, %v3195, %v3261
        %v3294 = vsel %vm3230, %v3197, %v3262
        %v3295 = vmul.f32 %v3263, %v272
        %v3296 = vmul.f32 %v3264, %v273
        %v3297 = vmul.f32 %v3265, %v274
        %v3298 = vmul.f32 %v3266, %v275
        %v3299 = vmul.f32 %v3267, %v272
        %v3300 = vmul.f32 %v3268, %v273
        %v3301 = vmul.f32 %v3269, %v274
        %v3302 = vmul.f32 %v3270, %v275
        %v3303 = vmul.f32 %v3271, %v272
        %v3304 = vmul.f32 %v3272, %v273
        %v3305 = vmul.f32 %v3273, %v274
        %v3306 = vmul.f32 %v3274, %v275
        %v3307 = vmul.f32 %v3275, %v272
        %v3308 = vmul.f32 %v3276, %v273
        %v3309 = vmul.f32 %v3277, %v274
        %v3310 = vmul.f32 %v3278, %v275
        %v3311 = vmul.f32 %v3279, %v272
        %v3312 = vmul.f32 %v3280, %v273
        %v3313 = vmul.f32 %v3281, %v274
        %v3314 = vmul.f32 %v3282, %v275
        %v3315 = vmul.f32 %v3283, %v272
        %v3316 = vmul.f32 %v3284, %v273
        %v3317 = vmul.f32 %v3285, %v274
        %v3318 = vmul.f32 %v3286, %v275
        %v3319 = vmul.f32 %v3287, %v272
        %v3320 = vmul.f32 %v3288, %v273
        %v3321 = vmul.f32 %v3289, %v274
        %v3322 = vmul.f32 %v3290, %v275
        %v3323 = vmul.f32 %v3291, %v272
        %v3324 = vmul.f32 %v3292, %v273
        %v3325 = vmul.f32 %v3293, %v274
        %v3326 = vmul.f32 %v3294, %v275
        %v3327 = vpack.c.bf16 %v3299, %v3295
        %v3328 = vpack.c.bf16 %v3300, %v3296
        %v3329 = vpack.c.bf16 %v3301, %v3297
        %v3330 = vpack.c.bf16 %v3302, %v3298
        %v3331 = vpack.c.bf16 %v3307, %v3303
        %v3332 = vpack.c.bf16 %v3308, %v3304
        %v3333 = vpack.c.bf16 %v3309, %v3305
        %v3334 = vpack.c.bf16 %v3310, %v3306
        %v3335 = vpack.c.bf16 %v3315, %v3311
        %v3336 = vpack.c.bf16 %v3316, %v3312
        %v3337 = vpack.c.bf16 %v3317, %v3313
        %v3338 = vpack.c.bf16 %v3318, %v3314
        %v3339 = vpack.c.bf16 %v3323, %v3319
        %v3340 = vpack.c.bf16 %v3324, %v3320
        %v3341 = vpack.c.bf16 %v3325, %v3321
        %v3342 = vpack.c.bf16 %v3326, %v3322
        %3343 = vst [vmem:[#allocation2 + $0x8] sm:$0xff] %v3327
        %3344 = vst [vmem:[#allocation2 + $0x10] sm:$0xff] %v3328
        %3345 = vst [vmem:[#allocation2 + $0x18] sm:$0xff] %v3329
        %3346 = vst [vmem:[#allocation2 + $0x20] sm:$0xff] %v3330
        %3347 = vst [vmem:[#allocation2 + $0x38] sm:$0xff] %v3331
        %3348 = vst [vmem:[#allocation2 + $0x40] sm:$0xff] %v3332
        %3349 = vst [vmem:[#allocation2 + $0x48] sm:$0xff] %v3333
        %3350 = vst [vmem:[#allocation2 + $0x50] sm:$0xff] %v3334
        %3351 = vst [vmem:[#allocation2 + $0x68] sm:$0xff] %v3335
        %3352 = vst [vmem:[#allocation2 + $0x70] sm:$0xff] %v3336
        %3353 = vst [vmem:[#allocation2 + $0x78] sm:$0xff] %v3337
        %3354 = vst [vmem:[#allocation2 + $0x80] sm:$0xff] %v3338
        %3355 = vst [vmem:[#allocation2 + $0x98] sm:$0xff] %v3339
        %3356 = vst [vmem:[#allocation2 + $0xa0] sm:$0xff] %v3340
        %3357 = vst [vmem:[#allocation2 + $0xa8] sm:$0xff] %v3341
        %3358 = vst [vmem:[#allocation2 + $0xb0] sm:$0xff] %v3342
        %v3359 = vld [vmem:[#allocation2] sm:$0xff]
        %v3360 = vld [vmem:[#allocation2 + $0x8] sm:$0xff]
        %v3361 = vld [vmem:[#allocation2 + $0x10] sm:$0xff]
        %v3362 = vld [vmem:[#allocation2 + $0x18] sm:$0xff]
        %v3363 = vld [vmem:[#allocation2 + $0x20] sm:$0xff]
        %v3364 = vld [vmem:[#allocation2 + $0x30] sm:$0xff]
        %v3365 = vld [vmem:[#allocation2 + $0x38] sm:$0xff]
        %v3366 = vld [vmem:[#allocation2 + $0x40] sm:$0xff]
        %v3367 = vld [vmem:[#allocation2 + $0x48] sm:$0xff]
        %v3368 = vld [vmem:[#allocation2 + $0x50] sm:$0xff]
        %v3369 = vld [vmem:[#allocation2 + $0x60] sm:$0xff]
        %v3370 = vld [vmem:[#allocation2 + $0x68] sm:$0xff]
        %v3371 = vld [vmem:[#allocation2 + $0x70] sm:$0xff]
        %v3372 = vld [vmem:[#allocation2 + $0x78] sm:$0xff]
        %v3373 = vld [vmem:[#allocation2 + $0x80] sm:$0xff]
        %v3374 = vld [vmem:[#allocation2 + $0x90] sm:$0xff]
        %v3375 = vld [vmem:[#allocation2 + $0x98] sm:$0xff]
        %v3376 = vld [vmem:[#allocation2 + $0xa0] sm:$0xff]
        %v3377 = vld [vmem:[#allocation2 + $0xa8] sm:$0xff]
        %v3378 = vld [vmem:[#allocation2 + $0xb0] sm:$0xff]
        %v3379 = vld [vmem:[#allocation2 + $0x8] sm:$0xff]
        %v3380 = vld [vmem:[#allocation2 + $0x10] sm:$0xff]
        %v3381 = vld [vmem:[#allocation2 + $0x18] sm:$0xff]
        %v3382 = vld [vmem:[#allocation2 + $0x20] sm:$0xff]
        %v3383 = vld [vmem:[#allocation2 + $0x28] sm:$0xff]
        %v3384 = vld [vmem:[#allocation2 + $0x38] sm:$0xff]
        %v3385 = vld [vmem:[#allocation2 + $0x40] sm:$0xff]
        %v3386 = vld [vmem:[#allocation2 + $0x48] sm:$0xff]
        %v3387 = vld [vmem:[#allocation2 + $0x50] sm:$0xff]
        %v3388 = vld [vmem:[#allocation2 + $0x58] sm:$0xff]
        %v3389 = vld [vmem:[#allocation2 + $0x68] sm:$0xff]
        %v3390 = vld [vmem:[#allocation2 + $0x70] sm:$0xff]
        %v3391 = vld [vmem:[#allocation2 + $0x78] sm:$0xff]
        %v3392 = vld [vmem:[#allocation2 + $0x80] sm:$0xff]
        %v3393 = vld [vmem:[#allocation2 + $0x88] sm:$0xff]
        %v3394 = vld [vmem:[#allocation2 + $0x98] sm:$0xff]
        %v3395 = vld [vmem:[#allocation2 + $0xa0] sm:$0xff]
        %v3396 = vld [vmem:[#allocation2 + $0xa8] sm:$0xff]
        %v3397 = vld [vmem:[#allocation2 + $0xb0] sm:$0xff]
        %v3398 = vld [vmem:[#allocation2 + $0xb8] sm:$0xff]
        %3415 = vrot.lane.b32.xlu0 %v3327, 124
        %v3416 = vpop.permute.xlu0 %3415
        %3417 = vrot.lane.b32.xlu0 %v3328, 124
        %v3418 = vpop.permute.xlu0 %3417
        %3419 = vrot.lane.b32.xlu0 %v3329, 124
        %v3420 = vpop.permute.xlu0 %3419
        %3421 = vrot.lane.b32.xlu0 %v3330, 124
        %v3422 = vpop.permute.xlu0 %3421
        %3423 = vrot.lane.b32.xlu0 %v3331, 124
        %v3424 = vpop.permute.xlu0 %3423
        %3425 = vrot.lane.b32.xlu0 %v3332, 124
        %v3426 = vpop.permute.xlu0 %3425
        %3427 = vrot.lane.b32.xlu0 %v3333, 124
        %v3428 = vpop.permute.xlu0 %3427
        %3429 = vrot.lane.b32.xlu0 %v3334, 124
        %v3430 = vpop.permute.xlu0 %3429
        %3431 = vrot.lane.b32.xlu0 %v3335, 124
        %v3432 = vpop.permute.xlu0 %3431
        %3433 = vrot.lane.b32.xlu0 %v3336, 124
        %v3434 = vpop.permute.xlu0 %3433
        %3435 = vrot.lane.b32.xlu0 %v3337, 124
        %v3436 = vpop.permute.xlu0 %3435
        %3437 = vrot.lane.b32.xlu0 %v3338, 124
        %v3438 = vpop.permute.xlu0 %3437
        %3439 = vrot.lane.b32.xlu0 %v3339, 124
        %v3440 = vpop.permute.xlu0 %3439
        %3441 = vrot.lane.b32.xlu0 %v3340, 124
        %v3442 = vpop.permute.xlu0 %3441
        %3443 = vrot.lane.b32.xlu0 %v3341, 124
        %v3444 = vpop.permute.xlu0 %3443
        %3445 = vrot.lane.b32.xlu0 %v3342, 124
        %v3446 = vpop.permute.xlu0 %3445
        %v3447 = vsel %vm1866, %v3416, %v3418
        %v3448 = vsel %vm1866, %v3418, %v3420
        %v3449 = vsel %vm1866, %v3420, %v3422
        %v3450 = vsel %vm1866, %v3424, %v3426
        %v3451 = vsel %vm1866, %v3426, %v3428
        %v3452 = vsel %vm1866, %v3428, %v3430
        %v3453 = vsel %vm1866, %v3432, %v3434
        %v3454 = vsel %vm1866, %v3434, %v3436
        %v3455 = vsel %vm1866, %v3436, %v3438
        %v3456 = vsel %vm1866, %v3440, %v3442
        %v3457 = vsel %vm1866, %v3442, %v3444
        %v3458 = vsel %vm1866, %v3444, %v3446
        %3479 = vrot.lane.b32.xlu0 %v3379, 120
        %v3480 = vpop.permute.xlu0 %3479
        %3481 = vrot.lane.b32.xlu0 %v3380, 120
        %v3482 = vpop.permute.xlu0 %3481
        %3483 = vrot.lane.b32.xlu0 %v3381, 120
        %v3484 = vpop.permute.xlu0 %3483
        %3485 = vrot.lane.b32.xlu0 %v3382, 120
        %v3486 = vpop.permute.xlu0 %3485
        %3487 = vrot.lane.b32.xlu0 %v3383, 120
        %v3488 = vpop.permute.xlu0 %3487
        %3489 = vrot.lane.b32.xlu0 %v3384, 120
        %v3490 = vpop.permute.xlu0 %3489
        %3491 = vrot.lane.b32.xlu0 %v3385, 120
        %v3492 = vpop.permute.xlu0 %3491
        %3493 = vrot.lane.b32.xlu0 %v3386, 120
        %v3494 = vpop.permute.xlu0 %3493
        %3495 = vrot.lane.b32.xlu0 %v3387, 120
        %v3496 = vpop.permute.xlu0 %3495
        %3497 = vrot.lane.b32.xlu0 %v3388, 120
        %v3498 = vpop.permute.xlu0 %3497
        %3499 = vrot.lane.b32.xlu0 %v3389, 120
        %v3500 = vpop.permute.xlu0 %3499
        %3501 = vrot.lane.b32.xlu0 %v3390, 120
        %v3502 = vpop.permute.xlu0 %3501
        %3503 = vrot.lane.b32.xlu0 %v3391, 120
        %v3504 = vpop.permute.xlu0 %3503
        %3505 = vrot.lane.b32.xlu0 %v3392, 120
        %v3506 = vpop.permute.xlu0 %3505
        %3507 = vrot.lane.b32.xlu0 %v3393, 120
        %v3508 = vpop.permute.xlu0 %3507
        %3509 = vrot.lane.b32.xlu0 %v3394, 120
        %v3510 = vpop.permute.xlu0 %3509
        %3511 = vrot.lane.b32.xlu0 %v3395, 120
        %v3512 = vpop.permute.xlu0 %3511
        %3513 = vrot.lane.b32.xlu0 %v3396, 120
        %v3514 = vpop.permute.xlu0 %3513
        %3515 = vrot.lane.b32.xlu0 %v3397, 120
        %v3516 = vpop.permute.xlu0 %3515
        %3517 = vrot.lane.b32.xlu0 %v3398, 120
        %v3518 = vpop.permute.xlu0 %3517
        %vm3519 = vcmask 982016
        %v3520 = vsel %vm3519, %v3480, %v3482
        %v3521 = vsel %vm3519, %v3482, %v3484
        %v3522 = vsel %vm3519, %v3484, %v3486
        %v3523 = vsel %vm3519, %v3486, %v3488
        %v3524 = vsel %vm3519, %v3490, %v3492
        %v3525 = vsel %vm3519, %v3492, %v3494
        %v3526 = vsel %vm3519, %v3494, %v3496
        %v3527 = vsel %vm3519, %v3496, %v3498
        %v3528 = vsel %vm3519, %v3500, %v3502
        %v3529 = vsel %vm3519, %v3502, %v3504
        %v3530 = vsel %vm3519, %v3504, %v3506
        %v3531 = vsel %vm3519, %v3506, %v3508
        %v3532 = vsel %vm3519, %v3510, %v3512
        %v3533 = vsel %vm3519, %v3512, %v3514
        %v3534 = vsel %vm3519, %v3514, %v3516
        %v3535 = vsel %vm3519, %v3516, %v3518
        %s3536 = scalar_lea.vmem %s2, 192
        %v3537 = vld [vmem:[%s3536] sm:$0xff]
        %v3538 = vld [vmem:[%s3536 + $0x8] sm:$0xff]
        %v3539 = vld [vmem:[%s3536 + $0x10] sm:$0xff]
        %v3540 = vld [vmem:[%s3536 + $0x18] sm:$0xff]
        %v3541 = vld [vmem:[%s3536 + $0x20] sm:$0xff]
        %v3542 = vld [vmem:[%s3536 + $0x28] sm:$0xff]
        %v3543 = vld [vmem:[%s3536 + $0x30] sm:$0xff]
        %v3544 = vld [vmem:[%s3536 + $0x38] sm:$0xff]
        %s3545 = scalar_lea.vmem %s4, 256
        %v3546 = vld [vmem:[%s3545] sm:$0xff]
        %v3547 = vld [vmem:[%s3545 + $0x8] sm:$0xff]
        %v3548 = vld [vmem:[%s3545 + $0x10] sm:$0xff]
        %v3549 = vld [vmem:[%s3545 + $0x18] sm:$0xff]
        %v3550 = vld [vmem:[%s3545 + $0x20] sm:$0xff]
        %v3551 = vld [vmem:[%s3545 + $0x28] sm:$0xff]
        %v3552 = vld [vmem:[%s3545 + $0x30] sm:$0xff]
        %v3553 = vld [vmem:[%s3545 + $0x38] sm:$0xff]
        %3555 = vset.pattern.permute.xlu0 0
        %3556 = vperm.xlu0 %3555, %v3546
        %v3557 = vpop.permute.xlu0 %3556
        %3560 = vset.pattern.permute.xlu0 0
        %3561 = vperm.xlu0 %3560, %v3547
        %v3562 = vpop.permute.xlu0 %3561
        %3565 = vset.pattern.permute.xlu0 0
        %3566 = vperm.xlu0 %3565, %v3548
        %v3567 = vpop.permute.xlu0 %3566
        %3570 = vset.pattern.permute.xlu0 0
        %3571 = vperm.xlu0 %3570, %v3549
        %v3572 = vpop.permute.xlu0 %3571
        %3575 = vset.pattern.permute.xlu0 0
        %3576 = vperm.xlu0 %3575, %v3550
        %v3577 = vpop.permute.xlu0 %3576
        %3580 = vset.pattern.permute.xlu0 0
        %3581 = vperm.xlu0 %3580, %v3551
        %v3582 = vpop.permute.xlu0 %3581
        %3585 = vset.pattern.permute.xlu0 0
        %3586 = vperm.xlu0 %3585, %v3552
        %v3587 = vpop.permute.xlu0 %3586
        %3590 = vset.pattern.permute.xlu0 0
        %3591 = vperm.xlu0 %3590, %v3553
        %v3592 = vpop.permute.xlu0 %3591
        %v3602 = vunpack.c.l.b16 %v3537
        %v3603 = vunpack.c.h.b16 %v3537
        %v3604 = vunpack.c.l.b16 %v3538
        %v3605 = vunpack.c.h.b16 %v3538
        %v3606 = vunpack.c.l.b16 %v3539
        %v3607 = vunpack.c.h.b16 %v3539
        %v3608 = vunpack.c.l.b16 %v3540
        %v3609 = vunpack.c.h.b16 %v3540
        %v3610 = vunpack.c.l.b16 %v3541
        %v3611 = vunpack.c.h.b16 %v3541
        %v3612 = vunpack.c.l.b16 %v3542
        %v3613 = vunpack.c.h.b16 %v3542
        %v3614 = vunpack.c.l.b16 %v3543
        %v3615 = vunpack.c.h.b16 %v3543
        %v3616 = vunpack.c.l.b16 %v3544
        %v3617 = vunpack.c.h.b16 %v3544
        %v3618 = vpack.c.b16 %v3604, %v3602
        %v3619 = vpack.c.b16 %v3605, %v3603
        %v3620 = vpack.c.b16 %v3608, %v3606
        %v3621 = vpack.c.b16 %v3609, %v3607
        %v3622 = vpack.c.b16 %v3612, %v3610
        %v3623 = vpack.c.b16 %v3613, %v3611
        %v3624 = vpack.c.b16 %v3616, %v3614
        %v3625 = vpack.c.b16 %v3617, %v3615
        %3650 = vrot.lane.b32.xlu0 %v3359, 4
        %v3651 = vpop.permute.xlu0 %3650
        %3652 = vrot.lane.b32.xlu0 %v3360, 4
        %v3653 = vpop.permute.xlu0 %3652
        %3654 = vrot.lane.b32.xlu0 %v3361, 4
        %v3655 = vpop.permute.xlu0 %3654
        %3656 = vrot.lane.b32.xlu0 %v3362, 4
        %v3657 = vpop.permute.xlu0 %3656
        %3658 = vrot.lane.b32.xlu0 %v3363, 4
        %v3659 = vpop.permute.xlu0 %3658
        %3660 = vrot.lane.b32.xlu0 %v3364, 4
        %v3661 = vpop.permute.xlu0 %3660
        %3662 = vrot.lane.b32.xlu0 %v3365, 4
        %v3663 = vpop.permute.xlu0 %3662
        %3664 = vrot.lane.b32.xlu0 %v3366, 4
        %v3665 = vpop.permute.xlu0 %3664
        %3666 = vrot.lane.b32.xlu0 %v3367, 4
        %v3667 = vpop.permute.xlu0 %3666
        %3668 = vrot.lane.b32.xlu0 %v3368, 4
        %v3669 = vpop.permute.xlu0 %3668
        %3670 = vrot.lane.b32.xlu0 %v3369, 4
        %v3671 = vpop.permute.xlu0 %3670
        %3672 = vrot.lane.b32.xlu0 %v3370, 4
        %v3673 = vpop.permute.xlu0 %3672
        %3674 = vrot.lane.b32.xlu0 %v3371, 4
        %v3675 = vpop.permute.xlu0 %3674
        %3676 = vrot.lane.b32.xlu0 %v3372, 4
        %v3677 = vpop.permute.xlu0 %3676
        %3678 = vrot.lane.b32.xlu0 %v3373, 4
        %v3679 = vpop.permute.xlu0 %3678
        %3680 = vrot.lane.b32.xlu0 %v3374, 4
        %v3681 = vpop.permute.xlu0 %3680
        %3682 = vrot.lane.b32.xlu0 %v3375, 4
        %v3683 = vpop.permute.xlu0 %3682
        %3684 = vrot.lane.b32.xlu0 %v3376, 4
        %v3685 = vpop.permute.xlu0 %3684
        %3686 = vrot.lane.b32.xlu0 %v3377, 4
        %v3687 = vpop.permute.xlu0 %3686
        %3688 = vrot.lane.b32.xlu0 %v3378, 4
        %v3689 = vpop.permute.xlu0 %3688
        %3690 = vrot.lane.b32.xlu0 %v3416, 4
        %v3691 = vpop.permute.xlu0 %3690
        %3692 = vrot.lane.b32.xlu0 %v3447, 4
        %v3693 = vpop.permute.xlu0 %3692
        %3694 = vrot.lane.b32.xlu0 %v3448, 4
        %v3695 = vpop.permute.xlu0 %3694
        %3696 = vrot.lane.b32.xlu0 %v3449, 4
        %v3697 = vpop.permute.xlu0 %3696
        %3698 = vrot.lane.b32.xlu0 %v3422, 4
        %v3699 = vpop.permute.xlu0 %3698
        %3700 = vrot.lane.b32.xlu0 %v3424, 4
        %v3701 = vpop.permute.xlu0 %3700
        %3702 = vrot.lane.b32.xlu0 %v3450, 4
        %v3703 = vpop.permute.xlu0 %3702
        %3704 = vrot.lane.b32.xlu0 %v3451, 4
        %v3705 = vpop.permute.xlu0 %3704
        %3706 = vrot.lane.b32.xlu0 %v3452, 4
        %v3707 = vpop.permute.xlu0 %3706
        %3708 = vrot.lane.b32.xlu0 %v3430, 4
        %v3709 = vpop.permute.xlu0 %3708
        %3710 = vrot.lane.b32.xlu0 %v3432, 4
        %v3711 = vpop.permute.xlu0 %3710
        %3712 = vrot.lane.b32.xlu0 %v3453, 4
        %v3713 = vpop.permute.xlu0 %3712
        %3714 = vrot.lane.b32.xlu0 %v3454, 4
        %v3715 = vpop.permute.xlu0 %3714
        %3716 = vrot.lane.b32.xlu0 %v3455, 4
        %v3717 = vpop.permute.xlu0 %3716
        %3718 = vrot.lane.b32.xlu0 %v3438, 4
        %v3719 = vpop.permute.xlu0 %3718
        %3720 = vrot.lane.b32.xlu0 %v3440, 4
        %v3721 = vpop.permute.xlu0 %3720
        %3722 = vrot.lane.b32.xlu0 %v3456, 4
        %v3723 = vpop.permute.xlu0 %3722
        %3724 = vrot.lane.b32.xlu0 %v3457, 4
        %v3725 = vpop.permute.xlu0 %3724
        %3726 = vrot.lane.b32.xlu0 %v3458, 4
        %v3727 = vpop.permute.xlu0 %3726
        %3728 = vrot.lane.b32.xlu0 %v3446, 4
        %v3729 = vpop.permute.xlu0 %3728
        %3730 = vrot.lane.b32.xlu0 %v3480, 4
        %v3731 = vpop.permute.xlu0 %3730
        %3732 = vrot.lane.b32.xlu0 %v3520, 4
        %v3733 = vpop.permute.xlu0 %3732
        %3734 = vrot.lane.b32.xlu0 %v3521, 4
        %v3735 = vpop.permute.xlu0 %3734
        %3736 = vrot.lane.b32.xlu0 %v3522, 4
        %v3737 = vpop.permute.xlu0 %3736
        %3738 = vrot.lane.b32.xlu0 %v3523, 4
        %v3739 = vpop.permute.xlu0 %3738
        %3740 = vrot.lane.b32.xlu0 %v3490, 4
        %v3741 = vpop.permute.xlu0 %3740
        %3742 = vrot.lane.b32.xlu0 %v3524, 4
        %v3743 = vpop.permute.xlu0 %3742
        %3744 = vrot.lane.b32.xlu0 %v3525, 4
        %v3745 = vpop.permute.xlu0 %3744
        %3746 = vrot.lane.b32.xlu0 %v3526, 4
        %v3747 = vpop.permute.xlu0 %3746
        %3748 = vrot.lane.b32.xlu0 %v3527, 4
        %v3749 = vpop.permute.xlu0 %3748
        %3750 = vrot.lane.b32.xlu0 %v3500, 4
        %v3751 = vpop.permute.xlu0 %3750
        %3752 = vrot.lane.b32.xlu0 %v3528, 4
        %v3753 = vpop.permute.xlu0 %3752
        %3754 = vrot.lane.b32.xlu0 %v3529, 4
        %v3755 = vpop.permute.xlu0 %3754
        %3756 = vrot.lane.b32.xlu0 %v3530, 4
        %v3757 = vpop.permute.xlu0 %3756
        %3758 = vrot.lane.b32.xlu0 %v3531, 4
        %v3759 = vpop.permute.xlu0 %3758
        %3760 = vrot.lane.b32.xlu0 %v3510, 4
        %v3761 = vpop.permute.xlu0 %3760
        %3762 = vrot.lane.b32.xlu0 %v3532, 4
        %v3763 = vpop.permute.xlu0 %3762
        %3764 = vrot.lane.b32.xlu0 %v3533, 4
        %v3765 = vpop.permute.xlu0 %3764
        %3766 = vrot.lane.b32.xlu0 %v3534, 4
        %v3767 = vpop.permute.xlu0 %3766
        %3768 = vrot.lane.b32.xlu0 %v3535, 4
        %v3769 = vpop.permute.xlu0 %3768
        %vm3770 = vcmask 31744
        %v3771 = vsel %vm3770, %v3651, %v3653
        %v3772 = vsel %vm3770, %v3653, %v3655
        %v3773 = vsel %vm3770, %v3655, %v3657
        %v3774 = vsel %vm3770, %v3657, %v3659
        %v3775 = vsel %vm3770, %v3661, %v3663
        %v3776 = vsel %vm3770, %v3663, %v3665
        %v3777 = vsel %vm3770, %v3665, %v3667
        %v3778 = vsel %vm3770, %v3667, %v3669
        %v3779 = vsel %vm3770, %v3671, %v3673
        %v3780 = vsel %vm3770, %v3673, %v3675
        %v3781 = vsel %vm3770, %v3675, %v3677
        %v3782 = vsel %vm3770, %v3677, %v3679
        %v3783 = vsel %vm3770, %v3681, %v3683
        %v3784 = vsel %vm3770, %v3683, %v3685
        %v3785 = vsel %vm3770, %v3685, %v3687
        %v3786 = vsel %vm3770, %v3687, %v3689
        %v3787 = vsel %vm3770, %v3691, %v3693
        %v3788 = vsel %vm3770, %v3693, %v3695
        %v3789 = vsel %vm3770, %v3695, %v3697
        %v3790 = vsel %vm3770, %v3697, %v3699
        %v3791 = vsel %vm3770, %v3701, %v3703
        %v3792 = vsel %vm3770, %v3703, %v3705
        %v3793 = vsel %vm3770, %v3705, %v3707
        %v3794 = vsel %vm3770, %v3707, %v3709
        %v3795 = vsel %vm3770, %v3711, %v3713
        %v3796 = vsel %vm3770, %v3713, %v3715
        %v3797 = vsel %vm3770, %v3715, %v3717
        %v3798 = vsel %vm3770, %v3717, %v3719
        %v3799 = vsel %vm3770, %v3721, %v3723
        %v3800 = vsel %vm3770, %v3723, %v3725
        %v3801 = vsel %vm3770, %v3725, %v3727
        %v3802 = vsel %vm3770, %v3727, %v3729
        %v3803 = vsel %vm3770, %v3731, %v3733
        %v3804 = vsel %vm3770, %v3733, %v3735
        %v3805 = vsel %vm3770, %v3735, %v3737
        %v3806 = vsel %vm3770, %v3737, %v3739
        %v3807 = vsel %vm3770, %v3741, %v3743
        %v3808 = vsel %vm3770, %v3743, %v3745
        %v3809 = vsel %vm3770, %v3745, %v3747
        %v3810 = vsel %vm3770, %v3747, %v3749
        %v3811 = vsel %vm3770, %v3751, %v3753
        %v3812 = vsel %vm3770, %v3753, %v3755
        %v3813 = vsel %vm3770, %v3755, %v3757
        %v3814 = vsel %vm3770, %v3757, %v3759
        %v3815 = vsel %vm3770, %v3761, %v3763
        %v3816 = vsel %vm3770, %v3763, %v3765
        %v3817 = vsel %vm3770, %v3765, %v3767
        %v3818 = vsel %vm3770, %v3767, %v3769
        %v3868 = vsel %vm1387, %v3619, 0
        %v3871 = vsel %vm1387, %v3621, 0
        %v3874 = vsel %vm1387, %v3623, 0
        %v3877 = vsel %vm1387, %v3625, 0
        %3879 = vmatprep.subr.bf16.mxu0 %v3772
        %3880 = vmatpush1.bf16.msra.mxu0 %v3771
        %3881 = vmatprep.subr.bf16.mxu0 %v3776
        %3882 = vmatpush1.bf16.msra.mxu0 %v3775
        %3883 = vmatprep.subr.bf16.mxu0 %v3780
        %3884 = vmatpush1.bf16.msra.mxu0 %v3779
        %3885 = vmatprep.subr.bf16.mxu0 %v3784
        %3886 = vmatpush1.bf16.msra.mxu0 %v3783
        %3887 = vmatprep.subr.bf16.mxu0 %v3788
        %3888 = vmatpush1.bf16.msra.mxu0 %v3787
        %3889 = vmatprep.subr.bf16.mxu0 %v3792
        %3890 = vmatpush1.bf16.msra.mxu0 %v3791
        %3891 = vmatprep.subr.bf16.mxu0 %v3796
        %3892 = vmatpush1.bf16.msra.mxu0 %v3795
        %3893 = vmatprep.subr.bf16.mxu0 %v3800
        %3894 = vmatpush1.bf16.msra.mxu0 %v3799
        %3895 = vmatprep.subr.bf16.mxu0 %v3804
        %3896 = vmatpush1.bf16.msra.mxu0 %v3803
        %3897 = vmatprep.subr.bf16.mxu0 %v3808
        %3898 = vmatpush1.bf16.msra.mxu0 %v3807
        %3899 = vmatprep.subr.bf16.mxu0 %v3812
        %3900 = vmatpush1.bf16.msra.mxu0 %v3811
        %3901 = vmatprep.subr.bf16.mxu0 %v3816
        %3902 = vmatpush1.bf16.msra.mxu0 %v3815
        %3903 = vmatprep.subr.bf16.mxu0 0
        %3904 = vmatpush1.bf16.msra.mxu0 0
        %3905 = vmatprep.subr.bf16.mxu0 0
        %3906 = vmatpush1.bf16.msra.mxu0 0
        %3907 = vmatprep.subr.bf16.mxu0 0
        %3908 = vmatpush1.bf16.msra.mxu0 0
        %3909 = vmatprep.subr.bf16.mxu0 0
        %3910 = vmatpush1.bf16.msra.mxu0 0
        %3911 = vmatprep.mubr.bf16.mxu0 %v3868
        %3912 = vmatmul.mubr.bf16.gmra.mrb[0].mxu0 %v3618
        %v3913 = vpop.f32.mrb[0].mxu0
        %v3914 = vadd.f32 %v3557, %v3913
        %v3915 = vpop.f32.mrb[0].mxu0
        %v3916 = vadd.f32 %v3557, %v3915
        %v3917 = vpop.f32.mrb[0].mxu0
        %v3918 = vadd.f32 %v3562, %v3917
        %v3919 = vpop.f32.mrb[0].mxu0
        %v3920 = vadd.f32 %v3562, %v3919
        %3921 = vmatprep.mubr.bf16.mxu0 %v3871
        %3922 = vmatmul.mubr.bf16.gmra.mrb[0].mxu0 %v3620
        %v3923 = vpop.f32.mrb[0].mxu0
        %v3924 = vadd.f32 %v3567, %v3923
        %v3925 = vpop.f32.mrb[0].mxu0
        %v3926 = vadd.f32 %v3567, %v3925
        %v3927 = vpop.f32.mrb[0].mxu0
        %v3928 = vadd.f32 %v3572, %v3927
        %v3929 = vpop.f32.mrb[0].mxu0
        %v3930 = vadd.f32 %v3572, %v3929
        %3931 = vmatprep.mubr.bf16.mxu0 %v3874
        %3932 = vmatmul.mubr.bf16.gmra.mrb[0].mxu0 %v3622
        %v3933 = vpop.f32.mrb[0].mxu0
        %v3934 = vadd.f32 %v3577, %v3933
        %v3935 = vpop.f32.mrb[0].mxu0
        %v3936 = vadd.f32 %v3577, %v3935
        %v3937 = vpop.f32.mrb[0].mxu0
        %v3938 = vadd.f32 %v3582, %v3937
        %v3939 = vpop.f32.mrb[0].mxu0
        %v3940 = vadd.f32 %v3582, %v3939
        %3941 = vmatprep.mubr.bf16.mxu0 %v3877
        %3942 = vmatmul.mubr.bf16.gmra.mrb[0].mxu0 %v3624
        %v3943 = vpop.f32.mrb[0].mxu0
        %v3944 = vadd.f32 %v3587, %v3943
        %v3945 = vpop.f32.mrb[0].mxu0
        %v3946 = vadd.f32 %v3587, %v3945
        %v3947 = vpop.f32.mrb[0].mxu0
        %v3948 = vadd.f32 %v3592, %v3947
        %v3949 = vpop.f32.mrb[0].mxu0
        %v3950 = vadd.f32 %v3592, %v3949
        %3951 = vdwg.mxu0
        %3952 = vmatprep.subr.bf16.mxu0 %v3774
        %3953 = vmatpush1.bf16.msra.mxu0 %v3773
        %3954 = vmatprep.subr.bf16.mxu0 %v3778
        %3955 = vmatpush1.bf16.msra.mxu0 %v3777
        %3956 = vmatprep.subr.bf16.mxu0 %v3782
        %3957 = vmatpush1.bf16.msra.mxu0 %v3781
        %3958 = vmatprep.subr.bf16.mxu0 %v3786
        %3959 = vmatpush1.bf16.msra.mxu0 %v3785
        %3960 = vmatprep.subr.bf16.mxu0 %v3790
        %3961 = vmatpush1.bf16.msra.mxu0 %v3789
        %3962 = vmatprep.subr.bf16.mxu0 %v3794
        %3963 = vmatpush1.bf16.msra.mxu0 %v3793
        %3964 = vmatprep.subr.bf16.mxu0 %v3798
        %3965 = vmatpush1.bf16.msra.mxu0 %v3797
        %3966 = vmatprep.subr.bf16.mxu0 %v3802
        %3967 = vmatpush1.bf16.msra.mxu0 %v3801
        %3968 = vmatprep.subr.bf16.mxu0 %v3806
        %3969 = vmatpush1.bf16.msra.mxu0 %v3805
        %3970 = vmatprep.subr.bf16.mxu0 %v3810
        %3971 = vmatpush1.bf16.msra.mxu0 %v3809
        %3972 = vmatprep.subr.bf16.mxu0 %v3814
        %3973 = vmatpush1.bf16.msra.mxu0 %v3813
        %3974 = vmatprep.subr.bf16.mxu0 %v3818
        %3975 = vmatpush1.bf16.msra.mxu0 %v3817
        %3976 = vmatprep.subr.bf16.mxu0 0
        %3977 = vmatpush1.bf16.msra.mxu0 0
        %3978 = vmatprep.subr.bf16.mxu0 0
        %3979 = vmatpush1.bf16.msra.mxu0 0
        %3980 = vmatprep.subr.bf16.mxu0 0
        %3981 = vmatpush1.bf16.msra.mxu0 0
        %3982 = vmatprep.subr.bf16.mxu0 0
        %3983 = vmatpush1.bf16.msra.mxu0 0
        %3984 = vmatprep.mubr.bf16.mxu0 %v3868
        %3985 = vmatmul.mubr.bf16.gmra.mrb[0].mxu0 %v3618
        %v3986 = vpop.f32.mrb[0].mxu0
        %v3987 = vadd.f32 %v3557, %v3986
        %v3988 = vpop.f32.mrb[0].mxu0
        %v3989 = vadd.f32 %v3557, %v3988
        %v3990 = vpop.f32.mrb[0].mxu0
        %v3991 = vadd.f32 %v3562, %v3990
        %v3992 = vpop.f32.mrb[0].mxu0
        %v3993 = vadd.f32 %v3562, %v3992
        %3994 = vmatprep.mubr.bf16.mxu0 %v3871
        %3995 = vmatmul.mubr.bf16.gmra.mrb[0].mxu0 %v3620
        %v3996 = vpop.f32.mrb[0].mxu0
        %v3997 = vadd.f32 %v3567, %v3996
        %v3998 = vpop.f32.mrb[0].mxu0
        %v3999 = vadd.f32 %v3567, %v3998
        %v4000 = vpop.f32.mrb[0].mxu0
        %v4001 = vadd.f32 %v3572, %v4000
        %v4002 = vpop.f32.mrb[0].mxu0
        %v4003 = vadd.f32 %v3572, %v4002
        %4004 = vmatprep.mubr.bf16.mxu0 %v3874
        %4005 = vmatmul.mubr.bf16.gmra.mrb[0].mxu0 %v3622
        %v4006 = vpop.f32.mrb[0].mxu0
        %v4007 = vadd.f32 %v3577, %v4006
        %v4008 = vpop.f32.mrb[0].mxu0
        %v4009 = vadd.f32 %v3577, %v4008
        %v4010 = vpop.f32.mrb[0].mxu0
        %v4011 = vadd.f32 %v3582, %v4010
        %v4012 = vpop.f32.mrb[0].mxu0
        %v4013 = vadd.f32 %v3582, %v4012
        %4014 = vmatprep.mubr.bf16.mxu0 %v3877
        %4015 = vmatmul.mubr.bf16.gmra.mrb[0].mxu0 %v3624
        %v4016 = vpop.f32.mrb[0].mxu0
        %v4017 = vadd.f32 %v3587, %v4016
        %v4018 = vpop.f32.mrb[0].mxu0
        %v4019 = vadd.f32 %v3587, %v4018
        %v4020 = vpop.f32.mrb[0].mxu0
        %v4021 = vadd.f32 %v3592, %v4020
        %v4022 = vpop.f32.mrb[0].mxu0
        %v4023 = vadd.f32 %v3592, %v4022
        %4024 = vdwg.mxu0
        %vm4025 = vcmp.ge.f32.partialorder %v3914, 0.0
        %vm4026 = vcmp.ge.f32.partialorder %v3916, 0.0
        %vm4027 = vcmp.ge.f32.partialorder %v3987, 0.0
        %vm4028 = vcmp.ge.f32.partialorder %v3989, 0.0
        %vm4029 = vcmp.ge.f32.partialorder %v3918, 0.0
        %vm4030 = vcmp.ge.f32.partialorder %v3920, 0.0
        %vm4031 = vcmp.ge.f32.partialorder %v3991, 0.0
        %vm4032 = vcmp.ge.f32.partialorder %v3993, 0.0
        %vm4033 = vcmp.ge.f32.partialorder %v3924, 0.0
        %vm4034 = vcmp.ge.f32.partialorder %v3926, 0.0
        %vm4035 = vcmp.ge.f32.partialorder %v3997, 0.0
        %vm4036 = vcmp.ge.f32.partialorder %v3999, 0.0
        %vm4037 = vcmp.ge.f32.partialorder %v3928, 0.0
        %vm4038 = vcmp.ge.f32.partialorder %v3930, 0.0
        %vm4039 = vcmp.ge.f32.partialorder %v4001, 0.0
        %vm4040 = vcmp.ge.f32.partialorder %v4003, 0.0
        %vm4041 = vcmp.ge.f32.partialorder %v3934, 0.0
        %vm4042 = vcmp.ge.f32.partialorder %v3936, 0.0
        %vm4043 = vcmp.ge.f32.partialorder %v4007, 0.0
        %vm4044 = vcmp.ge.f32.partialorder %v4009, 0.0
        %vm4045 = vcmp.ge.f32.partialorder %v3938, 0.0
        %vm4046 = vcmp.ge.f32.partialorder %v3940, 0.0
        %vm4047 = vcmp.ge.f32.partialorder %v4011, 0.0
        %vm4048 = vcmp.ge.f32.partialorder %v4013, 0.0
        %vm4049 = vcmp.ge.f32.partialorder %v3944, 0.0
        %vm4050 = vcmp.ge.f32.partialorder %v3946, 0.0
        %vm4051 = vcmp.ge.f32.partialorder %v4017, 0.0
        %vm4052 = vcmp.ge.f32.partialorder %v4019, 0.0
        %vm4053 = vcmp.ge.f32.partialorder %v3948, 0.0
        %vm4054 = vcmp.ge.f32.partialorder %v3950, 0.0
        %vm4055 = vcmp.ge.f32.partialorder %v4021, 0.0
        %vm4056 = vcmp.ge.f32.partialorder %v4023, 0.0
        %v4057 = vmul.f32 %v3914, 0.2
        %v4058 = vmul.f32 %v3916, 0.2
        %v4059 = vmul.f32 %v3987, 0.2
        %v4060 = vmul.f32 %v3989, 0.2
        %v4061 = vmul.f32 %v3918, 0.2
        %v4062 = vmul.f32 %v3920, 0.2
        %v4063 = vmul.f32 %v3991, 0.2
        %v4064 = vmul.f32 %v3993, 0.2
        %v4065 = vmul.f32 %v3924, 0.2
        %v4066 = vmul.f32 %v3926, 0.2
        %v4067 = vmul.f32 %v3997, 0.2
        %v4068 = vmul.f32 %v3999, 0.2
        %v4069 = vmul.f32 %v3928, 0.2
        %v4070 = vmul.f32 %v3930, 0.2
        %v4071 = vmul.f32 %v4001, 0.2
        %v4072 = vmul.f32 %v4003, 0.2
        %v4073 = vmul.f32 %v3934, 0.2
        %v4074 = vmul.f32 %v3936, 0.2
        %v4075 = vmul.f32 %v4007, 0.2
        %v4076 = vmul.f32 %v4009, 0.2
        %v4077 = vmul.f32 %v3938, 0.2
        %v4078 = vmul.f32 %v3940, 0.2
        %v4079 = vmul.f32 %v4011, 0.2
        %v4080 = vmul.f32 %v4013, 0.2
        %v4081 = vmul.f32 %v3944, 0.2
        %v4082 = vmul.f32 %v3946, 0.2
        %v4083 = vmul.f32 %v4017, 0.2
        %v4084 = vmul.f32 %v4019, 0.2
        %v4085 = vmul.f32 %v3948, 0.2
        %v4086 = vmul.f32 %v3950, 0.2
        %v4087 = vmul.f32 %v4021, 0.2
        %v4088 = vmul.f32 %v4023, 0.2
        %v4089 = vsel %vm4025, %v3914, %v4057
        %v4090 = vsel %vm4026, %v3916, %v4058
        %v4091 = vsel %vm4027, %v3987, %v4059
        %v4092 = vsel %vm4028, %v3989, %v4060
        %v4093 = vsel %vm4029, %v3918, %v4061
        %v4094 = vsel %vm4030, %v3920, %v4062
        %v4095 = vsel %vm4031, %v3991, %v4063
        %v4096 = vsel %vm4032, %v3993, %v4064
        %v4097 = vsel %vm4033, %v3924, %v4065
        %v4098 = vsel %vm4034, %v3926, %v4066
        %v4099 = vsel %vm4035, %v3997, %v4067
        %v4100 = vsel %vm4036, %v3999, %v4068
        %v4101 = vsel %vm4037, %v3928, %v4069
        %v4102 = vsel %vm4038, %v3930, %v4070
        %v4103 = vsel %vm4039, %v4001, %v4071
        %v4104 = vsel %vm4040, %v4003, %v4072
        %v4105 = vsel %vm4041, %v3934, %v4073
        %v4106 = vsel %vm4042, %v3936, %v4074
        %v4107 = vsel %vm4043, %v4007, %v4075
        %v4108 = vsel %vm4044, %v4009, %v4076
        %v4109 = vsel %vm4045, %v3938, %v4077
        %v4110 = vsel %vm4046, %v3940, %v4078
        %v4111 = vsel %vm4047, %v4011, %v4079
        %v4112 = vsel %vm4048, %v4013, %v4080
        %v4113 = vsel %vm4049, %v3944, %v4081
        %v4114 = vsel %vm4050, %v3946, %v4082
        %v4115 = vsel %vm4051, %v4017, %v4083
        %v4116 = vsel %vm4052, %v4019, %v4084
        %v4117 = vsel %vm4053, %v3948, %v4085
        %v4118 = vsel %vm4054, %v3950, %v4086
        %v4119 = vsel %vm4055, %v4021, %v4087
        %v4120 = vsel %vm4056, %v4023, %v4088
        %v4121 = vmul.f32 %v4089, %v272
        %v4122 = vmul.f32 %v4090, %v273
        %v4123 = vmul.f32 %v4091, %v274
        %v4124 = vmul.f32 %v4092, %v275
        %v4125 = vmul.f32 %v4093, %v272
        %v4126 = vmul.f32 %v4094, %v273
        %v4127 = vmul.f32 %v4095, %v274
        %v4128 = vmul.f32 %v4096, %v275
        %v4129 = vmul.f32 %v4097, %v272
        %v4130 = vmul.f32 %v4098, %v273
        %v4131 = vmul.f32 %v4099, %v274
        %v4132 = vmul.f32 %v4100, %v275
        %v4133 = vmul.f32 %v4101, %v272
        %v4134 = vmul.f32 %v4102, %v273
        %v4135 = vmul.f32 %v4103, %v274
        %v4136 = vmul.f32 %v4104, %v275
        %v4137 = vmul.f32 %v4105, %v272
        %v4138 = vmul.f32 %v4106, %v273
        %v4139 = vmul.f32 %v4107, %v274
        %v4140 = vmul.f32 %v4108, %v275
        %v4141 = vmul.f32 %v4109, %v272
        %v4142 = vmul.f32 %v4110, %v273
        %v4143 = vmul.f32 %v4111, %v274
        %v4144 = vmul.f32 %v4112, %v275
        %v4145 = vmul.f32 %v4113, %v272
        %v4146 = vmul.f32 %v4114, %v273
        %v4147 = vmul.f32 %v4115, %v274
        %v4148 = vmul.f32 %v4116, %v275
        %v4149 = vmul.f32 %v4117, %v272
        %v4150 = vmul.f32 %v4118, %v273
        %v4151 = vmul.f32 %v4119, %v274
        %v4152 = vmul.f32 %v4120, %v275
        %v4153 = vpack.c.bf16 %v4125, %v4121
        %v4154 = vpack.c.bf16 %v4126, %v4122
        %v4155 = vpack.c.bf16 %v4127, %v4123
        %v4156 = vpack.c.bf16 %v4128, %v4124
        %v4157 = vpack.c.bf16 %v4133, %v4129
        %v4158 = vpack.c.bf16 %v4134, %v4130
        %v4159 = vpack.c.bf16 %v4135, %v4131
        %v4160 = vpack.c.bf16 %v4136, %v4132
        %v4161 = vpack.c.bf16 %v4141, %v4137
        %v4162 = vpack.c.bf16 %v4142, %v4138
        %v4163 = vpack.c.bf16 %v4143, %v4139
        %v4164 = vpack.c.bf16 %v4144, %v4140
        %v4165 = vpack.c.bf16 %v4149, %v4145
        %v4166 = vpack.c.bf16 %v4150, %v4146
        %v4167 = vpack.c.bf16 %v4151, %v4147
        %v4168 = vpack.c.bf16 %v4152, %v4148
        %4169 = vst [vmem:[#allocation2 + $0x8] sm:$0xff] %v4153
        %4170 = vst [vmem:[#allocation2 + $0x10] sm:$0xff] %v4154
        %4171 = vst [vmem:[#allocation2 + $0x18] sm:$0xff] %v4155
        %4172 = vst [vmem:[#allocation2 + $0x20] sm:$0xff] %v4156
        %4173 = vst [vmem:[#allocation2 + $0x38] sm:$0xff] %v4157
        %4174 = vst [vmem:[#allocation2 + $0x40] sm:$0xff] %v4158
        %4175 = vst [vmem:[#allocation2 + $0x48] sm:$0xff] %v4159
        %4176 = vst [vmem:[#allocation2 + $0x50] sm:$0xff] %v4160
        %4177 = vst [vmem:[#allocation2 + $0x68] sm:$0xff] %v4161
        %4178 = vst [vmem:[#allocation2 + $0x70] sm:$0xff] %v4162
        %4179 = vst [vmem:[#allocation2 + $0x78] sm:$0xff] %v4163
        %4180 = vst [vmem:[#allocation2 + $0x80] sm:$0xff] %v4164
        %4181 = vst [vmem:[#allocation2 + $0x98] sm:$0xff] %v4165
        %4182 = vst [vmem:[#allocation2 + $0xa0] sm:$0xff] %v4166
        %4183 = vst [vmem:[#allocation2 + $0xa8] sm:$0xff] %v4167
        %4184 = vst [vmem:[#allocation2 + $0xb0] sm:$0xff] %v4168
        %v4185 = vld [vmem:[#allocation2] sm:$0xff]
        %v4186 = vld [vmem:[#allocation2 + $0x8] sm:$0xff]
        %v4187 = vld [vmem:[#allocation2 + $0x10] sm:$0xff]
        %v4188 = vld [vmem:[#allocation2 + $0x18] sm:$0xff]
        %v4189 = vld [vmem:[#allocation2 + $0x20] sm:$0xff]
        %v4190 = vld [vmem:[#allocation2 + $0x30] sm:$0xff]
        %v4191 = vld [vmem:[#allocation2 + $0x38] sm:$0xff]
        %v4192 = vld [vmem:[#allocation2 + $0x40] sm:$0xff]
        %v4193 = vld [vmem:[#allocation2 + $0x48] sm:$0xff]
        %v4194 = vld [vmem:[#allocation2 + $0x50] sm:$0xff]
        %v4195 = vld [vmem:[#allocation2 + $0x60] sm:$0xff]
        %v4196 = vld [vmem:[#allocation2 + $0x68] sm:$0xff]
        %v4197 = vld [vmem:[#allocation2 + $0x70] sm:$0xff]
        %v4198 = vld [vmem:[#allocation2 + $0x78] sm:$0xff]
        %v4199 = vld [vmem:[#allocation2 + $0x80] sm:$0xff]
        %v4200 = vld [vmem:[#allocation2 + $0x90] sm:$0xff]
        %v4201 = vld [vmem:[#allocation2 + $0x98] sm:$0xff]
        %v4202 = vld [vmem:[#allocation2 + $0xa0] sm:$0xff]
        %v4203 = vld [vmem:[#allocation2 + $0xa8] sm:$0xff]
        %v4204 = vld [vmem:[#allocation2 + $0xb0] sm:$0xff]
        %v4205 = vld [vmem:[#allocation2 + $0x8] sm:$0xff]
        %v4206 = vld [vmem:[#allocation2 + $0x10] sm:$0xff]
        %v4207 = vld [vmem:[#allocation2 + $0x18] sm:$0xff]
        %v4208 = vld [vmem:[#allocation2 + $0x20] sm:$0xff]
        %v4209 = vld [vmem:[#allocation2 + $0x28] sm:$0xff]
        %v4210 = vld [vmem:[#allocation2 + $0x38] sm:$0xff]
        %v4211 = vld [vmem:[#allocation2 + $0x40] sm:$0xff]
        %v4212 = vld [vmem:[#allocation2 + $0x48] sm:$0xff]
        %v4213 = vld [vmem:[#allocation2 + $0x50] sm:$0xff]
        %v4214 = vld [vmem:[#allocation2 + $0x58] sm:$0xff]
        %v4215 = vld [vmem:[#allocation2 + $0x68] sm:$0xff]
        %v4216 = vld [vmem:[#allocation2 + $0x70] sm:$0xff]
        %v4217 = vld [vmem:[#allocation2 + $0x78] sm:$0xff]
        %v4218 = vld [vmem:[#allocation2 + $0x80] sm:$0xff]
        %v4219 = vld [vmem:[#allocation2 + $0x88] sm:$0xff]
        %v4220 = vld [vmem:[#allocation2 + $0x98] sm:$0xff]
        %v4221 = vld [vmem:[#allocation2 + $0xa0] sm:$0xff]
        %v4222 = vld [vmem:[#allocation2 + $0xa8] sm:$0xff]
        %v4223 = vld [vmem:[#allocation2 + $0xb0] sm:$0xff]
        %v4224 = vld [vmem:[#allocation2 + $0xb8] sm:$0xff]
        %4241 = vrot.lane.b32.xlu0 %v4153, 123
        %v4242 = vpop.permute.xlu0 %4241
        %4243 = vrot.lane.b32.xlu0 %v4154, 123
        %v4244 = vpop.permute.xlu0 %4243
        %4245 = vrot.lane.b32.xlu0 %v4155, 123
        %v4246 = vpop.permute.xlu0 %4245
        %4247 = vrot.lane.b32.xlu0 %v4156, 123
        %v4248 = vpop.permute.xlu0 %4247
        %4249 = vrot.lane.b32.xlu0 %v4157, 123
        %v4250 = vpop.permute.xlu0 %4249
        %4251 = vrot.lane.b32.xlu0 %v4158, 123
        %v4252 = vpop.permute.xlu0 %4251
        %4253 = vrot.lane.b32.xlu0 %v4159, 123
        %v4254 = vpop.permute.xlu0 %4253
        %4255 = vrot.lane.b32.xlu0 %v4160, 123
        %v4256 = vpop.permute.xlu0 %4255
        %4257 = vrot.lane.b32.xlu0 %v4161, 123
        %v4258 = vpop.permute.xlu0 %4257
        %4259 = vrot.lane.b32.xlu0 %v4162, 123
        %v4260 = vpop.permute.xlu0 %4259
        %4261 = vrot.lane.b32.xlu0 %v4163, 123
        %v4262 = vpop.permute.xlu0 %4261
        %4263 = vrot.lane.b32.xlu0 %v4164, 123
        %v4264 = vpop.permute.xlu0 %4263
        %4265 = vrot.lane.b32.xlu0 %v4165, 123
        %v4266 = vpop.permute.xlu0 %4265
        %4267 = vrot.lane.b32.xlu0 %v4166, 123
        %v4268 = vpop.permute.xlu0 %4267
        %4269 = vrot.lane.b32.xlu0 %v4167, 123
        %v4270 = vpop.permute.xlu0 %4269
        %4271 = vrot.lane.b32.xlu0 %v4168, 123
        %v4272 = vpop.permute.xlu0 %4271
        %vm4273 = vcmask 1006592
        %v4274 = vsel %vm4273, %v4242, %v4244
        %v4275 = vsel %vm4273, %v4244, %v4246
        %v4276 = vsel %vm4273, %v4246, %v4248
        %v4277 = vsel %vm4273, %v4250, %v4252
        %v4278 = vsel %vm4273, %v4252, %v4254
        %v4279 = vsel %vm4273, %v4254, %v4256
        %v4280 = vsel %vm4273, %v4258, %v4260
        %v4281 = vsel %vm4273, %v4260, %v4262
        %v4282 = vsel %vm4273, %v4262, %v4264
        %v4283 = vsel %vm4273, %v4266, %v4268
        %v4284 = vsel %vm4273, %v4268, %v4270
        %v4285 = vsel %vm4273, %v4270, %v4272
        %4306 = vrot.lane.b32.xlu0 %v4205, 118
        %v4307 = vpop.permute.xlu0 %4306
        %4308 = vrot.lane.b32.xlu0 %v4206, 118
        %v4309 = vpop.permute.xlu0 %4308
        %4310 = vrot.lane.b32.xlu0 %v4207, 118
        %v4311 = vpop.permute.xlu0 %4310
        %4312 = vrot.lane.b32.xlu0 %v4208, 118
        %v4313 = vpop.permute.xlu0 %4312
        %4314 = vrot.lane.b32.xlu0 %v4209, 118
        %v4315 = vpop.permute.xlu0 %4314
        %4316 = vrot.lane.b32.xlu0 %v4210, 118
        %v4317 = vpop.permute.xlu0 %4316
        %4318 = vrot.lane.b32.xlu0 %v4211, 118
        %v4319 = vpop.permute.xlu0 %4318
        %4320 = vrot.lane.b32.xlu0 %v4212, 118
        %v4321 = vpop.permute.xlu0 %4320
        %4322 = vrot.lane.b32.xlu0 %v4213, 118
        %v4323 = vpop.permute.xlu0 %4322
        %4324 = vrot.lane.b32.xlu0 %v4214, 118
        %v4325 = vpop.permute.xlu0 %4324
        %4326 = vrot.lane.b32.xlu0 %v4215, 118
        %v4327 = vpop.permute.xlu0 %4326
        %4328 = vrot.lane.b32.xlu0 %v4216, 118
        %v4329 = vpop.permute.xlu0 %4328
        %4330 = vrot.lane.b32.xlu0 %v4217, 118
        %v4331 = vpop.permute.xlu0 %4330
        %4332 = vrot.lane.b32.xlu0 %v4218, 118
        %v4333 = vpop.permute.xlu0 %4332
        %4334 = vrot.lane.b32.xlu0 %v4219, 118
        %v4335 = vpop.permute.xlu0 %4334
        %4336 = vrot.lane.b32.xlu0 %v4220, 118
        %v4337 = vpop.permute.xlu0 %4336
        %4338 = vrot.lane.b32.xlu0 %v4221, 118
        %v4339 = vpop.permute.xlu0 %4338
        %4340 = vrot.lane.b32.xlu0 %v4222, 118
        %v4341 = vpop.permute.xlu0 %4340
        %4342 = vrot.lane.b32.xlu0 %v4223, 118
        %v4343 = vpop.permute.xlu0 %4342
        %4344 = vrot.lane.b32.xlu0 %v4224, 118
        %v4345 = vpop.permute.xlu0 %4344
        %vm4346 = vcmask 965632
        %v4347 = vsel %vm4346, %v4307, %v4309
        %v4348 = vsel %vm4346, %v4309, %v4311
        %v4349 = vsel %vm4346, %v4311, %v4313
        %v4350 = vsel %vm4346, %v4313, %v4315
        %v4351 = vsel %vm4346, %v4317, %v4319
        %v4352 = vsel %vm4346, %v4319, %v4321
        %v4353 = vsel %vm4346, %v4321, %v4323
        %v4354 = vsel %vm4346, %v4323, %v4325
        %v4355 = vsel %vm4346, %v4327, %v4329
        %v4356 = vsel %vm4346, %v4329, %v4331
        %v4357 = vsel %vm4346, %v4331, %v4333
        %v4358 = vsel %vm4346, %v4333, %v4335
        %v4359 = vsel %vm4346, %v4337, %v4339
        %v4360 = vsel %vm4346, %v4339, %v4341
        %v4361 = vsel %vm4346, %v4341, %v4343
        %v4362 = vsel %vm4346, %v4343, %v4345
        %s4363 = scalar_lea.vmem %s2, 256
        %v4364 = vld [vmem:[%s4363] sm:$0xff]
        %v4365 = vld [vmem:[%s4363 + $0x8] sm:$0xff]
        %v4366 = vld [vmem:[%s4363 + $0x10] sm:$0xff]
        %v4367 = vld [vmem:[%s4363 + $0x18] sm:$0xff]
        %v4368 = vld [vmem:[%s4363 + $0x20] sm:$0xff]
        %v4369 = vld [vmem:[%s4363 + $0x28] sm:$0xff]
        %v4370 = vld [vmem:[%s4363 + $0x30] sm:$0xff]
        %v4371 = vld [vmem:[%s4363 + $0x38] sm:$0xff]
        %s4372 = scalar_lea.vmem %s4, 320
        %v4373 = vld [vmem:[%s4372] sm:$0xff]
        %v4374 = vld [vmem:[%s4372 + $0x8] sm:$0xff]
        %v4375 = vld [vmem:[%s4372 + $0x10] sm:$0xff]
        %v4376 = vld [vmem:[%s4372 + $0x18] sm:$0xff]
        %v4377 = vld [vmem:[%s4372 + $0x20] sm:$0xff]
        %v4378 = vld [vmem:[%s4372 + $0x28] sm:$0xff]
        %v4379 = vld [vmem:[%s4372 + $0x30] sm:$0xff]
        %v4380 = vld [vmem:[%s4372 + $0x38] sm:$0xff]
        %4382 = vset.pattern.permute.xlu0 0
        %4383 = vperm.xlu0 %4382, %v4373
        %v4384 = vpop.permute.xlu0 %4383
        %4387 = vset.pattern.permute.xlu0 0
        %4388 = vperm.xlu0 %4387, %v4374
        %v4389 = vpop.permute.xlu0 %4388
        %4392 = vset.pattern.permute.xlu0 0
        %4393 = vperm.xlu0 %4392, %v4375
        %v4394 = vpop.permute.xlu0 %4393
        %4397 = vset.pattern.permute.xlu0 0
        %4398 = vperm.xlu0 %4397, %v4376
        %v4399 = vpop.permute.xlu0 %4398
        %4402 = vset.pattern.permute.xlu0 0
        %4403 = vperm.xlu0 %4402, %v4377
        %v4404 = vpop.permute.xlu0 %4403
        %4407 = vset.pattern.permute.xlu0 0
        %4408 = vperm.xlu0 %4407, %v4378
        %v4409 = vpop.permute.xlu0 %4408
        %4412 = vset.pattern.permute.xlu0 0
        %4413 = vperm.xlu0 %4412, %v4379
        %v4414 = vpop.permute.xlu0 %4413
        %4417 = vset.pattern.permute.xlu0 0
        %4418 = vperm.xlu0 %4417, %v4380
        %v4419 = vpop.permute.xlu0 %4418
        %v4429 = vunpack.c.l.b16 %v4364
        %v4430 = vunpack.c.h.b16 %v4364
        %v4431 = vunpack.c.l.b16 %v4365
        %v4432 = vunpack.c.h.b16 %v4365
        %v4433 = vunpack.c.l.b16 %v4366
        %v4434 = vunpack.c.h.b16 %v4366
        %v4435 = vunpack.c.l.b16 %v4367
        %v4436 = vunpack.c.h.b16 %v4367
        %v4437 = vunpack.c.l.b16 %v4368
        %v4438 = vunpack.c.h.b16 %v4368
        %v4439 = vunpack.c.l.b16 %v4369
        %v4440 = vunpack.c.h.b16 %v4369
        %v4441 = vunpack.c.l.b16 %v4370
        %v4442 = vunpack.c.h.b16 %v4370
        %v4443 = vunpack.c.l.b16 %v4371
        %v4444 = vunpack.c.h.b16 %v4371
        %v4445 = vpack.c.b16 %v4431, %v4429
        %v4446 = vpack.c.b16 %v4432, %v4430
        %v4447 = vpack.c.b16 %v4435, %v4433
        %v4448 = vpack.c.b16 %v4436, %v4434
        %v4449 = vpack.c.b16 %v4439, %v4437
        %v4450 = vpack.c.b16 %v4440, %v4438
        %v4451 = vpack.c.b16 %v4443, %v4441
        %v4452 = vpack.c.b16 %v4444, %v4442
        %4477 = vrot.lane.b32.xlu0 %v4185, 5
        %v4478 = vpop.permute.xlu0 %4477
        %4479 = vrot.lane.b32.xlu0 %v4186, 5
        %v4480 = vpop.permute.xlu0 %4479
        %4481 = vrot.lane.b32.xlu0 %v4187, 5
        %v4482 = vpop.permute.xlu0 %4481
        %4483 = vrot.lane.b32.xlu0 %v4188, 5
        %v4484 = vpop.permute.xlu0 %4483
        %4485 = vrot.lane.b32.xlu0 %v4189, 5
        %v4486 = vpop.permute.xlu0 %4485
        %4487 = vrot.lane.b32.xlu0 %v4190, 5
        %v4488 = vpop.permute.xlu0 %4487
        %4489 = vrot.lane.b32.xlu0 %v4191, 5
        %v4490 = vpop.permute.xlu0 %4489
        %4491 = vrot.lane.b32.xlu0 %v4192, 5
        %v4492 = vpop.permute.xlu0 %4491
        %4493 = vrot.lane.b32.xlu0 %v4193, 5
        %v4494 = vpop.permute.xlu0 %4493
        %4495 = vrot.lane.b32.xlu0 %v4194, 5
        %v4496 = vpop.permute.xlu0 %4495
        %4497 = vrot.lane.b32.xlu0 %v4195, 5
        %v4498 = vpop.permute.xlu0 %4497
        %4499 = vrot.lane.b32.xlu0 %v4196, 5
        %v4500 = vpop.permute.xlu0 %4499
        %4501 = vrot.lane.b32.xlu0 %v4197, 5
        %v4502 = vpop.permute.xlu0 %4501
        %4503 = vrot.lane.b32.xlu0 %v4198, 5
        %v4504 = vpop.permute.xlu0 %4503
        %4505 = vrot.lane.b32.xlu0 %v4199, 5
        %v4506 = vpop.permute.xlu0 %4505
        %4507 = vrot.lane.b32.xlu0 %v4200, 5
        %v4508 = vpop.permute.xlu0 %4507
        %4509 = vrot.lane.b32.xlu0 %v4201, 5
        %v4510 = vpop.permute.xlu0 %4509
        %4511 = vrot.lane.b32.xlu0 %v4202, 5
        %v4512 = vpop.permute.xlu0 %4511
        %4513 = vrot.lane.b32.xlu0 %v4203, 5
        %v4514 = vpop.permute.xlu0 %4513
        %4515 = vrot.lane.b32.xlu0 %v4204, 5
        %v4516 = vpop.permute.xlu0 %4515
        %4517 = vrot.lane.b32.xlu0 %v4242, 5
        %v4518 = vpop.permute.xlu0 %4517
        %4519 = vrot.lane.b32.xlu0 %v4274, 5
        %v4520 = vpop.permute.xlu0 %4519
        %4521 = vrot.lane.b32.xlu0 %v4275, 5
        %v4522 = vpop.permute.xlu0 %4521
        %4523 = vrot.lane.b32.xlu0 %v4276, 5
        %v4524 = vpop.permute.xlu0 %4523
        %4525 = vrot.lane.b32.xlu0 %v4248, 5
        %v4526 = vpop.permute.xlu0 %4525
        %4527 = vrot.lane.b32.xlu0 %v4250, 5
        %v4528 = vpop.permute.xlu0 %4527
        %4529 = vrot.lane.b32.xlu0 %v4277, 5
        %v4530 = vpop.permute.xlu0 %4529
        %4531 = vrot.lane.b32.xlu0 %v4278, 5
        %v4532 = vpop.permute.xlu0 %4531
        %4533 = vrot.lane.b32.xlu0 %v4279, 5
        %v4534 = vpop.permute.xlu0 %4533
        %4535 = vrot.lane.b32.xlu0 %v4256, 5
        %v4536 = vpop.permute.xlu0 %4535
        %4537 = vrot.lane.b32.xlu0 %v4258, 5
        %v4538 = vpop.permute.xlu0 %4537
        %4539 = vrot.lane.b32.xlu0 %v4280, 5
        %v4540 = vpop.permute.xlu0 %4539
        %4541 = vrot.lane.b32.xlu0 %v4281, 5
        %v4542 = vpop.permute.xlu0 %4541
        %4543 = vrot.lane.b32.xlu0 %v4282, 5
        %v4544 = vpop.permute.xlu0 %4543
        %4545 = vrot.lane.b32.xlu0 %v4264, 5
        %v4546 = vpop.permute.xlu0 %4545
        %4547 = vrot.lane.b32.xlu0 %v4266, 5
        %v4548 = vpop.permute.xlu0 %4547
        %4549 = vrot.lane.b32.xlu0 %v4283, 5
        %v4550 = vpop.permute.xlu0 %4549
        %4551 = vrot.lane.b32.xlu0 %v4284, 5
        %v4552 = vpop.permute.xlu0 %4551
        %4553 = vrot.lane.b32.xlu0 %v4285, 5
        %v4554 = vpop.permute.xlu0 %4553
        %4555 = vrot.lane.b32.xlu0 %v4272, 5
        %v4556 = vpop.permute.xlu0 %4555
        %4557 = vrot.lane.b32.xlu0 %v4307, 5
        %v4558 = vpop.permute.xlu0 %4557
        %4559 = vrot.lane.b32.xlu0 %v4347, 5
        %v4560 = vpop.permute.xlu0 %4559
        %4561 = vrot.lane.b32.xlu0 %v4348, 5
        %v4562 = vpop.permute.xlu0 %4561
        %4563 = vrot.lane.b32.xlu0 %v4349, 5
        %v4564 = vpop.permute.xlu0 %4563
        %4565 = vrot.lane.b32.xlu0 %v4350, 5
        %v4566 = vpop.permute.xlu0 %4565
        %4567 = vrot.lane.b32.xlu0 %v4317, 5
        %v4568 = vpop.permute.xlu0 %4567
        %4569 = vrot.lane.b32.xlu0 %v4351, 5
        %v4570 = vpop.permute.xlu0 %4569
        %4571 = vrot.lane.b32.xlu0 %v4352, 5
        %v4572 = vpop.permute.xlu0 %4571
        %4573 = vrot.lane.b32.xlu0 %v4353, 5
        %v4574 = vpop.permute.xlu0 %4573
        %4575 = vrot.lane.b32.xlu0 %v4354, 5
        %v4576 = vpop.permute.xlu0 %4575
        %4577 = vrot.lane.b32.xlu0 %v4327, 5
        %v4578 = vpop.permute.xlu0 %4577
        %4579 = vrot.lane.b32.xlu0 %v4355, 5
        %v4580 = vpop.permute.xlu0 %4579
        %4581 = vrot.lane.b32.xlu0 %v4356, 5
        %v4582 = vpop.permute.xlu0 %4581
        %4583 = vrot.lane.b32.xlu0 %v4357, 5
        %v4584 = vpop.permute.xlu0 %4583
        %4585 = vrot.lane.b32.xlu0 %v4358, 5
        %v4586 = vpop.permute.xlu0 %4585
        %4587 = vrot.lane.b32.xlu0 %v4337, 5
        %v4588 = vpop.permute.xlu0 %4587
        %4589 = vrot.lane.b32.xlu0 %v4359, 5
        %v4590 = vpop.permute.xlu0 %4589
        %4591 = vrot.lane.b32.xlu0 %v4360, 5
        %v4592 = vpop.permute.xlu0 %4591
        %4593 = vrot.lane.b32.xlu0 %v4361, 5
        %v4594 = vpop.permute.xlu0 %4593
        %4595 = vrot.lane.b32.xlu0 %v4362, 5
        %v4596 = vpop.permute.xlu0 %4595
        %vm4597 = vcmask 39936
        %v4598 = vsel %vm4597, %v4478, %v4480
        %v4599 = vsel %vm4597, %v4480, %v4482
        %v4600 = vsel %vm4597, %v4482, %v4484
        %v4601 = vsel %vm4597, %v4484, %v4486
        %v4602 = vsel %vm4597, %v4488, %v4490
        %v4603 = vsel %vm4597, %v4490, %v4492
        %v4604 = vsel %vm4597, %v4492, %v4494
        %v4605 = vsel %vm4597, %v4494, %v4496
        %v4606 = vsel %vm4597, %v4498, %v4500
        %v4607 = vsel %vm4597, %v4500, %v4502
        %v4608 = vsel %vm4597, %v4502, %v4504
        %v4609 = vsel %vm4597, %v4504, %v4506
        %v4610 = vsel %vm4597, %v4508, %v4510
        %v4611 = vsel %vm4597, %v4510, %v4512
        %v4612 = vsel %vm4597, %v4512, %v4514
        %v4613 = vsel %vm4597, %v4514, %v4516
        %v4614 = vsel %vm4597, %v4518, %v4520
        %v4615 = vsel %vm4597, %v4520, %v4522
        %v4616 = vsel %vm4597, %v4522, %v4524
        %v4617 = vsel %vm4597, %v4524, %v4526
        %v4618 = vsel %vm4597, %v4528, %v4530
        %v4619 = vsel %vm4597, %v4530, %v4532
        %v4620 = vsel %vm4597, %v4532, %v4534
        %v4621 = vsel %vm4597, %v4534, %v4536
        %v4622 = vsel %vm4597, %v4538, %v4540
        %v4623 = vsel %vm4597, %v4540, %v4542
        %v4624 = vsel %vm4597, %v4542, %v4544
        %v4625 = vsel %vm4597, %v4544, %v4546
        %v4626 = vsel %vm4597, %v4548, %v4550
        %v4627 = vsel %vm4597, %v4550, %v4552
        %v4628 = vsel %vm4597, %v4552, %v4554
        %v4629 = vsel %vm4597, %v4554, %v4556
        %v4630 = vsel %vm4597, %v4558, %v4560
        %v4631 = vsel %vm4597, %v4560, %v4562
        %v4632 = vsel %vm4597, %v4562, %v4564
        %v4633 = vsel %vm4597, %v4564, %v4566
        %v4634 = vsel %vm4597, %v4568, %v4570
        %v4635 = vsel %vm4597, %v4570, %v4572
        %v4636 = vsel %vm4597, %v4572, %v4574
        %v4637 = vsel %vm4597, %v4574, %v4576
        %v4638 = vsel %vm4597, %v4578, %v4580
        %v4639 = vsel %vm4597, %v4580, %v4582
        %v4640 = vsel %vm4597, %v4582, %v4584
        %v4641 = vsel %vm4597, %v4584, %v4586
        %v4642 = vsel %vm4597, %v4588, %v4590
        %v4643 = vsel %vm4597, %v4590, %v4592
        %v4644 = vsel %vm4597, %v4592, %v4594
        %v4645 = vsel %vm4597, %v4594, %v4596
        %v4695 = vsel %vm1387, %v4446, 0
        %v4698 = vsel %vm1387, %v4448, 0
        %v4701 = vsel %vm1387, %v4450, 0
        %v4704 = vsel %vm1387, %v4452, 0
        %4706 = vmatprep.subr.bf16.mxu0 %v4599
        %4707 = vmatpush1.bf16.msra.mxu0 %v4598
        %4708 = vmatprep.subr.bf16.mxu0 %v4603
        %4709 = vmatpush1.bf16.msra.mxu0 %v4602
        %4710 = vmatprep.subr.bf16.mxu0 %v4607
        %4711 = vmatpush1.bf16.msra.mxu0 %v4606
        %4712 = vmatprep.subr.bf16.mxu0 %v4611
        %4713 = vmatpush1.bf16.msra.mxu0 %v4610
        %4714 = vmatprep.subr.bf16.mxu0 %v4615
        %4715 = vmatpush1.bf16.msra.mxu0 %v4614
        %4716 = vmatprep.subr.bf16.mxu0 %v4619
        %4717 = vmatpush1.bf16.msra.mxu0 %v4618
        %4718 = vmatprep.subr.bf16.mxu0 %v4623
        %4719 = vmatpush1.bf16.msra.mxu0 %v4622
        %4720 = vmatprep.subr.bf16.mxu0 %v4627
        %4721 = vmatpush1.bf16.msra.mxu0 %v4626
        %4722 = vmatprep.subr.bf16.mxu0 %v4631
        %4723 = vmatpush1.bf16.msra.mxu0 %v4630
        %4724 = vmatprep.subr.bf16.mxu0 %v4635
        %4725 = vmatpush1.bf16.msra.mxu0 %v4634
        %4726 = vmatprep.subr.bf16.mxu0 %v4639
        %4727 = vmatpush1.bf16.msra.mxu0 %v4638
        %4728 = vmatprep.subr.bf16.mxu0 %v4643
        %4729 = vmatpush1.bf16.msra.mxu0 %v4642
        %4730 = vmatprep.subr.bf16.mxu0 0
        %4731 = vmatpush1.bf16.msra.mxu0 0
        %4732 = vmatprep.subr.bf16.mxu0 0
        %4733 = vmatpush1.bf16.msra.mxu0 0
        %4734 = vmatprep.subr.bf16.mxu0 0
        %4735 = vmatpush1.bf16.msra.mxu0 0
        %4736 = vmatprep.subr.bf16.mxu0 0
        %4737 = vmatpush1.bf16.msra.mxu0 0
        %4738 = vmatprep.mubr.bf16.mxu0 %v4695
        %4739 = vmatmul.mubr.bf16.gmra.mrb[0].mxu0 %v4445
        %v4740 = vpop.f32.mrb[0].mxu0
        %v4741 = vadd.f32 %v4384, %v4740
        %v4742 = vpop.f32.mrb[0].mxu0
        %v4743 = vadd.f32 %v4384, %v4742
        %v4744 = vpop.f32.mrb[0].mxu0
        %v4745 = vadd.f32 %v4389, %v4744
        %v4746 = vpop.f32.mrb[0].mxu0
        %v4747 = vadd.f32 %v4389, %v4746
        %4748 = vmatprep.mubr.bf16.mxu0 %v4698
        %4749 = vmatmul.mubr.bf16.gmra.mrb[0].mxu0 %v4447
        %v4750 = vpop.f32.mrb[0].mxu0
        %v4751 = vadd.f32 %v4394, %v4750
        %v4752 = vpop.f32.mrb[0].mxu0
        %v4753 = vadd.f32 %v4394, %v4752
        %v4754 = vpop.f32.mrb[0].mxu0
        %v4755 = vadd.f32 %v4399, %v4754
        %v4756 = vpop.f32.mrb[0].mxu0
        %v4757 = vadd.f32 %v4399, %v4756
        %4758 = vmatprep.mubr.bf16.mxu0 %v4701
        %4759 = vmatmul.mubr.bf16.gmra.mrb[0].mxu0 %v4449
        %v4760 = vpop.f32.mrb[0].mxu0
        %v4761 = vadd.f32 %v4404, %v4760
        %v4762 = vpop.f32.mrb[0].mxu0
        %v4763 = vadd.f32 %v4404, %v4762
        %v4764 = vpop.f32.mrb[0].mxu0
        %v4765 = vadd.f32 %v4409, %v4764
        %v4766 = vpop.f32.mrb[0].mxu0
        %v4767 = vadd.f32 %v4409, %v4766
        %4768 = vmatprep.mubr.bf16.mxu0 %v4704
        %4769 = vmatmul.mubr.bf16.gmra.mrb[0].mxu0 %v4451
        %v4770 = vpop.f32.mrb[0].mxu0
        %v4771 = vadd.f32 %v4414, %v4770
        %v4772 = vpop.f32.mrb[0].mxu0
        %v4773 = vadd.f32 %v4414, %v4772
        %v4774 = vpop.f32.mrb[0].mxu0
        %v4775 = vadd.f32 %v4419, %v4774
        %v4776 = vpop.f32.mrb[0].mxu0
        %v4777 = vadd.f32 %v4419, %v4776
        %4778 = vdwg.mxu0
        %4779 = vmatprep.subr.bf16.mxu0 %v4601
        %4780 = vmatpush1.bf16.msra.mxu0 %v4600
        %4781 = vmatprep.subr.bf16.mxu0 %v4605
        %4782 = vmatpush1.bf16.msra.mxu0 %v4604
        %4783 = vmatprep.subr.bf16.mxu0 %v4609
        %4784 = vmatpush1.bf16.msra.mxu0 %v4608
        %4785 = vmatprep.subr.bf16.mxu0 %v4613
        %4786 = vmatpush1.bf16.msra.mxu0 %v4612
        %4787 = vmatprep.subr.bf16.mxu0 %v4617
        %4788 = vmatpush1.bf16.msra.mxu0 %v4616
        %4789 = vmatprep.subr.bf16.mxu0 %v4621
        %4790 = vmatpush1.bf16.msra.mxu0 %v4620
        %4791 = vmatprep.subr.bf16.mxu0 %v4625
        %4792 = vmatpush1.bf16.msra.mxu0 %v4624
        %4793 = vmatprep.subr.bf16.mxu0 %v4629
        %4794 = vmatpush1.bf16.msra.mxu0 %v4628
        %4795 = vmatprep.subr.bf16.mxu0 %v4633
        %4796 = vmatpush1.bf16.msra.mxu0 %v4632
        %4797 = vmatprep.subr.bf16.mxu0 %v4637
        %4798 = vmatpush1.bf16.msra.mxu0 %v4636
        %4799 = vmatprep.subr.bf16.mxu0 %v4641
        %4800 = vmatpush1.bf16.msra.mxu0 %v4640
        %4801 = vmatprep.subr.bf16.mxu0 %v4645
        %4802 = vmatpush1.bf16.msra.mxu0 %v4644
        %4803 = vmatprep.subr.bf16.mxu0 0
        %4804 = vmatpush1.bf16.msra.mxu0 0
        %4805 = vmatprep.subr.bf16.mxu0 0
        %4806 = vmatpush1.bf16.msra.mxu0 0
        %4807 = vmatprep.subr.bf16.mxu0 0
        %4808 = vmatpush1.bf16.msra.mxu0 0
        %4809 = vmatprep.subr.bf16.mxu0 0
        %4810 = vmatpush1.bf16.msra.mxu0 0
        %4811 = vmatprep.mubr.bf16.mxu0 %v4695
        %4812 = vmatmul.mubr.bf16.gmra.mrb[0].mxu0 %v4445
        %v4813 = vpop.f32.mrb[0].mxu0
        %v4814 = vadd.f32 %v4384, %v4813
        %v4815 = vpop.f32.mrb[0].mxu0
        %v4816 = vadd.f32 %v4384, %v4815
        %v4817 = vpop.f32.mrb[0].mxu0
        %v4818 = vadd.f32 %v4389, %v4817
        %v4819 = vpop.f32.mrb[0].mxu0
        %v4820 = vadd.f32 %v4389, %v4819
        %4821 = vmatprep.mubr.bf16.mxu0 %v4698
        %4822 = vmatmul.mubr.bf16.gmra.mrb[0].mxu0 %v4447
        %v4823 = vpop.f32.mrb[0].mxu0
        %v4824 = vadd.f32 %v4394, %v4823
        %v4825 = vpop.f32.mrb[0].mxu0
        %v4826 = vadd.f32 %v4394, %v4825
        %v4827 = vpop.f32.mrb[0].mxu0
        %v4828 = vadd.f32 %v4399, %v4827
        %v4829 = vpop.f32.mrb[0].mxu0
        %v4830 = vadd.f32 %v4399, %v4829
        %4831 = vmatprep.mubr.bf16.mxu0 %v4701
        %4832 = vmatmul.mubr.bf16.gmra.mrb[0].mxu0 %v4449
        %v4833 = vpop.f32.mrb[0].mxu0
        %v4834 = vadd.f32 %v4404, %v4833
        %v4835 = vpop.f32.mrb[0].mxu0
        %v4836 = vadd.f32 %v4404, %v4835
        %v4837 = vpop.f32.mrb[0].mxu0
        %v4838 = vadd.f32 %v4409, %v4837
        %v4839 = vpop.f32.mrb[0].mxu0
        %v4840 = vadd.f32 %v4409, %v4839
        %4841 = vmatprep.mubr.bf16.mxu0 %v4704
        %4842 = vmatmul.mubr.bf16.gmra.mrb[0].mxu0 %v4451
        %v4843 = vpop.f32.mrb[0].mxu0
        %v4844 = vadd.f32 %v4414, %v4843
        %v4845 = vpop.f32.mrb[0].mxu0
        %v4846 = vadd.f32 %v4414, %v4845
        %v4847 = vpop.f32.mrb[0].mxu0
        %v4848 = vadd.f32 %v4419, %v4847
        %v4849 = vpop.f32.mrb[0].mxu0
        %v4850 = vadd.f32 %v4419, %v4849
        %4851 = vdwg.mxu0
        %vm4852 = vcmp.ge.f32.partialorder %v4741, 0.0
        %vm4853 = vcmp.ge.f32.partialorder %v4743, 0.0
        %vm4854 = vcmp.ge.f32.partialorder %v4814, 0.0
        %vm4855 = vcmp.ge.f32.partialorder %v4816, 0.0
        %vm4856 = vcmp.ge.f32.partialorder %v4745, 0.0
        %vm4857 = vcmp.ge.f32.partialorder %v4747, 0.0
        %vm4858 = vcmp.ge.f32.partialorder %v4818, 0.0
        %vm4859 = vcmp.ge.f32.partialorder %v4820, 0.0
        %vm4860 = vcmp.ge.f32.partialorder %v4751, 0.0
        %vm4861 = vcmp.ge.f32.partialorder %v4753, 0.0
        %vm4862 = vcmp.ge.f32.partialorder %v4824, 0.0
        %vm4863 = vcmp.ge.f32.partialorder %v4826, 0.0
        %vm4864 = vcmp.ge.f32.partialorder %v4755, 0.0
        %vm4865 = vcmp.ge.f32.partialorder %v4757, 0.0
        %vm4866 = vcmp.ge.f32.partialorder %v4828, 0.0
        %vm4867 = vcmp.ge.f32.partialorder %v4830, 0.0
        %vm4868 = vcmp.ge.f32.partialorder %v4761, 0.0
        %vm4869 = vcmp.ge.f32.partialorder %v4763, 0.0
        %vm4870 = vcmp.ge.f32.partialorder %v4834, 0.0
        %vm4871 = vcmp.ge.f32.partialorder %v4836, 0.0
        %vm4872 = vcmp.ge.f32.partialorder %v4765, 0.0
        %vm4873 = vcmp.ge.f32.partialorder %v4767, 0.0
        %vm4874 = vcmp.ge.f32.partialorder %v4838, 0.0
        %vm4875 = vcmp.ge.f32.partialorder %v4840, 0.0
        %vm4876 = vcmp.ge.f32.partialorder %v4771, 0.0
        %vm4877 = vcmp.ge.f32.partialorder %v4773, 0.0
        %vm4878 = vcmp.ge.f32.partialorder %v4844, 0.0
        %vm4879 = vcmp.ge.f32.partialorder %v4846, 0.0
        %vm4880 = vcmp.ge.f32.partialorder %v4775, 0.0
        %vm4881 = vcmp.ge.f32.partialorder %v4777, 0.0
        %vm4882 = vcmp.ge.f32.partialorder %v4848, 0.0
        %vm4883 = vcmp.ge.f32.partialorder %v4850, 0.0
        %v4884 = vmul.f32 %v4741, 0.2
        %v4885 = vmul.f32 %v4743, 0.2
        %v4886 = vmul.f32 %v4814, 0.2
        %v4887 = vmul.f32 %v4816, 0.2
        %v4888 = vmul.f32 %v4745, 0.2
        %v4889 = vmul.f32 %v4747, 0.2
        %v4890 = vmul.f32 %v4818, 0.2
        %v4891 = vmul.f32 %v4820, 0.2
        %v4892 = vmul.f32 %v4751, 0.2
        %v4893 = vmul.f32 %v4753, 0.2
        %v4894 = vmul.f32 %v4824, 0.2
        %v4895 = vmul.f32 %v4826, 0.2
        %v4896 = vmul.f32 %v4755, 0.2
        %v4897 = vmul.f32 %v4757, 0.2
        %v4898 = vmul.f32 %v4828, 0.2
        %v4899 = vmul.f32 %v4830, 0.2
        %v4900 = vmul.f32 %v4761, 0.2
        %v4901 = vmul.f32 %v4763, 0.2
        %v4902 = vmul.f32 %v4834, 0.2
        %v4903 = vmul.f32 %v4836, 0.2
        %v4904 = vmul.f32 %v4765, 0.2
        %v4905 = vmul.f32 %v4767, 0.2
        %v4906 = vmul.f32 %v4838, 0.2
        %v4907 = vmul.f32 %v4840, 0.2
        %v4908 = vmul.f32 %v4771, 0.2
        %v4909 = vmul.f32 %v4773, 0.2
        %v4910 = vmul.f32 %v4844, 0.2
        %v4911 = vmul.f32 %v4846, 0.2
        %v4912 = vmul.f32 %v4775, 0.2
        %v4913 = vmul.f32 %v4777, 0.2
        %v4914 = vmul.f32 %v4848, 0.2
        %v4915 = vmul.f32 %v4850, 0.2
        %v4916 = vsel %vm4852, %v4741, %v4884
        %v4917 = vsel %vm4853, %v4743, %v4885
        %v4918 = vsel %vm4854, %v4814, %v4886
        %v4919 = vsel %vm4855, %v4816, %v4887
        %v4920 = vsel %vm4856, %v4745, %v4888
        %v4921 = vsel %vm4857, %v4747, %v4889
        %v4922 = vsel %vm4858, %v4818, %v4890
        %v4923 = vsel %vm4859, %v4820, %v4891
        %v4924 = vsel %vm4860, %v4751, %v4892
        %v4925 = vsel %vm4861, %v4753, %v4893
        %v4926 = vsel %vm4862, %v4824, %v4894
        %v4927 = vsel %vm4863, %v4826, %v4895
        %v4928 = vsel %vm4864, %v4755, %v4896
        %v4929 = vsel %vm4865, %v4757, %v4897
        %v4930 = vsel %vm4866, %v4828, %v4898
        %v4931 = vsel %vm4867, %v4830, %v4899
        %v4932 = vsel %vm4868, %v4761, %v4900
        %v4933 = vsel %vm4869, %v4763, %v4901
        %v4934 = vsel %vm4870, %v4834, %v4902
        %v4935 = vsel %vm4871, %v4836, %v4903
        %v4936 = vsel %vm4872, %v4765, %v4904
        %v4937 = vsel %vm4873, %v4767, %v4905
        %v4938 = vsel %vm4874, %v4838, %v4906
        %v4939 = vsel %vm4875, %v4840, %v4907
        %v4940 = vsel %vm4876, %v4771, %v4908
        %v4941 = vsel %vm4877, %v4773, %v4909
        %v4942 = vsel %vm4878, %v4844, %v4910
        %v4943 = vsel %vm4879, %v4846, %v4911
        %v4944 = vsel %vm4880, %v4775, %v4912
        %v4945 = vsel %vm4881, %v4777, %v4913
        %v4946 = vsel %vm4882, %v4848, %v4914
        %v4947 = vsel %vm4883, %v4850, %v4915
        %v4948 = vmul.f32 %v4916, %v272
        %v4949 = vmul.f32 %v4917, %v273
        %v4950 = vmul.f32 %v4918, %v274
        %v4951 = vmul.f32 %v4919, %v275
        %v4952 = vmul.f32 %v4920, %v272
        %v4953 = vmul.f32 %v4921, %v273
        %v4954 = vmul.f32 %v4922, %v274
        %v4955 = vmul.f32 %v4923, %v275
        %v4956 = vmul.f32 %v4924, %v272
        %v4957 = vmul.f32 %v4925, %v273
        %v4958 = vmul.f32 %v4926, %v274
        %v4959 = vmul.f32 %v4927, %v275
        %v4960 = vmul.f32 %v4928, %v272
        %v4961 = vmul.f32 %v4929, %v273
        %v4962 = vmul.f32 %v4930, %v274
        %v4963 = vmul.f32 %v4931, %v275
        %v4964 = vmul.f32 %v4932, %v272
        %v4965 = vmul.f32 %v4933, %v273
        %v4966 = vmul.f32 %v4934, %v274
        %v4967 = vmul.f32 %v4935, %v275
        %v4968 = vmul.f32 %v4936, %v272
        %v4969 = vmul.f32 %v4937, %v273
        %v4970 = vmul.f32 %v4938, %v274
        %v4971 = vmul.f32 %v4939, %v275
        %v4972 = vmul.f32 %v4940, %v272
        %v4973 = vmul.f32 %v4941, %v273
        %v4974 = vmul.f32 %v4942, %v274
        %v4975 = vmul.f32 %v4943, %v275
        %v4976 = vmul.f32 %v4944, %v272
        %v4977 = vmul.f32 %v4945, %v273
        %v4978 = vmul.f32 %v4946, %v274
        %v4979 = vmul.f32 %v4947, %v275
        %v4980 = vpack.c.bf16 %v4952, %v4948
        %v4981 = vpack.c.bf16 %v4953, %v4949
        %v4982 = vpack.c.bf16 %v4954, %v4950
        %v4983 = vpack.c.bf16 %v4955, %v4951
        %v4984 = vpack.c.bf16 %v4960, %v4956
        %v4985 = vpack.c.bf16 %v4961, %v4957
        %v4986 = vpack.c.bf16 %v4962, %v4958
        %v4987 = vpack.c.bf16 %v4963, %v4959
        %v4988 = vpack.c.bf16 %v4968, %v4964
        %v4989 = vpack.c.bf16 %v4969, %v4965
        %v4990 = vpack.c.bf16 %v4970, %v4966
        %v4991 = vpack.c.bf16 %v4971, %v4967
        %v4992 = vpack.c.bf16 %v4976, %v4972
        %v4993 = vpack.c.bf16 %v4977, %v4973
        %v4994 = vpack.c.bf16 %v4978, %v4974
        %v4995 = vpack.c.bf16 %v4979, %v4975
        %4996 = vst [vmem:[#allocation2 + $0x8] sm:$0xff] %v4980
        %4997 = vst [vmem:[#allocation2 + $0x10] sm:$0xff] %v4981
        %4998 = vst [vmem:[#allocation2 + $0x18] sm:$0xff] %v4982
        %4999 = vst [vmem:[#allocation2 + $0x20] sm:$0xff] %v4983
        %5000 = vst [vmem:[#allocation2 + $0x38] sm:$0xff] %v4984
        %5001 = vst [vmem:[#allocation2 + $0x40] sm:$0xff] %v4985
        %5002 = vst [vmem:[#allocation2 + $0x48] sm:$0xff] %v4986
        %5003 = vst [vmem:[#allocation2 + $0x50] sm:$0xff] %v4987
        %5004 = vst [vmem:[#allocation2 + $0x68] sm:$0xff] %v4988
        %5005 = vst [vmem:[#allocation2 + $0x70] sm:$0xff] %v4989
        %5006 = vst [vmem:[#allocation2 + $0x78] sm:$0xff] %v4990
        %5007 = vst [vmem:[#allocation2 + $0x80] sm:$0xff] %v4991
        %5008 = vst [vmem:[#allocation2 + $0x98] sm:$0xff] %v4992
        %5009 = vst [vmem:[#allocation2 + $0xa0] sm:$0xff] %v4993
        %5010 = vst [vmem:[#allocation2 + $0xa8] sm:$0xff] %v4994
        %5011 = vst [vmem:[#allocation2 + $0xb0] sm:$0xff] %v4995
        %v5012 = vld [vmem:[#allocation2] sm:$0xff]
        %v5013 = vld [vmem:[#allocation2 + $0x8] sm:$0xff]
        %v5014 = vld [vmem:[#allocation2 + $0x10] sm:$0xff]
        %v5015 = vld [vmem:[#allocation2 + $0x18] sm:$0xff]
        %v5016 = vld [vmem:[#allocation2 + $0x20] sm:$0xff]
        %v5017 = vld [vmem:[#allocation2 + $0x30] sm:$0xff]
        %v5018 = vld [vmem:[#allocation2 + $0x38] sm:$0xff]
        %v5019 = vld [vmem:[#allocation2 + $0x40] sm:$0xff]
        %v5020 = vld [vmem:[#allocation2 + $0x48] sm:$0xff]
        %v5021 = vld [vmem:[#allocation2 + $0x50] sm:$0xff]
        %v5022 = vld [vmem:[#allocation2 + $0x60] sm:$0xff]
        %v5023 = vld [vmem:[#allocation2 + $0x68] sm:$0xff]
        %v5024 = vld [vmem:[#allocation2 + $0x70] sm:$0xff]
        %v5025 = vld [vmem:[#allocation2 + $0x78] sm:$0xff]
        %v5026 = vld [vmem:[#allocation2 + $0x80] sm:$0xff]
        %v5027 = vld [vmem:[#allocation2 + $0x90] sm:$0xff]
        %v5028 = vld [vmem:[#allocation2 + $0x98] sm:$0xff]
        %v5029 = vld [vmem:[#allocation2 + $0xa0] sm:$0xff]
        %v5030 = vld [vmem:[#allocation2 + $0xa8] sm:$0xff]
        %v5031 = vld [vmem:[#allocation2 + $0xb0] sm:$0xff]
        %v5032 = vld [vmem:[#allocation2 + $0x8] sm:$0xff]
        %v5033 = vld [vmem:[#allocation2 + $0x10] sm:$0xff]
        %v5034 = vld [vmem:[#allocation2 + $0x18] sm:$0xff]
        %v5035 = vld [vmem:[#allocation2 + $0x20] sm:$0xff]
        %v5036 = vld [vmem:[#allocation2 + $0x28] sm:$0xff]
        %v5037 = vld [vmem:[#allocation2 + $0x38] sm:$0xff]
        %v5038 = vld [vmem:[#allocation2 + $0x40] sm:$0xff]
        %v5039 = vld [vmem:[#allocation2 + $0x48] sm:$0xff]
        %v5040 = vld [vmem:[#allocation2 + $0x50] sm:$0xff]
        %v5041 = vld [vmem:[#allocation2 + $0x58] sm:$0xff]
        %v5042 = vld [vmem:[#allocation2 + $0x68] sm:$0xff]
        %v5043 = vld [vmem:[#allocation2 + $0x70] sm:$0xff]
        %v5044 = vld [vmem:[#allocation2 + $0x78] sm:$0xff]
        %v5045 = vld [vmem:[#allocation2 + $0x80] sm:$0xff]
        %v5046 = vld [vmem:[#allocation2 + $0x88] sm:$0xff]
        %v5047 = vld [vmem:[#allocation2 + $0x98] sm:$0xff]
        %v5048 = vld [vmem:[#allocation2 + $0xa0] sm:$0xff]
        %v5049 = vld [vmem:[#allocation2 + $0xa8] sm:$0xff]
        %v5050 = vld [vmem:[#allocation2 + $0xb0] sm:$0xff]
        %v5051 = vld [vmem:[#allocation2 + $0xb8] sm:$0xff]
        %5068 = vrot.lane.b32.xlu0 %v4980, 122
        %v5069 = vpop.permute.xlu0 %5068
        %5070 = vrot.lane.b32.xlu0 %v4981, 122
        %v5071 = vpop.permute.xlu0 %5070
        %5072 = vrot.lane.b32.xlu0 %v4982, 122
        %v5073 = vpop.permute.xlu0 %5072
        %5074 = vrot.lane.b32.xlu0 %v4983, 122
        %v5075 = vpop.permute.xlu0 %5074
        %5076 = vrot.lane.b32.xlu0 %v4984, 122
        %v5077 = vpop.permute.xlu0 %5076
        %5078 = vrot.lane.b32.xlu0 %v4985, 122
        %v5079 = vpop.permute.xlu0 %5078
        %5080 = vrot.lane.b32.xlu0 %v4986, 122
        %v5081 = vpop.permute.xlu0 %5080
        %5082 = vrot.lane.b32.xlu0 %v4987, 122
        %v5083 = vpop.permute.xlu0 %5082
        %5084 = vrot.lane.b32.xlu0 %v4988, 122
        %v5085 = vpop.permute.xlu0 %5084
        %5086 = vrot.lane.b32.xlu0 %v4989, 122
        %v5087 = vpop.permute.xlu0 %5086
        %5088 = vrot.lane.b32.xlu0 %v4990, 122
        %v5089 = vpop.permute.xlu0 %5088
        %5090 = vrot.lane.b32.xlu0 %v4991, 122
        %v5091 = vpop.permute.xlu0 %5090
        %5092 = vrot.lane.b32.xlu0 %v4992, 122
        %v5093 = vpop.permute.xlu0 %5092
        %5094 = vrot.lane.b32.xlu0 %v4993, 122
        %v5095 = vpop.permute.xlu0 %5094
        %5096 = vrot.lane.b32.xlu0 %v4994, 122
        %v5097 = vpop.permute.xlu0 %5096
        %5098 = vrot.lane.b32.xlu0 %v4995, 122
        %v5099 = vpop.permute.xlu0 %5098
        %v5100 = vsel %vm2693, %v5069, %v5071
        %v5101 = vsel %vm2693, %v5071, %v5073
        %v5102 = vsel %vm2693, %v5073, %v5075
        %v5103 = vsel %vm2693, %v5077, %v5079
        %v5104 = vsel %vm2693, %v5079, %v5081
        %v5105 = vsel %vm2693, %v5081, %v5083
        %v5106 = vsel %vm2693, %v5085, %v5087
        %v5107 = vsel %vm2693, %v5087, %v5089
        %v5108 = vsel %vm2693, %v5089, %v5091
        %v5109 = vsel %vm2693, %v5093, %v5095
        %v5110 = vsel %vm2693, %v5095, %v5097
        %v5111 = vsel %vm2693, %v5097, %v5099
        %5132 = vrot.lane.b32.xlu0 %v5032, 116
        %v5133 = vpop.permute.xlu0 %5132
        %5134 = vrot.lane.b32.xlu0 %v5033, 116
        %v5135 = vpop.permute.xlu0 %5134
        %5136 = vrot.lane.b32.xlu0 %v5034, 116
        %v5137 = vpop.permute.xlu0 %5136
        %5138 = vrot.lane.b32.xlu0 %v5035, 116
        %v5139 = vpop.permute.xlu0 %5138
        %5140 = vrot.lane.b32.xlu0 %v5036, 116
        %v5141 = vpop.permute.xlu0 %5140
        %5142 = vrot.lane.b32.xlu0 %v5037, 116
        %v5143 = vpop.permute.xlu0 %5142
        %5144 = vrot.lane.b32.xlu0 %v5038, 116
        %v5145 = vpop.permute.xlu0 %5144
        %5146 = vrot.lane.b32.xlu0 %v5039, 116
        %v5147 = vpop.permute.xlu0 %5146
        %5148 = vrot.lane.b32.xlu0 %v5040, 116
        %v5149 = vpop.permute.xlu0 %5148
        %5150 = vrot.lane.b32.xlu0 %v5041, 116
        %v5151 = vpop.permute.xlu0 %5150
        %5152 = vrot.lane.b32.xlu0 %v5042, 116
        %v5153 = vpop.permute.xlu0 %5152
        %5154 = vrot.lane.b32.xlu0 %v5043, 116
        %v5155 = vpop.permute.xlu0 %5154
        %5156 = vrot.lane.b32.xlu0 %v5044, 116
        %v5157 = vpop.permute.xlu0 %5156
        %5158 = vrot.lane.b32.xlu0 %v5045, 116
        %v5159 = vpop.permute.xlu0 %5158
        %5160 = vrot.lane.b32.xlu0 %v5046, 116
        %v5161 = vpop.permute.xlu0 %5160
        %5162 = vrot.lane.b32.xlu0 %v5047, 116
        %v5163 = vpop.permute.xlu0 %5162
        %5164 = vrot.lane.b32.xlu0 %v5048, 116
        %v5165 = vpop.permute.xlu0 %5164
        %5166 = vrot.lane.b32.xlu0 %v5049, 116
        %v5167 = vpop.permute.xlu0 %5166
        %5168 = vrot.lane.b32.xlu0 %v5050, 116
        %v5169 = vpop.permute.xlu0 %5168
        %5170 = vrot.lane.b32.xlu0 %v5051, 116
        %v5171 = vpop.permute.xlu0 %5170
        %vm5172 = vcmask 949248
        %v5173 = vsel %vm5172, %v5133, %v5135
        %v5174 = vsel %vm5172, %v5135, %v5137
        %v5175 = vsel %vm5172, %v5137, %v5139
        %v5176 = vsel %vm5172, %v5139, %v5141
        %v5177 = vsel %vm5172, %v5143, %v5145
        %v5178 = vsel %vm5172, %v5145, %v5147
        %v5179 = vsel %vm5172, %v5147, %v5149
        %v5180 = vsel %vm5172, %v5149, %v5151
        %v5181 = vsel %vm5172, %v5153, %v5155
        %v5182 = vsel %vm5172, %v5155, %v5157
        %v5183 = vsel %vm5172, %v5157, %v5159
        %v5184 = vsel %vm5172, %v5159, %v5161
        %v5185 = vsel %vm5172, %v5163, %v5165
        %v5186 = vsel %vm5172, %v5165, %v5167
        %v5187 = vsel %vm5172, %v5167, %v5169
        %v5188 = vsel %vm5172, %v5169, %v5171
        %s5189 = scalar_lea.vmem %s2, 320
        %v5190 = vld [vmem:[%s5189] sm:$0xff]
        %v5191 = vld [vmem:[%s5189 + $0x8] sm:$0xff]
        %v5192 = vld [vmem:[%s5189 + $0x10] sm:$0xff]
        %v5193 = vld [vmem:[%s5189 + $0x18] sm:$0xff]
        %v5194 = vld [vmem:[%s5189 + $0x20] sm:$0xff]
        %v5195 = vld [vmem:[%s5189 + $0x28] sm:$0xff]
        %v5196 = vld [vmem:[%s5189 + $0x30] sm:$0xff]
        %v5197 = vld [vmem:[%s5189 + $0x38] sm:$0xff]
        %s5198 = scalar_lea.vmem %s4, 384
        %v5199 = vld [vmem:[%s5198] sm:$0xff]
        %v5200 = vld [vmem:[%s5198 + $0x8] sm:$0xff]
        %v5201 = vld [vmem:[%s5198 + $0x10] sm:$0xff]
        %v5202 = vld [vmem:[%s5198 + $0x18] sm:$0xff]
        %v5203 = vld [vmem:[%s5198 + $0x20] sm:$0xff]
        %v5204 = vld [vmem:[%s5198 + $0x28] sm:$0xff]
        %v5205 = vld [vmem:[%s5198 + $0x30] sm:$0xff]
        %v5206 = vld [vmem:[%s5198 + $0x38] sm:$0xff]
        %5208 = vset.pattern.permute.xlu0 0
        %5209 = vperm.xlu0 %5208, %v5199
        %v5210 = vpop.permute.xlu0 %5209
        %5213 = vset.pattern.permute.xlu0 0
        %5214 = vperm.xlu0 %5213, %v5200
        %v5215 = vpop.permute.xlu0 %5214
        %5218 = vset.pattern.permute.xlu0 0
        %5219 = vperm.xlu0 %5218, %v5201
        %v5220 = vpop.permute.xlu0 %5219
        %5223 = vset.pattern.permute.xlu0 0
        %5224 = vperm.xlu0 %5223, %v5202
        %v5225 = vpop.permute.xlu0 %5224
        %5228 = vset.pattern.permute.xlu0 0
        %5229 = vperm.xlu0 %5228, %v5203
        %v5230 = vpop.permute.xlu0 %5229
        %5233 = vset.pattern.permute.xlu0 0
        %5234 = vperm.xlu0 %5233, %v5204
        %v5235 = vpop.permute.xlu0 %5234
        %5238 = vset.pattern.permute.xlu0 0
        %5239 = vperm.xlu0 %5238, %v5205
        %v5240 = vpop.permute.xlu0 %5239
        %5243 = vset.pattern.permute.xlu0 0
        %5244 = vperm.xlu0 %5243, %v5206
        %v5245 = vpop.permute.xlu0 %5244
        %v5255 = vunpack.c.l.b16 %v5190
        %v5256 = vunpack.c.h.b16 %v5190
        %v5257 = vunpack.c.l.b16 %v5191
        %v5258 = vunpack.c.h.b16 %v5191
        %v5259 = vunpack.c.l.b16 %v5192
        %v5260 = vunpack.c.h.b16 %v5192
        %v5261 = vunpack.c.l.b16 %v5193
        %v5262 = vunpack.c.h.b16 %v5193
        %v5263 = vunpack.c.l.b16 %v5194
        %v5264 = vunpack.c.h.b16 %v5194
        %v5265 = vunpack.c.l.b16 %v5195
        %v5266 = vunpack.c.h.b16 %v5195
        %v5267 = vunpack.c.l.b16 %v5196
        %v5268 = vunpack.c.h.b16 %v5196
        %v5269 = vunpack.c.l.b16 %v5197
        %v5270 = vunpack.c.h.b16 %v5197
        %v5271 = vpack.c.b16 %v5257, %v5255
        %v5272 = vpack.c.b16 %v5258, %v5256
        %v5273 = vpack.c.b16 %v5261, %v5259
        %v5274 = vpack.c.b16 %v5262, %v5260
        %v5275 = vpack.c.b16 %v5265, %v5263
        %v5276 = vpack.c.b16 %v5266, %v5264
        %v5277 = vpack.c.b16 %v5269, %v5267
        %v5278 = vpack.c.b16 %v5270, %v5268
        %5303 = vrot.lane.b32.xlu0 %v5012, 6
        %v5304 = vpop.permute.xlu0 %5303
        %5305 = vrot.lane.b32.xlu0 %v5013, 6
        %v5306 = vpop.permute.xlu0 %5305
        %5307 = vrot.lane.b32.xlu0 %v5014, 6
        %v5308 = vpop.permute.xlu0 %5307
        %5309 = vrot.lane.b32.xlu0 %v5015, 6
        %v5310 = vpop.permute.xlu0 %5309
        %5311 = vrot.lane.b32.xlu0 %v5016, 6
        %v5312 = vpop.permute.xlu0 %5311
        %5313 = vrot.lane.b32.xlu0 %v5017, 6
        %v5314 = vpop.permute.xlu0 %5313
        %5315 = vrot.lane.b32.xlu0 %v5018, 6
        %v5316 = vpop.permute.xlu0 %5315
        %5317 = vrot.lane.b32.xlu0 %v5019, 6
        %v5318 = vpop.permute.xlu0 %5317
        %5319 = vrot.lane.b32.xlu0 %v5020, 6
        %v5320 = vpop.permute.xlu0 %5319
        %5321 = vrot.lane.b32.xlu0 %v5021, 6
        %v5322 = vpop.permute.xlu0 %5321
        %5323 = vrot.lane.b32.xlu0 %v5022, 6
        %v5324 = vpop.permute.xlu0 %5323
        %5325 = vrot.lane.b32.xlu0 %v5023, 6
        %v5326 = vpop.permute.xlu0 %5325
        %5327 = vrot.lane.b32.xlu0 %v5024, 6
        %v5328 = vpop.permute.xlu0 %5327
        %5329 = vrot.lane.b32.xlu0 %v5025, 6
        %v5330 = vpop.permute.xlu0 %5329
        %5331 = vrot.lane.b32.xlu0 %v5026, 6
        %v5332 = vpop.permute.xlu0 %5331
        %5333 = vrot.lane.b32.xlu0 %v5027, 6
        %v5334 = vpop.permute.xlu0 %5333
        %5335 = vrot.lane.b32.xlu0 %v5028, 6
        %v5336 = vpop.permute.xlu0 %5335
        %5337 = vrot.lane.b32.xlu0 %v5029, 6
        %v5338 = vpop.permute.xlu0 %5337
        %5339 = vrot.lane.b32.xlu0 %v5030, 6
        %v5340 = vpop.permute.xlu0 %5339
        %5341 = vrot.lane.b32.xlu0 %v5031, 6
        %v5342 = vpop.permute.xlu0 %5341
        %5343 = vrot.lane.b32.xlu0 %v5069, 6
        %v5344 = vpop.permute.xlu0 %5343
        %5345 = vrot.lane.b32.xlu0 %v5100, 6
        %v5346 = vpop.permute.xlu0 %5345
        %5347 = vrot.lane.b32.xlu0 %v5101, 6
        %v5348 = vpop.permute.xlu0 %5347
        %5349 = vrot.lane.b32.xlu0 %v5102, 6
        %v5350 = vpop.permute.xlu0 %5349
        %5351 = vrot.lane.b32.xlu0 %v5075, 6
        %v5352 = vpop.permute.xlu0 %5351
        %5353 = vrot.lane.b32.xlu0 %v5077, 6
        %v5354 = vpop.permute.xlu0 %5353
        %5355 = vrot.lane.b32.xlu0 %v5103, 6
        %v5356 = vpop.permute.xlu0 %5355
        %5357 = vrot.lane.b32.xlu0 %v5104, 6
        %v5358 = vpop.permute.xlu0 %5357
        %5359 = vrot.lane.b32.xlu0 %v5105, 6
        %v5360 = vpop.permute.xlu0 %5359
        %5361 = vrot.lane.b32.xlu0 %v5083, 6
        %v5362 = vpop.permute.xlu0 %5361
        %5363 = vrot.lane.b32.xlu0 %v5085, 6
        %v5364 = vpop.permute.xlu0 %5363
        %5365 = vrot.lane.b32.xlu0 %v5106, 6
        %v5366 = vpop.permute.xlu0 %5365
        %5367 = vrot.lane.b32.xlu0 %v5107, 6
        %v5368 = vpop.permute.xlu0 %5367
        %5369 = vrot.lane.b32.xlu0 %v5108, 6
        %v5370 = vpop.permute.xlu0 %5369
        %5371 = vrot.lane.b32.xlu0 %v5091, 6
        %v5372 = vpop.permute.xlu0 %5371
        %5373 = vrot.lane.b32.xlu0 %v5093, 6
        %v5374 = vpop.permute.xlu0 %5373
        %5375 = vrot.lane.b32.xlu0 %v5109, 6
        %v5376 = vpop.permute.xlu0 %5375
        %5377 = vrot.lane.b32.xlu0 %v5110, 6
        %v5378 = vpop.permute.xlu0 %5377
        %5379 = vrot.lane.b32.xlu0 %v5111, 6
        %v5380 = vpop.permute.xlu0 %5379
        %5381 = vrot.lane.b32.xlu0 %v5099, 6
        %v5382 = vpop.permute.xlu0 %5381
        %5383 = vrot.lane.b32.xlu0 %v5133, 6
        %v5384 = vpop.permute.xlu0 %5383
        %5385 = vrot.lane.b32.xlu0 %v5173, 6
        %v5386 = vpop.permute.xlu0 %5385
        %5387 = vrot.lane.b32.xlu0 %v5174, 6
        %v5388 = vpop.permute.xlu0 %5387
        %5389 = vrot.lane.b32.xlu0 %v5175, 6
        %v5390 = vpop.permute.xlu0 %5389
        %5391 = vrot.lane.b32.xlu0 %v5176, 6
        %v5392 = vpop.permute.xlu0 %5391
        %5393 = vrot.lane.b32.xlu0 %v5143, 6
        %v5394 = vpop.permute.xlu0 %5393
        %5395 = vrot.lane.b32.xlu0 %v5177, 6
        %v5396 = vpop.permute.xlu0 %5395
        %5397 = vrot.lane.b32.xlu0 %v5178, 6
        %v5398 = vpop.permute.xlu0 %5397
        %5399 = vrot.lane.b32.xlu0 %v5179, 6
        %v5400 = vpop.permute.xlu0 %5399
        %5401 = vrot.lane.b32.xlu0 %v5180, 6
        %v5402 = vpop.permute.xlu0 %5401
        %5403 = vrot.lane.b32.xlu0 %v5153, 6
        %v5404 = vpop.permute.xlu0 %5403
        %5405 = vrot.lane.b32.xlu0 %v5181, 6
        %v5406 = vpop.permute.xlu0 %5405
        %5407 = vrot.lane.b32.xlu0 %v5182, 6
        %v5408 = vpop.permute.xlu0 %5407
        %5409 = vrot.lane.b32.xlu0 %v5183, 6
        %v5410 = vpop.permute.xlu0 %5409
        %5411 = vrot.lane.b32.xlu0 %v5184, 6
        %v5412 = vpop.permute.xlu0 %5411
        %5413 = vrot.lane.b32.xlu0 %v5163, 6
        %v5414 = vpop.permute.xlu0 %5413
        %5415 = vrot.lane.b32.xlu0 %v5185, 6
        %v5416 = vpop.permute.xlu0 %5415
        %5417 = vrot.lane.b32.xlu0 %v5186, 6
        %v5418 = vpop.permute.xlu0 %5417
        %5419 = vrot.lane.b32.xlu0 %v5187, 6
        %v5420 = vpop.permute.xlu0 %5419
        %5421 = vrot.lane.b32.xlu0 %v5188, 6
        %v5422 = vpop.permute.xlu0 %5421
        %vm5423 = vcmask 48128
        %v5424 = vsel %vm5423, %v5304, %v5306
        %v5425 = vsel %vm5423, %v5306, %v5308
        %v5426 = vsel %vm5423, %v5308, %v5310
        %v5427 = vsel %vm5423, %v5310, %v5312
        %v5428 = vsel %vm5423, %v5314, %v5316
        %v5429 = vsel %vm5423, %v5316, %v5318
        %v5430 = vsel %vm5423, %v5318, %v5320
        %v5431 = vsel %vm5423, %v5320, %v5322
        %v5432 = vsel %vm5423, %v5324, %v5326
        %v5433 = vsel %vm5423, %v5326, %v5328
        %v5434 = vsel %vm5423, %v5328, %v5330
        %v5435 = vsel %vm5423, %v5330, %v5332
        %v5436 = vsel %vm5423, %v5334, %v5336
        %v5437 = vsel %vm5423, %v5336, %v5338
        %v5438 = vsel %vm5423, %v5338, %v5340
        %v5439 = vsel %vm5423, %v5340, %v5342
        %v5440 = vsel %vm5423, %v5344, %v5346
        %v5441 = vsel %vm5423, %v5346, %v5348
        %v5442 = vsel %vm5423, %v5348, %v5350
        %v5443 = vsel %vm5423, %v5350, %v5352
        %v5444 = vsel %vm5423, %v5354, %v5356
        %v5445 = vsel %vm5423, %v5356, %v5358
        %v5446 = vsel %vm5423, %v5358, %v5360
        %v5447 = vsel %vm5423, %v5360, %v5362
        %v5448 = vsel %vm5423, %v5364, %v5366
        %v5449 = vsel %vm5423, %v5366, %v5368
        %v5450 = vsel %vm5423, %v5368, %v5370
        %v5451 = vsel %vm5423, %v5370, %v5372
        %v5452 = vsel %vm5423, %v5374, %v5376
        %v5453 = vsel %vm5423, %v5376, %v5378
        %v5454 = vsel %vm5423, %v5378, %v5380
        %v5455 = vsel %vm5423, %v5380, %v5382
        %v5456 = vsel %vm5423, %v5384, %v5386
        %v5457 = vsel %vm5423, %v5386, %v5388
        %v5458 = vsel %vm5423, %v5388, %v5390
        %v5459 = vsel %vm5423, %v5390, %v5392
        %v5460 = vsel %vm5423, %v5394, %v5396
        %v5461 = vsel %vm5423, %v5396, %v5398
        %v5462 = vsel %vm5423, %v5398, %v5400
        %v5463 = vsel %vm5423, %v5400, %v5402
        %v5464 = vsel %vm5423, %v5404, %v5406
        %v5465 = vsel %vm5423, %v5406, %v5408
        %v5466 = vsel %vm5423, %v5408, %v5410
        %v5467 = vsel %vm5423, %v5410, %v5412
        %v5468 = vsel %vm5423, %v5414, %v5416
        %v5469 = vsel %vm5423, %v5416, %v5418
        %v5470 = vsel %vm5423, %v5418, %v5420
        %v5471 = vsel %vm5423, %v5420, %v5422
        %v5521 = vsel %vm1387, %v5272, 0
        %v5524 = vsel %vm1387, %v5274, 0
        %v5527 = vsel %vm1387, %v5276, 0
        %v5530 = vsel %vm1387, %v5278, 0
        %5532 = vmatprep.subr.bf16.mxu0 %v5425
        %5533 = vmatpush1.bf16.msra.mxu0 %v5424
        %5534 = vmatprep.subr.bf16.mxu0 %v5429
        %5535 = vmatpush1.bf16.msra.mxu0 %v5428
        %5536 = vmatprep.subr.bf16.mxu0 %v5433
        %5537 = vmatpush1.bf16.msra.mxu0 %v5432
        %5538 = vmatprep.subr.bf16.mxu0 %v5437
        %5539 = vmatpush1.bf16.msra.mxu0 %v5436
        %5540 = vmatprep.subr.bf16.mxu0 %v5441
        %5541 = vmatpush1.bf16.msra.mxu0 %v5440
        %5542 = vmatprep.subr.bf16.mxu0 %v5445
        %5543 = vmatpush1.bf16.msra.mxu0 %v5444
        %5544 = vmatprep.subr.bf16.mxu0 %v5449
        %5545 = vmatpush1.bf16.msra.mxu0 %v5448
        %5546 = vmatprep.subr.bf16.mxu0 %v5453
        %5547 = vmatpush1.bf16.msra.mxu0 %v5452
        %5548 = vmatprep.subr.bf16.mxu0 %v5457
        %5549 = vmatpush1.bf16.msra.mxu0 %v5456
        %5550 = vmatprep.subr.bf16.mxu0 %v5461
        %5551 = vmatpush1.bf16.msra.mxu0 %v5460
        %5552 = vmatprep.subr.bf16.mxu0 %v5465
        %5553 = vmatpush1.bf16.msra.mxu0 %v5464
        %5554 = vmatprep.subr.bf16.mxu0 %v5469
        %5555 = vmatpush1.bf16.msra.mxu0 %v5468
        %5556 = vmatprep.subr.bf16.mxu0 0
        %5557 = vmatpush1.bf16.msra.mxu0 0
        %5558 = vmatprep.subr.bf16.mxu0 0
        %5559 = vmatpush1.bf16.msra.mxu0 0
        %5560 = vmatprep.subr.bf16.mxu0 0
        %5561 = vmatpush1.bf16.msra.mxu0 0
        %5562 = vmatprep.subr.bf16.mxu0 0
        %5563 = vmatpush1.bf16.msra.mxu0 0
        %5564 = vmatprep.mubr.bf16.mxu0 %v5521
        %5565 = vmatmul.mubr.bf16.gmra.mrb[0].mxu0 %v5271
        %v5566 = vpop.f32.mrb[0].mxu0
        %v5567 = vadd.f32 %v5210, %v5566
        %v5568 = vpop.f32.mrb[0].mxu0
        %v5569 = vadd.f32 %v5210, %v5568
        %v5570 = vpop.f32.mrb[0].mxu0
        %v5571 = vadd.f32 %v5215, %v5570
        %v5572 = vpop.f32.mrb[0].mxu0
        %v5573 = vadd.f32 %v5215, %v5572
        %5574 = vmatprep.mubr.bf16.mxu0 %v5524
        %5575 = vmatmul.mubr.bf16.gmra.mrb[0].mxu0 %v5273
        %v5576 = vpop.f32.mrb[0].mxu0
        %v5577 = vadd.f32 %v5220, %v5576
        %v5578 = vpop.f32.mrb[0].mxu0
        %v5579 = vadd.f32 %v5220, %v5578
        %v5580 = vpop.f32.mrb[0].mxu0
        %v5581 = vadd.f32 %v5225, %v5580
        %v5582 = vpop.f32.mrb[0].mxu0
        %v5583 = vadd.f32 %v5225, %v5582
        %5584 = vmatprep.mubr.bf16.mxu0 %v5527
        %5585 = vmatmul.mubr.bf16.gmra.mrb[0].mxu0 %v5275
        %v5586 = vpop.f32.mrb[0].mxu0
        %v5587 = vadd.f32 %v5230, %v5586
        %v5588 = vpop.f32.mrb[0].mxu0
        %v5589 = vadd.f32 %v5230, %v5588
        %v5590 = vpop.f32.mrb[0].mxu0
        %v5591 = vadd.f32 %v5235, %v5590
        %v5592 = vpop.f32.mrb[0].mxu0
        %v5593 = vadd.f32 %v5235, %v5592
        %5594 = vmatprep.mubr.bf16.mxu0 %v5530
        %5595 = vmatmul.mubr.bf16.gmra.mrb[0].mxu0 %v5277
        %v5596 = vpop.f32.mrb[0].mxu0
        %v5597 = vadd.f32 %v5240, %v5596
        %v5598 = vpop.f32.mrb[0].mxu0
        %v5599 = vadd.f32 %v5240, %v5598
        %v5600 = vpop.f32.mrb[0].mxu0
        %v5601 = vadd.f32 %v5245, %v5600
        %v5602 = vpop.f32.mrb[0].mxu0
        %v5603 = vadd.f32 %v5245, %v5602
        %5604 = vdwg.mxu0
        %5605 = vmatprep.subr.bf16.mxu0 %v5427
        %5606 = vmatpush1.bf16.msra.mxu0 %v5426
        %5607 = vmatprep.subr.bf16.mxu0 %v5431
        %5608 = vmatpush1.bf16.msra.mxu0 %v5430
        %5609 = vmatprep.subr.bf16.mxu0 %v5435
        %5610 = vmatpush1.bf16.msra.mxu0 %v5434
        %5611 = vmatprep.subr.bf16.mxu0 %v5439
        %5612 = vmatpush1.bf16.msra.mxu0 %v5438
        %5613 = vmatprep.subr.bf16.mxu0 %v5443
        %5614 = vmatpush1.bf16.msra.mxu0 %v5442
        %5615 = vmatprep.subr.bf16.mxu0 %v5447
        %5616 = vmatpush1.bf16.msra.mxu0 %v5446
        %5617 = vmatprep.subr.bf16.mxu0 %v5451
        %5618 = vmatpush1.bf16.msra.mxu0 %v5450
        %5619 = vmatprep.subr.bf16.mxu0 %v5455
        %5620 = vmatpush1.bf16.msra.mxu0 %v5454
        %5621 = vmatprep.subr.bf16.mxu0 %v5459
        %5622 = vmatpush1.bf16.msra.mxu0 %v5458
        %5623 = vmatprep.subr.bf16.mxu0 %v5463
        %5624 = vmatpush1.bf16.msra.mxu0 %v5462
        %5625 = vmatprep.subr.bf16.mxu0 %v5467
        %5626 = vmatpush1.bf16.msra.mxu0 %v5466
        %5627 = vmatprep.subr.bf16.mxu0 %v5471
        %5628 = vmatpush1.bf16.msra.mxu0 %v5470
        %5629 = vmatprep.subr.bf16.mxu0 0
        %5630 = vmatpush1.bf16.msra.mxu0 0
        %5631 = vmatprep.subr.bf16.mxu0 0
        %5632 = vmatpush1.bf16.msra.mxu0 0
        %5633 = vmatprep.subr.bf16.mxu0 0
        %5634 = vmatpush1.bf16.msra.mxu0 0
        %5635 = vmatprep.subr.bf16.mxu0 0
        %5636 = vmatpush1.bf16.msra.mxu0 0
        %5637 = vmatprep.mubr.bf16.mxu0 %v5521
        %5638 = vmatmul.mubr.bf16.gmra.mrb[0].mxu0 %v5271
        %v5639 = vpop.f32.mrb[0].mxu0
        %v5640 = vadd.f32 %v5210, %v5639
        %v5641 = vpop.f32.mrb[0].mxu0
        %v5642 = vadd.f32 %v5210, %v5641
        %v5643 = vpop.f32.mrb[0].mxu0
        %v5644 = vadd.f32 %v5215, %v5643
        %v5645 = vpop.f32.mrb[0].mxu0
        %v5646 = vadd.f32 %v5215, %v5645
        %5647 = vmatprep.mubr.bf16.mxu0 %v5524
        %5648 = vmatmul.mubr.bf16.gmra.mrb[0].mxu0 %v5273
        %v5649 = vpop.f32.mrb[0].mxu0
        %v5650 = vadd.f32 %v5220, %v5649
        %v5651 = vpop.f32.mrb[0].mxu0
        %v5652 = vadd.f32 %v5220, %v5651
        %v5653 = vpop.f32.mrb[0].mxu0
        %v5654 = vadd.f32 %v5225, %v5653
        %v5655 = vpop.f32.mrb[0].mxu0
        %v5656 = vadd.f32 %v5225, %v5655
        %5657 = vmatprep.mubr.bf16.mxu0 %v5527
        %5658 = vmatmul.mubr.bf16.gmra.mrb[0].mxu0 %v5275
        %v5659 = vpop.f32.mrb[0].mxu0
        %v5660 = vadd.f32 %v5230, %v5659
        %v5661 = vpop.f32.mrb[0].mxu0
        %v5662 = vadd.f32 %v5230, %v5661
        %v5663 = vpop.f32.mrb[0].mxu0
        %v5664 = vadd.f32 %v5235, %v5663
        %v5665 = vpop.f32.mrb[0].mxu0
        %v5666 = vadd.f32 %v5235, %v5665
        %5667 = vmatprep.mubr.bf16.mxu0 %v5530
        %5668 = vmatmul.mubr.bf16.gmra.mrb[0].mxu0 %v5277
        %v5669 = vpop.f32.mrb[0].mxu0
        %v5670 = vadd.f32 %v5240, %v5669
        %v5671 = vpop.f32.mrb[0].mxu0
        %v5672 = vadd.f32 %v5240, %v5671
        %v5673 = vpop.f32.mrb[0].mxu0
        %v5674 = vadd.f32 %v5245, %v5673
        %v5675 = vpop.f32.mrb[0].mxu0
        %v5676 = vadd.f32 %v5245, %v5675
        %5677 = vdwg.mxu0
        %vm5678 = vcmp.ge.f32.partialorder %v5567, 0.0
        %vm5679 = vcmp.ge.f32.partialorder %v5569, 0.0
        %vm5680 = vcmp.ge.f32.partialorder %v5640, 0.0
        %vm5681 = vcmp.ge.f32.partialorder %v5642, 0.0
        %vm5682 = vcmp.ge.f32.partialorder %v5571, 0.0
        %vm5683 = vcmp.ge.f32.partialorder %v5573, 0.0
        %vm5684 = vcmp.ge.f32.partialorder %v5644, 0.0
        %vm5685 = vcmp.ge.f32.partialorder %v5646, 0.0
        %vm5686 = vcmp.ge.f32.partialorder %v5577, 0.0
        %vm5687 = vcmp.ge.f32.partialorder %v5579, 0.0
        %vm5688 = vcmp.ge.f32.partialorder %v5650, 0.0
        %vm5689 = vcmp.ge.f32.partialorder %v5652, 0.0
        %vm5690 = vcmp.ge.f32.partialorder %v5581, 0.0
        %vm5691 = vcmp.ge.f32.partialorder %v5583, 0.0
        %vm5692 = vcmp.ge.f32.partialorder %v5654, 0.0
        %vm5693 = vcmp.ge.f32.partialorder %v5656, 0.0
        %vm5694 = vcmp.ge.f32.partialorder %v5587, 0.0
        %vm5695 = vcmp.ge.f32.partialorder %v5589, 0.0
        %vm5696 = vcmp.ge.f32.partialorder %v5660, 0.0
        %vm5697 = vcmp.ge.f32.partialorder %v5662, 0.0
        %vm5698 = vcmp.ge.f32.partialorder %v5591, 0.0
        %vm5699 = vcmp.ge.f32.partialorder %v5593, 0.0
        %vm5700 = vcmp.ge.f32.partialorder %v5664, 0.0
        %vm5701 = vcmp.ge.f32.partialorder %v5666, 0.0
        %vm5702 = vcmp.ge.f32.partialorder %v5597, 0.0
        %vm5703 = vcmp.ge.f32.partialorder %v5599, 0.0
        %vm5704 = vcmp.ge.f32.partialorder %v5670, 0.0
        %vm5705 = vcmp.ge.f32.partialorder %v5672, 0.0
        %vm5706 = vcmp.ge.f32.partialorder %v5601, 0.0
        %vm5707 = vcmp.ge.f32.partialorder %v5603, 0.0
        %vm5708 = vcmp.ge.f32.partialorder %v5674, 0.0
        %vm5709 = vcmp.ge.f32.partialorder %v5676, 0.0
        %v5710 = vmul.f32 %v5567, 0.2
        %v5711 = vmul.f32 %v5569, 0.2
        %v5712 = vmul.f32 %v5640, 0.2
        %v5713 = vmul.f32 %v5642, 0.2
        %v5714 = vmul.f32 %v5571, 0.2
        %v5715 = vmul.f32 %v5573, 0.2
        %v5716 = vmul.f32 %v5644, 0.2
        %v5717 = vmul.f32 %v5646, 0.2
        %v5718 = vmul.f32 %v5577, 0.2
        %v5719 = vmul.f32 %v5579, 0.2
        %v5720 = vmul.f32 %v5650, 0.2
        %v5721 = vmul.f32 %v5652, 0.2
        %v5722 = vmul.f32 %v5581, 0.2
        %v5723 = vmul.f32 %v5583, 0.2
        %v5724 = vmul.f32 %v5654, 0.2
        %v5725 = vmul.f32 %v5656, 0.2
        %v5726 = vmul.f32 %v5587, 0.2
        %v5727 = vmul.f32 %v5589, 0.2
        %v5728 = vmul.f32 %v5660, 0.2
        %v5729 = vmul.f32 %v5662, 0.2
        %v5730 = vmul.f32 %v5591, 0.2
        %v5731 = vmul.f32 %v5593, 0.2
        %v5732 = vmul.f32 %v5664, 0.2
        %v5733 = vmul.f32 %v5666, 0.2
        %v5734 = vmul.f32 %v5597, 0.2
        %v5735 = vmul.f32 %v5599, 0.2
        %v5736 = vmul.f32 %v5670, 0.2
        %v5737 = vmul.f32 %v5672, 0.2
        %v5738 = vmul.f32 %v5601, 0.2
        %v5739 = vmul.f32 %v5603, 0.2
        %v5740 = vmul.f32 %v5674, 0.2
        %v5741 = vmul.f32 %v5676, 0.2
        %v5742 = vsel %vm5678, %v5567, %v5710
        %v5743 = vsel %vm5679, %v5569, %v5711
        %v5744 = vsel %vm5680, %v5640, %v5712
        %v5745 = vsel %vm5681, %v5642, %v5713
        %v5746 = vsel %vm5682, %v5571, %v5714
        %v5747 = vsel %vm5683, %v5573, %v5715
        %v5748 = vsel %vm5684, %v5644, %v5716
        %v5749 = vsel %vm5685, %v5646, %v5717
        %v5750 = vsel %vm5686, %v5577, %v5718
        %v5751 = vsel %vm5687, %v5579, %v5719
        %v5752 = vsel %vm5688, %v5650, %v5720
        %v5753 = vsel %vm5689, %v5652, %v5721
        %v5754 = vsel %vm5690, %v5581, %v5722
        %v5755 = vsel %vm5691, %v5583, %v5723
        %v5756 = vsel %vm5692, %v5654, %v5724
        %v5757 = vsel %vm5693, %v5656, %v5725
        %v5758 = vsel %vm5694, %v5587, %v5726
        %v5759 = vsel %vm5695, %v5589, %v5727
        %v5760 = vsel %vm5696, %v5660, %v5728
        %v5761 = vsel %vm5697, %v5662, %v5729
        %v5762 = vsel %vm5698, %v5591, %v5730
        %v5763 = vsel %vm5699, %v5593, %v5731
        %v5764 = vsel %vm5700, %v5664, %v5732
        %v5765 = vsel %vm5701, %v5666, %v5733
        %v5766 = vsel %vm5702, %v5597, %v5734
        %v5767 = vsel %vm5703, %v5599, %v5735
        %v5768 = vsel %vm5704, %v5670, %v5736
        %v5769 = vsel %vm5705, %v5672, %v5737
        %v5770 = vsel %vm5706, %v5601, %v5738
        %v5771 = vsel %vm5707, %v5603, %v5739
        %v5772 = vsel %vm5708, %v5674, %v5740
        %v5773 = vsel %vm5709, %v5676, %v5741
        %v5774 = vmul.f32 %v5742, %v272
        %v5775 = vmul.f32 %v5743, %v273
        %v5776 = vmul.f32 %v5744, %v274
        %v5777 = vmul.f32 %v5745, %v275
        %v5778 = vmul.f32 %v5746, %v272
        %v5779 = vmul.f32 %v5747, %v273
        %v5780 = vmul.f32 %v5748, %v274
        %v5781 = vmul.f32 %v5749, %v275
        %v5782 = vmul.f32 %v5750, %v272
        %v5783 = vmul.f32 %v5751, %v273
        %v5784 = vmul.f32 %v5752, %v274
        %v5785 = vmul.f32 %v5753, %v275
        %v5786 = vmul.f32 %v5754, %v272
        %v5787 = vmul.f32 %v5755, %v273
        %v5788 = vmul.f32 %v5756, %v274
        %v5789 = vmul.f32 %v5757, %v275
        %v5790 = vmul.f32 %v5758, %v272
        %v5791 = vmul.f32 %v5759, %v273
        %v5792 = vmul.f32 %v5760, %v274
        %v5793 = vmul.f32 %v5761, %v275
        %v5794 = vmul.f32 %v5762, %v272
        %v5795 = vmul.f32 %v5763, %v273
        %v5796 = vmul.f32 %v5764, %v274
        %v5797 = vmul.f32 %v5765, %v275
        %v5798 = vmul.f32 %v5766, %v272
        %v5799 = vmul.f32 %v5767, %v273
        %v5800 = vmul.f32 %v5768, %v274
        %v5801 = vmul.f32 %v5769, %v275
        %v5802 = vmul.f32 %v5770, %v272
        %v5803 = vmul.f32 %v5771, %v273
        %v5804 = vmul.f32 %v5772, %v274
        %v5805 = vmul.f32 %v5773, %v275
        %v5806 = vpack.c.bf16 %v5778, %v5774
        %v5807 = vpack.c.bf16 %v5779, %v5775
        %v5808 = vpack.c.bf16 %v5780, %v5776
        %v5809 = vpack.c.bf16 %v5781, %v5777
        %v5810 = vpack.c.bf16 %v5786, %v5782
        %v5811 = vpack.c.bf16 %v5787, %v5783
        %v5812 = vpack.c.bf16 %v5788, %v5784
        %v5813 = vpack.c.bf16 %v5789, %v5785
        %v5814 = vpack.c.bf16 %v5794, %v5790
        %v5815 = vpack.c.bf16 %v5795, %v5791
        %v5816 = vpack.c.bf16 %v5796, %v5792
        %v5817 = vpack.c.bf16 %v5797, %v5793
        %v5818 = vpack.c.bf16 %v5802, %v5798
        %v5819 = vpack.c.bf16 %v5803, %v5799
        %v5820 = vpack.c.bf16 %v5804, %v5800
        %v5821 = vpack.c.bf16 %v5805, %v5801
        %5822 = vst [vmem:[#allocation2 + $0x8] sm:$0xff] %v5806
        %5823 = vst [vmem:[#allocation2 + $0x10] sm:$0xff] %v5807
        %5824 = vst [vmem:[#allocation2 + $0x18] sm:$0xff] %v5808
        %5825 = vst [vmem:[#allocation2 + $0x20] sm:$0xff] %v5809
        %5826 = vst [vmem:[#allocation2 + $0x38] sm:$0xff] %v5810
        %5827 = vst [vmem:[#allocation2 + $0x40] sm:$0xff] %v5811
        %5828 = vst [vmem:[#allocation2 + $0x48] sm:$0xff] %v5812
        %5829 = vst [vmem:[#allocation2 + $0x50] sm:$0xff] %v5813
        %5830 = vst [vmem:[#allocation2 + $0x68] sm:$0xff] %v5814
        %5831 = vst [vmem:[#allocation2 + $0x70] sm:$0xff] %v5815
        %5832 = vst [vmem:[#allocation2 + $0x78] sm:$0xff] %v5816
        %5833 = vst [vmem:[#allocation2 + $0x80] sm:$0xff] %v5817
        %5834 = vst [vmem:[#allocation2 + $0x98] sm:$0xff] %v5818
        %5835 = vst [vmem:[#allocation2 + $0xa0] sm:$0xff] %v5819
        %5836 = vst [vmem:[#allocation2 + $0xa8] sm:$0xff] %v5820
        %5837 = vst [vmem:[#allocation2 + $0xb0] sm:$0xff] %v5821
        %v5838 = vld [vmem:[#allocation2] sm:$0xff]
        %v5839 = vld [vmem:[#allocation2 + $0x8] sm:$0xff]
        %v5840 = vld [vmem:[#allocation2 + $0x10] sm:$0xff]
        %v5841 = vld [vmem:[#allocation2 + $0x18] sm:$0xff]
        %v5842 = vld [vmem:[#allocation2 + $0x20] sm:$0xff]
        %v5843 = vld [vmem:[#allocation2 + $0x30] sm:$0xff]
        %v5844 = vld [vmem:[#allocation2 + $0x38] sm:$0xff]
        %v5845 = vld [vmem:[#allocation2 + $0x40] sm:$0xff]
        %v5846 = vld [vmem:[#allocation2 + $0x48] sm:$0xff]
        %v5847 = vld [vmem:[#allocation2 + $0x50] sm:$0xff]
        %v5848 = vld [vmem:[#allocation2 + $0x60] sm:$0xff]
        %v5849 = vld [vmem:[#allocation2 + $0x68] sm:$0xff]
        %v5850 = vld [vmem:[#allocation2 + $0x70] sm:$0xff]
        %v5851 = vld [vmem:[#allocation2 + $0x78] sm:$0xff]
        %v5852 = vld [vmem:[#allocation2 + $0x80] sm:$0xff]
        %v5853 = vld [vmem:[#allocation2 + $0x90] sm:$0xff]
        %v5854 = vld [vmem:[#allocation2 + $0x98] sm:$0xff]
        %v5855 = vld [vmem:[#allocation2 + $0xa0] sm:$0xff]
        %v5856 = vld [vmem:[#allocation2 + $0xa8] sm:$0xff]
        %v5857 = vld [vmem:[#allocation2 + $0xb0] sm:$0xff]
        %v5858 = vld [vmem:[#allocation2 + $0x8] sm:$0xff]
        %v5859 = vld [vmem:[#allocation2 + $0x10] sm:$0xff]
        %v5860 = vld [vmem:[#allocation2 + $0x18] sm:$0xff]
        %v5861 = vld [vmem:[#allocation2 + $0x20] sm:$0xff]
        %v5862 = vld [vmem:[#allocation2 + $0x28] sm:$0xff]
        %v5863 = vld [vmem:[#allocation2 + $0x38] sm:$0xff]
        %v5864 = vld [vmem:[#allocation2 + $0x40] sm:$0xff]
        %v5865 = vld [vmem:[#allocation2 + $0x48] sm:$0xff]
        %v5866 = vld [vmem:[#allocation2 + $0x50] sm:$0xff]
        %v5867 = vld [vmem:[#allocation2 + $0x58] sm:$0xff]
        %v5868 = vld [vmem:[#allocation2 + $0x68] sm:$0xff]
        %v5869 = vld [vmem:[#allocation2 + $0x70] sm:$0xff]
        %v5870 = vld [vmem:[#allocation2 + $0x78] sm:$0xff]
        %v5871 = vld [vmem:[#allocation2 + $0x80] sm:$0xff]
        %v5872 = vld [vmem:[#allocation2 + $0x88] sm:$0xff]
        %v5873 = vld [vmem:[#allocation2 + $0x98] sm:$0xff]
        %v5874 = vld [vmem:[#allocation2 + $0xa0] sm:$0xff]
        %v5875 = vld [vmem:[#allocation2 + $0xa8] sm:$0xff]
        %v5876 = vld [vmem:[#allocation2 + $0xb0] sm:$0xff]
        %v5877 = vld [vmem:[#allocation2 + $0xb8] sm:$0xff]
        %5894 = vrot.lane.b32.xlu0 %v5806, 121
        %v5895 = vpop.permute.xlu0 %5894
        %5896 = vrot.lane.b32.xlu0 %v5807, 121
        %v5897 = vpop.permute.xlu0 %5896
        %5898 = vrot.lane.b32.xlu0 %v5808, 121
        %v5899 = vpop.permute.xlu0 %5898
        %5900 = vrot.lane.b32.xlu0 %v5809, 121
        %v5901 = vpop.permute.xlu0 %5900
        %5902 = vrot.lane.b32.xlu0 %v5810, 121
        %v5903 = vpop.permute.xlu0 %5902
        %5904 = vrot.lane.b32.xlu0 %v5811, 121
        %v5905 = vpop.permute.xlu0 %5904
        %5906 = vrot.lane.b32.xlu0 %v5812, 121
        %v5907 = vpop.permute.xlu0 %5906
        %5908 = vrot.lane.b32.xlu0 %v5813, 121
        %v5909 = vpop.permute.xlu0 %5908
        %5910 = vrot.lane.b32.xlu0 %v5814, 121
        %v5911 = vpop.permute.xlu0 %5910
        %5912 = vrot.lane.b32.xlu0 %v5815, 121
        %v5913 = vpop.permute.xlu0 %5912
        %5914 = vrot.lane.b32.xlu0 %v5816, 121
        %v5915 = vpop.permute.xlu0 %5914
        %5916 = vrot.lane.b32.xlu0 %v5817, 121
        %v5917 = vpop.permute.xlu0 %5916
        %5918 = vrot.lane.b32.xlu0 %v5818, 121
        %v5919 = vpop.permute.xlu0 %5918
        %5920 = vrot.lane.b32.xlu0 %v5819, 121
        %v5921 = vpop.permute.xlu0 %5920
        %5922 = vrot.lane.b32.xlu0 %v5820, 121
        %v5923 = vpop.permute.xlu0 %5922
        %5924 = vrot.lane.b32.xlu0 %v5821, 121
        %v5925 = vpop.permute.xlu0 %5924
        %vm5926 = vcmask 990208
        %v5927 = vsel %vm5926, %v5895, %v5897
        %v5928 = vsel %vm5926, %v5897, %v5899
        %v5929 = vsel %vm5926, %v5899, %v5901
        %v5930 = vsel %vm5926, %v5903, %v5905
        %v5931 = vsel %vm5926, %v5905, %v5907
        %v5932 = vsel %vm5926, %v5907, %v5909
        %v5933 = vsel %vm5926, %v5911, %v5913
        %v5934 = vsel %vm5926, %v5913, %v5915
        %v5935 = vsel %vm5926, %v5915, %v5917
        %v5936 = vsel %vm5926, %v5919, %v5921
        %v5937 = vsel %vm5926, %v5921, %v5923
        %v5938 = vsel %vm5926, %v5923, %v5925
        %5959 = vrot.lane.b32.xlu0 %v5858, 114
        %v5960 = vpop.permute.xlu0 %5959
        %5961 = vrot.lane.b32.xlu0 %v5859, 114
        %v5962 = vpop.permute.xlu0 %5961
        %5963 = vrot.lane.b32.xlu0 %v5860, 114
        %v5964 = vpop.permute.xlu0 %5963
        %5965 = vrot.lane.b32.xlu0 %v5861, 114
        %v5966 = vpop.permute.xlu0 %5965
        %5967 = vrot.lane.b32.xlu0 %v5862, 114
        %v5968 = vpop.permute.xlu0 %5967
        %5969 = vrot.lane.b32.xlu0 %v5863, 114
        %v5970 = vpop.permute.xlu0 %5969
        %5971 = vrot.lane.b32.xlu0 %v5864, 114
        %v5972 = vpop.permute.xlu0 %5971
        %5973 = vrot.lane.b32.xlu0 %v5865, 114
        %v5974 = vpop.permute.xlu0 %5973
        %5975 = vrot.lane.b32.xlu0 %v5866, 114
        %v5976 = vpop.permute.xlu0 %5975
        %5977 = vrot.lane.b32.xlu0 %v5867, 114
        %v5978 = vpop.permute.xlu0 %5977
        %5979 = vrot.lane.b32.xlu0 %v5868, 114
        %v5980 = vpop.permute.xlu0 %5979
        %5981 = vrot.lane.b32.xlu0 %v5869, 114
        %v5982 = vpop.permute.xlu0 %5981
        %5983 = vrot.lane.b32.xlu0 %v5870, 114
        %v5984 = vpop.permute.xlu0 %5983
        %5985 = vrot.lane.b32.xlu0 %v5871, 114
        %v5986 = vpop.permute.xlu0 %5985
        %5987 = vrot.lane.b32.xlu0 %v5872, 114
        %v5988 = vpop.permute.xlu0 %5987
        %5989 = vrot.lane.b32.xlu0 %v5873, 114
        %v5990 = vpop.permute.xlu0 %5989
        %5991 = vrot.lane.b32.xlu0 %v5874, 114
        %v5992 = vpop.permute.xlu0 %5991
        %5993 = vrot.lane.b32.xlu0 %v5875, 114
        %v5994 = vpop.permute.xlu0 %5993
        %5995 = vrot.lane.b32.xlu0 %v5876, 114
        %v5996 = vpop.permute.xlu0 %5995
        %5997 = vrot.lane.b32.xlu0 %v5877, 114
        %v5998 = vpop.permute.xlu0 %5997
        %vm5999 = vcmask 932864
        %v6000 = vsel %vm5999, %v5960, %v5962
        %v6001 = vsel %vm5999, %v5962, %v5964
        %v6002 = vsel %vm5999, %v5964, %v5966
        %v6003 = vsel %vm5999, %v5966, %v5968
        %v6004 = vsel %vm5999, %v5970, %v5972
        %v6005 = vsel %vm5999, %v5972, %v5974
        %v6006 = vsel %vm5999, %v5974, %v5976
        %v6007 = vsel %vm5999, %v5976, %v5978
        %v6008 = vsel %vm5999, %v5980, %v5982
        %v6009 = vsel %vm5999, %v5982, %v5984
        %v6010 = vsel %vm5999, %v5984, %v5986
        %v6011 = vsel %vm5999, %v5986, %v5988
        %v6012 = vsel %vm5999, %v5990, %v5992
        %v6013 = vsel %vm5999, %v5992, %v5994
        %v6014 = vsel %vm5999, %v5994, %v5996
        %v6015 = vsel %vm5999, %v5996, %v5998
        %s6016 = scalar_lea.vmem %s2, 384
        %v6017 = vld [vmem:[%s6016] sm:$0xff]
        %v6018 = vld [vmem:[%s6016 + $0x8] sm:$0xff]
        %v6019 = vld [vmem:[%s6016 + $0x10] sm:$0xff]
        %v6020 = vld [vmem:[%s6016 + $0x18] sm:$0xff]
        %v6021 = vld [vmem:[%s6016 + $0x20] sm:$0xff]
        %v6022 = vld [vmem:[%s6016 + $0x28] sm:$0xff]
        %v6023 = vld [vmem:[%s6016 + $0x30] sm:$0xff]
        %v6024 = vld [vmem:[%s6016 + $0x38] sm:$0xff]
        %s6025 = scalar_lea.vmem %s4, 448
        %v6026 = vld [vmem:[%s6025] sm:$0xff]
        %v6027 = vld [vmem:[%s6025 + $0x8] sm:$0xff]
        %v6028 = vld [vmem:[%s6025 + $0x10] sm:$0xff]
        %v6029 = vld [vmem:[%s6025 + $0x18] sm:$0xff]
        %v6030 = vld [vmem:[%s6025 + $0x20] sm:$0xff]
        %v6031 = vld [vmem:[%s6025 + $0x28] sm:$0xff]
        %v6032 = vld [vmem:[%s6025 + $0x30] sm:$0xff]
        %v6033 = vld [vmem:[%s6025 + $0x38] sm:$0xff]
        %6035 = vset.pattern.permute.xlu0 0
        %6036 = vperm.xlu0 %6035, %v6026
        %v6037 = vpop.permute.xlu0 %6036
        %6040 = vset.pattern.permute.xlu0 0
        %6041 = vperm.xlu0 %6040, %v6027
        %v6042 = vpop.permute.xlu0 %6041
        %6045 = vset.pattern.permute.xlu0 0
        %6046 = vperm.xlu0 %6045, %v6028
        %v6047 = vpop.permute.xlu0 %6046
        %6050 = vset.pattern.permute.xlu0 0
        %6051 = vperm.xlu0 %6050, %v6029
        %v6052 = vpop.permute.xlu0 %6051
        %6055 = vset.pattern.permute.xlu0 0
        %6056 = vperm.xlu0 %6055, %v6030
        %v6057 = vpop.permute.xlu0 %6056
        %6060 = vset.pattern.permute.xlu0 0
        %6061 = vperm.xlu0 %6060, %v6031
        %v6062 = vpop.permute.xlu0 %6061
        %6065 = vset.pattern.permute.xlu0 0
        %6066 = vperm.xlu0 %6065, %v6032
        %v6067 = vpop.permute.xlu0 %6066
        %6070 = vset.pattern.permute.xlu0 0
        %6071 = vperm.xlu0 %6070, %v6033
        %v6072 = vpop.permute.xlu0 %6071
        %v6082 = vunpack.c.l.b16 %v6017
        %v6083 = vunpack.c.h.b16 %v6017
        %v6084 = vunpack.c.l.b16 %v6018
        %v6085 = vunpack.c.h.b16 %v6018
        %v6086 = vunpack.c.l.b16 %v6019
        %v6087 = vunpack.c.h.b16 %v6019
        %v6088 = vunpack.c.l.b16 %v6020
        %v6089 = vunpack.c.h.b16 %v6020
        %v6090 = vunpack.c.l.b16 %v6021
        %v6091 = vunpack.c.h.b16 %v6021
        %v6092 = vunpack.c.l.b16 %v6022
        %v6093 = vunpack.c.h.b16 %v6022
        %v6094 = vunpack.c.l.b16 %v6023
        %v6095 = vunpack.c.h.b16 %v6023
        %v6096 = vunpack.c.l.b16 %v6024
        %v6097 = vunpack.c.h.b16 %v6024
        %v6098 = vpack.c.b16 %v6084, %v6082
        %v6099 = vpack.c.b16 %v6085, %v6083
        %v6100 = vpack.c.b16 %v6088, %v6086
        %v6101 = vpack.c.b16 %v6089, %v6087
        %v6102 = vpack.c.b16 %v6092, %v6090
        %v6103 = vpack.c.b16 %v6093, %v6091
        %v6104 = vpack.c.b16 %v6096, %v6094
        %v6105 = vpack.c.b16 %v6097, %v6095
        %6130 = vrot.lane.b32.xlu0 %v5838, 7
        %v6131 = vpop.permute.xlu0 %6130
        %6132 = vrot.lane.b32.xlu0 %v5839, 7
        %v6133 = vpop.permute.xlu0 %6132
        %6134 = vrot.lane.b32.xlu0 %v5840, 7
        %v6135 = vpop.permute.xlu0 %6134
        %6136 = vrot.lane.b32.xlu0 %v5841, 7
        %v6137 = vpop.permute.xlu0 %6136
        %6138 = vrot.lane.b32.xlu0 %v5842, 7
        %v6139 = vpop.permute.xlu0 %6138
        %6140 = vrot.lane.b32.xlu0 %v5843, 7
        %v6141 = vpop.permute.xlu0 %6140
        %6142 = vrot.lane.b32.xlu0 %v5844, 7
        %v6143 = vpop.permute.xlu0 %6142
        %6144 = vrot.lane.b32.xlu0 %v5845, 7
        %v6145 = vpop.permute.xlu0 %6144
        %6146 = vrot.lane.b32.xlu0 %v5846, 7
        %v6147 = vpop.permute.xlu0 %6146
        %6148 = vrot.lane.b32.xlu0 %v5847, 7
        %v6149 = vpop.permute.xlu0 %6148
        %6150 = vrot.lane.b32.xlu0 %v5848, 7
        %v6151 = vpop.permute.xlu0 %6150
        %6152 = vrot.lane.b32.xlu0 %v5849, 7
        %v6153 = vpop.permute.xlu0 %6152
        %6154 = vrot.lane.b32.xlu0 %v5850, 7
        %v6155 = vpop.permute.xlu0 %6154
        %6156 = vrot.lane.b32.xlu0 %v5851, 7
        %v6157 = vpop.permute.xlu0 %6156
        %6158 = vrot.lane.b32.xlu0 %v5852, 7
        %v6159 = vpop.permute.xlu0 %6158
        %6160 = vrot.lane.b32.xlu0 %v5853, 7
        %v6161 = vpop.permute.xlu0 %6160
        %6162 = vrot.lane.b32.xlu0 %v5854, 7
        %v6163 = vpop.permute.xlu0 %6162
        %6164 = vrot.lane.b32.xlu0 %v5855, 7
        %v6165 = vpop.permute.xlu0 %6164
        %6166 = vrot.lane.b32.xlu0 %v5856, 7
        %v6167 = vpop.permute.xlu0 %6166
        %6168 = vrot.lane.b32.xlu0 %v5857, 7
        %v6169 = vpop.permute.xlu0 %6168
        %6170 = vrot.lane.b32.xlu0 %v5895, 7
        %v6171 = vpop.permute.xlu0 %6170
        %6172 = vrot.lane.b32.xlu0 %v5927, 7
        %v6173 = vpop.permute.xlu0 %6172
        %6174 = vrot.lane.b32.xlu0 %v5928, 7
        %v6175 = vpop.permute.xlu0 %6174
        %6176 = vrot.lane.b32.xlu0 %v5929, 7
        %v6177 = vpop.permute.xlu0 %6176
        %6178 = vrot.lane.b32.xlu0 %v5901, 7
        %v6179 = vpop.permute.xlu0 %6178
        %6180 = vrot.lane.b32.xlu0 %v5903, 7
        %v6181 = vpop.permute.xlu0 %6180
        %6182 = vrot.lane.b32.xlu0 %v5930, 7
        %v6183 = vpop.permute.xlu0 %6182
        %6184 = vrot.lane.b32.xlu0 %v5931, 7
        %v6185 = vpop.permute.xlu0 %6184
        %6186 = vrot.lane.b32.xlu0 %v5932, 7
        %v6187 = vpop.permute.xlu0 %6186
        %6188 = vrot.lane.b32.xlu0 %v5909, 7
        %v6189 = vpop.permute.xlu0 %6188
        %6190 = vrot.lane.b32.xlu0 %v5911, 7
        %v6191 = vpop.permute.xlu0 %6190
        %6192 = vrot.lane.b32.xlu0 %v5933, 7
        %v6193 = vpop.permute.xlu0 %6192
        %6194 = vrot.lane.b32.xlu0 %v5934, 7
        %v6195 = vpop.permute.xlu0 %6194
        %6196 = vrot.lane.b32.xlu0 %v5935, 7
        %v6197 = vpop.permute.xlu0 %6196
        %6198 = vrot.lane.b32.xlu0 %v5917, 7
        %v6199 = vpop.permute.xlu0 %6198
        %6200 = vrot.lane.b32.xlu0 %v5919, 7
        %v6201 = vpop.permute.xlu0 %6200
        %6202 = vrot.lane.b32.xlu0 %v5936, 7
        %v6203 = vpop.permute.xlu0 %6202
        %6204 = vrot.lane.b32.xlu0 %v5937, 7
        %v6205 = vpop.permute.xlu0 %6204
        %6206 = vrot.lane.b32.xlu0 %v5938, 7
        %v6207 = vpop.permute.xlu0 %6206
        %6208 = vrot.lane.b32.xlu0 %v5925, 7
        %v6209 = vpop.permute.xlu0 %6208
        %6210 = vrot.lane.b32.xlu0 %v5960, 7
        %v6211 = vpop.permute.xlu0 %6210
        %6212 = vrot.lane.b32.xlu0 %v6000, 7
        %v6213 = vpop.permute.xlu0 %6212
        %6214 = vrot.lane.b32.xlu0 %v6001, 7
        %v6215 = vpop.permute.xlu0 %6214
        %6216 = vrot.lane.b32.xlu0 %v6002, 7
        %v6217 = vpop.permute.xlu0 %6216
        %6218 = vrot.lane.b32.xlu0 %v6003, 7
        %v6219 = vpop.permute.xlu0 %6218
        %6220 = vrot.lane.b32.xlu0 %v5970, 7
        %v6221 = vpop.permute.xlu0 %6220
        %6222 = vrot.lane.b32.xlu0 %v6004, 7
        %v6223 = vpop.permute.xlu0 %6222
        %6224 = vrot.lane.b32.xlu0 %v6005, 7
        %v6225 = vpop.permute.xlu0 %6224
        %6226 = vrot.lane.b32.xlu0 %v6006, 7
        %v6227 = vpop.permute.xlu0 %6226
        %6228 = vrot.lane.b32.xlu0 %v6007, 7
        %v6229 = vpop.permute.xlu0 %6228
        %6230 = vrot.lane.b32.xlu0 %v5980, 7
        %v6231 = vpop.permute.xlu0 %6230
        %6232 = vrot.lane.b32.xlu0 %v6008, 7
        %v6233 = vpop.permute.xlu0 %6232
        %6234 = vrot.lane.b32.xlu0 %v6009, 7
        %v6235 = vpop.permute.xlu0 %6234
        %6236 = vrot.lane.b32.xlu0 %v6010, 7
        %v6237 = vpop.permute.xlu0 %6236
        %6238 = vrot.lane.b32.xlu0 %v6011, 7
        %v6239 = vpop.permute.xlu0 %6238
        %6240 = vrot.lane.b32.xlu0 %v5990, 7
        %v6241 = vpop.permute.xlu0 %6240
        %6242 = vrot.lane.b32.xlu0 %v6012, 7
        %v6243 = vpop.permute.xlu0 %6242
        %6244 = vrot.lane.b32.xlu0 %v6013, 7
        %v6245 = vpop.permute.xlu0 %6244
        %6246 = vrot.lane.b32.xlu0 %v6014, 7
        %v6247 = vpop.permute.xlu0 %6246
        %6248 = vrot.lane.b32.xlu0 %v6015, 7
        %v6249 = vpop.permute.xlu0 %6248
        %vm6250 = vcmask 56320
        %v6251 = vsel %vm6250, %v6131, %v6133
        %v6252 = vsel %vm6250, %v6133, %v6135
        %v6253 = vsel %vm6250, %v6135, %v6137
        %v6254 = vsel %vm6250, %v6137, %v6139
        %v6255 = vsel %vm6250, %v6141, %v6143
        %v6256 = vsel %vm6250, %v6143, %v6145
        %v6257 = vsel %vm6250, %v6145, %v6147
        %v6258 = vsel %vm6250, %v6147, %v6149
        %v6259 = vsel %vm6250, %v6151, %v6153
        %v6260 = vsel %vm6250, %v6153, %v6155
        %v6261 = vsel %vm6250, %v6155, %v6157
        %v6262 = vsel %vm6250, %v6157, %v6159
        %v6263 = vsel %vm6250, %v6161, %v6163
        %v6264 = vsel %vm6250, %v6163, %v6165
        %v6265 = vsel %vm6250, %v6165, %v6167
        %v6266 = vsel %vm6250, %v6167, %v6169
        %v6267 = vsel %vm6250, %v6171, %v6173
        %v6268 = vsel %vm6250, %v6173, %v6175
        %v6269 = vsel %vm6250, %v6175, %v6177
        %v6270 = vsel %vm6250, %v6177, %v6179
        %v6271 = vsel %vm6250, %v6181, %v6183
        %v6272 = vsel %vm6250, %v6183, %v6185
        %v6273 = vsel %vm6250, %v6185, %v6187
        %v6274 = vsel %vm6250, %v6187, %v6189
        %v6275 = vsel %vm6250, %v6191, %v6193
        %v6276 = vsel %vm6250, %v6193, %v6195
        %v6277 = vsel %vm6250, %v6195, %v6197
        %v6278 = vsel %vm6250, %v6197, %v6199
        %v6279 = vsel %vm6250, %v6201, %v6203
        %v6280 = vsel %vm6250, %v6203, %v6205
        %v6281 = vsel %vm6250, %v6205, %v6207
        %v6282 = vsel %vm6250, %v6207, %v6209
        %v6283 = vsel %vm6250, %v6211, %v6213
        %v6284 = vsel %vm6250, %v6213, %v6215
        %v6285 = vsel %vm6250, %v6215, %v6217
        %v6286 = vsel %vm6250, %v6217, %v6219
        %v6287 = vsel %vm6250, %v6221, %v6223
        %v6288 = vsel %vm6250, %v6223, %v6225
        %v6289 = vsel %vm6250, %v6225, %v6227
        %v6290 = vsel %vm6250, %v6227, %v6229
        %v6291 = vsel %vm6250, %v6231, %v6233
        %v6292 = vsel %vm6250, %v6233, %v6235
        %v6293 = vsel %vm6250, %v6235, %v6237
        %v6294 = vsel %vm6250, %v6237, %v6239
        %v6295 = vsel %vm6250, %v6241, %v6243
        %v6296 = vsel %vm6250, %v6243, %v6245
        %v6297 = vsel %vm6250, %v6245, %v6247
        %v6298 = vsel %vm6250, %v6247, %v6249
        %v6348 = vsel %vm1387, %v6099, 0
        %v6351 = vsel %vm1387, %v6101, 0
        %v6354 = vsel %vm1387, %v6103, 0
        %v6357 = vsel %vm1387, %v6105, 0
        %6359 = vmatprep.subr.bf16.mxu0 %v6252
        %6360 = vmatpush1.bf16.msra.mxu0 %v6251
        %6361 = vmatprep.subr.bf16.mxu0 %v6256
        %6362 = vmatpush1.bf16.msra.mxu0 %v6255
        %6363 = vmatprep.subr.bf16.mxu0 %v6260
        %6364 = vmatpush1.bf16.msra.mxu0 %v6259
        %6365 = vmatprep.subr.bf16.mxu0 %v6264
        %6366 = vmatpush1.bf16.msra.mxu0 %v6263
        %6367 = vmatprep.subr.bf16.mxu0 %v6268
        %6368 = vmatpush1.bf16.msra.mxu0 %v6267
        %6369 = vmatprep.subr.bf16.mxu0 %v6272
        %6370 = vmatpush1.bf16.msra.mxu0 %v6271
        %6371 = vmatprep.subr.bf16.mxu0 %v6276
        %6372 = vmatpush1.bf16.msra.mxu0 %v6275
        %6373 = vmatprep.subr.bf16.mxu0 %v6280
        %6374 = vmatpush1.bf16.msra.mxu0 %v6279
        %6375 = vmatprep.subr.bf16.mxu0 %v6284
        %6376 = vmatpush1.bf16.msra.mxu0 %v6283
        %6377 = vmatprep.subr.bf16.mxu0 %v6288
        %6378 = vmatpush1.bf16.msra.mxu0 %v6287
        %6379 = vmatprep.subr.bf16.mxu0 %v6292
        %6380 = vmatpush1.bf16.msra.mxu0 %v6291
        %6381 = vmatprep.subr.bf16.mxu0 %v6296
        %6382 = vmatpush1.bf16.msra.mxu0 %v6295
        %6383 = vmatprep.subr.bf16.mxu0 0
        %6384 = vmatpush1.bf16.msra.mxu0 0
        %6385 = vmatprep.subr.bf16.mxu0 0
        %6386 = vmatpush1.bf16.msra.mxu0 0
        %6387 = vmatprep.subr.bf16.mxu0 0
        %6388 = vmatpush1.bf16.msra.mxu0 0
        %6389 = vmatprep.subr.bf16.mxu0 0
        %6390 = vmatpush1.bf16.msra.mxu0 0
        %6391 = vmatprep.mubr.bf16.mxu0 %v6348
        %6392 = vmatmul.mubr.bf16.gmra.mrb[0].mxu0 %v6098
        %v6393 = vpop.f32.mrb[0].mxu0
        %v6394 = vadd.f32 %v6037, %v6393
        %v6395 = vpop.f32.mrb[0].mxu0
        %v6396 = vadd.f32 %v6037, %v6395
        %v6397 = vpop.f32.mrb[0].mxu0
        %v6398 = vadd.f32 %v6042, %v6397
        %v6399 = vpop.f32.mrb[0].mxu0
        %v6400 = vadd.f32 %v6042, %v6399
        %6401 = vmatprep.mubr.bf16.mxu0 %v6351
        %6402 = vmatmul.mubr.bf16.gmra.mrb[0].mxu0 %v6100
        %v6403 = vpop.f32.mrb[0].mxu0
        %v6404 = vadd.f32 %v6047, %v6403
        %v6405 = vpop.f32.mrb[0].mxu0
        %v6406 = vadd.f32 %v6047, %v6405
        %v6407 = vpop.f32.mrb[0].mxu0
        %v6408 = vadd.f32 %v6052, %v6407
        %v6409 = vpop.f32.mrb[0].mxu0
        %v6410 = vadd.f32 %v6052, %v6409
        %6411 = vmatprep.mubr.bf16.mxu0 %v6354
        %6412 = vmatmul.mubr.bf16.gmra.mrb[0].mxu0 %v6102
        %v6413 = vpop.f32.mrb[0].mxu0
        %v6414 = vadd.f32 %v6057, %v6413
        %v6415 = vpop.f32.mrb[0].mxu0
        %v6416 = vadd.f32 %v6057, %v6415
        %v6417 = vpop.f32.mrb[0].mxu0
        %v6418 = vadd.f32 %v6062, %v6417
        %v6419 = vpop.f32.mrb[0].mxu0
        %v6420 = vadd.f32 %v6062, %v6419
        %6421 = vmatprep.mubr.bf16.mxu0 %v6357
        %6422 = vmatmul.mubr.bf16.gmra.mrb[0].mxu0 %v6104
        %v6423 = vpop.f32.mrb[0].mxu0
        %v6424 = vadd.f32 %v6067, %v6423
        %v6425 = vpop.f32.mrb[0].mxu0
        %v6426 = vadd.f32 %v6067, %v6425
        %v6427 = vpop.f32.mrb[0].mxu0
        %v6428 = vadd.f32 %v6072, %v6427
        %v6429 = vpop.f32.mrb[0].mxu0
        %v6430 = vadd.f32 %v6072, %v6429
        %6431 = vdwg.mxu0
        %6432 = vmatprep.subr.bf16.mxu0 %v6254
        %6433 = vmatpush1.bf16.msra.mxu0 %v6253
        %6434 = vmatprep.subr.bf16.mxu0 %v6258
        %6435 = vmatpush1.bf16.msra.mxu0 %v6257
        %6436 = vmatprep.subr.bf16.mxu0 %v6262
        %6437 = vmatpush1.bf16.msra.mxu0 %v6261
        %6438 = vmatprep.subr.bf16.mxu0 %v6266
        %6439 = vmatpush1.bf16.msra.mxu0 %v6265
        %6440 = vmatprep.subr.bf16.mxu0 %v6270
        %6441 = vmatpush1.bf16.msra.mxu0 %v6269
        %6442 = vmatprep.subr.bf16.mxu0 %v6274
        %6443 = vmatpush1.bf16.msra.mxu0 %v6273
        %6444 = vmatprep.subr.bf16.mxu0 %v6278
        %6445 = vmatpush1.bf16.msra.mxu0 %v6277
        %6446 = vmatprep.subr.bf16.mxu0 %v6282
        %6447 = vmatpush1.bf16.msra.mxu0 %v6281
        %6448 = vmatprep.subr.bf16.mxu0 %v6286
        %6449 = vmatpush1.bf16.msra.mxu0 %v6285
        %6450 = vmatprep.subr.bf16.mxu0 %v6290
        %6451 = vmatpush1.bf16.msra.mxu0 %v6289
        %6452 = vmatprep.subr.bf16.mxu0 %v6294
        %6453 = vmatpush1.bf16.msra.mxu0 %v6293
        %6454 = vmatprep.subr.bf16.mxu0 %v6298
        %6455 = vmatpush1.bf16.msra.mxu0 %v6297
        %6456 = vmatprep.subr.bf16.mxu0 0
        %6457 = vmatpush1.bf16.msra.mxu0 0
        %6458 = vmatprep.subr.bf16.mxu0 0
        %6459 = vmatpush1.bf16.msra.mxu0 0
        %6460 = vmatprep.subr.bf16.mxu0 0
        %6461 = vmatpush1.bf16.msra.mxu0 0
        %6462 = vmatprep.subr.bf16.mxu0 0
        %6463 = vmatpush1.bf16.msra.mxu0 0
        %6464 = vmatprep.mubr.bf16.mxu0 %v6348
        %6465 = vmatmul.mubr.bf16.gmra.mrb[0].mxu0 %v6098
        %v6466 = vpop.f32.mrb[0].mxu0
        %v6467 = vadd.f32 %v6037, %v6466
        %v6468 = vpop.f32.mrb[0].mxu0
        %v6469 = vadd.f32 %v6037, %v6468
        %v6470 = vpop.f32.mrb[0].mxu0
        %v6471 = vadd.f32 %v6042, %v6470
        %v6472 = vpop.f32.mrb[0].mxu0
        %v6473 = vadd.f32 %v6042, %v6472
        %6474 = vmatprep.mubr.bf16.mxu0 %v6351
        %6475 = vmatmul.mubr.bf16.gmra.mrb[0].mxu0 %v6100
        %v6476 = vpop.f32.mrb[0].mxu0
        %v6477 = vadd.f32 %v6047, %v6476
        %v6478 = vpop.f32.mrb[0].mxu0
        %v6479 = vadd.f32 %v6047, %v6478
        %v6480 = vpop.f32.mrb[0].mxu0
        %v6481 = vadd.f32 %v6052, %v6480
        %v6482 = vpop.f32.mrb[0].mxu0
        %v6483 = vadd.f32 %v6052, %v6482
        %6484 = vmatprep.mubr.bf16.mxu0 %v6354
        %6485 = vmatmul.mubr.bf16.gmra.mrb[0].mxu0 %v6102
        %v6486 = vpop.f32.mrb[0].mxu0
        %v6487 = vadd.f32 %v6057, %v6486
        %v6488 = vpop.f32.mrb[0].mxu0
        %v6489 = vadd.f32 %v6057, %v6488
        %v6490 = vpop.f32.mrb[0].mxu0
        %v6491 = vadd.f32 %v6062, %v6490
        %v6492 = vpop.f32.mrb[0].mxu0
        %v6493 = vadd.f32 %v6062, %v6492
        %6494 = vmatprep.mubr.bf16.mxu0 %v6357
        %6495 = vmatmul.mubr.bf16.gmra.mrb[0].mxu0 %v6104
        %v6496 = vpop.f32.mrb[0].mxu0
        %v6497 = vadd.f32 %v6067, %v6496
        %v6498 = vpop.f32.mrb[0].mxu0
        %v6499 = vadd.f32 %v6067, %v6498
        %v6500 = vpop.f32.mrb[0].mxu0
        %v6501 = vadd.f32 %v6072, %v6500
        %v6502 = vpop.f32.mrb[0].mxu0
        %v6503 = vadd.f32 %v6072, %v6502
        %6504 = vdwg.mxu0
        %vm6505 = vcmp.ge.f32.partialorder %v6394, 0.0
        %vm6506 = vcmp.ge.f32.partialorder %v6396, 0.0
        %vm6507 = vcmp.ge.f32.partialorder %v6467, 0.0
        %vm6508 = vcmp.ge.f32.partialorder %v6469, 0.0
        %vm6509 = vcmp.ge.f32.partialorder %v6398, 0.0
        %vm6510 = vcmp.ge.f32.partialorder %v6400, 0.0
        %vm6511 = vcmp.ge.f32.partialorder %v6471, 0.0
        %vm6512 = vcmp.ge.f32.partialorder %v6473, 0.0
        %vm6513 = vcmp.ge.f32.partialorder %v6404, 0.0
        %vm6514 = vcmp.ge.f32.partialorder %v6406, 0.0
        %vm6515 = vcmp.ge.f32.partialorder %v6477, 0.0
        %vm6516 = vcmp.ge.f32.partialorder %v6479, 0.0
        %vm6517 = vcmp.ge.f32.partialorder %v6408, 0.0
        %vm6518 = vcmp.ge.f32.partialorder %v6410, 0.0
        %vm6519 = vcmp.ge.f32.partialorder %v6481, 0.0
        %vm6520 = vcmp.ge.f32.partialorder %v6483, 0.0
        %vm6521 = vcmp.ge.f32.partialorder %v6414, 0.0
        %vm6522 = vcmp.ge.f32.partialorder %v6416, 0.0
        %vm6523 = vcmp.ge.f32.partialorder %v6487, 0.0
        %vm6524 = vcmp.ge.f32.partialorder %v6489, 0.0
        %vm6525 = vcmp.ge.f32.partialorder %v6418, 0.0
        %vm6526 = vcmp.ge.f32.partialorder %v6420, 0.0
        %vm6527 = vcmp.ge.f32.partialorder %v6491, 0.0
        %vm6528 = vcmp.ge.f32.partialorder %v6493, 0.0
        %vm6529 = vcmp.ge.f32.partialorder %v6424, 0.0
        %vm6530 = vcmp.ge.f32.partialorder %v6426, 0.0
        %vm6531 = vcmp.ge.f32.partialorder %v6497, 0.0
        %vm6532 = vcmp.ge.f32.partialorder %v6499, 0.0
        %vm6533 = vcmp.ge.f32.partialorder %v6428, 0.0
        %vm6534 = vcmp.ge.f32.partialorder %v6430, 0.0
        %vm6535 = vcmp.ge.f32.partialorder %v6501, 0.0
        %vm6536 = vcmp.ge.f32.partialorder %v6503, 0.0
        %v6537 = vmul.f32 %v6394, 0.2
        %v6538 = vmul.f32 %v6396, 0.2
        %v6539 = vmul.f32 %v6467, 0.2
        %v6540 = vmul.f32 %v6469, 0.2
        %v6541 = vmul.f32 %v6398, 0.2
        %v6542 = vmul.f32 %v6400, 0.2
        %v6543 = vmul.f32 %v6471, 0.2
        %v6544 = vmul.f32 %v6473, 0.2
        %v6545 = vmul.f32 %v6404, 0.2
        %v6546 = vmul.f32 %v6406, 0.2
        %v6547 = vmul.f32 %v6477, 0.2
        %v6548 = vmul.f32 %v6479, 0.2
        %v6549 = vmul.f32 %v6408, 0.2
        %v6550 = vmul.f32 %v6410, 0.2
        %v6551 = vmul.f32 %v6481, 0.2
        %v6552 = vmul.f32 %v6483, 0.2
        %v6553 = vmul.f32 %v6414, 0.2
        %v6554 = vmul.f32 %v6416, 0.2
        %v6555 = vmul.f32 %v6487, 0.2
        %v6556 = vmul.f32 %v6489, 0.2
        %v6557 = vmul.f32 %v6418, 0.2
        %v6558 = vmul.f32 %v6420, 0.2
        %v6559 = vmul.f32 %v6491, 0.2
        %v6560 = vmul.f32 %v6493, 0.2
        %v6561 = vmul.f32 %v6424, 0.2
        %v6562 = vmul.f32 %v6426, 0.2
        %v6563 = vmul.f32 %v6497, 0.2
        %v6564 = vmul.f32 %v6499, 0.2
        %v6565 = vmul.f32 %v6428, 0.2
        %v6566 = vmul.f32 %v6430, 0.2
        %v6567 = vmul.f32 %v6501, 0.2
        %v6568 = vmul.f32 %v6503, 0.2
        %v6569 = vsel %vm6505, %v6394, %v6537
        %v6570 = vsel %vm6506, %v6396, %v6538
        %v6571 = vsel %vm6507, %v6467, %v6539
        %v6572 = vsel %vm6508, %v6469, %v6540
        %v6573 = vsel %vm6509, %v6398, %v6541
        %v6574 = vsel %vm6510, %v6400, %v6542
        %v6575 = vsel %vm6511, %v6471, %v6543
        %v6576 = vsel %vm6512, %v6473, %v6544
        %v6577 = vsel %vm6513, %v6404, %v6545
        %v6578 = vsel %vm6514, %v6406, %v6546
        %v6579 = vsel %vm6515, %v6477, %v6547
        %v6580 = vsel %vm6516, %v6479, %v6548
        %v6581 = vsel %vm6517, %v6408, %v6549
        %v6582 = vsel %vm6518, %v6410, %v6550
        %v6583 = vsel %vm6519, %v6481, %v6551
        %v6584 = vsel %vm6520, %v6483, %v6552
        %v6585 = vsel %vm6521, %v6414, %v6553
        %v6586 = vsel %vm6522, %v6416, %v6554
        %v6587 = vsel %vm6523, %v6487, %v6555
        %v6588 = vsel %vm6524, %v6489, %v6556
        %v6589 = vsel %vm6525, %v6418, %v6557
        %v6590 = vsel %vm6526, %v6420, %v6558
        %v6591 = vsel %vm6527, %v6491, %v6559
        %v6592 = vsel %vm6528, %v6493, %v6560
        %v6593 = vsel %vm6529, %v6424, %v6561
        %v6594 = vsel %vm6530, %v6426, %v6562
        %v6595 = vsel %vm6531, %v6497, %v6563
        %v6596 = vsel %vm6532, %v6499, %v6564
        %v6597 = vsel %vm6533, %v6428, %v6565
        %v6598 = vsel %vm6534, %v6430, %v6566
        %v6599 = vsel %vm6535, %v6501, %v6567
        %v6600 = vsel %vm6536, %v6503, %v6568
        %v6601 = vmul.f32 %v6569, %v272
        %v6602 = vmul.f32 %v6570, %v273
        %v6603 = vmul.f32 %v6571, %v274
        %v6604 = vmul.f32 %v6572, %v275
        %v6605 = vmul.f32 %v6573, %v272
        %v6606 = vmul.f32 %v6574, %v273
        %v6607 = vmul.f32 %v6575, %v274
        %v6608 = vmul.f32 %v6576, %v275
        %v6609 = vmul.f32 %v6577, %v272
        %v6610 = vmul.f32 %v6578, %v273
        %v6611 = vmul.f32 %v6579, %v274
        %v6612 = vmul.f32 %v6580, %v275
        %v6613 = vmul.f32 %v6581, %v272
        %v6614 = vmul.f32 %v6582, %v273
        %v6615 = vmul.f32 %v6583, %v274
        %v6616 = vmul.f32 %v6584, %v275
        %v6617 = vmul.f32 %v6585, %v272
        %v6618 = vmul.f32 %v6586, %v273
        %v6619 = vmul.f32 %v6587, %v274
        %v6620 = vmul.f32 %v6588, %v275
        %v6621 = vmul.f32 %v6589, %v272
        %v6622 = vmul.f32 %v6590, %v273
        %v6623 = vmul.f32 %v6591, %v274
        %v6624 = vmul.f32 %v6592, %v275
        %v6625 = vmul.f32 %v6593, %v272
        %v6626 = vmul.f32 %v6594, %v273
        %v6627 = vmul.f32 %v6595, %v274
        %v6628 = vmul.f32 %v6596, %v275
        %v6629 = vmul.f32 %v6597, %v272
        %v6630 = vmul.f32 %v6598, %v273
        %v6631 = vmul.f32 %v6599, %v274
        %v6632 = vmul.f32 %v6600, %v275
        %v6633 = vpack.c.bf16 %v6605, %v6601
        %v6634 = vpack.c.bf16 %v6606, %v6602
        %v6635 = vpack.c.bf16 %v6607, %v6603
        %v6636 = vpack.c.bf16 %v6608, %v6604
        %v6637 = vpack.c.bf16 %v6613, %v6609
        %v6638 = vpack.c.bf16 %v6614, %v6610
        %v6639 = vpack.c.bf16 %v6615, %v6611
        %v6640 = vpack.c.bf16 %v6616, %v6612
        %v6641 = vpack.c.bf16 %v6621, %v6617
        %v6642 = vpack.c.bf16 %v6622, %v6618
        %v6643 = vpack.c.bf16 %v6623, %v6619
        %v6644 = vpack.c.bf16 %v6624, %v6620
        %v6645 = vpack.c.bf16 %v6629, %v6625
        %v6646 = vpack.c.bf16 %v6630, %v6626
        %v6647 = vpack.c.bf16 %v6631, %v6627
        %v6648 = vpack.c.bf16 %v6632, %v6628
        %6649 = vst [vmem:[#allocation2 + $0x8] sm:$0xff] %v6633
        %6650 = vst [vmem:[#allocation2 + $0x10] sm:$0xff] %v6634
        %6651 = vst [vmem:[#allocation2 + $0x18] sm:$0xff] %v6635
        %6652 = vst [vmem:[#allocation2 + $0x20] sm:$0xff] %v6636
        %6653 = vst [vmem:[#allocation2 + $0x38] sm:$0xff] %v6637
        %6654 = vst [vmem:[#allocation2 + $0x40] sm:$0xff] %v6638
        %6655 = vst [vmem:[#allocation2 + $0x48] sm:$0xff] %v6639
        %6656 = vst [vmem:[#allocation2 + $0x50] sm:$0xff] %v6640
        %6657 = vst [vmem:[#allocation2 + $0x68] sm:$0xff] %v6641
        %6658 = vst [vmem:[#allocation2 + $0x70] sm:$0xff] %v6642
        %6659 = vst [vmem:[#allocation2 + $0x78] sm:$0xff] %v6643
        %6660 = vst [vmem:[#allocation2 + $0x80] sm:$0xff] %v6644
        %6661 = vst [vmem:[#allocation2 + $0x98] sm:$0xff] %v6645
        %6662 = vst [vmem:[#allocation2 + $0xa0] sm:$0xff] %v6646
        %6663 = vst [vmem:[#allocation2 + $0xa8] sm:$0xff] %v6647
        %6664 = vst [vmem:[#allocation2 + $0xb0] sm:$0xff] %v6648
        %v6665 = vld [vmem:[#allocation2] sm:$0xff]
        %v6666 = vld [vmem:[#allocation2 + $0x8] sm:$0xff]
        %v6667 = vld [vmem:[#allocation2 + $0x10] sm:$0xff]
        %v6668 = vld [vmem:[#allocation2 + $0x18] sm:$0xff]
        %v6669 = vld [vmem:[#allocation2 + $0x20] sm:$0xff]
        %v6670 = vld [vmem:[#allocation2 + $0x30] sm:$0xff]
        %v6671 = vld [vmem:[#allocation2 + $0x38] sm:$0xff]
        %v6672 = vld [vmem:[#allocation2 + $0x40] sm:$0xff]
        %v6673 = vld [vmem:[#allocation2 + $0x48] sm:$0xff]
        %v6674 = vld [vmem:[#allocation2 + $0x50] sm:$0xff]
        %v6675 = vld [vmem:[#allocation2 + $0x60] sm:$0xff]
        %v6676 = vld [vmem:[#allocation2 + $0x68] sm:$0xff]
        %v6677 = vld [vmem:[#allocation2 + $0x70] sm:$0xff]
        %v6678 = vld [vmem:[#allocation2 + $0x78] sm:$0xff]
        %v6679 = vld [vmem:[#allocation2 + $0x80] sm:$0xff]
        %v6680 = vld [vmem:[#allocation2 + $0x90] sm:$0xff]
        %v6681 = vld [vmem:[#allocation2 + $0x98] sm:$0xff]
        %v6682 = vld [vmem:[#allocation2 + $0xa0] sm:$0xff]
        %v6683 = vld [vmem:[#allocation2 + $0xa8] sm:$0xff]
        %v6684 = vld [vmem:[#allocation2 + $0xb0] sm:$0xff]
        %v6685 = vld [vmem:[#allocation2 + $0x8] sm:$0xff]
        %v6686 = vld [vmem:[#allocation2 + $0x10] sm:$0xff]
        %v6687 = vld [vmem:[#allocation2 + $0x18] sm:$0xff]
        %v6688 = vld [vmem:[#allocation2 + $0x20] sm:$0xff]
        %v6689 = vld [vmem:[#allocation2 + $0x28] sm:$0xff]
        %v6690 = vld [vmem:[#allocation2 + $0x38] sm:$0xff]
        %v6691 = vld [vmem:[#allocation2 + $0x40] sm:$0xff]
        %v6692 = vld [vmem:[#allocation2 + $0x48] sm:$0xff]
        %v6693 = vld [vmem:[#allocation2 + $0x50] sm:$0xff]
        %v6694 = vld [vmem:[#allocation2 + $0x58] sm:$0xff]
        %v6695 = vld [vmem:[#allocation2 + $0x68] sm:$0xff]
        %v6696 = vld [vmem:[#allocation2 + $0x70] sm:$0xff]
        %v6697 = vld [vmem:[#allocation2 + $0x78] sm:$0xff]
        %v6698 = vld [vmem:[#allocation2 + $0x80] sm:$0xff]
        %v6699 = vld [vmem:[#allocation2 + $0x88] sm:$0xff]
        %v6700 = vld [vmem:[#allocation2 + $0x98] sm:$0xff]
        %v6701 = vld [vmem:[#allocation2 + $0xa0] sm:$0xff]
        %v6702 = vld [vmem:[#allocation2 + $0xa8] sm:$0xff]
        %v6703 = vld [vmem:[#allocation2 + $0xb0] sm:$0xff]
        %v6704 = vld [vmem:[#allocation2 + $0xb8] sm:$0xff]
        %6721 = vrot.lane.b32.xlu0 %v6633, 120
        %v6722 = vpop.permute.xlu0 %6721
        %6723 = vrot.lane.b32.xlu0 %v6634, 120
        %v6724 = vpop.permute.xlu0 %6723
        %6725 = vrot.lane.b32.xlu0 %v6635, 120
        %v6726 = vpop.permute.xlu0 %6725
        %6727 = vrot.lane.b32.xlu0 %v6636, 120
        %v6728 = vpop.permute.xlu0 %6727
        %6729 = vrot.lane.b32.xlu0 %v6637, 120
        %v6730 = vpop.permute.xlu0 %6729
        %6731 = vrot.lane.b32.xlu0 %v6638, 120
        %v6732 = vpop.permute.xlu0 %6731
        %6733 = vrot.lane.b32.xlu0 %v6639, 120
        %v6734 = vpop.permute.xlu0 %6733
        %6735 = vrot.lane.b32.xlu0 %v6640, 120
        %v6736 = vpop.permute.xlu0 %6735
        %6737 = vrot.lane.b32.xlu0 %v6641, 120
        %v6738 = vpop.permute.xlu0 %6737
        %6739 = vrot.lane.b32.xlu0 %v6642, 120
        %v6740 = vpop.permute.xlu0 %6739
        %6741 = vrot.lane.b32.xlu0 %v6643, 120
        %v6742 = vpop.permute.xlu0 %6741
        %6743 = vrot.lane.b32.xlu0 %v6644, 120
        %v6744 = vpop.permute.xlu0 %6743
        %6745 = vrot.lane.b32.xlu0 %v6645, 120
        %v6746 = vpop.permute.xlu0 %6745
        %6747 = vrot.lane.b32.xlu0 %v6646, 120
        %v6748 = vpop.permute.xlu0 %6747
        %6749 = vrot.lane.b32.xlu0 %v6647, 120
        %v6750 = vpop.permute.xlu0 %6749
        %6751 = vrot.lane.b32.xlu0 %v6648, 120
        %v6752 = vpop.permute.xlu0 %6751
        %v6753 = vsel %vm3519, %v6722, %v6724
        %v6754 = vsel %vm3519, %v6724, %v6726
        %v6755 = vsel %vm3519, %v6726, %v6728
        %v6756 = vsel %vm3519, %v6730, %v6732
        %v6757 = vsel %vm3519, %v6732, %v6734
        %v6758 = vsel %vm3519, %v6734, %v6736
        %v6759 = vsel %vm3519, %v6738, %v6740
        %v6760 = vsel %vm3519, %v6740, %v6742
        %v6761 = vsel %vm3519, %v6742, %v6744
        %v6762 = vsel %vm3519, %v6746, %v6748
        %v6763 = vsel %vm3519, %v6748, %v6750
        %v6764 = vsel %vm3519, %v6750, %v6752
        %6785 = vrot.lane.b32.xlu0 %v6685, 112
        %v6786 = vpop.permute.xlu0 %6785
        %6787 = vrot.lane.b32.xlu0 %v6686, 112
        %v6788 = vpop.permute.xlu0 %6787
        %6789 = vrot.lane.b32.xlu0 %v6687, 112
        %v6790 = vpop.permute.xlu0 %6789
        %6791 = vrot.lane.b32.xlu0 %v6688, 112
        %v6792 = vpop.permute.xlu0 %6791
        %6793 = vrot.lane.b32.xlu0 %v6689, 112
        %v6794 = vpop.permute.xlu0 %6793
        %6795 = vrot.lane.b32.xlu0 %v6690, 112
        %v6796 = vpop.permute.xlu0 %6795
        %6797 = vrot.lane.b32.xlu0 %v6691, 112
        %v6798 = vpop.permute.xlu0 %6797
        %6799 = vrot.lane.b32.xlu0 %v6692, 112
        %v6800 = vpop.permute.xlu0 %6799
        %6801 = vrot.lane.b32.xlu0 %v6693, 112
        %v6802 = vpop.permute.xlu0 %6801
        %6803 = vrot.lane.b32.xlu0 %v6694, 112
        %v6804 = vpop.permute.xlu0 %6803
        %6805 = vrot.lane.b32.xlu0 %v6695, 112
        %v6806 = vpop.permute.xlu0 %6805
        %6807 = vrot.lane.b32.xlu0 %v6696, 112
        %v6808 = vpop.permute.xlu0 %6807
        %6809 = vrot.lane.b32.xlu0 %v6697, 112
        %v6810 = vpop.permute.xlu0 %6809
        %6811 = vrot.lane.b32.xlu0 %v6698, 112
        %v6812 = vpop.permute.xlu0 %6811
        %6813 = vrot.lane.b32.xlu0 %v6699, 112
        %v6814 = vpop.permute.xlu0 %6813
        %6815 = vrot.lane.b32.xlu0 %v6700, 112
        %v6816 = vpop.permute.xlu0 %6815
        %6817 = vrot.lane.b32.xlu0 %v6701, 112
        %v6818 = vpop.permute.xlu0 %6817
        %6819 = vrot.lane.b32.xlu0 %v6702, 112
        %v6820 = vpop.permute.xlu0 %6819
        %6821 = vrot.lane.b32.xlu0 %v6703, 112
        %v6822 = vpop.permute.xlu0 %6821
        %6823 = vrot.lane.b32.xlu0 %v6704, 112
        %v6824 = vpop.permute.xlu0 %6823
        %vm6825 = vcmask 916480
        %v6826 = vsel %vm6825, %v6786, %v6788
        %v6827 = vsel %vm6825, %v6788, %v6790
        %v6828 = vsel %vm6825, %v6790, %v6792
        %v6829 = vsel %vm6825, %v6792, %v6794
        %v6830 = vsel %vm6825, %v6796, %v6798
        %v6831 = vsel %vm6825, %v6798, %v6800
        %v6832 = vsel %vm6825, %v6800, %v6802
        %v6833 = vsel %vm6825, %v6802, %v6804
        %v6834 = vsel %vm6825, %v6806, %v6808
        %v6835 = vsel %vm6825, %v6808, %v6810
        %v6836 = vsel %vm6825, %v6810, %v6812
        %v6837 = vsel %vm6825, %v6812, %v6814
        %v6838 = vsel %vm6825, %v6816, %v6818
        %v6839 = vsel %vm6825, %v6818, %v6820
        %v6840 = vsel %vm6825, %v6820, %v6822
        %v6841 = vsel %vm6825, %v6822, %v6824
        %s6842 = scalar_lea.vmem %s2, 448
        %v6843 = vld [vmem:[%s6842] sm:$0xff]
        %v6844 = vld [vmem:[%s6842 + $0x8] sm:$0xff]
        %v6845 = vld [vmem:[%s6842 + $0x10] sm:$0xff]
        %v6846 = vld [vmem:[%s6842 + $0x18] sm:$0xff]
        %v6847 = vld [vmem:[%s6842 + $0x20] sm:$0xff]
        %v6848 = vld [vmem:[%s6842 + $0x28] sm:$0xff]
        %v6849 = vld [vmem:[%s6842 + $0x30] sm:$0xff]
        %v6850 = vld [vmem:[%s6842 + $0x38] sm:$0xff]
        %s6851 = scalar_lea.vmem %s4, 512
        %v6852 = vld [vmem:[%s6851] sm:$0xff]
        %v6853 = vld [vmem:[%s6851 + $0x8] sm:$0xff]
        %v6854 = vld [vmem:[%s6851 + $0x10] sm:$0xff]
        %v6855 = vld [vmem:[%s6851 + $0x18] sm:$0xff]
        %v6856 = vld [vmem:[%s6851 + $0x20] sm:$0xff]
        %v6857 = vld [vmem:[%s6851 + $0x28] sm:$0xff]
        %v6858 = vld [vmem:[%s6851 + $0x30] sm:$0xff]
        %v6859 = vld [vmem:[%s6851 + $0x38] sm:$0xff]
        %6861 = vset.pattern.permute.xlu0 0
        %6862 = vperm.xlu0 %6861, %v6852
        %v6863 = vpop.permute.xlu0 %6862
        %6866 = vset.pattern.permute.xlu0 0
        %6867 = vperm.xlu0 %6866, %v6853
        %v6868 = vpop.permute.xlu0 %6867
        %6871 = vset.pattern.permute.xlu0 0
        %6872 = vperm.xlu0 %6871, %v6854
        %v6873 = vpop.permute.xlu0 %6872
        %6876 = vset.pattern.permute.xlu0 0
        %6877 = vperm.xlu0 %6876, %v6855
        %v6878 = vpop.permute.xlu0 %6877
        %6881 = vset.pattern.permute.xlu0 0
        %6882 = vperm.xlu0 %6881, %v6856
        %v6883 = vpop.permute.xlu0 %6882
        %6886 = vset.pattern.permute.xlu0 0
        %6887 = vperm.xlu0 %6886, %v6857
        %v6888 = vpop.permute.xlu0 %6887
        %6891 = vset.pattern.permute.xlu0 0
        %6892 = vperm.xlu0 %6891, %v6858
        %v6893 = vpop.permute.xlu0 %6892
        %6896 = vset.pattern.permute.xlu0 0
        %6897 = vperm.xlu0 %6896, %v6859
        %v6898 = vpop.permute.xlu0 %6897
        %v6908 = vunpack.c.l.b16 %v6843
        %v6909 = vunpack.c.h.b16 %v6843
        %v6910 = vunpack.c.l.b16 %v6844
        %v6911 = vunpack.c.h.b16 %v6844
        %v6912 = vunpack.c.l.b16 %v6845
        %v6913 = vunpack.c.h.b16 %v6845
        %v6914 = vunpack.c.l.b16 %v6846
        %v6915 = vunpack.c.h.b16 %v6846
        %v6916 = vunpack.c.l.b16 %v6847
        %v6917 = vunpack.c.h.b16 %v6847
        %v6918 = vunpack.c.l.b16 %v6848
        %v6919 = vunpack.c.h.b16 %v6848
        %v6920 = vunpack.c.l.b16 %v6849
        %v6921 = vunpack.c.h.b16 %v6849
        %v6922 = vunpack.c.l.b16 %v6850
        %v6923 = vunpack.c.h.b16 %v6850
        %v6924 = vpack.c.b16 %v6910, %v6908
        %v6925 = vpack.c.b16 %v6911, %v6909
        %v6926 = vpack.c.b16 %v6914, %v6912
        %v6927 = vpack.c.b16 %v6915, %v6913
        %v6928 = vpack.c.b16 %v6918, %v6916
        %v6929 = vpack.c.b16 %v6919, %v6917
        %v6930 = vpack.c.b16 %v6922, %v6920
        %v6931 = vpack.c.b16 %v6923, %v6921
        %6956 = vrot.lane.b32.xlu0 %v6665, 8
        %v6957 = vpop.permute.xlu0 %6956
        %6958 = vrot.lane.b32.xlu0 %v6666, 8
        %v6959 = vpop.permute.xlu0 %6958
        %6960 = vrot.lane.b32.xlu0 %v6667, 8
        %v6961 = vpop.permute.xlu0 %6960
        %6962 = vrot.lane.b32.xlu0 %v6668, 8
        %v6963 = vpop.permute.xlu0 %6962
        %6964 = vrot.lane.b32.xlu0 %v6669, 8
        %v6965 = vpop.permute.xlu0 %6964
        %6966 = vrot.lane.b32.xlu0 %v6670, 8
        %v6967 = vpop.permute.xlu0 %6966
        %6968 = vrot.lane.b32.xlu0 %v6671, 8
        %v6969 = vpop.permute.xlu0 %6968
        %6970 = vrot.lane.b32.xlu0 %v6672, 8
        %v6971 = vpop.permute.xlu0 %6970
        %6972 = vrot.lane.b32.xlu0 %v6673, 8
        %v6973 = vpop.permute.xlu0 %6972
        %6974 = vrot.lane.b32.xlu0 %v6674, 8
        %v6975 = vpop.permute.xlu0 %6974
        %6976 = vrot.lane.b32.xlu0 %v6675, 8
        %v6977 = vpop.permute.xlu0 %6976
        %6978 = vrot.lane.b32.xlu0 %v6676, 8
        %v6979 = vpop.permute.xlu0 %6978
        %6980 = vrot.lane.b32.xlu0 %v6677, 8
        %v6981 = vpop.permute.xlu0 %6980
        %6982 = vrot.lane.b32.xlu0 %v6678, 8
        %v6983 = vpop.permute.xlu0 %6982
        %6984 = vrot.lane.b32.xlu0 %v6679, 8
        %v6985 = vpop.permute.xlu0 %6984
        %6986 = vrot.lane.b32.xlu0 %v6680, 8
        %v6987 = vpop.permute.xlu0 %6986
        %6988 = vrot.lane.b32.xlu0 %v6681, 8
        %v6989 = vpop.permute.xlu0 %6988
        %6990 = vrot.lane.b32.xlu0 %v6682, 8
        %v6991 = vpop.permute.xlu0 %6990
        %6992 = vrot.lane.b32.xlu0 %v6683, 8
        %v6993 = vpop.permute.xlu0 %6992
        %6994 = vrot.lane.b32.xlu0 %v6684, 8
        %v6995 = vpop.permute.xlu0 %6994
        %6996 = vrot.lane.b32.xlu0 %v6722, 8
        %v6997 = vpop.permute.xlu0 %6996
        %6998 = vrot.lane.b32.xlu0 %v6753, 8
        %v6999 = vpop.permute.xlu0 %6998
        %7000 = vrot.lane.b32.xlu0 %v6754, 8
        %v7001 = vpop.permute.xlu0 %7000
        %7002 = vrot.lane.b32.xlu0 %v6755, 8
        %v7003 = vpop.permute.xlu0 %7002
        %7004 = vrot.lane.b32.xlu0 %v6728, 8
        %v7005 = vpop.permute.xlu0 %7004
        %7006 = vrot.lane.b32.xlu0 %v6730, 8
        %v7007 = vpop.permute.xlu0 %7006
        %7008 = vrot.lane.b32.xlu0 %v6756, 8
        %v7009 = vpop.permute.xlu0 %7008
        %7010 = vrot.lane.b32.xlu0 %v6757, 8
        %v7011 = vpop.permute.xlu0 %7010
        %7012 = vrot.lane.b32.xlu0 %v6758, 8
        %v7013 = vpop.permute.xlu0 %7012
        %7014 = vrot.lane.b32.xlu0 %v6736, 8
        %v7015 = vpop.permute.xlu0 %7014
        %7016 = vrot.lane.b32.xlu0 %v6738, 8
        %v7017 = vpop.permute.xlu0 %7016
        %7018 = vrot.lane.b32.xlu0 %v6759, 8
        %v7019 = vpop.permute.xlu0 %7018
        %7020 = vrot.lane.b32.xlu0 %v6760, 8
        %v7021 = vpop.permute.xlu0 %7020
        %7022 = vrot.lane.b32.xlu0 %v6761, 8
        %v7023 = vpop.permute.xlu0 %7022
        %7024 = vrot.lane.b32.xlu0 %v6744, 8
        %v7025 = vpop.permute.xlu0 %7024
        %7026 = vrot.lane.b32.xlu0 %v6746, 8
        %v7027 = vpop.permute.xlu0 %7026
        %7028 = vrot.lane.b32.xlu0 %v6762, 8
        %v7029 = vpop.permute.xlu0 %7028
        %7030 = vrot.lane.b32.xlu0 %v6763, 8
        %v7031 = vpop.permute.xlu0 %7030
        %7032 = vrot.lane.b32.xlu0 %v6764, 8
        %v7033 = vpop.permute.xlu0 %7032
        %7034 = vrot.lane.b32.xlu0 %v6752, 8
        %v7035 = vpop.permute.xlu0 %7034
        %7036 = vrot.lane.b32.xlu0 %v6786, 8
        %v7037 = vpop.permute.xlu0 %7036
        %7038 = vrot.lane.b32.xlu0 %v6826, 8
        %v7039 = vpop.permute.xlu0 %7038
        %7040 = vrot.lane.b32.xlu0 %v6827, 8
        %v7041 = vpop.permute.xlu0 %7040
        %7042 = vrot.lane.b32.xlu0 %v6828, 8
        %v7043 = vpop.permute.xlu0 %7042
        %7044 = vrot.lane.b32.xlu0 %v6829, 8
        %v7045 = vpop.permute.xlu0 %7044
        %7046 = vrot.lane.b32.xlu0 %v6796, 8
        %v7047 = vpop.permute.xlu0 %7046
        %7048 = vrot.lane.b32.xlu0 %v6830, 8
        %v7049 = vpop.permute.xlu0 %7048
        %7050 = vrot.lane.b32.xlu0 %v6831, 8
        %v7051 = vpop.permute.xlu0 %7050
        %7052 = vrot.lane.b32.xlu0 %v6832, 8
        %v7053 = vpop.permute.xlu0 %7052
        %7054 = vrot.lane.b32.xlu0 %v6833, 8
        %v7055 = vpop.permute.xlu0 %7054
        %7056 = vrot.lane.b32.xlu0 %v6806, 8
        %v7057 = vpop.permute.xlu0 %7056
        %7058 = vrot.lane.b32.xlu0 %v6834, 8
        %v7059 = vpop.permute.xlu0 %7058
        %7060 = vrot.lane.b32.xlu0 %v6835, 8
        %v7061 = vpop.permute.xlu0 %7060
        %7062 = vrot.lane.b32.xlu0 %v6836, 8
        %v7063 = vpop.permute.xlu0 %7062
        %7064 = vrot.lane.b32.xlu0 %v6837, 8
        %v7065 = vpop.permute.xlu0 %7064
        %7066 = vrot.lane.b32.xlu0 %v6816, 8
        %v7067 = vpop.permute.xlu0 %7066
        %7068 = vrot.lane.b32.xlu0 %v6838, 8
        %v7069 = vpop.permute.xlu0 %7068
        %7070 = vrot.lane.b32.xlu0 %v6839, 8
        %v7071 = vpop.permute.xlu0 %7070
        %7072 = vrot.lane.b32.xlu0 %v6840, 8
        %v7073 = vpop.permute.xlu0 %7072
        %7074 = vrot.lane.b32.xlu0 %v6841, 8
        %v7075 = vpop.permute.xlu0 %7074
        %vm7076 = vcmask 64512
        %v7077 = vsel %vm7076, %v6957, %v6959
        %v7078 = vsel %vm7076, %v6959, %v6961
        %v7079 = vsel %vm7076, %v6961, %v6963
        %v7080 = vsel %vm7076, %v6963, %v6965
        %v7081 = vsel %vm7076, %v6967, %v6969
        %v7082 = vsel %vm7076, %v6969, %v6971
        %v7083 = vsel %vm7076, %v6971, %v6973
        %v7084 = vsel %vm7076, %v6973, %v6975
        %v7085 = vsel %vm7076, %v6977, %v6979
        %v7086 = vsel %vm7076, %v6979, %v6981
        %v7087 = vsel %vm7076, %v6981, %v6983
        %v7088 = vsel %vm7076, %v6983, %v6985
        %v7089 = vsel %vm7076, %v6987, %v6989
        %v7090 = vsel %vm7076, %v6989, %v6991
        %v7091 = vsel %vm7076, %v6991, %v6993
        %v7092 = vsel %vm7076, %v6993, %v6995
        %v7093 = vsel %vm7076, %v6997, %v6999
        %v7094 = vsel %vm7076, %v6999, %v7001
        %v7095 = vsel %vm7076, %v7001, %v7003
        %v7096 = vsel %vm7076, %v7003, %v7005
        %v7097 = vsel %vm7076, %v7007, %v7009
        %v7098 = vsel %vm7076, %v7009, %v7011
        %v7099 = vsel %vm7076, %v7011, %v7013
        %v7100 = vsel %vm7076, %v7013, %v7015
        %v7101 = vsel %vm7076, %v7017, %v7019
        %v7102 = vsel %vm7076, %v7019, %v7021
        %v7103 = vsel %vm7076, %v7021, %v7023
        %v7104 = vsel %vm7076, %v7023, %v7025
        %v7105 = vsel %vm7076, %v7027, %v7029
        %v7106 = vsel %vm7076, %v7029, %v7031
        %v7107 = vsel %vm7076, %v7031, %v7033
        %v7108 = vsel %vm7076, %v7033, %v7035
        %v7109 = vsel %vm7076, %v7037, %v7039
        %v7110 = vsel %vm7076, %v7039, %v7041
        %v7111 = vsel %vm7076, %v7041, %v7043
        %v7112 = vsel %vm7076, %v7043, %v7045
        %v7113 = vsel %vm7076, %v7047, %v7049
        %v7114 = vsel %vm7076, %v7049, %v7051
        %v7115 = vsel %vm7076, %v7051, %v7053
        %v7116 = vsel %vm7076, %v7053, %v7055
        %v7117 = vsel %vm7076, %v7057, %v7059
        %v7118 = vsel %vm7076, %v7059, %v7061
        %v7119 = vsel %vm7076, %v7061, %v7063
        %v7120 = vsel %vm7076, %v7063, %v7065
        %v7121 = vsel %vm7076, %v7067, %v7069
        %v7122 = vsel %vm7076, %v7069, %v7071
        %v7123 = vsel %vm7076, %v7071, %v7073
        %v7124 = vsel %vm7076, %v7073, %v7075
        %v7174 = vsel %vm1387, %v6925, 0
        %v7177 = vsel %vm1387, %v6927, 0
        %v7180 = vsel %vm1387, %v6929, 0
        %v7183 = vsel %vm1387, %v6931, 0
        %7185 = vmatprep.subr.bf16.mxu0 %v7078
        %7186 = vmatpush1.bf16.msra.mxu0 %v7077
        %7187 = vmatprep.subr.bf16.mxu0 %v7082
        %7188 = vmatpush1.bf16.msra.mxu0 %v7081
        %7189 = vmatprep.subr.bf16.mxu0 %v7086
        %7190 = vmatpush1.bf16.msra.mxu0 %v7085
        %7191 = vmatprep.subr.bf16.mxu0 %v7090
        %7192 = vmatpush1.bf16.msra.mxu0 %v7089
        %7193 = vmatprep.subr.bf16.mxu0 %v7094
        %7194 = vmatpush1.bf16.msra.mxu0 %v7093
        %7195 = vmatprep.subr.bf16.mxu0 %v7098
        %7196 = vmatpush1.bf16.msra.mxu0 %v7097
        %7197 = vmatprep.subr.bf16.mxu0 %v7102
        %7198 = vmatpush1.bf16.msra.mxu0 %v7101
        %7199 = vmatprep.subr.bf16.mxu0 %v7106
        %7200 = vmatpush1.bf16.msra.mxu0 %v7105
        %7201 = vmatprep.subr.bf16.mxu0 %v7110
        %7202 = vmatpush1.bf16.msra.mxu0 %v7109
        %7203 = vmatprep.subr.bf16.mxu0 %v7114
        %7204 = vmatpush1.bf16.msra.mxu0 %v7113
        %7205 = vmatprep.subr.bf16.mxu0 %v7118
        %7206 = vmatpush1.bf16.msra.mxu0 %v7117
        %7207 = vmatprep.subr.bf16.mxu0 %v7122
        %7208 = vmatpush1.bf16.msra.mxu0 %v7121
        %7209 = vmatprep.subr.bf16.mxu0 0
        %7210 = vmatpush1.bf16.msra.mxu0 0
        %7211 = vmatprep.subr.bf16.mxu0 0
        %7212 = vmatpush1.bf16.msra.mxu0 0
        %7213 = vmatprep.subr.bf16.mxu0 0
        %7214 = vmatpush1.bf16.msra.mxu0 0
        %7215 = vmatprep.subr.bf16.mxu0 0
        %7216 = vmatpush1.bf16.msra.mxu0 0
        %7217 = vmatprep.mubr.bf16.mxu0 %v7174
        %7218 = vmatmul.mubr.bf16.gmra.mrb[0].mxu0 %v6924
        %v7219 = vpop.f32.mrb[0].mxu0
        %v7220 = vadd.f32 %v6863, %v7219
        %v7221 = vpop.f32.mrb[0].mxu0
        %v7222 = vadd.f32 %v6863, %v7221
        %v7223 = vpop.f32.mrb[0].mxu0
        %v7224 = vadd.f32 %v6868, %v7223
        %v7225 = vpop.f32.mrb[0].mxu0
        %v7226 = vadd.f32 %v6868, %v7225
        %7227 = vmatprep.mubr.bf16.mxu0 %v7177
        %7228 = vmatmul.mubr.bf16.gmra.mrb[0].mxu0 %v6926
        %v7229 = vpop.f32.mrb[0].mxu0
        %v7230 = vadd.f32 %v6873, %v7229
        %v7231 = vpop.f32.mrb[0].mxu0
        %v7232 = vadd.f32 %v6873, %v7231
        %v7233 = vpop.f32.mrb[0].mxu0
        %v7234 = vadd.f32 %v6878, %v7233
        %v7235 = vpop.f32.mrb[0].mxu0
        %v7236 = vadd.f32 %v6878, %v7235
        %7237 = vmatprep.mubr.bf16.mxu0 %v7180
        %7238 = vmatmul.mubr.bf16.gmra.mrb[0].mxu0 %v6928
        %v7239 = vpop.f32.mrb[0].mxu0
        %v7240 = vadd.f32 %v6883, %v7239
        %v7241 = vpop.f32.mrb[0].mxu0
        %v7242 = vadd.f32 %v6883, %v7241
        %v7243 = vpop.f32.mrb[0].mxu0
        %v7244 = vadd.f32 %v6888, %v7243
        %v7245 = vpop.f32.mrb[0].mxu0
        %v7246 = vadd.f32 %v6888, %v7245
        %7247 = vmatprep.mubr.bf16.mxu0 %v7183
        %7248 = vmatmul.mubr.bf16.gmra.mrb[0].mxu0 %v6930
        %v7249 = vpop.f32.mrb[0].mxu0
        %v7250 = vadd.f32 %v6893, %v7249
        %v7251 = vpop.f32.mrb[0].mxu0
        %v7252 = vadd.f32 %v6893, %v7251
        %v7253 = vpop.f32.mrb[0].mxu0
        %v7254 = vadd.f32 %v6898, %v7253
        %v7255 = vpop.f32.mrb[0].mxu0
        %v7256 = vadd.f32 %v6898, %v7255
        %7257 = vdwg.mxu0
        %7258 = vmatprep.subr.bf16.mxu0 %v7080
        %7259 = vmatpush1.bf16.msra.mxu0 %v7079
        %7260 = vmatprep.subr.bf16.mxu0 %v7084
        %7261 = vmatpush1.bf16.msra.mxu0 %v7083
        %7262 = vmatprep.subr.bf16.mxu0 %v7088
        %7263 = vmatpush1.bf16.msra.mxu0 %v7087
        %7264 = vmatprep.subr.bf16.mxu0 %v7092
        %7265 = vmatpush1.bf16.msra.mxu0 %v7091
        %7266 = vmatprep.subr.bf16.mxu0 %v7096
        %7267 = vmatpush1.bf16.msra.mxu0 %v7095
        %7268 = vmatprep.subr.bf16.mxu0 %v7100
        %7269 = vmatpush1.bf16.msra.mxu0 %v7099
        %7270 = vmatprep.subr.bf16.mxu0 %v7104
        %7271 = vmatpush1.bf16.msra.mxu0 %v7103
        %7272 = vmatprep.subr.bf16.mxu0 %v7108
        %7273 = vmatpush1.bf16.msra.mxu0 %v7107
        %7274 = vmatprep.subr.bf16.mxu0 %v7112
        %7275 = vmatpush1.bf16.msra.mxu0 %v7111
        %7276 = vmatprep.subr.bf16.mxu0 %v7116
        %7277 = vmatpush1.bf16.msra.mxu0 %v7115
        %7278 = vmatprep.subr.bf16.mxu0 %v7120
        %7279 = vmatpush1.bf16.msra.mxu0 %v7119
        %7280 = vmatprep.subr.bf16.mxu0 %v7124
        %7281 = vmatpush1.bf16.msra.mxu0 %v7123
        %7282 = vmatprep.subr.bf16.mxu0 0
        %7283 = vmatpush1.bf16.msra.mxu0 0
        %7284 = vmatprep.subr.bf16.mxu0 0
        %7285 = vmatpush1.bf16.msra.mxu0 0
        %7286 = vmatprep.subr.bf16.mxu0 0
        %7287 = vmatpush1.bf16.msra.mxu0 0
        %7288 = vmatprep.subr.bf16.mxu0 0
        %7289 = vmatpush1.bf16.msra.mxu0 0
        %7290 = vmatprep.mubr.bf16.mxu0 %v7174
        %7291 = vmatmul.mubr.bf16.gmra.mrb[0].mxu0 %v6924
        %v7292 = vpop.f32.mrb[0].mxu0
        %v7293 = vadd.f32 %v6863, %v7292
        %v7294 = vpop.f32.mrb[0].mxu0
        %v7295 = vadd.f32 %v6863, %v7294
        %v7296 = vpop.f32.mrb[0].mxu0
        %v7297 = vadd.f32 %v6868, %v7296
        %v7298 = vpop.f32.mrb[0].mxu0
        %v7299 = vadd.f32 %v6868, %v7298
        %7300 = vmatprep.mubr.bf16.mxu0 %v7177
        %7301 = vmatmul.mubr.bf16.gmra.mrb[0].mxu0 %v6926
        %v7302 = vpop.f32.mrb[0].mxu0
        %v7303 = vadd.f32 %v6873, %v7302
        %v7304 = vpop.f32.mrb[0].mxu0
        %v7305 = vadd.f32 %v6873, %v7304
        %v7306 = vpop.f32.mrb[0].mxu0
        %v7307 = vadd.f32 %v6878, %v7306
        %v7308 = vpop.f32.mrb[0].mxu0
        %v7309 = vadd.f32 %v6878, %v7308
        %7310 = vmatprep.mubr.bf16.mxu0 %v7180
        %7311 = vmatmul.mubr.bf16.gmra.mrb[0].mxu0 %v6928
        %v7312 = vpop.f32.mrb[0].mxu0
        %v7313 = vadd.f32 %v6883, %v7312
        %v7314 = vpop.f32.mrb[0].mxu0
        %v7315 = vadd.f32 %v6883, %v7314
        %v7316 = vpop.f32.mrb[0].mxu0
        %v7317 = vadd.f32 %v6888, %v7316
        %v7318 = vpop.f32.mrb[0].mxu0
        %v7319 = vadd.f32 %v6888, %v7318
        %7320 = vmatprep.mubr.bf16.mxu0 %v7183
        %7321 = vmatmul.mubr.bf16.gmra.mrb[0].mxu0 %v6930
        %v7322 = vpop.f32.mrb[0].mxu0
        %v7323 = vadd.f32 %v6893, %v7322
        %v7324 = vpop.f32.mrb[0].mxu0
        %v7325 = vadd.f32 %v6893, %v7324
        %v7326 = vpop.f32.mrb[0].mxu0
        %v7327 = vadd.f32 %v6898, %v7326
        %v7328 = vpop.f32.mrb[0].mxu0
        %v7329 = vadd.f32 %v6898, %v7328
        %7330 = vdwg.mxu0
        %vm7331 = vcmp.ge.f32.partialorder %v7220, 0.0
        %vm7332 = vcmp.ge.f32.partialorder %v7222, 0.0
        %vm7333 = vcmp.ge.f32.partialorder %v7293, 0.0
        %vm7334 = vcmp.ge.f32.partialorder %v7295, 0.0
        %vm7335 = vcmp.ge.f32.partialorder %v7224, 0.0
        %vm7336 = vcmp.ge.f32.partialorder %v7226, 0.0
        %vm7337 = vcmp.ge.f32.partialorder %v7297, 0.0
        %vm7338 = vcmp.ge.f32.partialorder %v7299, 0.0
        %vm7339 = vcmp.ge.f32.partialorder %v7230, 0.0
        %vm7340 = vcmp.ge.f32.partialorder %v7232, 0.0
        %vm7341 = vcmp.ge.f32.partialorder %v7303, 0.0
        %vm7342 = vcmp.ge.f32.partialorder %v7305, 0.0
        %vm7343 = vcmp.ge.f32.partialorder %v7234, 0.0
        %vm7344 = vcmp.ge.f32.partialorder %v7236, 0.0
        %vm7345 = vcmp.ge.f32.partialorder %v7307, 0.0
        %vm7346 = vcmp.ge.f32.partialorder %v7309, 0.0
        %vm7347 = vcmp.ge.f32.partialorder %v7240, 0.0
        %vm7348 = vcmp.ge.f32.partialorder %v7242, 0.0
        %vm7349 = vcmp.ge.f32.partialorder %v7313, 0.0
        %vm7350 = vcmp.ge.f32.partialorder %v7315, 0.0
        %vm7351 = vcmp.ge.f32.partialorder %v7244, 0.0
        %vm7352 = vcmp.ge.f32.partialorder %v7246, 0.0
        %vm7353 = vcmp.ge.f32.partialorder %v7317, 0.0
        %vm7354 = vcmp.ge.f32.partialorder %v7319, 0.0
        %vm7355 = vcmp.ge.f32.partialorder %v7250, 0.0
        %vm7356 = vcmp.ge.f32.partialorder %v7252, 0.0
        %vm7357 = vcmp.ge.f32.partialorder %v7323, 0.0
        %vm7358 = vcmp.ge.f32.partialorder %v7325, 0.0
        %vm7359 = vcmp.ge.f32.partialorder %v7254, 0.0
        %vm7360 = vcmp.ge.f32.partialorder %v7256, 0.0
        %vm7361 = vcmp.ge.f32.partialorder %v7327, 0.0
        %vm7362 = vcmp.ge.f32.partialorder %v7329, 0.0
        %v7363 = vmul.f32 %v7220, 0.2
        %v7364 = vmul.f32 %v7222, 0.2
        %v7365 = vmul.f32 %v7293, 0.2
        %v7366 = vmul.f32 %v7295, 0.2
        %v7367 = vmul.f32 %v7224, 0.2
        %v7368 = vmul.f32 %v7226, 0.2
        %v7369 = vmul.f32 %v7297, 0.2
        %v7370 = vmul.f32 %v7299, 0.2
        %v7371 = vmul.f32 %v7230, 0.2
        %v7372 = vmul.f32 %v7232, 0.2
        %v7373 = vmul.f32 %v7303, 0.2
        %v7374 = vmul.f32 %v7305, 0.2
        %v7375 = vmul.f32 %v7234, 0.2
        %v7376 = vmul.f32 %v7236, 0.2
        %v7377 = vmul.f32 %v7307, 0.2
        %v7378 = vmul.f32 %v7309, 0.2
        %v7379 = vmul.f32 %v7240, 0.2
        %v7380 = vmul.f32 %v7242, 0.2
        %v7381 = vmul.f32 %v7313, 0.2
        %v7382 = vmul.f32 %v7315, 0.2
        %v7383 = vmul.f32 %v7244, 0.2
        %v7384 = vmul.f32 %v7246, 0.2
        %v7385 = vmul.f32 %v7317, 0.2
        %v7386 = vmul.f32 %v7319, 0.2
        %v7387 = vmul.f32 %v7250, 0.2
        %v7388 = vmul.f32 %v7252, 0.2
        %v7389 = vmul.f32 %v7323, 0.2
        %v7390 = vmul.f32 %v7325, 0.2
        %v7391 = vmul.f32 %v7254, 0.2
        %v7392 = vmul.f32 %v7256, 0.2
        %v7393 = vmul.f32 %v7327, 0.2
        %v7394 = vmul.f32 %v7329, 0.2
        %v7395 = vsel %vm7331, %v7220, %v7363
        %v7396 = vsel %vm7332, %v7222, %v7364
        %v7397 = vsel %vm7333, %v7293, %v7365
        %v7398 = vsel %vm7334, %v7295, %v7366
        %v7399 = vsel %vm7335, %v7224, %v7367
        %v7400 = vsel %vm7336, %v7226, %v7368
        %v7401 = vsel %vm7337, %v7297, %v7369
        %v7402 = vsel %vm7338, %v7299, %v7370
        %v7403 = vsel %vm7339, %v7230, %v7371
        %v7404 = vsel %vm7340, %v7232, %v7372
        %v7405 = vsel %vm7341, %v7303, %v7373
        %v7406 = vsel %vm7342, %v7305, %v7374
        %v7407 = vsel %vm7343, %v7234, %v7375
        %v7408 = vsel %vm7344, %v7236, %v7376
        %v7409 = vsel %vm7345, %v7307, %v7377
        %v7410 = vsel %vm7346, %v7309, %v7378
        %v7411 = vsel %vm7347, %v7240, %v7379
        %v7412 = vsel %vm7348, %v7242, %v7380
        %v7413 = vsel %vm7349, %v7313, %v7381
        %v7414 = vsel %vm7350, %v7315, %v7382
        %v7415 = vsel %vm7351, %v7244, %v7383
        %v7416 = vsel %vm7352, %v7246, %v7384
        %v7417 = vsel %vm7353, %v7317, %v7385
        %v7418 = vsel %vm7354, %v7319, %v7386
        %v7419 = vsel %vm7355, %v7250, %v7387
        %v7420 = vsel %vm7356, %v7252, %v7388
        %v7421 = vsel %vm7357, %v7323, %v7389
        %v7422 = vsel %vm7358, %v7325, %v7390
        %v7423 = vsel %vm7359, %v7254, %v7391
        %v7424 = vsel %vm7360, %v7256, %v7392
        %v7425 = vsel %vm7361, %v7327, %v7393
        %v7426 = vsel %vm7362, %v7329, %v7394
        %v7427 = vmul.f32 %v7395, %v272
        %v7428 = vmul.f32 %v7396, %v273
        %v7429 = vmul.f32 %v7397, %v274
        %v7430 = vmul.f32 %v7398, %v275
        %v7431 = vmul.f32 %v7399, %v272
        %v7432 = vmul.f32 %v7400, %v273
        %v7433 = vmul.f32 %v7401, %v274
        %v7434 = vmul.f32 %v7402, %v275
        %v7435 = vmul.f32 %v7403, %v272
        %v7436 = vmul.f32 %v7404, %v273
        %v7437 = vmul.f32 %v7405, %v274
        %v7438 = vmul.f32 %v7406, %v275
        %v7439 = vmul.f32 %v7407, %v272
        %v7440 = vmul.f32 %v7408, %v273
        %v7441 = vmul.f32 %v7409, %v274
        %v7442 = vmul.f32 %v7410, %v275
        %v7443 = vmul.f32 %v7411, %v272
        %v7444 = vmul.f32 %v7412, %v273
        %v7445 = vmul.f32 %v7413, %v274
        %v7446 = vmul.f32 %v7414, %v275
        %v7447 = vmul.f32 %v7415, %v272
        %v7448 = vmul.f32 %v7416, %v273
        %v7449 = vmul.f32 %v7417, %v274
        %v7450 = vmul.f32 %v7418, %v275
        %v7451 = vmul.f32 %v7419, %v272
        %v7452 = vmul.f32 %v7420, %v273
        %v7453 = vmul.f32 %v7421, %v274
        %v7454 = vmul.f32 %v7422, %v275
        %v7455 = vmul.f32 %v7423, %v272
        %v7456 = vmul.f32 %v7424, %v273
        %v7457 = vmul.f32 %v7425, %v274
        %v7458 = vmul.f32 %v7426, %v275
        %v7459 = vpack.c.bf16 %v7431, %v7427
        %v7460 = vpack.c.bf16 %v7432, %v7428
        %v7461 = vpack.c.bf16 %v7433, %v7429
        %v7462 = vpack.c.bf16 %v7434, %v7430
        %v7463 = vpack.c.bf16 %v7439, %v7435
        %v7464 = vpack.c.bf16 %v7440, %v7436
        %v7465 = vpack.c.bf16 %v7441, %v7437
        %v7466 = vpack.c.bf16 %v7442, %v7438
        %v7467 = vpack.c.bf16 %v7447, %v7443
        %v7468 = vpack.c.bf16 %v7448, %v7444
        %v7469 = vpack.c.bf16 %v7449, %v7445
        %v7470 = vpack.c.bf16 %v7450, %v7446
        %v7471 = vpack.c.bf16 %v7455, %v7451
        %v7472 = vpack.c.bf16 %v7456, %v7452
        %v7473 = vpack.c.bf16 %v7457, %v7453
        %v7474 = vpack.c.bf16 %v7458, %v7454
        %7475 = vst [vmem:[#allocation2 + $0x8] sm:$0xff] %v7459
        %7476 = vst [vmem:[#allocation2 + $0x10] sm:$0xff] %v7460
        %7477 = vst [vmem:[#allocation2 + $0x18] sm:$0xff] %v7461
        %7478 = vst [vmem:[#allocation2 + $0x20] sm:$0xff] %v7462
        %7479 = vst [vmem:[#allocation2 + $0x38] sm:$0xff] %v7463
        %7480 = vst [vmem:[#allocation2 + $0x40] sm:$0xff] %v7464
        %7481 = vst [vmem:[#allocation2 + $0x48] sm:$0xff] %v7465
        %7482 = vst [vmem:[#allocation2 + $0x50] sm:$0xff] %v7466
        %7483 = vst [vmem:[#allocation2 + $0x68] sm:$0xff] %v7467
        %7484 = vst [vmem:[#allocation2 + $0x70] sm:$0xff] %v7468
        %7485 = vst [vmem:[#allocation2 + $0x78] sm:$0xff] %v7469
        %7486 = vst [vmem:[#allocation2 + $0x80] sm:$0xff] %v7470
        %7487 = vst [vmem:[#allocation2 + $0x98] sm:$0xff] %v7471
        %7488 = vst [vmem:[#allocation2 + $0xa0] sm:$0xff] %v7472
        %7489 = vst [vmem:[#allocation2 + $0xa8] sm:$0xff] %v7473
        %7490 = vst [vmem:[#allocation2 + $0xb0] sm:$0xff] %v7474
        %v7491 = vld [vmem:[#allocation2 + $0x8] sm:$0xff]
        %v7492 = vld [vmem:[#allocation2 + $0x10] sm:$0xff]
        %v7493 = vld [vmem:[#allocation2 + $0x18] sm:$0xff]
        %v7494 = vld [vmem:[#allocation2 + $0x38] sm:$0xff]
        %v7495 = vld [vmem:[#allocation2 + $0x40] sm:$0xff]
        %v7496 = vld [vmem:[#allocation2 + $0x48] sm:$0xff]
        %v7497 = vld [vmem:[#allocation2 + $0x68] sm:$0xff]
        %v7498 = vld [vmem:[#allocation2 + $0x70] sm:$0xff]
        %v7499 = vld [vmem:[#allocation2 + $0x78] sm:$0xff]
        %v7500 = vld [vmem:[#allocation2 + $0x98] sm:$0xff]
        %v7501 = vld [vmem:[#allocation2 + $0xa0] sm:$0xff]
        %v7502 = vld [vmem:[#allocation2 + $0xa8] sm:$0xff]
        %v7503 = vld [vmem:[#allocation2 + $0x8] sm:$0xff]
        %v7504 = vld [vmem:[#allocation2 + $0x10] sm:$0xff]
        %v7505 = vld [vmem:[#allocation2 + $0x18] sm:$0xff]
        %v7506 = vld [vmem:[#allocation2 + $0x20] sm:$0xff]
        %v7507 = vld [vmem:[#allocation2 + $0x38] sm:$0xff]
        %v7508 = vld [vmem:[#allocation2 + $0x40] sm:$0xff]
        %v7509 = vld [vmem:[#allocation2 + $0x48] sm:$0xff]
        %v7510 = vld [vmem:[#allocation2 + $0x50] sm:$0xff]
        %v7511 = vld [vmem:[#allocation2 + $0x68] sm:$0xff]
        %v7512 = vld [vmem:[#allocation2 + $0x70] sm:$0xff]
        %v7513 = vld [vmem:[#allocation2 + $0x78] sm:$0xff]
        %v7514 = vld [vmem:[#allocation2 + $0x80] sm:$0xff]
        %v7515 = vld [vmem:[#allocation2 + $0x98] sm:$0xff]
        %v7516 = vld [vmem:[#allocation2 + $0xa0] sm:$0xff]
        %v7517 = vld [vmem:[#allocation2 + $0xa8] sm:$0xff]
        %v7518 = vld [vmem:[#allocation2 + $0xb0] sm:$0xff]
        %7535 = vrot.lane.b32.xlu0 %v7459, 127
        %v7536 = vpop.permute.xlu0 %7535
        %7537 = vrot.lane.b32.xlu0 %v7460, 127
        %v7538 = vpop.permute.xlu0 %7537
        %7539 = vrot.lane.b32.xlu0 %v7461, 127
        %v7540 = vpop.permute.xlu0 %7539
        %7541 = vrot.lane.b32.xlu0 %v7462, 127
        %v7542 = vpop.permute.xlu0 %7541
        %7543 = vrot.lane.b32.xlu0 %v7463, 127
        %v7544 = vpop.permute.xlu0 %7543
        %7545 = vrot.lane.b32.xlu0 %v7464, 127
        %v7546 = vpop.permute.xlu0 %7545
        %7547 = vrot.lane.b32.xlu0 %v7465, 127
        %v7548 = vpop.permute.xlu0 %7547
        %7549 = vrot.lane.b32.xlu0 %v7466, 127
        %v7550 = vpop.permute.xlu0 %7549
        %7551 = vrot.lane.b32.xlu0 %v7467, 127
        %v7552 = vpop.permute.xlu0 %7551
        %7553 = vrot.lane.b32.xlu0 %v7468, 127
        %v7554 = vpop.permute.xlu0 %7553
        %7555 = vrot.lane.b32.xlu0 %v7469, 127
        %v7556 = vpop.permute.xlu0 %7555
        %7557 = vrot.lane.b32.xlu0 %v7470, 127
        %v7558 = vpop.permute.xlu0 %7557
        %7559 = vrot.lane.b32.xlu0 %v7471, 127
        %v7560 = vpop.permute.xlu0 %7559
        %7561 = vrot.lane.b32.xlu0 %v7472, 127
        %v7562 = vpop.permute.xlu0 %7561
        %7563 = vrot.lane.b32.xlu0 %v7473, 127
        %v7564 = vpop.permute.xlu0 %7563
        %7565 = vrot.lane.b32.xlu0 %v7474, 127
        %v7566 = vpop.permute.xlu0 %7565
        %v7567 = vsel %vm967, %v7536, %v7538
        %v7568 = vsel %vm967, %v7538, %v7540
        %v7569 = vsel %vm967, %v7540, %v7542
        %v7570 = vsel %vm967, %v7544, %v7546
        %v7571 = vsel %vm967, %v7546, %v7548
        %v7572 = vsel %vm967, %v7548, %v7550
        %v7573 = vsel %vm967, %v7552, %v7554
        %v7574 = vsel %vm967, %v7554, %v7556
        %v7575 = vsel %vm967, %v7556, %v7558
        %v7576 = vsel %vm967, %v7560, %v7562
        %v7577 = vsel %vm967, %v7562, %v7564
        %v7578 = vsel %vm967, %v7564, %v7566
        %7595 = vrot.lane.b32.xlu0 %v7503, 126
        %v7596 = vpop.permute.xlu0 %7595
        %7597 = vrot.lane.b32.xlu0 %v7504, 126
        %v7598 = vpop.permute.xlu0 %7597
        %7599 = vrot.lane.b32.xlu0 %v7505, 126
        %v7600 = vpop.permute.xlu0 %7599
        %7601 = vrot.lane.b32.xlu0 %v7506, 126
        %v7602 = vpop.permute.xlu0 %7601
        %7603 = vrot.lane.b32.xlu0 %v7507, 126
        %v7604 = vpop.permute.xlu0 %7603
        %7605 = vrot.lane.b32.xlu0 %v7508, 126
        %v7606 = vpop.permute.xlu0 %7605
        %7607 = vrot.lane.b32.xlu0 %v7509, 126
        %v7608 = vpop.permute.xlu0 %7607
        %7609 = vrot.lane.b32.xlu0 %v7510, 126
        %v7610 = vpop.permute.xlu0 %7609
        %7611 = vrot.lane.b32.xlu0 %v7511, 126
        %v7612 = vpop.permute.xlu0 %7611
        %7613 = vrot.lane.b32.xlu0 %v7512, 126
        %v7614 = vpop.permute.xlu0 %7613
        %7615 = vrot.lane.b32.xlu0 %v7513, 126
        %v7616 = vpop.permute.xlu0 %7615
        %7617 = vrot.lane.b32.xlu0 %v7514, 126
        %v7618 = vpop.permute.xlu0 %7617
        %7619 = vrot.lane.b32.xlu0 %v7515, 126
        %v7620 = vpop.permute.xlu0 %7619
        %7621 = vrot.lane.b32.xlu0 %v7516, 126
        %v7622 = vpop.permute.xlu0 %7621
        %7623 = vrot.lane.b32.xlu0 %v7517, 126
        %v7624 = vpop.permute.xlu0 %7623
        %7625 = vrot.lane.b32.xlu0 %v7518, 126
        %v7626 = vpop.permute.xlu0 %7625
        %v7627 = vsel %vm1040, %v7596, %v7598
        %v7628 = vsel %vm1040, %v7598, %v7600
        %v7629 = vsel %vm1040, %v7600, %v7602
        %v7630 = vsel %vm1040, %v7604, %v7606
        %v7631 = vsel %vm1040, %v7606, %v7608
        %v7632 = vsel %vm1040, %v7608, %v7610
        %v7633 = vsel %vm1040, %v7612, %v7614
        %v7634 = vsel %vm1040, %v7614, %v7616
        %v7635 = vsel %vm1040, %v7616, %v7618
        %v7636 = vsel %vm1040, %v7620, %v7622
        %v7637 = vsel %vm1040, %v7622, %v7624
        %v7638 = vsel %vm1040, %v7624, %v7626
        %v7639 = vld [vmem:[%s3] sm:$0xff]
        %v7641 = vunpack.c.l.b16 %v7639
        %v7642 = vunpack.c.h.b16 %v7639
        %v7643 = vpack.c.b16 %v7641, %v7641
        %v7644 = vpack.c.b16 %v7642, %v7642
        %7658 = vrot.lane.b32.xlu0 %v7491, 1
        %v7659 = vpop.permute.xlu0 %7658
        %7660 = vrot.lane.b32.xlu0 %v7492, 1
        %v7661 = vpop.permute.xlu0 %7660
        %7662 = vrot.lane.b32.xlu0 %v7493, 1
        %v7663 = vpop.permute.xlu0 %7662
        %7664 = vrot.lane.b32.xlu0 %v7494, 1
        %v7665 = vpop.permute.xlu0 %7664
        %7666 = vrot.lane.b32.xlu0 %v7495, 1
        %v7667 = vpop.permute.xlu0 %7666
        %7668 = vrot.lane.b32.xlu0 %v7496, 1
        %v7669 = vpop.permute.xlu0 %7668
        %7670 = vrot.lane.b32.xlu0 %v7497, 1
        %v7671 = vpop.permute.xlu0 %7670
        %7672 = vrot.lane.b32.xlu0 %v7498, 1
        %v7673 = vpop.permute.xlu0 %7672
        %7674 = vrot.lane.b32.xlu0 %v7499, 1
        %v7675 = vpop.permute.xlu0 %7674
        %7676 = vrot.lane.b32.xlu0 %v7500, 1
        %v7677 = vpop.permute.xlu0 %7676
        %7678 = vrot.lane.b32.xlu0 %v7501, 1
        %v7679 = vpop.permute.xlu0 %7678
        %7680 = vrot.lane.b32.xlu0 %v7502, 1
        %v7681 = vpop.permute.xlu0 %7680
        %7682 = vrot.lane.b32.xlu0 %v7567, 1
        %v7683 = vpop.permute.xlu0 %7682
        %7684 = vrot.lane.b32.xlu0 %v7568, 1
        %v7685 = vpop.permute.xlu0 %7684
        %7686 = vrot.lane.b32.xlu0 %v7569, 1
        %v7687 = vpop.permute.xlu0 %7686
        %7688 = vrot.lane.b32.xlu0 %v7570, 1
        %v7689 = vpop.permute.xlu0 %7688
        %7690 = vrot.lane.b32.xlu0 %v7571, 1
        %v7691 = vpop.permute.xlu0 %7690
        %7692 = vrot.lane.b32.xlu0 %v7572, 1
        %v7693 = vpop.permute.xlu0 %7692
        %7694 = vrot.lane.b32.xlu0 %v7573, 1
        %v7695 = vpop.permute.xlu0 %7694
        %7696 = vrot.lane.b32.xlu0 %v7574, 1
        %v7697 = vpop.permute.xlu0 %7696
        %7698 = vrot.lane.b32.xlu0 %v7575, 1
        %v7699 = vpop.permute.xlu0 %7698
        %7700 = vrot.lane.b32.xlu0 %v7576, 1
        %v7701 = vpop.permute.xlu0 %7700
        %7702 = vrot.lane.b32.xlu0 %v7577, 1
        %v7703 = vpop.permute.xlu0 %7702
        %7704 = vrot.lane.b32.xlu0 %v7578, 1
        %v7705 = vpop.permute.xlu0 %7704
        %7706 = vrot.lane.b32.xlu0 %v7627, 1
        %v7707 = vpop.permute.xlu0 %7706
        %7708 = vrot.lane.b32.xlu0 %v7628, 1
        %v7709 = vpop.permute.xlu0 %7708
        %7710 = vrot.lane.b32.xlu0 %v7629, 1
        %v7711 = vpop.permute.xlu0 %7710
        %7712 = vrot.lane.b32.xlu0 %v7630, 1
        %v7713 = vpop.permute.xlu0 %7712
        %7714 = vrot.lane.b32.xlu0 %v7631, 1
        %v7715 = vpop.permute.xlu0 %7714
        %7716 = vrot.lane.b32.xlu0 %v7632, 1
        %v7717 = vpop.permute.xlu0 %7716
        %7718 = vrot.lane.b32.xlu0 %v7633, 1
        %v7719 = vpop.permute.xlu0 %7718
        %7720 = vrot.lane.b32.xlu0 %v7634, 1
        %v7721 = vpop.permute.xlu0 %7720
        %7722 = vrot.lane.b32.xlu0 %v7635, 1
        %v7723 = vpop.permute.xlu0 %7722
        %7724 = vrot.lane.b32.xlu0 %v7636, 1
        %v7725 = vpop.permute.xlu0 %7724
        %7726 = vrot.lane.b32.xlu0 %v7637, 1
        %v7727 = vpop.permute.xlu0 %7726
        %7728 = vrot.lane.b32.xlu0 %v7638, 1
        %v7729 = vpop.permute.xlu0 %7728
        %v7730 = vsel %vm1290, %v7659, %v7661
        %v7731 = vsel %vm1290, %v7661, %v7663
        %v7732 = vsel %vm1290, %v7665, %v7667
        %v7733 = vsel %vm1290, %v7667, %v7669
        %v7734 = vsel %vm1290, %v7671, %v7673
        %v7735 = vsel %vm1290, %v7673, %v7675
        %v7736 = vsel %vm1290, %v7677, %v7679
        %v7737 = vsel %vm1290, %v7679, %v7681
        %v7738 = vsel %vm1290, %v7683, %v7685
        %v7739 = vsel %vm1290, %v7685, %v7687
        %v7740 = vsel %vm1290, %v7689, %v7691
        %v7741 = vsel %vm1290, %v7691, %v7693
        %v7742 = vsel %vm1290, %v7695, %v7697
        %v7743 = vsel %vm1290, %v7697, %v7699
        %v7744 = vsel %vm1290, %v7701, %v7703
        %v7745 = vsel %vm1290, %v7703, %v7705
        %v7746 = vsel %vm1290, %v7707, %v7709
        %v7747 = vsel %vm1290, %v7709, %v7711
        %v7748 = vsel %vm1290, %v7713, %v7715
        %v7749 = vsel %vm1290, %v7715, %v7717
        %v7750 = vsel %vm1290, %v7719, %v7721
        %v7751 = vsel %vm1290, %v7721, %v7723
        %v7752 = vsel %vm1290, %v7725, %v7727
        %v7753 = vsel %vm1290, %v7727, %v7729
        %v7779 = vsel %vm1387, %v7644, 0
        %7781 = vmatprep.subr.bf16.mxu0 %v7731
        %7782 = vmatpush1.bf16.msra.mxu0 %v7730
        %7783 = vmatprep.subr.bf16.mxu0 %v7733
        %7784 = vmatpush1.bf16.msra.mxu0 %v7732
        %7785 = vmatprep.subr.bf16.mxu0 %v7735
        %7786 = vmatpush1.bf16.msra.mxu0 %v7734
        %7787 = vmatprep.subr.bf16.mxu0 %v7737
        %7788 = vmatpush1.bf16.msra.mxu0 %v7736
        %7789 = vmatprep.subr.bf16.mxu0 %v7739
        %7790 = vmatpush1.bf16.msra.mxu0 %v7738
        %7791 = vmatprep.subr.bf16.mxu0 %v7741
        %7792 = vmatpush1.bf16.msra.mxu0 %v7740
        %7793 = vmatprep.subr.bf16.mxu0 %v7743
        %7794 = vmatpush1.bf16.msra.mxu0 %v7742
        %7795 = vmatprep.subr.bf16.mxu0 %v7745
        %7796 = vmatpush1.bf16.msra.mxu0 %v7744
        %7797 = vmatprep.subr.bf16.mxu0 %v7747
        %7798 = vmatpush1.bf16.msra.mxu0 %v7746
        %7799 = vmatprep.subr.bf16.mxu0 %v7749
        %7800 = vmatpush1.bf16.msra.mxu0 %v7748
        %7801 = vmatprep.subr.bf16.mxu0 %v7751
        %7802 = vmatpush1.bf16.msra.mxu0 %v7750
        %7803 = vmatprep.subr.bf16.mxu0 %v7753
        %7804 = vmatpush1.bf16.msra.mxu0 %v7752
        %7805 = vmatprep.subr.bf16.mxu0 0
        %7806 = vmatpush1.bf16.msra.mxu0 0
        %7807 = vmatprep.subr.bf16.mxu0 0
        %7808 = vmatpush1.bf16.msra.mxu0 0
        %7809 = vmatprep.subr.bf16.mxu0 0
        %7810 = vmatpush1.bf16.msra.mxu0 0
        %7811 = vmatprep.subr.bf16.mxu0 0
        %7812 = vmatpush1.bf16.msra.mxu0 0
        %7813 = vmatprep.mubr.bf16.mxu0 %v7779
        %7814 = vmatmul.mubr.bf16.gmra.mrb[0].mxu0 %v7643
        %v7815 = vpop.f32.mrb[0].mxu0
        %v7816 = vadd.f32 0.0, %v7815
        %v7817 = vpop.f32.mrb[0].mxu0
        %v7818 = vadd.f32 0.0, %v7817
        %v7819 = vpop.f32.mrb[0].mxu0
        %v7820 = vpop.f32.mrb[0].mxu0
        %7821 = vdwg.mxu0
        %s7822 = scalar_lea.vmem %s4, 576
        %v7823 = vld [vmem:[%s7822] sm:$0xff]
        %7825 = vset.pattern.permute.xlu0 0
        %7826 = vperm.xlu0 %7825, %v7823
        %v7827 = vpop.permute.xlu0 %7826
        %v7829 = vadd.f32 %v7816, %v7827
        %v7830 = vadd.f32 %v7818, %v7827
        %v7833 = vcombine.low %v7829, %v7830
        %v7835 = vunpack.c.l.s4 1966171168
        %v7836 = vunpack.c.0.s8 %v7835
        %v7837 = vlaneseq
        %v7838 = vshrl.u32 %v7837, 7
        %v7839 = vsub.s32 %v7836, %v7838
        %v7840 = vrot.slane %v7833, %v7839
        %v7842 = vunpack.c.l.s4 1966171168
        %v7843 = vunpack.c.0.s8 %v7842
        %v7844 = vlaneseq
        %v7845 = vshrl.u32 %v7844, 7
        %v7846 = vsub.s32 %v7843, %v7845
        %v7847 = vrot.slane %v7840, %v7846
        %v7849 = vlaneseq
        %vm7850 = vcmp.ge.s32.totalorder %v7849, 0
        %vm7851 = vcmp.lt.s32.totalorder %v7849, 256
        %vm7852 = vmand %vm7850, %vm7851
        %7853 = vst.msk [vmem:[%s229] sm:$0x3] %vm7852, %v7847
        %s7854 = sand.u32 %s151, 1
        %s7855 = scalar_lea.sflag [#allocation4], %s7854
        %s7856 = sand.u32 %s151, 1
        %s7857 = smul.addr %s7856, 2
        %s7858 = scalar_lea.vmem [#allocation3], %s7857
        // Predicated region
        $region41: #{tpu_custom_call.1} parent=39 // pred_check
          %p7859 = pneg %p161
        $region42: #{tpu_custom_call.1} parent=39 // pred_check_branch
          %7861 = sbr.rel (%p7859) target = $region44
        $region43: #{tpu_custom_call.1} parent=39 // pred_region
          %s7862 = smul.u32 2, %s24
          %s7864 = ssub.s32 32, 32
          %7865 = vsyncadd %s7855, %s7864
          %s7866 = smul.addr %s23, 6
          %s7867 = sadd.s32 %s7862, %s7866
          %s7868 = smul.addr %s7867, 16
          %s7869 = scalar_lea.hbm %s5, %s7868
          %s7871 = sshll.u32 %s7858, 4
          %s7872 = int_to_ptr.vmem [resolvable:$true] %s7871
          %7874 = dma.vmem_to_hbm [thread:$0]  %s7872, 32, %s7869, %s7855
        $region44: #{tpu_custom_call.1} parent=39 // pred_fallthru
          _
      $region40: #{tpu_custom_call.1} parent=5 // pred_fallthru
        _
      %p7875 = scmp.le.s32.totalorder 2, %s14
      // Predicated region
      $region45: #{tpu_custom_call.1} parent=5 // pred_check
        %p7876 = pneg %p7875
      $region46: #{tpu_custom_call.1} parent=5 // pred_check_branch
        %7878 = sbr.rel (%p7876) target = $region48
      $region47: #{tpu_custom_call.1} parent=5 // pred_region
        %s7879 = ssub.s32 %s14, 2
        // Predicated region
        $region49: #{tpu_custom_call.1} parent=47 // pred_check
          %p7880 = pneg %p167
        $region50: #{tpu_custom_call.1} parent=47 // pred_check_branch
          %7882 = sbr.rel (%p7880) target = $region52
        $region51: #{tpu_custom_call.1} parent=47 // pred_region
          %s7883 = sand.u32 %s152, 1
          %s7884 = scalar_lea.sflag [#allocation4], %s7883
          %s7885 = sand.u32 %s152, 1
          %s7886 = smul.addr %s7885, 2
          %s7887 = scalar_lea.vmem [#allocation3], %s7886
          %7888 = dma.done %s7884, 32
        $region52: #{tpu_custom_call.1} parent=47 // pred_fallthru
          _
      $region48: #{tpu_custom_call.1} parent=5 // pred_fallthru
        _
    $region6: #{tpu_custom_call.1} parent=1 // loop_footer
      %s18 = sadd.s32 1, %s14
    $region7: #{tpu_custom_call.1} parent=1 // loop_footer_branch
      %13 = sbr.rel target = $region3
    $region8: #{tpu_custom_call.1} parent=1 // loop_exit
      _
    %7889 = vsyncpa [#allocation4], 1
    %s7890 = scalar_lea.sflag [#allocation4], 1
    %7891 = vsyncpa %s7890, 1

</llo_original>
